<compile_context>
chip_gen: v7x
topology: tpu7x:2x2x1
jax: 0.10.0
libtpu: 0.0.40
codegen_flags: <defaults>
</compile_context>

<pallas_src>
import jax
import jax.numpy as jnp
from jax.experimental import pallas as pl
from jax.experimental.pallas import tpu as pltpu

IN_DIM = 128 * 3 * 3   # 1152
HID = 1024
OUT = 2
PAD_OUT = 128          # final projection padded to one full lane width
EPS = 1e-5


def _dann_domain_kernel(x_ref,
                        w1_ref, g1_ref, be1_ref,
                        w2_ref, g2_ref, be2_ref,
                        w3_ref, b3_ref,
                        out_ref):
    # GradReverse is identity in the forward pass.
    inv_b = jnp.float32(1.0 / x_ref.shape[0])            # static batch size
    x = x_ref[...]                                        # (B, 1152) bf16 (cast in wrapper)

    # ---- Linear(1152 -> 1024): bias omitted, exactly absorbed by train-mode BN.
    h = jnp.dot(x, w1_ref[...], preferred_element_type=jnp.float32)
    mu = jnp.sum(h, axis=0, keepdims=True) * inv_b
    d = h - mu
    var = jnp.sum(d * d, axis=0, keepdims=True) * inv_b   # biased var (PyTorch train mode)
    h = d * (g1_ref[...] * jax.lax.rsqrt(var + EPS)) + be1_ref[...]
    h = jnp.maximum(h, 0.0)                               # ReLU (Dropout(p=0) = identity)

    # ---- Linear(1024 -> 1024) + BatchNorm1d + ReLU
    h = jnp.dot(h.astype(jnp.bfloat16), w2_ref[...],
                preferred_element_type=jnp.float32)
    mu = jnp.sum(h, axis=0, keepdims=True) * inv_b
    d = h - mu
    var = jnp.sum(d * d, axis=0, keepdims=True) * inv_b
    h = d * (g2_ref[...] * jax.lax.rsqrt(var + EPS)) + be2_ref[...]
    h = jnp.maximum(h, 0.0)

    # ---- Linear(1024 -> 2), padded to 128 lanes, + masked LogSoftmax(dim=1).
    logits = jnp.dot(h.astype(jnp.bfloat16), w3_ref[...],
                     preferred_element_type=jnp.float32) + b3_ref[...]    # (B, 128)
    lane = jax.lax.broadcasted_iota(jnp.int32, logits.shape, 1)
    logits = jnp.where(lane < OUT, logits, jnp.float32(-1e30))            # mask pad lanes
    m = jnp.max(logits, axis=1, keepdims=True)
    lse = m + jnp.log(jnp.sum(jnp.exp(logits - m), axis=1, keepdims=True))
    # Lane-dense (B, 128) store; wrapper slices the first OUT columns.
    out_ref[...] = (logits - lse).astype(out_ref.dtype)


def init_params(key):
    """Deterministic synthetic parameters (shapes from the PyTorch __init__).

    Linear weights stored (in, out) in bf16 (halves weight DMA; matmuls still
    accumulate in f32).  The final projection is zero-padded to 128 output
    lanes.  BN params / final bias stay f32.
    """
    ks = jax.random.split(key, 6)

    def lin(kw, kb, fan_in, fan_out):
        bound = 1.0 / jnp.sqrt(fan_in)
        w = jax.random.uniform(kw, (fan_in, fan_out), jnp.float32, -bound, bound)
        b = jax.random.uniform(kb, (1, fan_out), jnp.float32, -bound, bound)
        return w, b

    w1, b1 = lin(ks[0], ks[1], IN_DIM, HID)
    w2, b2 = lin(ks[2], ks[3], HID, HID)
    w3, b3 = lin(ks[4], ks[5], HID, OUT)

    w3p = jnp.zeros((HID, PAD_OUT), jnp.float32).at[:, :OUT].set(w3)
    b3p = jnp.zeros((1, PAD_OUT), jnp.float32).at[:, :OUT].set(b3)

    g1 = jnp.ones((1, HID), jnp.float32)
    be1 = jnp.zeros((1, HID), jnp.float32)
    g2 = jnp.ones((1, HID), jnp.float32)
    be2 = jnp.zeros((1, HID), jnp.float32)
    return (w1.astype(jnp.bfloat16), b1, g1, be1,
            w2.astype(jnp.bfloat16), b2, g2, be2,
            w3p.astype(jnp.bfloat16), b3p)


def svhn_domain_classifier_forward(x, params, constant=1.0):
    # `constant` only affects the backward pass of GradReverse; forward is identity.
    del constant
    w1, b1, g1, be1, w2, b2, g2, be2, w3p, b3p = params
    # b1/b2 are exactly cancelled by the following train-mode BatchNorm (the
    # batch mean absorbs any per-feature shift), so they are not passed in.
    del b1, b2
    B = x.shape[0]

    # Cast in the wrapper so XLA fuses it upstream and the kernel streams bf16.
    x_bf16 = x.astype(jnp.bfloat16)

    # Whole-array, single-buffer VMEM residency for every operand (no grid,
    # so no wasted double-buffering of the ~4.4 MiB of bf16 weights).
    vmem = lambda: pl.BlockSpec(memory_space=pltpu.MemorySpace.VMEM)

    # Right-size the scoped VMEM limit from B instead of a fixed constant.
    weight_bytes = (IN_DIM * HID + HID * HID + HID * PAD_OUT) * 2 \
                   + (4 * HID + PAD_OUT) * 4
    act_bytes = B * (IN_DIM * 2 + 2 * HID * 4 + PAD_OUT * 4)
    vmem_limit = int(min(64 << 20, max(16 << 20, 2 * (weight_bytes + act_bytes))))

    out_padded = pl.pallas_call(
        _dann_domain_kernel,
        out_shape=jax.ShapeDtypeStruct((B, PAD_OUT), jnp.float32),
        in_specs=[vmem() for _ in range(9)],
        out_specs=vmem(),
        compiler_params=pltpu.CompilerParams(vmem_limit_bytes=vmem_limit),
    )(x_bf16, w1, g1, be1, w2, g2, be2, w3p, b3p)
    return out_padded[:, :OUT]


def _reference_forward(x, params):
    """Pure-JAX reference with the same numerics (bf16 dots, f32 accumulation)."""
    w1, b1, g1, be1, w2, b2, g2, be2, w3p, b3p = params
    w3 = w3p[:, :OUT]
    b3 = b3p[:, :OUT]

    def bn(h, g, be):
        mu = jnp.mean(h, axis=0, keepdims=True)
        var = jnp.mean((h - mu) ** 2, axis=0, keepdims=True)
        return (h - mu) * jax.lax.rsqrt(var + EPS) * g + be

    h = jnp.dot(x.astype(jnp.bfloat16), w1, preferred_element_type=jnp.float32) + b1
    h = jnp.maximum(bn(h, g1, be1), 0.0)
    h = jnp.dot(h.astype(jnp.bfloat16), w2, preferred_element_type=jnp.float32) + b2
    h = jnp.maximum(bn(h, g2, be2), 0.0)
    logits = jnp.dot(h.astype(jnp.bfloat16), w3, preferred_element_type=jnp.float32) + b3
    return jax.nn.log_softmax(logits, axis=1)


if __name__ == "__main__":
    key = jax.random.PRNGKey(0)
    k_x, k_p = jax.random.split(key)

    B = 8
    x = jax.random.normal(k_x, (B, IN_DIM), jnp.float32)
    params = init_params(k_p)

    out = svhn_domain_classifier_forward(x, params, constant=0.5)
    out = jax.block_until_ready(out)

    assert out.shape == (B, OUT)
    # log-softmax rows must (log-)sum to ~0
    assert jnp.allclose(jnp.sum(jnp.exp(out), axis=1), 1.0, atol=1e-4)
    # Compare against a pure-JAX reference (same bf16/f32 mixed precision);
    # bias-before-BN removal, lane padding and two-pass variance are exact up
    # to fp rounding.
    ref = _reference_forward(x, params)
    assert jnp.allclose(out, ref, atol=2e-2), float(jnp.max(jnp.abs(out - ref)))
    print("KERNEL_OK")
</pallas_src>

<mosaic_0001>
module attributes {stable_mosaic.version = 11 : i64} {
  func.func @_dann_domain_kernel(%arg0: memref<8x1152xbf16, #tpu.memory_space<vmem>>, %arg1: memref<1152x1024xbf16, #tpu.memory_space<vmem>>, %arg2: memref<1x1024xf32, #tpu.memory_space<vmem>>, %arg3: memref<1x1024xf32, #tpu.memory_space<vmem>>, %arg4: memref<1024x1024xbf16, #tpu.memory_space<vmem>>, %arg5: memref<1x1024xf32, #tpu.memory_space<vmem>>, %arg6: memref<1x1024xf32, #tpu.memory_space<vmem>>, %arg7: memref<1024x128xbf16, #tpu.memory_space<vmem>>, %arg8: memref<1x128xf32, #tpu.memory_space<vmem>>, %arg9: memref<8x128xf32, #tpu.memory_space<vmem>>) attributes {dimension_semantics = [], scalar_prefetch = 0 : i64, scratch_operands = 0 : i64, tpu.core_type = #tpu.core_type<tc>} {
    %c0 = arith.constant 0 : index
    %c0_0 = arith.constant 0 : index
    %0 = vector.load %arg0[%c0, %c0_0] : memref<8x1152xbf16, #tpu.memory_space<vmem>>, vector<8x1152xbf16>
    %c0_1 = arith.constant 0 : index
    %c0_2 = arith.constant 0 : index
    %1 = vector.load %arg1[%c0_1, %c0_2] : memref<1152x1024xbf16, #tpu.memory_space<vmem>>, vector<1152x1024xbf16>
    %cst = arith.constant dense<0.000000e+00> : vector<8x1024xf32>
    %2 = tpu.matmul %0, %1, %cst {dimension_numbers = #tpu.dot_dimension_numbers<[1], [0], [0], [1], [0, 0, 1, 1], [], []>} : vector<8x1152xbf16>, vector<1152x1024xbf16>, vector<8x1024xf32> -> vector<8x1024xf32>
    %cst_3 = arith.constant dense<0.000000e+00> : vector<1024xf32>
    %3 = vector.multi_reduction <add>, %2, %cst_3 [0] : vector<8x1024xf32> to vector<1024xf32>
    %4 = vector.shape_cast %3 : vector<1024xf32> to vector<1x1024xf32>
    %cst_4 = arith.constant 1.250000e-01 : f32
    %5 = vector.broadcast %cst_4 : f32 to vector<1x1024xf32>
    %6 = arith.mulf %4, %5 : vector<1x1024xf32>
    %7 = vector.broadcast %6 : vector<1x1024xf32> to vector<8x1024xf32>
    %8 = arith.subf %2, %7 : vector<8x1024xf32>
    %9 = arith.mulf %8, %8 : vector<8x1024xf32>
    %cst_5 = arith.constant dense<0.000000e+00> : vector<1024xf32>
    %10 = vector.multi_reduction <add>, %9, %cst_5 [0] : vector<8x1024xf32> to vector<1024xf32>
    %11 = vector.shape_cast %10 : vector<1024xf32> to vector<1x1024xf32>
    %cst_6 = arith.constant 1.250000e-01 : f32
    %12 = vector.broadcast %cst_6 : f32 to vector<1x1024xf32>
    %13 = arith.mulf %11, %12 : vector<1x1024xf32>
    %c0_7 = arith.constant 0 : index
    %c0_8 = arith.constant 0 : index
    %14 = vector.load %arg2[%c0_7, %c0_8] : memref<1x1024xf32, #tpu.memory_space<vmem>>, vector<1x1024xf32>
    %cst_9 = arith.constant 9.99999974E-6 : f32
    %15 = vector.broadcast %cst_9 : f32 to vector<1x1024xf32>
    %16 = arith.addf %13, %15 : vector<1x1024xf32>
    %17 = math.rsqrt %16 : vector<1x1024xf32>
    %18 = arith.mulf %14, %17 : vector<1x1024xf32>
    %19 = vector.broadcast %18 : vector<1x1024xf32> to vector<8x1024xf32>
    %20 = arith.mulf %8, %19 : vector<8x1024xf32>
    %c0_10 = arith.constant 0 : index
    %c0_11 = arith.constant 0 : index
    %21 = vector.load %arg3[%c0_10, %c0_11] : memref<1x1024xf32, #tpu.memory_space<vmem>>, vector<1x1024xf32>
    %22 = vector.broadcast %21 : vector<1x1024xf32> to vector<8x1024xf32>
    %23 = arith.addf %20, %22 : vector<8x1024xf32>
    %cst_12 = arith.constant 0.000000e+00 : f32
    %24 = vector.broadcast %cst_12 : f32 to vector<8x1024xf32>
    %25 = arith.maximumf %23, %24 : vector<8x1024xf32>
    %26 = arith.truncf %25 : vector<8x1024xf32> to vector<8x1024xbf16>
    %c0_13 = arith.constant 0 : index
    %c0_14 = arith.constant 0 : index
    %27 = vector.load %arg4[%c0_13, %c0_14] : memref<1024x1024xbf16, #tpu.memory_space<vmem>>, vector<1024x1024xbf16>
    %cst_15 = arith.constant dense<0.000000e+00> : vector<8x1024xf32>
    %28 = tpu.matmul %26, %27, %cst_15 {dimension_numbers = #tpu.dot_dimension_numbers<[1], [0], [0], [1], [0, 0, 1, 1], [], []>} : vector<8x1024xbf16>, vector<1024x1024xbf16>, vector<8x1024xf32> -> vector<8x1024xf32>
    %cst_16 = arith.constant dense<0.000000e+00> : vector<1024xf32>
    %29 = vector.multi_reduction <add>, %28, %cst_16 [0] : vector<8x1024xf32> to vector<1024xf32>
    %30 = vector.shape_cast %29 : vector<1024xf32> to vector<1x1024xf32>
    %cst_17 = arith.constant 1.250000e-01 : f32
    %31 = vector.broadcast %cst_17 : f32 to vector<1x1024xf32>
    %32 = arith.mulf %30, %31 : vector<1x1024xf32>
    %33 = vector.broadcast %32 : vector<1x1024xf32> to vector<8x1024xf32>
    %34 = arith.subf %28, %33 : vector<8x1024xf32>
    %35 = arith.mulf %34, %34 : vector<8x1024xf32>
    %cst_18 = arith.constant dense<0.000000e+00> : vector<1024xf32>
    %36 = vector.multi_reduction <add>, %35, %cst_18 [0] : vector<8x1024xf32> to vector<1024xf32>
    %37 = vector.shape_cast %36 : vector<1024xf32> to vector<1x1024xf32>
    %cst_19 = arith.constant 1.250000e-01 : f32
    %38 = vector.broadcast %cst_19 : f32 to vector<1x1024xf32>
    %39 = arith.mulf %37, %38 : vector<1x1024xf32>
    %c0_20 = arith.constant 0 : index
    %c0_21 = arith.constant 0 : index
    %40 = vector.load %arg5[%c0_20, %c0_21] : memref<1x1024xf32, #tpu.memory_space<vmem>>, vector<1x1024xf32>
    %cst_22 = arith.constant 9.99999974E-6 : f32
    %41 = vector.broadcast %cst_22 : f32 to vector<1x1024xf32>
    %42 = arith.addf %39, %41 : vector<1x1024xf32>
    %43 = math.rsqrt %42 : vector<1x1024xf32>
    %44 = arith.mulf %40, %43 : vector<1x1024xf32>
    %45 = vector.broadcast %44 : vector<1x1024xf32> to vector<8x1024xf32>
    %46 = arith.mulf %34, %45 : vector<8x1024xf32>
    %c0_23 = arith.constant 0 : index
    %c0_24 = arith.constant 0 : index
    %47 = vector.load %arg6[%c0_23, %c0_24] : memref<1x1024xf32, #tpu.memory_space<vmem>>, vector<1x1024xf32>
    %48 = vector.broadcast %47 : vector<1x1024xf32> to vector<8x1024xf32>
    %49 = arith.addf %46, %48 : vector<8x1024xf32>
    %cst_25 = arith.constant 0.000000e+00 : f32
    %50 = vector.broadcast %cst_25 : f32 to vector<8x1024xf32>
    %51 = arith.maximumf %49, %50 : vector<8x1024xf32>
    %52 = arith.truncf %51 : vector<8x1024xf32> to vector<8x1024xbf16>
    %c0_26 = arith.constant 0 : index
    %c0_27 = arith.constant 0 : index
    %53 = vector.load %arg7[%c0_26, %c0_27] : memref<1024x128xbf16, #tpu.memory_space<vmem>>, vector<1024x128xbf16>
    %cst_28 = arith.constant dense<0.000000e+00> : vector<8x128xf32>
    %54 = tpu.matmul %52, %53, %cst_28 {dimension_numbers = #tpu.dot_dimension_numbers<[1], [0], [0], [1], [0, 0, 1, 1], [], []>} : vector<8x1024xbf16>, vector<1024x128xbf16>, vector<8x128xf32> -> vector<8x128xf32>
    %c0_29 = arith.constant 0 : index
    %c0_30 = arith.constant 0 : index
    %55 = vector.load %arg8[%c0_29, %c0_30] : memref<1x128xf32, #tpu.memory_space<vmem>>, vector<1x128xf32>
    %56 = vector.broadcast %55 : vector<1x128xf32> to vector<8x128xf32>
    %57 = arith.addf %54, %56 : vector<8x128xf32>
    %58 = tpu.iota {dimensions = array<i32: 1>} : vector<8x128xi32>
    %c2_i32 = arith.constant 2 : i32
    %59 = vector.broadcast %c2_i32 : i32 to vector<8x128xi32>
    %60 = arith.cmpi slt, %58, %59 : vector<8x128xi32>
    %cst_31 = arith.constant -1.000000e+30 : f32
    %61 = vector.broadcast %cst_31 : f32 to vector<8x128xf32>
    %62 = arith.select %60, %57, %61 : vector<8x128xi1>, vector<8x128xf32>
    %cst_32 = arith.constant dense<0xFF800000> : vector<8xf32>
    %63 = vector.multi_reduction <maximumf>, %62, %cst_32 [1] : vector<8x128xf32> to vector<8xf32>
    %64 = vector.shape_cast %63 : vector<8xf32> to vector<8x1xf32>
    %65 = vector.broadcast %64 : vector<8x1xf32> to vector<8x128xf32>
    %66 = arith.subf %62, %65 : vector<8x128xf32>
    %67 = math.exp %66 : vector<8x128xf32>
    %cst_33 = arith.constant dense<0.000000e+00> : vector<8xf32>
    %68 = vector.multi_reduction <add>, %67, %cst_33 [1] : vector<8x128xf32> to vector<8xf32>
    %69 = vector.shape_cast %68 : vector<8xf32> to vector<8x1xf32>
    %70 = math.log %69 : vector<8x1xf32>
    %71 = arith.addf %64, %70 : vector<8x1xf32>
    %72 = vector.broadcast %71 : vector<8x1xf32> to vector<8x128xf32>
    %73 = arith.subf %62, %72 : vector<8x128xf32>
    %c0_34 = arith.constant 0 : index
    %c0_35 = arith.constant 0 : index
    %74 = vector.load %arg9[%c0_34, %c0_35] : memref<8x128xf32, #tpu.memory_space<vmem>>, vector<8x128xf32>
    tpu.vector_store %arg9[%c0_34, %c0_35], %73 {strides = array<i32>} : memref<8x128xf32, #tpu.memory_space<vmem>>, vector<8x128xf32>,
    return
  }
}

</mosaic_0001>

<llo_original>
// kernel: tpu_custom_call.1
$region0: #{tpu_custom_call.1}
  #allocation0 [shape = 'u32[]', space=smem, size = 0x4, offset = 0x4, fixed_abs, tag = 'smem constant byte address 0x4 - core index']
  #allocation1 [shape = 'u32[144,128]{1,0:T(1,128)}', space=vmem, size = 0x12000, scoped, tag = 'internal scratch']
  %s0 = inlined_call_operand.hbm [shape: bf16[8,1152], index: 0, kind: input, shape index: {}]
  %s1 = inlined_call_operand.hbm [shape: bf16[1152,1024], index: 1, kind: input, shape index: {}]
  %s2 = inlined_call_operand.hbm [shape: f32[1,1024], index: 2, kind: input, shape index: {}]
  %s3 = inlined_call_operand.hbm [shape: f32[1,1024], index: 3, kind: input, shape index: {}]
  %s4 = inlined_call_operand.hbm [shape: bf16[1024,1024], index: 4, kind: input, shape index: {}]
  %s5 = inlined_call_operand.hbm [shape: f32[1,1024], index: 5, kind: input, shape index: {}]
  %s6 = inlined_call_operand.hbm [shape: f32[1,1024], index: 6, kind: input, shape index: {}]
  %s7 = inlined_call_operand.hbm [shape: bf16[1024,128], index: 7, kind: input, shape index: {}]
  %s8 = inlined_call_operand.hbm [shape: f32[1,128], index: 8, kind: input, shape index: {}]
  %s9 = inlined_call_operand.hbm [shape: f32[8,128], index: 9, kind: output, shape index: {}]
  %s10 = sld [smem:[#allocation0]]
  $region82: #{tpu_custom_call.1} parent=0
    _
  %s12 = ssub.s32 1, %s10
  %s13 = scalar_select 0, %s12, %s10
  $region1: #{tpu_custom_call.1} parent=0
    #allocation2 [shape = 'u8[18432]{0}', space=vmem, size = 0x4800, scoped, tag = 'input window, operand 0, single buffered']
    #allocation3 [shape = 's32[1]{0}', space=sflag, size = 0x4, scoped, tag = 'scoped memory for tpu_custom_call.1']
    #allocation4 [shape = 's32[1]{0}', space=sflag, size = 0x4, scoped, tag = 'scoped memory for tpu_custom_call.1']
    #allocation5 [shape = 'u8[2359296]{0}', space=vmem, size = 0x240000, scoped, tag = 'input window, operand 1, single buffered']
    #allocation6 [shape = 's32[1]{0}', space=sflag, size = 0x4, scoped, tag = 'scoped memory for tpu_custom_call.1']
    #allocation7 [shape = 'u8[4096]{0}', space=vmem, size = 0x1000, scoped, tag = 'input window, operand 2, single buffered']
    #allocation8 [shape = 'u8[4096]{0}', space=vmem, size = 0x1000, scoped, tag = 'input window, operand 3, single buffered']
    #allocation9 [shape = 's32[1]{0}', space=sflag, size = 0x4, scoped, tag = 'scoped memory for tpu_custom_call.1']
    #allocation10 [shape = 'u8[2097152]{0}', space=vmem, size = 0x200000, scoped, tag = 'input window, operand 4, single buffered']
    #allocation11 [shape = 'u8[4096]{0}', space=vmem, size = 0x1000, scoped, tag = 'input window, operand 5, single buffered']
    #allocation12 [shape = 's32[1]{0}', space=sflag, size = 0x4, scoped, tag = 'scoped memory for tpu_custom_call.1']
    #allocation13 [shape = 'u8[4096]{0}', space=vmem, size = 0x1000, scoped, tag = 'input window, operand 6, single buffered']
    #allocation14 [shape = 'u8[262144]{0}', space=vmem, size = 0x40000, scoped, tag = 'input window, operand 7, single buffered']
    #allocation15 [shape = 's32[1]{0}', space=sflag, size = 0x4, scoped, tag = 'scoped memory for tpu_custom_call.1']
    #allocation16 [shape = 'u8[512]{0}', space=vmem, size = 0x400, scoped, tag = 'input window, operand 8, single buffered']
    #allocation17 [shape = 'u8[4096]{0}', space=vmem, size = 0x1000, scoped, tag = 'output window, operand 0, single buffered']
    %14 = vsyncpa [#allocation3], 0
    %15 = vsyncpa [#allocation6], 0
    %16 = vsyncpa [#allocation9], 0
    %17 = vsyncpa [#allocation12], 0
    %18 = vsyncpa [#allocation15], 0
    %19 = vsyncpa [#allocation4], 0
    // Predicated region
    $region2: #{tpu_custom_call.1} parent=1 // pred_check
      _
    $region3: #{tpu_custom_call.1} parent=1 // pred_check_branch
      %21 = sbr.rel (0) target = $region5
    $region4: #{tpu_custom_call.1} parent=1 // pred_region
      %s23 = ssub.s32 576, 576
      %24 = vsyncadd [#allocation3], %s23
      %s26 = sshll.u32 [#allocation2], 4
      %s27 = int_to_ptr.vmem [resolvable:$true] %s26
      %29 = dma.hbm_to_vmem [thread:$0]  %s0, 576, %s27, [#allocation3]
    $region5: #{tpu_custom_call.1} parent=1 // pred_fallthru
      _
    // Predicated region
    $region6: #{tpu_custom_call.1} parent=1 // pred_check
      _
    $region7: #{tpu_custom_call.1} parent=1 // pred_check_branch
      %31 = sbr.rel (0) target = $region9
    $region8: #{tpu_custom_call.1} parent=1 // pred_region
      %s33 = ssub.s32 73728, 73728
      %34 = vsyncadd [#allocation6], %s33
      %s35 = sshll.u32 [#allocation5], 4
      %s36 = int_to_ptr.vmem [resolvable:$true] %s35
      %41 = dma.hbm_to_vmem [thread:$0]  %s1, 73728, %s36, [#allocation6], 512, 512, 32
    $region9: #{tpu_custom_call.1} parent=1 // pred_fallthru
      _
    // Predicated region
    $region10: #{tpu_custom_call.1} parent=1 // pred_check
      _
    $region11: #{tpu_custom_call.1} parent=1 // pred_check_branch
      %43 = sbr.rel (0) target = $region13
    $region12: #{tpu_custom_call.1} parent=1 // pred_region
      %s45 = ssub.s32 128, 128
      %46 = vsyncadd [#allocation6], %s45
      %s48 = sshll.u32 [#allocation7], 4
      %s49 = int_to_ptr.vmem [resolvable:$true] %s48
      %51 = dma.hbm_to_vmem [thread:$0]  %s2, 128, %s49, [#allocation6]
    $region13: #{tpu_custom_call.1} parent=1 // pred_fallthru
      _
    // Predicated region
    $region14: #{tpu_custom_call.1} parent=1 // pred_check
      _
    $region15: #{tpu_custom_call.1} parent=1 // pred_check_branch
      %53 = sbr.rel (0) target = $region17
    $region16: #{tpu_custom_call.1} parent=1 // pred_region
      %s55 = ssub.s32 128, 128
      %56 = vsyncadd [#allocation9], %s55
      %s58 = sshll.u32 [#allocation8], 4
      %s59 = int_to_ptr.vmem [resolvable:$true] %s58
      %61 = dma.hbm_to_vmem [thread:$0]  %s3, 128, %s59, [#allocation9]
    $region17: #{tpu_custom_call.1} parent=1 // pred_fallthru
      _
    // Predicated region
    $region18: #{tpu_custom_call.1} parent=1 // pred_check
      _
    $region19: #{tpu_custom_call.1} parent=1 // pred_check_branch
      %63 = sbr.rel (0) target = $region21
    $region20: #{tpu_custom_call.1} parent=1 // pred_region
      %s65 = ssub.s32 65536, 65536
      %66 = vsyncadd [#allocation9], %s65
      %s67 = sshll.u32 [#allocation10], 4
      %s68 = int_to_ptr.vmem [resolvable:$true] %s67
      %73 = dma.hbm_to_vmem [thread:$0]  %s4, 65536, %s68, [#allocation9], 512, 512, 32
    $region21: #{tpu_custom_call.1} parent=1 // pred_fallthru
      _
    // Predicated region
    $region22: #{tpu_custom_call.1} parent=1 // pred_check
      _
    $region23: #{tpu_custom_call.1} parent=1 // pred_check_branch
      %75 = sbr.rel (0) target = $region25
    $region24: #{tpu_custom_call.1} parent=1 // pred_region
      %s77 = ssub.s32 128, 128
      %78 = vsyncadd [#allocation12], %s77
      %s80 = sshll.u32 [#allocation11], 4
      %s81 = int_to_ptr.vmem [resolvable:$true] %s80
      %83 = dma.hbm_to_vmem [thread:$0]  %s5, 128, %s81, [#allocation12]
    $region25: #{tpu_custom_call.1} parent=1 // pred_fallthru
      _
    // Predicated region
    $region26: #{tpu_custom_call.1} parent=1 // pred_check
      _
    $region27: #{tpu_custom_call.1} parent=1 // pred_check_branch
      %85 = sbr.rel (0) target = $region29
    $region28: #{tpu_custom_call.1} parent=1 // pred_region
      %s87 = ssub.s32 128, 128
      %88 = vsyncadd [#allocation12], %s87
      %s90 = sshll.u32 [#allocation13], 4
      %s91 = int_to_ptr.vmem [resolvable:$true] %s90
      %93 = dma.hbm_to_vmem [thread:$0]  %s6, 128, %s91, [#allocation12]
    $region29: #{tpu_custom_call.1} parent=1 // pred_fallthru
      _
    // Predicated region
    $region30: #{tpu_custom_call.1} parent=1 // pred_check
      _
    $region31: #{tpu_custom_call.1} parent=1 // pred_check_branch
      %95 = sbr.rel (0) target = $region33
    $region32: #{tpu_custom_call.1} parent=1 // pred_region
      %s97 = ssub.s32 8192, 8192
      %98 = vsyncadd [#allocation15], %s97
      %s99 = sshll.u32 [#allocation14], 4
      %s100 = int_to_ptr.vmem [resolvable:$true] %s99
      %105 = dma.hbm_to_vmem [thread:$0]  %s7, 8192, %s100, [#allocation15], 64, 64, 4
    $region33: #{tpu_custom_call.1} parent=1 // pred_fallthru
      _
    // Predicated region
    $region34: #{tpu_custom_call.1} parent=1 // pred_check
      _
    $region35: #{tpu_custom_call.1} parent=1 // pred_check_branch
      %107 = sbr.rel (0) target = $region37
    $region36: #{tpu_custom_call.1} parent=1 // pred_region
      %s109 = ssub.s32 16, 16
      %110 = vsyncadd [#allocation15], %s109
      %s112 = sshll.u32 [#allocation16], 4
      %s113 = int_to_ptr.vmem [resolvable:$true] %s112
      %115 = dma.hbm_to_vmem [thread:$0]  %s8, 16, %s113, [#allocation15]
    $region37: #{tpu_custom_call.1} parent=1 // pred_fallthru
      _
    // Predicated region
    $region38: #{tpu_custom_call.1} parent=1 // pred_check
      _
    $region39: #{tpu_custom_call.1} parent=1 // pred_check_branch
      %117 = sbr.rel (0) target = $region41
    $region40: #{tpu_custom_call.1} parent=1 // pred_region
      %118 = dma.done [#allocation3], 576
    $region41: #{tpu_custom_call.1} parent=1 // pred_fallthru
      _
    // Predicated region
    $region42: #{tpu_custom_call.1} parent=1 // pred_check
      _
    $region43: #{tpu_custom_call.1} parent=1 // pred_check_branch
      %120 = sbr.rel (0) target = $region45
    $region44: #{tpu_custom_call.1} parent=1 // pred_region
      %121 = dma.done [#allocation6], 73728
    $region45: #{tpu_custom_call.1} parent=1 // pred_fallthru
      _
    // Predicated region
    $region46: #{tpu_custom_call.1} parent=1 // pred_check
      _
    $region47: #{tpu_custom_call.1} parent=1 // pred_check_branch
      %123 = sbr.rel (0) target = $region49
    $region48: #{tpu_custom_call.1} parent=1 // pred_region
      %124 = dma.done [#allocation6], 128
    $region49: #{tpu_custom_call.1} parent=1 // pred_fallthru
      _
    // Predicated region
    $region50: #{tpu_custom_call.1} parent=1 // pred_check
      _
    $region51: #{tpu_custom_call.1} parent=1 // pred_check_branch
      %126 = sbr.rel (0) target = $region53
    $region52: #{tpu_custom_call.1} parent=1 // pred_region
      %127 = dma.done [#allocation9], 128
    $region53: #{tpu_custom_call.1} parent=1 // pred_fallthru
      _
    // Predicated region
    $region54: #{tpu_custom_call.1} parent=1 // pred_check
      _
    $region55: #{tpu_custom_call.1} parent=1 // pred_check_branch
      %129 = sbr.rel (0) target = $region57
    $region56: #{tpu_custom_call.1} parent=1 // pred_region
      %130 = dma.done [#allocation9], 65536
    $region57: #{tpu_custom_call.1} parent=1 // pred_fallthru
      _
    // Predicated region
    $region58: #{tpu_custom_call.1} parent=1 // pred_check
      _
    $region59: #{tpu_custom_call.1} parent=1 // pred_check_branch
      %132 = sbr.rel (0) target = $region61
    $region60: #{tpu_custom_call.1} parent=1 // pred_region
      %133 = dma.done [#allocation12], 128
    $region61: #{tpu_custom_call.1} parent=1 // pred_fallthru
      _
    // Predicated region
    $region62: #{tpu_custom_call.1} parent=1 // pred_check
      _
    $region63: #{tpu_custom_call.1} parent=1 // pred_check_branch
      %135 = sbr.rel (0) target = $region65
    $region64: #{tpu_custom_call.1} parent=1 // pred_region
      %136 = dma.done [#allocation12], 128
    $region65: #{tpu_custom_call.1} parent=1 // pred_fallthru
      _
    // Predicated region
    $region66: #{tpu_custom_call.1} parent=1 // pred_check
      _
    $region67: #{tpu_custom_call.1} parent=1 // pred_check_branch
      %138 = sbr.rel (0) target = $region69
    $region68: #{tpu_custom_call.1} parent=1 // pred_region
      %139 = dma.done [#allocation15], 8192
    $region69: #{tpu_custom_call.1} parent=1 // pred_fallthru
      _
    // Predicated region
    $region70: #{tpu_custom_call.1} parent=1 // pred_check
      _
    $region71: #{tpu_custom_call.1} parent=1 // pred_check_branch
      %141 = sbr.rel (0) target = $region73
    $region72: #{tpu_custom_call.1} parent=1 // pred_region
      %142 = dma.done [#allocation15], 16
    $region73: #{tpu_custom_call.1} parent=1 // pred_fallthru
      _
    %v144 = vld [vmem:[#allocation2] sm:$0xff]
    %v145 = vld [vmem:[#allocation2 + $0x8] sm:$0xff]
    %v146 = vld [vmem:[#allocation2 + $0x10] sm:$0xff]
    %v147 = vld [vmem:[#allocation2 + $0x18] sm:$0xff]
    %v148 = vld [vmem:[#allocation2 + $0x20] sm:$0xf]
    %v149 = vld [vmem:[#allocation5] sm:$0xff]
    %v150 = vld [vmem:[#allocation5 + $0x8] sm:$0xff]
    %v151 = vld [vmem:[#allocation5 + $0x10] sm:$0xff]
    %v152 = vld [vmem:[#allocation5 + $0x18] sm:$0xff]
    %v153 = vld [vmem:[#allocation5 + $0x20] sm:$0xff]
    %v154 = vld [vmem:[#allocation5 + $0x28] sm:$0xff]
    %v155 = vld [vmem:[#allocation5 + $0x30] sm:$0xff]
    %v156 = vld [vmem:[#allocation5 + $0x38] sm:$0xff]
    %v157 = vld [vmem:[#allocation5 + $0x40] sm:$0xff]
    %v158 = vld [vmem:[#allocation5 + $0x48] sm:$0xff]
    %v159 = vld [vmem:[#allocation5 + $0x50] sm:$0xff]
    %v160 = vld [vmem:[#allocation5 + $0x58] sm:$0xff]
    %v161 = vld [vmem:[#allocation5 + $0x60] sm:$0xff]
    %v162 = vld [vmem:[#allocation5 + $0x68] sm:$0xff]
    %v163 = vld [vmem:[#allocation5 + $0x70] sm:$0xff]
    %v164 = vld [vmem:[#allocation5 + $0x78] sm:$0xff]
    %v165 = vld [vmem:[#allocation5 + $0x80] sm:$0xff]
    %v166 = vld [vmem:[#allocation5 + $0x88] sm:$0xff]
    %v167 = vld [vmem:[#allocation5 + $0x90] sm:$0xff]
    %v168 = vld [vmem:[#allocation5 + $0x98] sm:$0xff]
    %v169 = vld [vmem:[#allocation5 + $0xa0] sm:$0xff]
    %v170 = vld [vmem:[#allocation5 + $0xa8] sm:$0xff]
    %v171 = vld [vmem:[#allocation5 + $0xb0] sm:$0xff]
    %v172 = vld [vmem:[#allocation5 + $0xb8] sm:$0xff]
    %v173 = vld [vmem:[#allocation5 + $0xc0] sm:$0xff]
    %v174 = vld [vmem:[#allocation5 + $0xc8] sm:$0xff]
    %v175 = vld [vmem:[#allocation5 + $0xd0] sm:$0xff]
    %v176 = vld [vmem:[#allocation5 + $0xd8] sm:$0xff]
    %v177 = vld [vmem:[#allocation5 + $0xe0] sm:$0xff]
    %v178 = vld [vmem:[#allocation5 + $0xe8] sm:$0xff]
    %v179 = vld [vmem:[#allocation5 + $0xf0] sm:$0xff]
    %v180 = vld [vmem:[#allocation5 + $0xf8] sm:$0xff]
    %v181 = vld [vmem:[#allocation5 + $0x100] sm:$0xff]
    %v182 = vld [vmem:[#allocation5 + $0x108] sm:$0xff]
    %v183 = vld [vmem:[#allocation5 + $0x110] sm:$0xff]
    %v184 = vld [vmem:[#allocation5 + $0x118] sm:$0xff]
    %v185 = vld [vmem:[#allocation5 + $0x120] sm:$0xff]
    %v186 = vld [vmem:[#allocation5 + $0x128] sm:$0xff]
    %v187 = vld [vmem:[#allocation5 + $0x130] sm:$0xff]
    %v188 = vld [vmem:[#allocation5 + $0x138] sm:$0xff]
    %v189 = vld [vmem:[#allocation5 + $0x140] sm:$0xff]
    %v190 = vld [vmem:[#allocation5 + $0x148] sm:$0xff]
    %v191 = vld [vmem:[#allocation5 + $0x150] sm:$0xff]
    %v192 = vld [vmem:[#allocation5 + $0x158] sm:$0xff]
    %v193 = vld [vmem:[#allocation5 + $0x160] sm:$0xff]
    %v194 = vld [vmem:[#allocation5 + $0x168] sm:$0xff]
    %v195 = vld [vmem:[#allocation5 + $0x170] sm:$0xff]
    %v196 = vld [vmem:[#allocation5 + $0x178] sm:$0xff]
    %v197 = vld [vmem:[#allocation5 + $0x180] sm:$0xff]
    %v198 = vld [vmem:[#allocation5 + $0x188] sm:$0xff]
    %v199 = vld [vmem:[#allocation5 + $0x190] sm:$0xff]
    %v200 = vld [vmem:[#allocation5 + $0x198] sm:$0xff]
    %v201 = vld [vmem:[#allocation5 + $0x1a0] sm:$0xff]
    %v202 = vld [vmem:[#allocation5 + $0x1a8] sm:$0xff]
    %v203 = vld [vmem:[#allocation5 + $0x1b0] sm:$0xff]
    %v204 = vld [vmem:[#allocation5 + $0x1b8] sm:$0xff]
    %v205 = vld [vmem:[#allocation5 + $0x1c0] sm:$0xff]
    %v206 = vld [vmem:[#allocation5 + $0x1c8] sm:$0xff]
    %v207 = vld [vmem:[#allocation5 + $0x1d0] sm:$0xff]
    %v208 = vld [vmem:[#allocation5 + $0x1d8] sm:$0xff]
    %v209 = vld [vmem:[#allocation5 + $0x1e0] sm:$0xff]
    %v210 = vld [vmem:[#allocation5 + $0x1e8] sm:$0xff]
    %v211 = vld [vmem:[#allocation5 + $0x1f0] sm:$0xff]
    %v212 = vld [vmem:[#allocation5 + $0x1f8] sm:$0xff]
    %v213 = vld [vmem:[#allocation5 + $0x200] sm:$0xff]
    %v214 = vld [vmem:[#allocation5 + $0x208] sm:$0xff]
    %v215 = vld [vmem:[#allocation5 + $0x210] sm:$0xff]
    %v216 = vld [vmem:[#allocation5 + $0x218] sm:$0xff]
    %v217 = vld [vmem:[#allocation5 + $0x220] sm:$0xff]
    %v218 = vld [vmem:[#allocation5 + $0x228] sm:$0xff]
    %v219 = vld [vmem:[#allocation5 + $0x230] sm:$0xff]
    %v220 = vld [vmem:[#allocation5 + $0x238] sm:$0xff]
    %v221 = vld [vmem:[#allocation5 + $0x240] sm:$0xff]
    %v222 = vld [vmem:[#allocation5 + $0x248] sm:$0xff]
    %v223 = vld [vmem:[#allocation5 + $0x250] sm:$0xff]
    %v224 = vld [vmem:[#allocation5 + $0x258] sm:$0xff]
    %v225 = vld [vmem:[#allocation5 + $0x260] sm:$0xff]
    %v226 = vld [vmem:[#allocation5 + $0x268] sm:$0xff]
    %v227 = vld [vmem:[#allocation5 + $0x270] sm:$0xff]
    %v228 = vld [vmem:[#allocation5 + $0x278] sm:$0xff]
    %v229 = vld [vmem:[#allocation5 + $0x280] sm:$0xff]
    %v230 = vld [vmem:[#allocation5 + $0x288] sm:$0xff]
    %v231 = vld [vmem:[#allocation5 + $0x290] sm:$0xff]
    %v232 = vld [vmem:[#allocation5 + $0x298] sm:$0xff]
    %v233 = vld [vmem:[#allocation5 + $0x2a0] sm:$0xff]
    %v234 = vld [vmem:[#allocation5 + $0x2a8] sm:$0xff]
    %v235 = vld [vmem:[#allocation5 + $0x2b0] sm:$0xff]
    %v236 = vld [vmem:[#allocation5 + $0x2b8] sm:$0xff]
    %v237 = vld [vmem:[#allocation5 + $0x2c0] sm:$0xff]
    %v238 = vld [vmem:[#allocation5 + $0x2c8] sm:$0xff]
    %v239 = vld [vmem:[#allocation5 + $0x2d0] sm:$0xff]
    %v240 = vld [vmem:[#allocation5 + $0x2d8] sm:$0xff]
    %v241 = vld [vmem:[#allocation5 + $0x2e0] sm:$0xff]
    %v242 = vld [vmem:[#allocation5 + $0x2e8] sm:$0xff]
    %v243 = vld [vmem:[#allocation5 + $0x2f0] sm:$0xff]
    %v244 = vld [vmem:[#allocation5 + $0x2f8] sm:$0xff]
    %v245 = vld [vmem:[#allocation5 + $0x300] sm:$0xff]
    %v246 = vld [vmem:[#allocation5 + $0x308] sm:$0xff]
    %v247 = vld [vmem:[#allocation5 + $0x310] sm:$0xff]
    %v248 = vld [vmem:[#allocation5 + $0x318] sm:$0xff]
    %v249 = vld [vmem:[#allocation5 + $0x320] sm:$0xff]
    %v250 = vld [vmem:[#allocation5 + $0x328] sm:$0xff]
    %v251 = vld [vmem:[#allocation5 + $0x330] sm:$0xff]
    %v252 = vld [vmem:[#allocation5 + $0x338] sm:$0xff]
    %v253 = vld [vmem:[#allocation5 + $0x340] sm:$0xff]
    %v254 = vld [vmem:[#allocation5 + $0x348] sm:$0xff]
    %v255 = vld [vmem:[#allocation5 + $0x350] sm:$0xff]
    %v256 = vld [vmem:[#allocation5 + $0x358] sm:$0xff]
    %v257 = vld [vmem:[#allocation5 + $0x360] sm:$0xff]
    %v258 = vld [vmem:[#allocation5 + $0x368] sm:$0xff]
    %v259 = vld [vmem:[#allocation5 + $0x370] sm:$0xff]
    %v260 = vld [vmem:[#allocation5 + $0x378] sm:$0xff]
    %v261 = vld [vmem:[#allocation5 + $0x380] sm:$0xff]
    %v262 = vld [vmem:[#allocation5 + $0x388] sm:$0xff]
    %v263 = vld [vmem:[#allocation5 + $0x390] sm:$0xff]
    %v264 = vld [vmem:[#allocation5 + $0x398] sm:$0xff]
    %v265 = vld [vmem:[#allocation5 + $0x3a0] sm:$0xff]
    %v266 = vld [vmem:[#allocation5 + $0x3a8] sm:$0xff]
    %v267 = vld [vmem:[#allocation5 + $0x3b0] sm:$0xff]
    %v268 = vld [vmem:[#allocation5 + $0x3b8] sm:$0xff]
    %v269 = vld [vmem:[#allocation5 + $0x3c0] sm:$0xff]
    %v270 = vld [vmem:[#allocation5 + $0x3c8] sm:$0xff]
    %v271 = vld [vmem:[#allocation5 + $0x3d0] sm:$0xff]
    %v272 = vld [vmem:[#allocation5 + $0x3d8] sm:$0xff]
    %v273 = vld [vmem:[#allocation5 + $0x3e0] sm:$0xff]
    %v274 = vld [vmem:[#allocation5 + $0x3e8] sm:$0xff]
    %v275 = vld [vmem:[#allocation5 + $0x3f0] sm:$0xff]
    %v276 = vld [vmem:[#allocation5 + $0x3f8] sm:$0xff]
    %v277 = vld [vmem:[#allocation5 + $0x400] sm:$0xff]
    %v278 = vld [vmem:[#allocation5 + $0x408] sm:$0xff]
    %v279 = vld [vmem:[#allocation5 + $0x410] sm:$0xff]
    %v280 = vld [vmem:[#allocation5 + $0x418] sm:$0xff]
    %v281 = vld [vmem:[#allocation5 + $0x420] sm:$0xff]
    %v282 = vld [vmem:[#allocation5 + $0x428] sm:$0xff]
    %v283 = vld [vmem:[#allocation5 + $0x430] sm:$0xff]
    %v284 = vld [vmem:[#allocation5 + $0x438] sm:$0xff]
    %v285 = vld [vmem:[#allocation5 + $0x440] sm:$0xff]
    %v286 = vld [vmem:[#allocation5 + $0x448] sm:$0xff]
    %v287 = vld [vmem:[#allocation5 + $0x450] sm:$0xff]
    %v288 = vld [vmem:[#allocation5 + $0x458] sm:$0xff]
    %v289 = vld [vmem:[#allocation5 + $0x460] sm:$0xff]
    %v290 = vld [vmem:[#allocation5 + $0x468] sm:$0xff]
    %v291 = vld [vmem:[#allocation5 + $0x470] sm:$0xff]
    %v292 = vld [vmem:[#allocation5 + $0x478] sm:$0xff]
    %v293 = vld [vmem:[#allocation5 + $0x480] sm:$0xff]
    %v294 = vld [vmem:[#allocation5 + $0x488] sm:$0xff]
    %v295 = vld [vmem:[#allocation5 + $0x490] sm:$0xff]
    %v296 = vld [vmem:[#allocation5 + $0x498] sm:$0xff]
    %v297 = vld [vmem:[#allocation5 + $0x4a0] sm:$0xff]
    %v298 = vld [vmem:[#allocation5 + $0x4a8] sm:$0xff]
    %v299 = vld [vmem:[#allocation5 + $0x4b0] sm:$0xff]
    %v300 = vld [vmem:[#allocation5 + $0x4b8] sm:$0xff]
    %v301 = vld [vmem:[#allocation5 + $0x4c0] sm:$0xff]
    %v302 = vld [vmem:[#allocation5 + $0x4c8] sm:$0xff]
    %v303 = vld [vmem:[#allocation5 + $0x4d0] sm:$0xff]
    %v304 = vld [vmem:[#allocation5 + $0x4d8] sm:$0xff]
    %v305 = vld [vmem:[#allocation5 + $0x4e0] sm:$0xff]
    %v306 = vld [vmem:[#allocation5 + $0x4e8] sm:$0xff]
    %v307 = vld [vmem:[#allocation5 + $0x4f0] sm:$0xff]
    %v308 = vld [vmem:[#allocation5 + $0x4f8] sm:$0xff]
    %v309 = vld [vmem:[#allocation5 + $0x500] sm:$0xff]
    %v310 = vld [vmem:[#allocation5 + $0x508] sm:$0xff]
    %v311 = vld [vmem:[#allocation5 + $0x510] sm:$0xff]
    %v312 = vld [vmem:[#allocation5 + $0x518] sm:$0xff]
    %v313 = vld [vmem:[#allocation5 + $0x520] sm:$0xff]
    %v314 = vld [vmem:[#allocation5 + $0x528] sm:$0xff]
    %v315 = vld [vmem:[#allocation5 + $0x530] sm:$0xff]
    %v316 = vld [vmem:[#allocation5 + $0x538] sm:$0xff]
    %v317 = vld [vmem:[#allocation5 + $0x540] sm:$0xff]
    %v318 = vld [vmem:[#allocation5 + $0x548] sm:$0xff]
    %v319 = vld [vmem:[#allocation5 + $0x550] sm:$0xff]
    %v320 = vld [vmem:[#allocation5 + $0x558] sm:$0xff]
    %v321 = vld [vmem:[#allocation5 + $0x560] sm:$0xff]
    %v322 = vld [vmem:[#allocation5 + $0x568] sm:$0xff]
    %v323 = vld [vmem:[#allocation5 + $0x570] sm:$0xff]
    %v324 = vld [vmem:[#allocation5 + $0x578] sm:$0xff]
    %v325 = vld [vmem:[#allocation5 + $0x580] sm:$0xff]
    %v326 = vld [vmem:[#allocation5 + $0x588] sm:$0xff]
    %v327 = vld [vmem:[#allocation5 + $0x590] sm:$0xff]
    %v328 = vld [vmem:[#allocation5 + $0x598] sm:$0xff]
    %v329 = vld [vmem:[#allocation5 + $0x5a0] sm:$0xff]
    %v330 = vld [vmem:[#allocation5 + $0x5a8] sm:$0xff]
    %v331 = vld [vmem:[#allocation5 + $0x5b0] sm:$0xff]
    %v332 = vld [vmem:[#allocation5 + $0x5b8] sm:$0xff]
    %v333 = vld [vmem:[#allocation5 + $0x5c0] sm:$0xff]
    %v334 = vld [vmem:[#allocation5 + $0x5c8] sm:$0xff]
    %v335 = vld [vmem:[#allocation5 + $0x5d0] sm:$0xff]
    %v336 = vld [vmem:[#allocation5 + $0x5d8] sm:$0xff]
    %v337 = vld [vmem:[#allocation5 + $0x5e0] sm:$0xff]
    %v338 = vld [vmem:[#allocation5 + $0x5e8] sm:$0xff]
    %v339 = vld [vmem:[#allocation5 + $0x5f0] sm:$0xff]
    %v340 = vld [vmem:[#allocation5 + $0x5f8] sm:$0xff]
    %v341 = vld [vmem:[#allocation5 + $0x600] sm:$0xff]
    %v342 = vld [vmem:[#allocation5 + $0x608] sm:$0xff]
    %v343 = vld [vmem:[#allocation5 + $0x610] sm:$0xff]
    %v344 = vld [vmem:[#allocation5 + $0x618] sm:$0xff]
    %v345 = vld [vmem:[#allocation5 + $0x620] sm:$0xff]
    %v346 = vld [vmem:[#allocation5 + $0x628] sm:$0xff]
    %v347 = vld [vmem:[#allocation5 + $0x630] sm:$0xff]
    %v348 = vld [vmem:[#allocation5 + $0x638] sm:$0xff]
    %v349 = vld [vmem:[#allocation5 + $0x640] sm:$0xff]
    %v350 = vld [vmem:[#allocation5 + $0x648] sm:$0xff]
    %v351 = vld [vmem:[#allocation5 + $0x650] sm:$0xff]
    %v352 = vld [vmem:[#allocation5 + $0x658] sm:$0xff]
    %v353 = vld [vmem:[#allocation5 + $0x660] sm:$0xff]
    %v354 = vld [vmem:[#allocation5 + $0x668] sm:$0xff]
    %v355 = vld [vmem:[#allocation5 + $0x670] sm:$0xff]
    %v356 = vld [vmem:[#allocation5 + $0x678] sm:$0xff]
    %v357 = vld [vmem:[#allocation5 + $0x680] sm:$0xff]
    %v358 = vld [vmem:[#allocation5 + $0x688] sm:$0xff]
    %v359 = vld [vmem:[#allocation5 + $0x690] sm:$0xff]
    %v360 = vld [vmem:[#allocation5 + $0x698] sm:$0xff]
    %v361 = vld [vmem:[#allocation5 + $0x6a0] sm:$0xff]
    %v362 = vld [vmem:[#allocation5 + $0x6a8] sm:$0xff]
    %v363 = vld [vmem:[#allocation5 + $0x6b0] sm:$0xff]
    %v364 = vld [vmem:[#allocation5 + $0x6b8] sm:$0xff]
    %v365 = vld [vmem:[#allocation5 + $0x6c0] sm:$0xff]
    %v366 = vld [vmem:[#allocation5 + $0x6c8] sm:$0xff]
    %v367 = vld [vmem:[#allocation5 + $0x6d0] sm:$0xff]
    %v368 = vld [vmem:[#allocation5 + $0x6d8] sm:$0xff]
    %v369 = vld [vmem:[#allocation5 + $0x6e0] sm:$0xff]
    %v370 = vld [vmem:[#allocation5 + $0x6e8] sm:$0xff]
    %v371 = vld [vmem:[#allocation5 + $0x6f0] sm:$0xff]
    %v372 = vld [vmem:[#allocation5 + $0x6f8] sm:$0xff]
    %v373 = vld [vmem:[#allocation5 + $0x700] sm:$0xff]
    %v374 = vld [vmem:[#allocation5 + $0x708] sm:$0xff]
    %v375 = vld [vmem:[#allocation5 + $0x710] sm:$0xff]
    %v376 = vld [vmem:[#allocation5 + $0x718] sm:$0xff]
    %v377 = vld [vmem:[#allocation5 + $0x720] sm:$0xff]
    %v378 = vld [vmem:[#allocation5 + $0x728] sm:$0xff]
    %v379 = vld [vmem:[#allocation5 + $0x730] sm:$0xff]
    %v380 = vld [vmem:[#allocation5 + $0x738] sm:$0xff]
    %v381 = vld [vmem:[#allocation5 + $0x740] sm:$0xff]
    %v382 = vld [vmem:[#allocation5 + $0x748] sm:$0xff]
    %v383 = vld [vmem:[#allocation5 + $0x750] sm:$0xff]
    %v384 = vld [vmem:[#allocation5 + $0x758] sm:$0xff]
    %v385 = vld [vmem:[#allocation5 + $0x760] sm:$0xff]
    %v386 = vld [vmem:[#allocation5 + $0x768] sm:$0xff]
    %v387 = vld [vmem:[#allocation5 + $0x770] sm:$0xff]
    %v388 = vld [vmem:[#allocation5 + $0x778] sm:$0xff]
    %v389 = vld [vmem:[#allocation5 + $0x780] sm:$0xff]
    %v390 = vld [vmem:[#allocation5 + $0x788] sm:$0xff]
    %v391 = vld [vmem:[#allocation5 + $0x790] sm:$0xff]
    %v392 = vld [vmem:[#allocation5 + $0x798] sm:$0xff]
    %v393 = vld [vmem:[#allocation5 + $0x7a0] sm:$0xff]
    %v394 = vld [vmem:[#allocation5 + $0x7a8] sm:$0xff]
    %v395 = vld [vmem:[#allocation5 + $0x7b0] sm:$0xff]
    %v396 = vld [vmem:[#allocation5 + $0x7b8] sm:$0xff]
    %v397 = vld [vmem:[#allocation5 + $0x7c0] sm:$0xff]
    %v398 = vld [vmem:[#allocation5 + $0x7c8] sm:$0xff]
    %v399 = vld [vmem:[#allocation5 + $0x7d0] sm:$0xff]
    %v400 = vld [vmem:[#allocation5 + $0x7d8] sm:$0xff]
    %v401 = vld [vmem:[#allocation5 + $0x7e0] sm:$0xff]
    %v402 = vld [vmem:[#allocation5 + $0x7e8] sm:$0xff]
    %v403 = vld [vmem:[#allocation5 + $0x7f0] sm:$0xff]
    %v404 = vld [vmem:[#allocation5 + $0x7f8] sm:$0xff]
    %v405 = vld [vmem:[#allocation5 + $0x800] sm:$0xff]
    %v406 = vld [vmem:[#allocation5 + $0x808] sm:$0xff]
    %v407 = vld [vmem:[#allocation5 + $0x810] sm:$0xff]
    %v408 = vld [vmem:[#allocation5 + $0x818] sm:$0xff]
    %v409 = vld [vmem:[#allocation5 + $0x820] sm:$0xff]
    %v410 = vld [vmem:[#allocation5 + $0x828] sm:$0xff]
    %v411 = vld [vmem:[#allocation5 + $0x830] sm:$0xff]
    %v412 = vld [vmem:[#allocation5 + $0x838] sm:$0xff]
    %v413 = vld [vmem:[#allocation5 + $0x840] sm:$0xff]
    %v414 = vld [vmem:[#allocation5 + $0x848] sm:$0xff]
    %v415 = vld [vmem:[#allocation5 + $0x850] sm:$0xff]
    %v416 = vld [vmem:[#allocation5 + $0x858] sm:$0xff]
    %v417 = vld [vmem:[#allocation5 + $0x860] sm:$0xff]
    %v418 = vld [vmem:[#allocation5 + $0x868] sm:$0xff]
    %v419 = vld [vmem:[#allocation5 + $0x870] sm:$0xff]
    %v420 = vld [vmem:[#allocation5 + $0x878] sm:$0xff]
    %v421 = vld [vmem:[#allocation5 + $0x880] sm:$0xff]
    %v422 = vld [vmem:[#allocation5 + $0x888] sm:$0xff]
    %v423 = vld [vmem:[#allocation5 + $0x890] sm:$0xff]
    %v424 = vld [vmem:[#allocation5 + $0x898] sm:$0xff]
    %v425 = vld [vmem:[#allocation5 + $0x8a0] sm:$0xff]
    %v426 = vld [vmem:[#allocation5 + $0x8a8] sm:$0xff]
    %v427 = vld [vmem:[#allocation5 + $0x8b0] sm:$0xff]
    %v428 = vld [vmem:[#allocation5 + $0x8b8] sm:$0xff]
    %v429 = vld [vmem:[#allocation5 + $0x8c0] sm:$0xff]
    %v430 = vld [vmem:[#allocation5 + $0x8c8] sm:$0xff]
    %v431 = vld [vmem:[#allocation5 + $0x8d0] sm:$0xff]
    %v432 = vld [vmem:[#allocation5 + $0x8d8] sm:$0xff]
    %v433 = vld [vmem:[#allocation5 + $0x8e0] sm:$0xff]
    %v434 = vld [vmem:[#allocation5 + $0x8e8] sm:$0xff]
    %v435 = vld [vmem:[#allocation5 + $0x8f0] sm:$0xff]
    %v436 = vld [vmem:[#allocation5 + $0x8f8] sm:$0xff]
    %v437 = vld [vmem:[#allocation5 + $0x900] sm:$0xff]
    %v438 = vld [vmem:[#allocation5 + $0x908] sm:$0xff]
    %v439 = vld [vmem:[#allocation5 + $0x910] sm:$0xff]
    %v440 = vld [vmem:[#allocation5 + $0x918] sm:$0xff]
    %v441 = vld [vmem:[#allocation5 + $0x920] sm:$0xff]
    %v442 = vld [vmem:[#allocation5 + $0x928] sm:$0xff]
    %v443 = vld [vmem:[#allocation5 + $0x930] sm:$0xff]
    %v444 = vld [vmem:[#allocation5 + $0x938] sm:$0xff]
    %v445 = vld [vmem:[#allocation5 + $0x940] sm:$0xff]
    %v446 = vld [vmem:[#allocation5 + $0x948] sm:$0xff]
    %v447 = vld [vmem:[#allocation5 + $0x950] sm:$0xff]
    %v448 = vld [vmem:[#allocation5 + $0x958] sm:$0xff]
    %v449 = vld [vmem:[#allocation5 + $0x960] sm:$0xff]
    %v450 = vld [vmem:[#allocation5 + $0x968] sm:$0xff]
    %v451 = vld [vmem:[#allocation5 + $0x970] sm:$0xff]
    %v452 = vld [vmem:[#allocation5 + $0x978] sm:$0xff]
    %v453 = vld [vmem:[#allocation5 + $0x980] sm:$0xff]
    %v454 = vld [vmem:[#allocation5 + $0x988] sm:$0xff]
    %v455 = vld [vmem:[#allocation5 + $0x990] sm:$0xff]
    %v456 = vld [vmem:[#allocation5 + $0x998] sm:$0xff]
    %v457 = vld [vmem:[#allocation5 + $0x9a0] sm:$0xff]
    %v458 = vld [vmem:[#allocation5 + $0x9a8] sm:$0xff]
    %v459 = vld [vmem:[#allocation5 + $0x9b0] sm:$0xff]
    %v460 = vld [vmem:[#allocation5 + $0x9b8] sm:$0xff]
    %v461 = vld [vmem:[#allocation5 + $0x9c0] sm:$0xff]
    %v462 = vld [vmem:[#allocation5 + $0x9c8] sm:$0xff]
    %v463 = vld [vmem:[#allocation5 + $0x9d0] sm:$0xff]
    %v464 = vld [vmem:[#allocation5 + $0x9d8] sm:$0xff]
    %v465 = vld [vmem:[#allocation5 + $0x9e0] sm:$0xff]
    %v466 = vld [vmem:[#allocation5 + $0x9e8] sm:$0xff]
    %v467 = vld [vmem:[#allocation5 + $0x9f0] sm:$0xff]
    %v468 = vld [vmem:[#allocation5 + $0x9f8] sm:$0xff]
    %v469 = vld [vmem:[#allocation5 + $0xa00] sm:$0xff]
    %v470 = vld [vmem:[#allocation5 + $0xa08] sm:$0xff]
    %v471 = vld [vmem:[#allocation5 + $0xa10] sm:$0xff]
    %v472 = vld [vmem:[#allocation5 + $0xa18] sm:$0xff]
    %v473 = vld [vmem:[#allocation5 + $0xa20] sm:$0xff]
    %v474 = vld [vmem:[#allocation5 + $0xa28] sm:$0xff]
    %v475 = vld [vmem:[#allocation5 + $0xa30] sm:$0xff]
    %v476 = vld [vmem:[#allocation5 + $0xa38] sm:$0xff]
    %v477 = vld [vmem:[#allocation5 + $0xa40] sm:$0xff]
    %v478 = vld [vmem:[#allocation5 + $0xa48] sm:$0xff]
    %v479 = vld [vmem:[#allocation5 + $0xa50] sm:$0xff]
    %v480 = vld [vmem:[#allocation5 + $0xa58] sm:$0xff]
    %v481 = vld [vmem:[#allocation5 + $0xa60] sm:$0xff]
    %v482 = vld [vmem:[#allocation5 + $0xa68] sm:$0xff]
    %v483 = vld [vmem:[#allocation5 + $0xa70] sm:$0xff]
    %v484 = vld [vmem:[#allocation5 + $0xa78] sm:$0xff]
    %v485 = vld [vmem:[#allocation5 + $0xa80] sm:$0xff]
    %v486 = vld [vmem:[#allocation5 + $0xa88] sm:$0xff]
    %v487 = vld [vmem:[#allocation5 + $0xa90] sm:$0xff]
    %v488 = vld [vmem:[#allocation5 + $0xa98] sm:$0xff]
    %v489 = vld [vmem:[#allocation5 + $0xaa0] sm:$0xff]
    %v490 = vld [vmem:[#allocation5 + $0xaa8] sm:$0xff]
    %v491 = vld [vmem:[#allocation5 + $0xab0] sm:$0xff]
    %v492 = vld [vmem:[#allocation5 + $0xab8] sm:$0xff]
    %v493 = vld [vmem:[#allocation5 + $0xac0] sm:$0xff]
    %v494 = vld [vmem:[#allocation5 + $0xac8] sm:$0xff]
    %v495 = vld [vmem:[#allocation5 + $0xad0] sm:$0xff]
    %v496 = vld [vmem:[#allocation5 + $0xad8] sm:$0xff]
    %v497 = vld [vmem:[#allocation5 + $0xae0] sm:$0xff]
    %v498 = vld [vmem:[#allocation5 + $0xae8] sm:$0xff]
    %v499 = vld [vmem:[#allocation5 + $0xaf0] sm:$0xff]
    %v500 = vld [vmem:[#allocation5 + $0xaf8] sm:$0xff]
    %v501 = vld [vmem:[#allocation5 + $0xb00] sm:$0xff]
    %v502 = vld [vmem:[#allocation5 + $0xb08] sm:$0xff]
    %v503 = vld [vmem:[#allocation5 + $0xb10] sm:$0xff]
    %v504 = vld [vmem:[#allocation5 + $0xb18] sm:$0xff]
    %v505 = vld [vmem:[#allocation5 + $0xb20] sm:$0xff]
    %v506 = vld [vmem:[#allocation5 + $0xb28] sm:$0xff]
    %v507 = vld [vmem:[#allocation5 + $0xb30] sm:$0xff]
    %v508 = vld [vmem:[#allocation5 + $0xb38] sm:$0xff]
    %v509 = vld [vmem:[#allocation5 + $0xb40] sm:$0xff]
    %v510 = vld [vmem:[#allocation5 + $0xb48] sm:$0xff]
    %v511 = vld [vmem:[#allocation5 + $0xb50] sm:$0xff]
    %v512 = vld [vmem:[#allocation5 + $0xb58] sm:$0xff]
    %v513 = vld [vmem:[#allocation5 + $0xb60] sm:$0xff]
    %v514 = vld [vmem:[#allocation5 + $0xb68] sm:$0xff]
    %v515 = vld [vmem:[#allocation5 + $0xb70] sm:$0xff]
    %v516 = vld [vmem:[#allocation5 + $0xb78] sm:$0xff]
    %v517 = vld [vmem:[#allocation5 + $0xb80] sm:$0xff]
    %v518 = vld [vmem:[#allocation5 + $0xb88] sm:$0xff]
    %v519 = vld [vmem:[#allocation5 + $0xb90] sm:$0xff]
    %v520 = vld [vmem:[#allocation5 + $0xb98] sm:$0xff]
    %v521 = vld [vmem:[#allocation5 + $0xba0] sm:$0xff]
    %v522 = vld [vmem:[#allocation5 + $0xba8] sm:$0xff]
    %v523 = vld [vmem:[#allocation5 + $0xbb0] sm:$0xff]
    %v524 = vld [vmem:[#allocation5 + $0xbb8] sm:$0xff]
    %v525 = vld [vmem:[#allocation5 + $0xbc0] sm:$0xff]
    %v526 = vld [vmem:[#allocation5 + $0xbc8] sm:$0xff]
    %v527 = vld [vmem:[#allocation5 + $0xbd0] sm:$0xff]
    %v528 = vld [vmem:[#allocation5 + $0xbd8] sm:$0xff]
    %v529 = vld [vmem:[#allocation5 + $0xbe0] sm:$0xff]
    %v530 = vld [vmem:[#allocation5 + $0xbe8] sm:$0xff]
    %v531 = vld [vmem:[#allocation5 + $0xbf0] sm:$0xff]
    %v532 = vld [vmem:[#allocation5 + $0xbf8] sm:$0xff]
    %v533 = vld [vmem:[#allocation5 + $0xc00] sm:$0xff]
    %v534 = vld [vmem:[#allocation5 + $0xc08] sm:$0xff]
    %v535 = vld [vmem:[#allocation5 + $0xc10] sm:$0xff]
    %v536 = vld [vmem:[#allocation5 + $0xc18] sm:$0xff]
    %v537 = vld [vmem:[#allocation5 + $0xc20] sm:$0xff]
    %v538 = vld [vmem:[#allocation5 + $0xc28] sm:$0xff]
    %v539 = vld [vmem:[#allocation5 + $0xc30] sm:$0xff]
    %v540 = vld [vmem:[#allocation5 + $0xc38] sm:$0xff]
    %v541 = vld [vmem:[#allocation5 + $0xc40] sm:$0xff]
    %v542 = vld [vmem:[#allocation5 + $0xc48] sm:$0xff]
    %v543 = vld [vmem:[#allocation5 + $0xc50] sm:$0xff]
    %v544 = vld [vmem:[#allocation5 + $0xc58] sm:$0xff]
    %v545 = vld [vmem:[#allocation5 + $0xc60] sm:$0xff]
    %v546 = vld [vmem:[#allocation5 + $0xc68] sm:$0xff]
    %v547 = vld [vmem:[#allocation5 + $0xc70] sm:$0xff]
    %v548 = vld [vmem:[#allocation5 + $0xc78] sm:$0xff]
    %v549 = vld [vmem:[#allocation5 + $0xc80] sm:$0xff]
    %v550 = vld [vmem:[#allocation5 + $0xc88] sm:$0xff]
    %v551 = vld [vmem:[#allocation5 + $0xc90] sm:$0xff]
    %v552 = vld [vmem:[#allocation5 + $0xc98] sm:$0xff]
    %v553 = vld [vmem:[#allocation5 + $0xca0] sm:$0xff]
    %v554 = vld [vmem:[#allocation5 + $0xca8] sm:$0xff]
    %v555 = vld [vmem:[#allocation5 + $0xcb0] sm:$0xff]
    %v556 = vld [vmem:[#allocation5 + $0xcb8] sm:$0xff]
    %v557 = vld [vmem:[#allocation5 + $0xcc0] sm:$0xff]
    %v558 = vld [vmem:[#allocation5 + $0xcc8] sm:$0xff]
    %v559 = vld [vmem:[#allocation5 + $0xcd0] sm:$0xff]
    %v560 = vld [vmem:[#allocation5 + $0xcd8] sm:$0xff]
    %v561 = vld [vmem:[#allocation5 + $0xce0] sm:$0xff]
    %v562 = vld [vmem:[#allocation5 + $0xce8] sm:$0xff]
    %v563 = vld [vmem:[#allocation5 + $0xcf0] sm:$0xff]
    %v564 = vld [vmem:[#allocation5 + $0xcf8] sm:$0xff]
    %v565 = vld [vmem:[#allocation5 + $0xd00] sm:$0xff]
    %v566 = vld [vmem:[#allocation5 + $0xd08] sm:$0xff]
    %v567 = vld [vmem:[#allocation5 + $0xd10] sm:$0xff]
    %v568 = vld [vmem:[#allocation5 + $0xd18] sm:$0xff]
    %v569 = vld [vmem:[#allocation5 + $0xd20] sm:$0xff]
    %v570 = vld [vmem:[#allocation5 + $0xd28] sm:$0xff]
    %v571 = vld [vmem:[#allocation5 + $0xd30] sm:$0xff]
    %v572 = vld [vmem:[#allocation5 + $0xd38] sm:$0xff]
    %v573 = vld [vmem:[#allocation5 + $0xd40] sm:$0xff]
    %v574 = vld [vmem:[#allocation5 + $0xd48] sm:$0xff]
    %v575 = vld [vmem:[#allocation5 + $0xd50] sm:$0xff]
    %v576 = vld [vmem:[#allocation5 + $0xd58] sm:$0xff]
    %v577 = vld [vmem:[#allocation5 + $0xd60] sm:$0xff]
    %v578 = vld [vmem:[#allocation5 + $0xd68] sm:$0xff]
    %v579 = vld [vmem:[#allocation5 + $0xd70] sm:$0xff]
    %v580 = vld [vmem:[#allocation5 + $0xd78] sm:$0xff]
    %v581 = vld [vmem:[#allocation5 + $0xd80] sm:$0xff]
    %v582 = vld [vmem:[#allocation5 + $0xd88] sm:$0xff]
    %v583 = vld [vmem:[#allocation5 + $0xd90] sm:$0xff]
    %v584 = vld [vmem:[#allocation5 + $0xd98] sm:$0xff]
    %v585 = vld [vmem:[#allocation5 + $0xda0] sm:$0xff]
    %v586 = vld [vmem:[#allocation5 + $0xda8] sm:$0xff]
    %v587 = vld [vmem:[#allocation5 + $0xdb0] sm:$0xff]
    %v588 = vld [vmem:[#allocation5 + $0xdb8] sm:$0xff]
    %v589 = vld [vmem:[#allocation5 + $0xdc0] sm:$0xff]
    %v590 = vld [vmem:[#allocation5 + $0xdc8] sm:$0xff]
    %v591 = vld [vmem:[#allocation5 + $0xdd0] sm:$0xff]
    %v592 = vld [vmem:[#allocation5 + $0xdd8] sm:$0xff]
    %v593 = vld [vmem:[#allocation5 + $0xde0] sm:$0xff]
    %v594 = vld [vmem:[#allocation5 + $0xde8] sm:$0xff]
    %v595 = vld [vmem:[#allocation5 + $0xdf0] sm:$0xff]
    %v596 = vld [vmem:[#allocation5 + $0xdf8] sm:$0xff]
    %v597 = vld [vmem:[#allocation5 + $0xe00] sm:$0xff]
    %v598 = vld [vmem:[#allocation5 + $0xe08] sm:$0xff]
    %v599 = vld [vmem:[#allocation5 + $0xe10] sm:$0xff]
    %v600 = vld [vmem:[#allocation5 + $0xe18] sm:$0xff]
    %v601 = vld [vmem:[#allocation5 + $0xe20] sm:$0xff]
    %v602 = vld [vmem:[#allocation5 + $0xe28] sm:$0xff]
    %v603 = vld [vmem:[#allocation5 + $0xe30] sm:$0xff]
    %v604 = vld [vmem:[#allocation5 + $0xe38] sm:$0xff]
    %v605 = vld [vmem:[#allocation5 + $0xe40] sm:$0xff]
    %v606 = vld [vmem:[#allocation5 + $0xe48] sm:$0xff]
    %v607 = vld [vmem:[#allocation5 + $0xe50] sm:$0xff]
    %v608 = vld [vmem:[#allocation5 + $0xe58] sm:$0xff]
    %v609 = vld [vmem:[#allocation5 + $0xe60] sm:$0xff]
    %v610 = vld [vmem:[#allocation5 + $0xe68] sm:$0xff]
    %v611 = vld [vmem:[#allocation5 + $0xe70] sm:$0xff]
    %v612 = vld [vmem:[#allocation5 + $0xe78] sm:$0xff]
    %v613 = vld [vmem:[#allocation5 + $0xe80] sm:$0xff]
    %v614 = vld [vmem:[#allocation5 + $0xe88] sm:$0xff]
    %v615 = vld [vmem:[#allocation5 + $0xe90] sm:$0xff]
    %v616 = vld [vmem:[#allocation5 + $0xe98] sm:$0xff]
    %v617 = vld [vmem:[#allocation5 + $0xea0] sm:$0xff]
    %v618 = vld [vmem:[#allocation5 + $0xea8] sm:$0xff]
    %v619 = vld [vmem:[#allocation5 + $0xeb0] sm:$0xff]
    %v620 = vld [vmem:[#allocation5 + $0xeb8] sm:$0xff]
    %v621 = vld [vmem:[#allocation5 + $0xec0] sm:$0xff]
    %v622 = vld [vmem:[#allocation5 + $0xec8] sm:$0xff]
    %v623 = vld [vmem:[#allocation5 + $0xed0] sm:$0xff]
    %v624 = vld [vmem:[#allocation5 + $0xed8] sm:$0xff]
    %v625 = vld [vmem:[#allocation5 + $0xee0] sm:$0xff]
    %v626 = vld [vmem:[#allocation5 + $0xee8] sm:$0xff]
    %v627 = vld [vmem:[#allocation5 + $0xef0] sm:$0xff]
    %v628 = vld [vmem:[#allocation5 + $0xef8] sm:$0xff]
    %v629 = vld [vmem:[#allocation5 + $0xf00] sm:$0xff]
    %v630 = vld [vmem:[#allocation5 + $0xf08] sm:$0xff]
    %v631 = vld [vmem:[#allocation5 + $0xf10] sm:$0xff]
    %v632 = vld [vmem:[#allocation5 + $0xf18] sm:$0xff]
    %v633 = vld [vmem:[#allocation5 + $0xf20] sm:$0xff]
    %v634 = vld [vmem:[#allocation5 + $0xf28] sm:$0xff]
    %v635 = vld [vmem:[#allocation5 + $0xf30] sm:$0xff]
    %v636 = vld [vmem:[#allocation5 + $0xf38] sm:$0xff]
    %v637 = vld [vmem:[#allocation5 + $0xf40] sm:$0xff]
    %v638 = vld [vmem:[#allocation5 + $0xf48] sm:$0xff]
    %v639 = vld [vmem:[#allocation5 + $0xf50] sm:$0xff]
    %v640 = vld [vmem:[#allocation5 + $0xf58] sm:$0xff]
    %v641 = vld [vmem:[#allocation5 + $0xf60] sm:$0xff]
    %v642 = vld [vmem:[#allocation5 + $0xf68] sm:$0xff]
    %v643 = vld [vmem:[#allocation5 + $0xf70] sm:$0xff]
    %v644 = vld [vmem:[#allocation5 + $0xf78] sm:$0xff]
    %v645 = vld [vmem:[#allocation5 + $0xf80] sm:$0xff]
    %v646 = vld [vmem:[#allocation5 + $0xf88] sm:$0xff]
    %v647 = vld [vmem:[#allocation5 + $0xf90] sm:$0xff]
    %v648 = vld [vmem:[#allocation5 + $0xf98] sm:$0xff]
    %v649 = vld [vmem:[#allocation5 + $0xfa0] sm:$0xff]
    %v650 = vld [vmem:[#allocation5 + $0xfa8] sm:$0xff]
    %v651 = vld [vmem:[#allocation5 + $0xfb0] sm:$0xff]
    %v652 = vld [vmem:[#allocation5 + $0xfb8] sm:$0xff]
    %v653 = vld [vmem:[#allocation5 + $0xfc0] sm:$0xff]
    %v654 = vld [vmem:[#allocation5 + $0xfc8] sm:$0xff]
    %v655 = vld [vmem:[#allocation5 + $0xfd0] sm:$0xff]
    %v656 = vld [vmem:[#allocation5 + $0xfd8] sm:$0xff]
    %v657 = vld [vmem:[#allocation5 + $0xfe0] sm:$0xff]
    %v658 = vld [vmem:[#allocation5 + $0xfe8] sm:$0xff]
    %v659 = vld [vmem:[#allocation5 + $0xff0] sm:$0xff]
    %v660 = vld [vmem:[#allocation5 + $0xff8] sm:$0xff]
    %v661 = vld [vmem:[#allocation5 + $0x1000] sm:$0xff]
    %v662 = vld [vmem:[#allocation5 + $0x1008] sm:$0xff]
    %v663 = vld [vmem:[#allocation5 + $0x1010] sm:$0xff]
    %v664 = vld [vmem:[#allocation5 + $0x1018] sm:$0xff]
    %v665 = vld [vmem:[#allocation5 + $0x1020] sm:$0xff]
    %v666 = vld [vmem:[#allocation5 + $0x1028] sm:$0xff]
    %v667 = vld [vmem:[#allocation5 + $0x1030] sm:$0xff]
    %v668 = vld [vmem:[#allocation5 + $0x1038] sm:$0xff]
    %v669 = vld [vmem:[#allocation5 + $0x1040] sm:$0xff]
    %v670 = vld [vmem:[#allocation5 + $0x1048] sm:$0xff]
    %v671 = vld [vmem:[#allocation5 + $0x1050] sm:$0xff]
    %v672 = vld [vmem:[#allocation5 + $0x1058] sm:$0xff]
    %v673 = vld [vmem:[#allocation5 + $0x1060] sm:$0xff]
    %v674 = vld [vmem:[#allocation5 + $0x1068] sm:$0xff]
    %v675 = vld [vmem:[#allocation5 + $0x1070] sm:$0xff]
    %v676 = vld [vmem:[#allocation5 + $0x1078] sm:$0xff]
    %v677 = vld [vmem:[#allocation5 + $0x1080] sm:$0xff]
    %v678 = vld [vmem:[#allocation5 + $0x1088] sm:$0xff]
    %v679 = vld [vmem:[#allocation5 + $0x1090] sm:$0xff]
    %v680 = vld [vmem:[#allocation5 + $0x1098] sm:$0xff]
    %v681 = vld [vmem:[#allocation5 + $0x10a0] sm:$0xff]
    %v682 = vld [vmem:[#allocation5 + $0x10a8] sm:$0xff]
    %v683 = vld [vmem:[#allocation5 + $0x10b0] sm:$0xff]
    %v684 = vld [vmem:[#allocation5 + $0x10b8] sm:$0xff]
    %v685 = vld [vmem:[#allocation5 + $0x10c0] sm:$0xff]
    %v686 = vld [vmem:[#allocation5 + $0x10c8] sm:$0xff]
    %v687 = vld [vmem:[#allocation5 + $0x10d0] sm:$0xff]
    %v688 = vld [vmem:[#allocation5 + $0x10d8] sm:$0xff]
    %v689 = vld [vmem:[#allocation5 + $0x10e0] sm:$0xff]
    %v690 = vld [vmem:[#allocation5 + $0x10e8] sm:$0xff]
    %v691 = vld [vmem:[#allocation5 + $0x10f0] sm:$0xff]
    %v692 = vld [vmem:[#allocation5 + $0x10f8] sm:$0xff]
    %v693 = vld [vmem:[#allocation5 + $0x1100] sm:$0xff]
    %v694 = vld [vmem:[#allocation5 + $0x1108] sm:$0xff]
    %v695 = vld [vmem:[#allocation5 + $0x1110] sm:$0xff]
    %v696 = vld [vmem:[#allocation5 + $0x1118] sm:$0xff]
    %v697 = vld [vmem:[#allocation5 + $0x1120] sm:$0xff]
    %v698 = vld [vmem:[#allocation5 + $0x1128] sm:$0xff]
    %v699 = vld [vmem:[#allocation5 + $0x1130] sm:$0xff]
    %v700 = vld [vmem:[#allocation5 + $0x1138] sm:$0xff]
    %v701 = vld [vmem:[#allocation5 + $0x1140] sm:$0xff]
    %v702 = vld [vmem:[#allocation5 + $0x1148] sm:$0xff]
    %v703 = vld [vmem:[#allocation5 + $0x1150] sm:$0xff]
    %v704 = vld [vmem:[#allocation5 + $0x1158] sm:$0xff]
    %v705 = vld [vmem:[#allocation5 + $0x1160] sm:$0xff]
    %v706 = vld [vmem:[#allocation5 + $0x1168] sm:$0xff]
    %v707 = vld [vmem:[#allocation5 + $0x1170] sm:$0xff]
    %v708 = vld [vmem:[#allocation5 + $0x1178] sm:$0xff]
    %v709 = vld [vmem:[#allocation5 + $0x1180] sm:$0xff]
    %v710 = vld [vmem:[#allocation5 + $0x1188] sm:$0xff]
    %v711 = vld [vmem:[#allocation5 + $0x1190] sm:$0xff]
    %v712 = vld [vmem:[#allocation5 + $0x1198] sm:$0xff]
    %v713 = vld [vmem:[#allocation5 + $0x11a0] sm:$0xff]
    %v714 = vld [vmem:[#allocation5 + $0x11a8] sm:$0xff]
    %v715 = vld [vmem:[#allocation5 + $0x11b0] sm:$0xff]
    %v716 = vld [vmem:[#allocation5 + $0x11b8] sm:$0xff]
    %v717 = vld [vmem:[#allocation5 + $0x11c0] sm:$0xff]
    %v718 = vld [vmem:[#allocation5 + $0x11c8] sm:$0xff]
    %v719 = vld [vmem:[#allocation5 + $0x11d0] sm:$0xff]
    %v720 = vld [vmem:[#allocation5 + $0x11d8] sm:$0xff]
    %v721 = vld [vmem:[#allocation5 + $0x11e0] sm:$0xff]
    %v722 = vld [vmem:[#allocation5 + $0x11e8] sm:$0xff]
    %v723 = vld [vmem:[#allocation5 + $0x11f0] sm:$0xff]
    %v724 = vld [vmem:[#allocation5 + $0x11f8] sm:$0xff]
    %v730 = vunpack.c.l.b16 %v144
    %v731 = vunpack.c.h.b16 %v144
    %v732 = vunpack.c.l.b16 %v145
    %v733 = vunpack.c.h.b16 %v145
    %v734 = vunpack.c.l.b16 %v146
    %v735 = vunpack.c.h.b16 %v146
    %v736 = vunpack.c.l.b16 %v147
    %v737 = vunpack.c.h.b16 %v147
    %v738 = vunpack.c.l.b16 %v148
    %v739 = vpack.c.b16 %v730, %v730
    %v740 = vpack.c.b16 %v731, %v731
    %v741 = vpack.c.b16 %v732, %v732
    %v742 = vpack.c.b16 %v733, %v733
    %v743 = vpack.c.b16 %v734, %v734
    %v744 = vpack.c.b16 %v735, %v735
    %v745 = vpack.c.b16 %v736, %v736
    %v746 = vpack.c.b16 %v737, %v737
    %v747 = vpack.c.b16 %v738, %v738
    %v1333 = vunpack.c.l.b16 %v149
    %v1334 = vunpack.c.h.b16 %v149
    %v1335 = vunpack.c.l.b16 %v150
    %v1336 = vunpack.c.h.b16 %v150
    %v1337 = vunpack.c.l.b16 %v151
    %v1338 = vunpack.c.h.b16 %v151
    %v1339 = vunpack.c.l.b16 %v152
    %v1340 = vunpack.c.h.b16 %v152
    %v1341 = vunpack.c.l.b16 %v153
    %v1342 = vunpack.c.h.b16 %v153
    %v1343 = vunpack.c.l.b16 %v154
    %v1344 = vunpack.c.h.b16 %v154
    %v1345 = vunpack.c.l.b16 %v155
    %v1346 = vunpack.c.h.b16 %v155
    %v1347 = vunpack.c.l.b16 %v156
    %v1348 = vunpack.c.h.b16 %v156
    %v1349 = vunpack.c.l.b16 %v157
    %v1350 = vunpack.c.h.b16 %v157
    %v1351 = vunpack.c.l.b16 %v158
    %v1352 = vunpack.c.h.b16 %v158
    %v1353 = vunpack.c.l.b16 %v159
    %v1354 = vunpack.c.h.b16 %v159
    %v1355 = vunpack.c.l.b16 %v160
    %v1356 = vunpack.c.h.b16 %v160
    %v1357 = vunpack.c.l.b16 %v161
    %v1358 = vunpack.c.h.b16 %v161
    %v1359 = vunpack.c.l.b16 %v162
    %v1360 = vunpack.c.h.b16 %v162
    %v1361 = vunpack.c.l.b16 %v163
    %v1362 = vunpack.c.h.b16 %v163
    %v1363 = vunpack.c.l.b16 %v164
    %v1364 = vunpack.c.h.b16 %v164
    %v1365 = vunpack.c.l.b16 %v165
    %v1366 = vunpack.c.h.b16 %v165
    %v1367 = vunpack.c.l.b16 %v166
    %v1368 = vunpack.c.h.b16 %v166
    %v1369 = vunpack.c.l.b16 %v167
    %v1370 = vunpack.c.h.b16 %v167
    %v1371 = vunpack.c.l.b16 %v168
    %v1372 = vunpack.c.h.b16 %v168
    %v1373 = vunpack.c.l.b16 %v169
    %v1374 = vunpack.c.h.b16 %v169
    %v1375 = vunpack.c.l.b16 %v170
    %v1376 = vunpack.c.h.b16 %v170
    %v1377 = vunpack.c.l.b16 %v171
    %v1378 = vunpack.c.h.b16 %v171
    %v1379 = vunpack.c.l.b16 %v172
    %v1380 = vunpack.c.h.b16 %v172
    %v1381 = vunpack.c.l.b16 %v173
    %v1382 = vunpack.c.h.b16 %v173
    %v1383 = vunpack.c.l.b16 %v174
    %v1384 = vunpack.c.h.b16 %v174
    %v1385 = vunpack.c.l.b16 %v175
    %v1386 = vunpack.c.h.b16 %v175
    %v1387 = vunpack.c.l.b16 %v176
    %v1388 = vunpack.c.h.b16 %v176
    %v1389 = vunpack.c.l.b16 %v177
    %v1390 = vunpack.c.h.b16 %v177
    %v1391 = vunpack.c.l.b16 %v178
    %v1392 = vunpack.c.h.b16 %v178
    %v1393 = vunpack.c.l.b16 %v179
    %v1394 = vunpack.c.h.b16 %v179
    %v1395 = vunpack.c.l.b16 %v180
    %v1396 = vunpack.c.h.b16 %v180
    %v1397 = vunpack.c.l.b16 %v181
    %v1398 = vunpack.c.h.b16 %v181
    %v1399 = vunpack.c.l.b16 %v182
    %v1400 = vunpack.c.h.b16 %v182
    %v1401 = vunpack.c.l.b16 %v183
    %v1402 = vunpack.c.h.b16 %v183
    %v1403 = vunpack.c.l.b16 %v184
    %v1404 = vunpack.c.h.b16 %v184
    %v1405 = vunpack.c.l.b16 %v185
    %v1406 = vunpack.c.h.b16 %v185
    %v1407 = vunpack.c.l.b16 %v186
    %v1408 = vunpack.c.h.b16 %v186
    %v1409 = vunpack.c.l.b16 %v187
    %v1410 = vunpack.c.h.b16 %v187
    %v1411 = vunpack.c.l.b16 %v188
    %v1412 = vunpack.c.h.b16 %v188
    %v1413 = vunpack.c.l.b16 %v189
    %v1414 = vunpack.c.h.b16 %v189
    %v1415 = vunpack.c.l.b16 %v190
    %v1416 = vunpack.c.h.b16 %v190
    %v1417 = vunpack.c.l.b16 %v191
    %v1418 = vunpack.c.h.b16 %v191
    %v1419 = vunpack.c.l.b16 %v192
    %v1420 = vunpack.c.h.b16 %v192
    %v1421 = vunpack.c.l.b16 %v193
    %v1422 = vunpack.c.h.b16 %v193
    %v1423 = vunpack.c.l.b16 %v194
    %v1424 = vunpack.c.h.b16 %v194
    %v1425 = vunpack.c.l.b16 %v195
    %v1426 = vunpack.c.h.b16 %v195
    %v1427 = vunpack.c.l.b16 %v196
    %v1428 = vunpack.c.h.b16 %v196
    %v1429 = vunpack.c.l.b16 %v197
    %v1430 = vunpack.c.h.b16 %v197
    %v1431 = vunpack.c.l.b16 %v198
    %v1432 = vunpack.c.h.b16 %v198
    %v1433 = vunpack.c.l.b16 %v199
    %v1434 = vunpack.c.h.b16 %v199
    %v1435 = vunpack.c.l.b16 %v200
    %v1436 = vunpack.c.h.b16 %v200
    %v1437 = vunpack.c.l.b16 %v201
    %v1438 = vunpack.c.h.b16 %v201
    %v1439 = vunpack.c.l.b16 %v202
    %v1440 = vunpack.c.h.b16 %v202
    %v1441 = vunpack.c.l.b16 %v203
    %v1442 = vunpack.c.h.b16 %v203
    %v1443 = vunpack.c.l.b16 %v204
    %v1444 = vunpack.c.h.b16 %v204
    %v1445 = vunpack.c.l.b16 %v205
    %v1446 = vunpack.c.h.b16 %v205
    %v1447 = vunpack.c.l.b16 %v206
    %v1448 = vunpack.c.h.b16 %v206
    %v1449 = vunpack.c.l.b16 %v207
    %v1450 = vunpack.c.h.b16 %v207
    %v1451 = vunpack.c.l.b16 %v208
    %v1452 = vunpack.c.h.b16 %v208
    %v1453 = vunpack.c.l.b16 %v209
    %v1454 = vunpack.c.h.b16 %v209
    %v1455 = vunpack.c.l.b16 %v210
    %v1456 = vunpack.c.h.b16 %v210
    %v1457 = vunpack.c.l.b16 %v211
    %v1458 = vunpack.c.h.b16 %v211
    %v1459 = vunpack.c.l.b16 %v212
    %v1460 = vunpack.c.h.b16 %v212
    %v1461 = vunpack.c.l.b16 %v213
    %v1462 = vunpack.c.h.b16 %v213
    %v1463 = vunpack.c.l.b16 %v214
    %v1464 = vunpack.c.h.b16 %v214
    %v1465 = vunpack.c.l.b16 %v215
    %v1466 = vunpack.c.h.b16 %v215
    %v1467 = vunpack.c.l.b16 %v216
    %v1468 = vunpack.c.h.b16 %v216
    %v1469 = vunpack.c.l.b16 %v217
    %v1470 = vunpack.c.h.b16 %v217
    %v1471 = vunpack.c.l.b16 %v218
    %v1472 = vunpack.c.h.b16 %v218
    %v1473 = vunpack.c.l.b16 %v219
    %v1474 = vunpack.c.h.b16 %v219
    %v1475 = vunpack.c.l.b16 %v220
    %v1476 = vunpack.c.h.b16 %v220
    %v1477 = vunpack.c.l.b16 %v221
    %v1478 = vunpack.c.h.b16 %v221
    %v1479 = vunpack.c.l.b16 %v222
    %v1480 = vunpack.c.h.b16 %v222
    %v1481 = vunpack.c.l.b16 %v223
    %v1482 = vunpack.c.h.b16 %v223
    %v1483 = vunpack.c.l.b16 %v224
    %v1484 = vunpack.c.h.b16 %v224
    %v1485 = vunpack.c.l.b16 %v225
    %v1486 = vunpack.c.h.b16 %v225
    %v1487 = vunpack.c.l.b16 %v226
    %v1488 = vunpack.c.h.b16 %v226
    %v1489 = vunpack.c.l.b16 %v227
    %v1490 = vunpack.c.h.b16 %v227
    %v1491 = vunpack.c.l.b16 %v228
    %v1492 = vunpack.c.h.b16 %v228
    %v1493 = vunpack.c.l.b16 %v229
    %v1494 = vunpack.c.h.b16 %v229
    %v1495 = vunpack.c.l.b16 %v230
    %v1496 = vunpack.c.h.b16 %v230
    %v1497 = vunpack.c.l.b16 %v231
    %v1498 = vunpack.c.h.b16 %v231
    %v1499 = vunpack.c.l.b16 %v232
    %v1500 = vunpack.c.h.b16 %v232
    %v1501 = vunpack.c.l.b16 %v233
    %v1502 = vunpack.c.h.b16 %v233
    %v1503 = vunpack.c.l.b16 %v234
    %v1504 = vunpack.c.h.b16 %v234
    %v1505 = vunpack.c.l.b16 %v235
    %v1506 = vunpack.c.h.b16 %v235
    %v1507 = vunpack.c.l.b16 %v236
    %v1508 = vunpack.c.h.b16 %v236
    %v1509 = vunpack.c.l.b16 %v237
    %v1510 = vunpack.c.h.b16 %v237
    %v1511 = vunpack.c.l.b16 %v238
    %v1512 = vunpack.c.h.b16 %v238
    %v1513 = vunpack.c.l.b16 %v239
    %v1514 = vunpack.c.h.b16 %v239
    %v1515 = vunpack.c.l.b16 %v240
    %v1516 = vunpack.c.h.b16 %v240
    %v1517 = vunpack.c.l.b16 %v241
    %v1518 = vunpack.c.h.b16 %v241
    %v1519 = vunpack.c.l.b16 %v242
    %v1520 = vunpack.c.h.b16 %v242
    %v1521 = vunpack.c.l.b16 %v243
    %v1522 = vunpack.c.h.b16 %v243
    %v1523 = vunpack.c.l.b16 %v244
    %v1524 = vunpack.c.h.b16 %v244
    %v1525 = vunpack.c.l.b16 %v245
    %v1526 = vunpack.c.h.b16 %v245
    %v1527 = vunpack.c.l.b16 %v246
    %v1528 = vunpack.c.h.b16 %v246
    %v1529 = vunpack.c.l.b16 %v247
    %v1530 = vunpack.c.h.b16 %v247
    %v1531 = vunpack.c.l.b16 %v248
    %v1532 = vunpack.c.h.b16 %v248
    %v1533 = vunpack.c.l.b16 %v249
    %v1534 = vunpack.c.h.b16 %v249
    %v1535 = vunpack.c.l.b16 %v250
    %v1536 = vunpack.c.h.b16 %v250
    %v1537 = vunpack.c.l.b16 %v251
    %v1538 = vunpack.c.h.b16 %v251
    %v1539 = vunpack.c.l.b16 %v252
    %v1540 = vunpack.c.h.b16 %v252
    %v1541 = vunpack.c.l.b16 %v253
    %v1542 = vunpack.c.h.b16 %v253
    %v1543 = vunpack.c.l.b16 %v254
    %v1544 = vunpack.c.h.b16 %v254
    %v1545 = vunpack.c.l.b16 %v255
    %v1546 = vunpack.c.h.b16 %v255
    %v1547 = vunpack.c.l.b16 %v256
    %v1548 = vunpack.c.h.b16 %v256
    %v1549 = vunpack.c.l.b16 %v257
    %v1550 = vunpack.c.h.b16 %v257
    %v1551 = vunpack.c.l.b16 %v258
    %v1552 = vunpack.c.h.b16 %v258
    %v1553 = vunpack.c.l.b16 %v259
    %v1554 = vunpack.c.h.b16 %v259
    %v1555 = vunpack.c.l.b16 %v260
    %v1556 = vunpack.c.h.b16 %v260
    %v1557 = vunpack.c.l.b16 %v261
    %v1558 = vunpack.c.h.b16 %v261
    %v1559 = vunpack.c.l.b16 %v262
    %v1560 = vunpack.c.h.b16 %v262
    %v1561 = vunpack.c.l.b16 %v263
    %v1562 = vunpack.c.h.b16 %v263
    %v1563 = vunpack.c.l.b16 %v264
    %v1564 = vunpack.c.h.b16 %v264
    %v1565 = vunpack.c.l.b16 %v265
    %v1566 = vunpack.c.h.b16 %v265
    %v1567 = vunpack.c.l.b16 %v266
    %v1568 = vunpack.c.h.b16 %v266
    %v1569 = vunpack.c.l.b16 %v267
    %v1570 = vunpack.c.h.b16 %v267
    %v1571 = vunpack.c.l.b16 %v268
    %v1572 = vunpack.c.h.b16 %v268
    %v1573 = vunpack.c.l.b16 %v269
    %v1574 = vunpack.c.h.b16 %v269
    %v1575 = vunpack.c.l.b16 %v270
    %v1576 = vunpack.c.h.b16 %v270
    %v1577 = vunpack.c.l.b16 %v271
    %v1578 = vunpack.c.h.b16 %v271
    %v1579 = vunpack.c.l.b16 %v272
    %v1580 = vunpack.c.h.b16 %v272
    %v1581 = vunpack.c.l.b16 %v273
    %v1582 = vunpack.c.h.b16 %v273
    %v1583 = vunpack.c.l.b16 %v274
    %v1584 = vunpack.c.h.b16 %v274
    %v1585 = vunpack.c.l.b16 %v275
    %v1586 = vunpack.c.h.b16 %v275
    %v1587 = vunpack.c.l.b16 %v276
    %v1588 = vunpack.c.h.b16 %v276
    %v1589 = vunpack.c.l.b16 %v277
    %v1590 = vunpack.c.h.b16 %v277
    %v1591 = vunpack.c.l.b16 %v278
    %v1592 = vunpack.c.h.b16 %v278
    %v1593 = vunpack.c.l.b16 %v279
    %v1594 = vunpack.c.h.b16 %v279
    %v1595 = vunpack.c.l.b16 %v280
    %v1596 = vunpack.c.h.b16 %v280
    %v1597 = vunpack.c.l.b16 %v281
    %v1598 = vunpack.c.h.b16 %v281
    %v1599 = vunpack.c.l.b16 %v282
    %v1600 = vunpack.c.h.b16 %v282
    %v1601 = vunpack.c.l.b16 %v283
    %v1602 = vunpack.c.h.b16 %v283
    %v1603 = vunpack.c.l.b16 %v284
    %v1604 = vunpack.c.h.b16 %v284
    %v1605 = vunpack.c.l.b16 %v285
    %v1606 = vunpack.c.h.b16 %v285
    %v1607 = vunpack.c.l.b16 %v286
    %v1608 = vunpack.c.h.b16 %v286
    %v1609 = vunpack.c.l.b16 %v287
    %v1610 = vunpack.c.h.b16 %v287
    %v1611 = vunpack.c.l.b16 %v288
    %v1612 = vunpack.c.h.b16 %v288
    %v1613 = vunpack.c.l.b16 %v289
    %v1614 = vunpack.c.h.b16 %v289
    %v1615 = vunpack.c.l.b16 %v290
    %v1616 = vunpack.c.h.b16 %v290
    %v1617 = vunpack.c.l.b16 %v291
    %v1618 = vunpack.c.h.b16 %v291
    %v1619 = vunpack.c.l.b16 %v292
    %v1620 = vunpack.c.h.b16 %v292
    %v1621 = vunpack.c.l.b16 %v293
    %v1622 = vunpack.c.h.b16 %v293
    %v1623 = vunpack.c.l.b16 %v294
    %v1624 = vunpack.c.h.b16 %v294
    %v1625 = vunpack.c.l.b16 %v295
    %v1626 = vunpack.c.h.b16 %v295
    %v1627 = vunpack.c.l.b16 %v296
    %v1628 = vunpack.c.h.b16 %v296
    %v1629 = vunpack.c.l.b16 %v297
    %v1630 = vunpack.c.h.b16 %v297
    %v1631 = vunpack.c.l.b16 %v298
    %v1632 = vunpack.c.h.b16 %v298
    %v1633 = vunpack.c.l.b16 %v299
    %v1634 = vunpack.c.h.b16 %v299
    %v1635 = vunpack.c.l.b16 %v300
    %v1636 = vunpack.c.h.b16 %v300
    %v1637 = vunpack.c.l.b16 %v301
    %v1638 = vunpack.c.h.b16 %v301
    %v1639 = vunpack.c.l.b16 %v302
    %v1640 = vunpack.c.h.b16 %v302
    %v1641 = vunpack.c.l.b16 %v303
    %v1642 = vunpack.c.h.b16 %v303
    %v1643 = vunpack.c.l.b16 %v304
    %v1644 = vunpack.c.h.b16 %v304
    %v1645 = vunpack.c.l.b16 %v305
    %v1646 = vunpack.c.h.b16 %v305
    %v1647 = vunpack.c.l.b16 %v306
    %v1648 = vunpack.c.h.b16 %v306
    %v1649 = vunpack.c.l.b16 %v307
    %v1650 = vunpack.c.h.b16 %v307
    %v1651 = vunpack.c.l.b16 %v308
    %v1652 = vunpack.c.h.b16 %v308
    %v1653 = vunpack.c.l.b16 %v309
    %v1654 = vunpack.c.h.b16 %v309
    %v1655 = vunpack.c.l.b16 %v310
    %v1656 = vunpack.c.h.b16 %v310
    %v1657 = vunpack.c.l.b16 %v311
    %v1658 = vunpack.c.h.b16 %v311
    %v1659 = vunpack.c.l.b16 %v312
    %v1660 = vunpack.c.h.b16 %v312
    %v1661 = vunpack.c.l.b16 %v313
    %v1662 = vunpack.c.h.b16 %v313
    %v1663 = vunpack.c.l.b16 %v314
    %v1664 = vunpack.c.h.b16 %v314
    %v1665 = vunpack.c.l.b16 %v315
    %v1666 = vunpack.c.h.b16 %v315
    %v1667 = vunpack.c.l.b16 %v316
    %v1668 = vunpack.c.h.b16 %v316
    %v1669 = vunpack.c.l.b16 %v317
    %v1670 = vunpack.c.h.b16 %v317
    %v1671 = vunpack.c.l.b16 %v318
    %v1672 = vunpack.c.h.b16 %v318
    %v1673 = vunpack.c.l.b16 %v319
    %v1674 = vunpack.c.h.b16 %v319
    %v1675 = vunpack.c.l.b16 %v320
    %v1676 = vunpack.c.h.b16 %v320
    %v1677 = vunpack.c.l.b16 %v321
    %v1678 = vunpack.c.h.b16 %v321
    %v1679 = vunpack.c.l.b16 %v322
    %v1680 = vunpack.c.h.b16 %v322
    %v1681 = vunpack.c.l.b16 %v323
    %v1682 = vunpack.c.h.b16 %v323
    %v1683 = vunpack.c.l.b16 %v324
    %v1684 = vunpack.c.h.b16 %v324
    %v1685 = vunpack.c.l.b16 %v325
    %v1686 = vunpack.c.h.b16 %v325
    %v1687 = vunpack.c.l.b16 %v326
    %v1688 = vunpack.c.h.b16 %v326
    %v1689 = vunpack.c.l.b16 %v327
    %v1690 = vunpack.c.h.b16 %v327
    %v1691 = vunpack.c.l.b16 %v328
    %v1692 = vunpack.c.h.b16 %v328
    %v1693 = vunpack.c.l.b16 %v329
    %v1694 = vunpack.c.h.b16 %v329
    %v1695 = vunpack.c.l.b16 %v330
    %v1696 = vunpack.c.h.b16 %v330
    %v1697 = vunpack.c.l.b16 %v331
    %v1698 = vunpack.c.h.b16 %v331
    %v1699 = vunpack.c.l.b16 %v332
    %v1700 = vunpack.c.h.b16 %v332
    %v1701 = vunpack.c.l.b16 %v333
    %v1702 = vunpack.c.h.b16 %v333
    %v1703 = vunpack.c.l.b16 %v334
    %v1704 = vunpack.c.h.b16 %v334
    %v1705 = vunpack.c.l.b16 %v335
    %v1706 = vunpack.c.h.b16 %v335
    %v1707 = vunpack.c.l.b16 %v336
    %v1708 = vunpack.c.h.b16 %v336
    %v1709 = vunpack.c.l.b16 %v337
    %v1710 = vunpack.c.h.b16 %v337
    %v1711 = vunpack.c.l.b16 %v338
    %v1712 = vunpack.c.h.b16 %v338
    %v1713 = vunpack.c.l.b16 %v339
    %v1714 = vunpack.c.h.b16 %v339
    %v1715 = vunpack.c.l.b16 %v340
    %v1716 = vunpack.c.h.b16 %v340
    %v1717 = vunpack.c.l.b16 %v341
    %v1718 = vunpack.c.h.b16 %v341
    %v1719 = vunpack.c.l.b16 %v342
    %v1720 = vunpack.c.h.b16 %v342
    %v1721 = vunpack.c.l.b16 %v343
    %v1722 = vunpack.c.h.b16 %v343
    %v1723 = vunpack.c.l.b16 %v344
    %v1724 = vunpack.c.h.b16 %v344
    %v1725 = vunpack.c.l.b16 %v345
    %v1726 = vunpack.c.h.b16 %v345
    %v1727 = vunpack.c.l.b16 %v346
    %v1728 = vunpack.c.h.b16 %v346
    %v1729 = vunpack.c.l.b16 %v347
    %v1730 = vunpack.c.h.b16 %v347
    %v1731 = vunpack.c.l.b16 %v348
    %v1732 = vunpack.c.h.b16 %v348
    %v1733 = vunpack.c.l.b16 %v349
    %v1734 = vunpack.c.h.b16 %v349
    %v1735 = vunpack.c.l.b16 %v350
    %v1736 = vunpack.c.h.b16 %v350
    %v1737 = vunpack.c.l.b16 %v351
    %v1738 = vunpack.c.h.b16 %v351
    %v1739 = vunpack.c.l.b16 %v352
    %v1740 = vunpack.c.h.b16 %v352
    %v1741 = vunpack.c.l.b16 %v353
    %v1742 = vunpack.c.h.b16 %v353
    %v1743 = vunpack.c.l.b16 %v354
    %v1744 = vunpack.c.h.b16 %v354
    %v1745 = vunpack.c.l.b16 %v355
    %v1746 = vunpack.c.h.b16 %v355
    %v1747 = vunpack.c.l.b16 %v356
    %v1748 = vunpack.c.h.b16 %v356
    %v1749 = vunpack.c.l.b16 %v357
    %v1750 = vunpack.c.h.b16 %v357
    %v1751 = vunpack.c.l.b16 %v358
    %v1752 = vunpack.c.h.b16 %v358
    %v1753 = vunpack.c.l.b16 %v359
    %v1754 = vunpack.c.h.b16 %v359
    %v1755 = vunpack.c.l.b16 %v360
    %v1756 = vunpack.c.h.b16 %v360
    %v1757 = vunpack.c.l.b16 %v361
    %v1758 = vunpack.c.h.b16 %v361
    %v1759 = vunpack.c.l.b16 %v362
    %v1760 = vunpack.c.h.b16 %v362
    %v1761 = vunpack.c.l.b16 %v363
    %v1762 = vunpack.c.h.b16 %v363
    %v1763 = vunpack.c.l.b16 %v364
    %v1764 = vunpack.c.h.b16 %v364
    %v1765 = vunpack.c.l.b16 %v365
    %v1766 = vunpack.c.h.b16 %v365
    %v1767 = vunpack.c.l.b16 %v366
    %v1768 = vunpack.c.h.b16 %v366
    %v1769 = vunpack.c.l.b16 %v367
    %v1770 = vunpack.c.h.b16 %v367
    %v1771 = vunpack.c.l.b16 %v368
    %v1772 = vunpack.c.h.b16 %v368
    %v1773 = vunpack.c.l.b16 %v369
    %v1774 = vunpack.c.h.b16 %v369
    %v1775 = vunpack.c.l.b16 %v370
    %v1776 = vunpack.c.h.b16 %v370
    %v1777 = vunpack.c.l.b16 %v371
    %v1778 = vunpack.c.h.b16 %v371
    %v1779 = vunpack.c.l.b16 %v372
    %v1780 = vunpack.c.h.b16 %v372
    %v1781 = vunpack.c.l.b16 %v373
    %v1782 = vunpack.c.h.b16 %v373
    %v1783 = vunpack.c.l.b16 %v374
    %v1784 = vunpack.c.h.b16 %v374
    %v1785 = vunpack.c.l.b16 %v375
    %v1786 = vunpack.c.h.b16 %v375
    %v1787 = vunpack.c.l.b16 %v376
    %v1788 = vunpack.c.h.b16 %v376
    %v1789 = vunpack.c.l.b16 %v377
    %v1790 = vunpack.c.h.b16 %v377
    %v1791 = vunpack.c.l.b16 %v378
    %v1792 = vunpack.c.h.b16 %v378
    %v1793 = vunpack.c.l.b16 %v379
    %v1794 = vunpack.c.h.b16 %v379
    %v1795 = vunpack.c.l.b16 %v380
    %v1796 = vunpack.c.h.b16 %v380
    %v1797 = vunpack.c.l.b16 %v381
    %v1798 = vunpack.c.h.b16 %v381
    %v1799 = vunpack.c.l.b16 %v382
    %v1800 = vunpack.c.h.b16 %v382
    %v1801 = vunpack.c.l.b16 %v383
    %v1802 = vunpack.c.h.b16 %v383
    %v1803 = vunpack.c.l.b16 %v384
    %v1804 = vunpack.c.h.b16 %v384
    %v1805 = vunpack.c.l.b16 %v385
    %v1806 = vunpack.c.h.b16 %v385
    %v1807 = vunpack.c.l.b16 %v386
    %v1808 = vunpack.c.h.b16 %v386
    %v1809 = vunpack.c.l.b16 %v387
    %v1810 = vunpack.c.h.b16 %v387
    %v1811 = vunpack.c.l.b16 %v388
    %v1812 = vunpack.c.h.b16 %v388
    %v1813 = vunpack.c.l.b16 %v389
    %v1814 = vunpack.c.h.b16 %v389
    %v1815 = vunpack.c.l.b16 %v390
    %v1816 = vunpack.c.h.b16 %v390
    %v1817 = vunpack.c.l.b16 %v391
    %v1818 = vunpack.c.h.b16 %v391
    %v1819 = vunpack.c.l.b16 %v392
    %v1820 = vunpack.c.h.b16 %v392
    %v1821 = vunpack.c.l.b16 %v393
    %v1822 = vunpack.c.h.b16 %v393
    %v1823 = vunpack.c.l.b16 %v394
    %v1824 = vunpack.c.h.b16 %v394
    %v1825 = vunpack.c.l.b16 %v395
    %v1826 = vunpack.c.h.b16 %v395
    %v1827 = vunpack.c.l.b16 %v396
    %v1828 = vunpack.c.h.b16 %v396
    %v1829 = vunpack.c.l.b16 %v397
    %v1830 = vunpack.c.h.b16 %v397
    %v1831 = vunpack.c.l.b16 %v398
    %v1832 = vunpack.c.h.b16 %v398
    %v1833 = vunpack.c.l.b16 %v399
    %v1834 = vunpack.c.h.b16 %v399
    %v1835 = vunpack.c.l.b16 %v400
    %v1836 = vunpack.c.h.b16 %v400
    %v1837 = vunpack.c.l.b16 %v401
    %v1838 = vunpack.c.h.b16 %v401
    %v1839 = vunpack.c.l.b16 %v402
    %v1840 = vunpack.c.h.b16 %v402
    %v1841 = vunpack.c.l.b16 %v403
    %v1842 = vunpack.c.h.b16 %v403
    %v1843 = vunpack.c.l.b16 %v404
    %v1844 = vunpack.c.h.b16 %v404
    %v1845 = vunpack.c.l.b16 %v405
    %v1846 = vunpack.c.h.b16 %v405
    %v1847 = vunpack.c.l.b16 %v406
    %v1848 = vunpack.c.h.b16 %v406
    %v1849 = vunpack.c.l.b16 %v407
    %v1850 = vunpack.c.h.b16 %v407
    %v1851 = vunpack.c.l.b16 %v408
    %v1852 = vunpack.c.h.b16 %v408
    %v1853 = vunpack.c.l.b16 %v409
    %v1854 = vunpack.c.h.b16 %v409
    %v1855 = vunpack.c.l.b16 %v410
    %v1856 = vunpack.c.h.b16 %v410
    %v1857 = vunpack.c.l.b16 %v411
    %v1858 = vunpack.c.h.b16 %v411
    %v1859 = vunpack.c.l.b16 %v412
    %v1860 = vunpack.c.h.b16 %v412
    %v1861 = vunpack.c.l.b16 %v413
    %v1862 = vunpack.c.h.b16 %v413
    %v1863 = vunpack.c.l.b16 %v414
    %v1864 = vunpack.c.h.b16 %v414
    %v1865 = vunpack.c.l.b16 %v415
    %v1866 = vunpack.c.h.b16 %v415
    %v1867 = vunpack.c.l.b16 %v416
    %v1868 = vunpack.c.h.b16 %v416
    %v1869 = vunpack.c.l.b16 %v417
    %v1870 = vunpack.c.h.b16 %v417
    %v1871 = vunpack.c.l.b16 %v418
    %v1872 = vunpack.c.h.b16 %v418
    %v1873 = vunpack.c.l.b16 %v419
    %v1874 = vunpack.c.h.b16 %v419
    %v1875 = vunpack.c.l.b16 %v420
    %v1876 = vunpack.c.h.b16 %v420
    %v1877 = vunpack.c.l.b16 %v421
    %v1878 = vunpack.c.h.b16 %v421
    %v1879 = vunpack.c.l.b16 %v422
    %v1880 = vunpack.c.h.b16 %v422
    %v1881 = vunpack.c.l.b16 %v423
    %v1882 = vunpack.c.h.b16 %v423
    %v1883 = vunpack.c.l.b16 %v424
    %v1884 = vunpack.c.h.b16 %v424
    %v1885 = vunpack.c.l.b16 %v425
    %v1886 = vunpack.c.h.b16 %v425
    %v1887 = vunpack.c.l.b16 %v426
    %v1888 = vunpack.c.h.b16 %v426
    %v1889 = vunpack.c.l.b16 %v427
    %v1890 = vunpack.c.h.b16 %v427
    %v1891 = vunpack.c.l.b16 %v428
    %v1892 = vunpack.c.h.b16 %v428
    %v1893 = vunpack.c.l.b16 %v429
    %v1894 = vunpack.c.h.b16 %v429
    %v1895 = vunpack.c.l.b16 %v430
    %v1896 = vunpack.c.h.b16 %v430
    %v1897 = vunpack.c.l.b16 %v431
    %v1898 = vunpack.c.h.b16 %v431
    %v1899 = vunpack.c.l.b16 %v432
    %v1900 = vunpack.c.h.b16 %v432
    %v1901 = vunpack.c.l.b16 %v433
    %v1902 = vunpack.c.h.b16 %v433
    %v1903 = vunpack.c.l.b16 %v434
    %v1904 = vunpack.c.h.b16 %v434
    %v1905 = vunpack.c.l.b16 %v435
    %v1906 = vunpack.c.h.b16 %v435
    %v1907 = vunpack.c.l.b16 %v436
    %v1908 = vunpack.c.h.b16 %v436
    %v1909 = vunpack.c.l.b16 %v437
    %v1910 = vunpack.c.h.b16 %v437
    %v1911 = vunpack.c.l.b16 %v438
    %v1912 = vunpack.c.h.b16 %v438
    %v1913 = vunpack.c.l.b16 %v439
    %v1914 = vunpack.c.h.b16 %v439
    %v1915 = vunpack.c.l.b16 %v440
    %v1916 = vunpack.c.h.b16 %v440
    %v1917 = vunpack.c.l.b16 %v441
    %v1918 = vunpack.c.h.b16 %v441
    %v1919 = vunpack.c.l.b16 %v442
    %v1920 = vunpack.c.h.b16 %v442
    %v1921 = vunpack.c.l.b16 %v443
    %v1922 = vunpack.c.h.b16 %v443
    %v1923 = vunpack.c.l.b16 %v444
    %v1924 = vunpack.c.h.b16 %v444
    %v1925 = vunpack.c.l.b16 %v445
    %v1926 = vunpack.c.h.b16 %v445
    %v1927 = vunpack.c.l.b16 %v446
    %v1928 = vunpack.c.h.b16 %v446
    %v1929 = vunpack.c.l.b16 %v447
    %v1930 = vunpack.c.h.b16 %v447
    %v1931 = vunpack.c.l.b16 %v448
    %v1932 = vunpack.c.h.b16 %v448
    %v1933 = vunpack.c.l.b16 %v449
    %v1934 = vunpack.c.h.b16 %v449
    %v1935 = vunpack.c.l.b16 %v450
    %v1936 = vunpack.c.h.b16 %v450
    %v1937 = vunpack.c.l.b16 %v451
    %v1938 = vunpack.c.h.b16 %v451
    %v1939 = vunpack.c.l.b16 %v452
    %v1940 = vunpack.c.h.b16 %v452
    %v1941 = vunpack.c.l.b16 %v453
    %v1942 = vunpack.c.h.b16 %v453
    %v1943 = vunpack.c.l.b16 %v454
    %v1944 = vunpack.c.h.b16 %v454
    %v1945 = vunpack.c.l.b16 %v455
    %v1946 = vunpack.c.h.b16 %v455
    %v1947 = vunpack.c.l.b16 %v456
    %v1948 = vunpack.c.h.b16 %v456
    %v1949 = vunpack.c.l.b16 %v457
    %v1950 = vunpack.c.h.b16 %v457
    %v1951 = vunpack.c.l.b16 %v458
    %v1952 = vunpack.c.h.b16 %v458
    %v1953 = vunpack.c.l.b16 %v459
    %v1954 = vunpack.c.h.b16 %v459
    %v1955 = vunpack.c.l.b16 %v460
    %v1956 = vunpack.c.h.b16 %v460
    %v1957 = vunpack.c.l.b16 %v461
    %v1958 = vunpack.c.h.b16 %v461
    %v1959 = vunpack.c.l.b16 %v462
    %v1960 = vunpack.c.h.b16 %v462
    %v1961 = vunpack.c.l.b16 %v463
    %v1962 = vunpack.c.h.b16 %v463
    %v1963 = vunpack.c.l.b16 %v464
    %v1964 = vunpack.c.h.b16 %v464
    %v1965 = vunpack.c.l.b16 %v465
    %v1966 = vunpack.c.h.b16 %v465
    %v1967 = vunpack.c.l.b16 %v466
    %v1968 = vunpack.c.h.b16 %v466
    %v1969 = vunpack.c.l.b16 %v467
    %v1970 = vunpack.c.h.b16 %v467
    %v1971 = vunpack.c.l.b16 %v468
    %v1972 = vunpack.c.h.b16 %v468
    %v1973 = vunpack.c.l.b16 %v469
    %v1974 = vunpack.c.h.b16 %v469
    %v1975 = vunpack.c.l.b16 %v470
    %v1976 = vunpack.c.h.b16 %v470
    %v1977 = vunpack.c.l.b16 %v471
    %v1978 = vunpack.c.h.b16 %v471
    %v1979 = vunpack.c.l.b16 %v472
    %v1980 = vunpack.c.h.b16 %v472
    %v1981 = vunpack.c.l.b16 %v473
    %v1982 = vunpack.c.h.b16 %v473
    %v1983 = vunpack.c.l.b16 %v474
    %v1984 = vunpack.c.h.b16 %v474
    %v1985 = vunpack.c.l.b16 %v475
    %v1986 = vunpack.c.h.b16 %v475
    %v1987 = vunpack.c.l.b16 %v476
    %v1988 = vunpack.c.h.b16 %v476
    %v1989 = vunpack.c.l.b16 %v477
    %v1990 = vunpack.c.h.b16 %v477
    %v1991 = vunpack.c.l.b16 %v478
    %v1992 = vunpack.c.h.b16 %v478
    %v1993 = vunpack.c.l.b16 %v479
    %v1994 = vunpack.c.h.b16 %v479
    %v1995 = vunpack.c.l.b16 %v480
    %v1996 = vunpack.c.h.b16 %v480
    %v1997 = vunpack.c.l.b16 %v481
    %v1998 = vunpack.c.h.b16 %v481
    %v1999 = vunpack.c.l.b16 %v482
    %v2000 = vunpack.c.h.b16 %v482
    %v2001 = vunpack.c.l.b16 %v483
    %v2002 = vunpack.c.h.b16 %v483
    %v2003 = vunpack.c.l.b16 %v484
    %v2004 = vunpack.c.h.b16 %v484
    %v2005 = vunpack.c.l.b16 %v485
    %v2006 = vunpack.c.h.b16 %v485
    %v2007 = vunpack.c.l.b16 %v486
    %v2008 = vunpack.c.h.b16 %v486
    %v2009 = vunpack.c.l.b16 %v487
    %v2010 = vunpack.c.h.b16 %v487
    %v2011 = vunpack.c.l.b16 %v488
    %v2012 = vunpack.c.h.b16 %v488
    %v2013 = vunpack.c.l.b16 %v489
    %v2014 = vunpack.c.h.b16 %v489
    %v2015 = vunpack.c.l.b16 %v490
    %v2016 = vunpack.c.h.b16 %v490
    %v2017 = vunpack.c.l.b16 %v491
    %v2018 = vunpack.c.h.b16 %v491
    %v2019 = vunpack.c.l.b16 %v492
    %v2020 = vunpack.c.h.b16 %v492
    %v2021 = vunpack.c.l.b16 %v493
    %v2022 = vunpack.c.h.b16 %v493
    %v2023 = vunpack.c.l.b16 %v494
    %v2024 = vunpack.c.h.b16 %v494
    %v2025 = vunpack.c.l.b16 %v495
    %v2026 = vunpack.c.h.b16 %v495
    %v2027 = vunpack.c.l.b16 %v496
    %v2028 = vunpack.c.h.b16 %v496
    %v2029 = vunpack.c.l.b16 %v497
    %v2030 = vunpack.c.h.b16 %v497
    %v2031 = vunpack.c.l.b16 %v498
    %v2032 = vunpack.c.h.b16 %v498
    %v2033 = vunpack.c.l.b16 %v499
    %v2034 = vunpack.c.h.b16 %v499
    %v2035 = vunpack.c.l.b16 %v500
    %v2036 = vunpack.c.h.b16 %v500
    %v2037 = vunpack.c.l.b16 %v501
    %v2038 = vunpack.c.h.b16 %v501
    %v2039 = vunpack.c.l.b16 %v502
    %v2040 = vunpack.c.h.b16 %v502
    %v2041 = vunpack.c.l.b16 %v503
    %v2042 = vunpack.c.h.b16 %v503
    %v2043 = vunpack.c.l.b16 %v504
    %v2044 = vunpack.c.h.b16 %v504
    %v2045 = vunpack.c.l.b16 %v505
    %v2046 = vunpack.c.h.b16 %v505
    %v2047 = vunpack.c.l.b16 %v506
    %v2048 = vunpack.c.h.b16 %v506
    %v2049 = vunpack.c.l.b16 %v507
    %v2050 = vunpack.c.h.b16 %v507
    %v2051 = vunpack.c.l.b16 %v508
    %v2052 = vunpack.c.h.b16 %v508
    %v2053 = vunpack.c.l.b16 %v509
    %v2054 = vunpack.c.h.b16 %v509
    %v2055 = vunpack.c.l.b16 %v510
    %v2056 = vunpack.c.h.b16 %v510
    %v2057 = vunpack.c.l.b16 %v511
    %v2058 = vunpack.c.h.b16 %v511
    %v2059 = vunpack.c.l.b16 %v512
    %v2060 = vunpack.c.h.b16 %v512
    %v2061 = vunpack.c.l.b16 %v513
    %v2062 = vunpack.c.h.b16 %v513
    %v2063 = vunpack.c.l.b16 %v514
    %v2064 = vunpack.c.h.b16 %v514
    %v2065 = vunpack.c.l.b16 %v515
    %v2066 = vunpack.c.h.b16 %v515
    %v2067 = vunpack.c.l.b16 %v516
    %v2068 = vunpack.c.h.b16 %v516
    %v2069 = vunpack.c.l.b16 %v517
    %v2070 = vunpack.c.h.b16 %v517
    %v2071 = vunpack.c.l.b16 %v518
    %v2072 = vunpack.c.h.b16 %v518
    %v2073 = vunpack.c.l.b16 %v519
    %v2074 = vunpack.c.h.b16 %v519
    %v2075 = vunpack.c.l.b16 %v520
    %v2076 = vunpack.c.h.b16 %v520
    %v2077 = vunpack.c.l.b16 %v521
    %v2078 = vunpack.c.h.b16 %v521
    %v2079 = vunpack.c.l.b16 %v522
    %v2080 = vunpack.c.h.b16 %v522
    %v2081 = vunpack.c.l.b16 %v523
    %v2082 = vunpack.c.h.b16 %v523
    %v2083 = vunpack.c.l.b16 %v524
    %v2084 = vunpack.c.h.b16 %v524
    %v2085 = vunpack.c.l.b16 %v525
    %v2086 = vunpack.c.h.b16 %v525
    %v2087 = vunpack.c.l.b16 %v526
    %v2088 = vunpack.c.h.b16 %v526
    %v2089 = vunpack.c.l.b16 %v527
    %v2090 = vunpack.c.h.b16 %v527
    %v2091 = vunpack.c.l.b16 %v528
    %v2092 = vunpack.c.h.b16 %v528
    %v2093 = vunpack.c.l.b16 %v529
    %v2094 = vunpack.c.h.b16 %v529
    %v2095 = vunpack.c.l.b16 %v530
    %v2096 = vunpack.c.h.b16 %v530
    %v2097 = vunpack.c.l.b16 %v531
    %v2098 = vunpack.c.h.b16 %v531
    %v2099 = vunpack.c.l.b16 %v532
    %v2100 = vunpack.c.h.b16 %v532
    %v2101 = vunpack.c.l.b16 %v533
    %v2102 = vunpack.c.h.b16 %v533
    %v2103 = vunpack.c.l.b16 %v534
    %v2104 = vunpack.c.h.b16 %v534
    %v2105 = vunpack.c.l.b16 %v535
    %v2106 = vunpack.c.h.b16 %v535
    %v2107 = vunpack.c.l.b16 %v536
    %v2108 = vunpack.c.h.b16 %v536
    %v2109 = vunpack.c.l.b16 %v537
    %v2110 = vunpack.c.h.b16 %v537
    %v2111 = vunpack.c.l.b16 %v538
    %v2112 = vunpack.c.h.b16 %v538
    %v2113 = vunpack.c.l.b16 %v539
    %v2114 = vunpack.c.h.b16 %v539
    %v2115 = vunpack.c.l.b16 %v540
    %v2116 = vunpack.c.h.b16 %v540
    %v2117 = vunpack.c.l.b16 %v541
    %v2118 = vunpack.c.h.b16 %v541
    %v2119 = vunpack.c.l.b16 %v542
    %v2120 = vunpack.c.h.b16 %v542
    %v2121 = vunpack.c.l.b16 %v543
    %v2122 = vunpack.c.h.b16 %v543
    %v2123 = vunpack.c.l.b16 %v544
    %v2124 = vunpack.c.h.b16 %v544
    %v2125 = vunpack.c.l.b16 %v545
    %v2126 = vunpack.c.h.b16 %v545
    %v2127 = vunpack.c.l.b16 %v546
    %v2128 = vunpack.c.h.b16 %v546
    %v2129 = vunpack.c.l.b16 %v547
    %v2130 = vunpack.c.h.b16 %v547
    %v2131 = vunpack.c.l.b16 %v548
    %v2132 = vunpack.c.h.b16 %v548
    %v2133 = vunpack.c.l.b16 %v549
    %v2134 = vunpack.c.h.b16 %v549
    %v2135 = vunpack.c.l.b16 %v550
    %v2136 = vunpack.c.h.b16 %v550
    %v2137 = vunpack.c.l.b16 %v551
    %v2138 = vunpack.c.h.b16 %v551
    %v2139 = vunpack.c.l.b16 %v552
    %v2140 = vunpack.c.h.b16 %v552
    %v2141 = vunpack.c.l.b16 %v553
    %v2142 = vunpack.c.h.b16 %v553
    %v2143 = vunpack.c.l.b16 %v554
    %v2144 = vunpack.c.h.b16 %v554
    %v2145 = vunpack.c.l.b16 %v555
    %v2146 = vunpack.c.h.b16 %v555
    %v2147 = vunpack.c.l.b16 %v556
    %v2148 = vunpack.c.h.b16 %v556
    %v2149 = vunpack.c.l.b16 %v557
    %v2150 = vunpack.c.h.b16 %v557
    %v2151 = vunpack.c.l.b16 %v558
    %v2152 = vunpack.c.h.b16 %v558
    %v2153 = vunpack.c.l.b16 %v559
    %v2154 = vunpack.c.h.b16 %v559
    %v2155 = vunpack.c.l.b16 %v560
    %v2156 = vunpack.c.h.b16 %v560
    %v2157 = vunpack.c.l.b16 %v561
    %v2158 = vunpack.c.h.b16 %v561
    %v2159 = vunpack.c.l.b16 %v562
    %v2160 = vunpack.c.h.b16 %v562
    %v2161 = vunpack.c.l.b16 %v563
    %v2162 = vunpack.c.h.b16 %v563
    %v2163 = vunpack.c.l.b16 %v564
    %v2164 = vunpack.c.h.b16 %v564
    %v2165 = vunpack.c.l.b16 %v565
    %v2166 = vunpack.c.h.b16 %v565
    %v2167 = vunpack.c.l.b16 %v566
    %v2168 = vunpack.c.h.b16 %v566
    %v2169 = vunpack.c.l.b16 %v567
    %v2170 = vunpack.c.h.b16 %v567
    %v2171 = vunpack.c.l.b16 %v568
    %v2172 = vunpack.c.h.b16 %v568
    %v2173 = vunpack.c.l.b16 %v569
    %v2174 = vunpack.c.h.b16 %v569
    %v2175 = vunpack.c.l.b16 %v570
    %v2176 = vunpack.c.h.b16 %v570
    %v2177 = vunpack.c.l.b16 %v571
    %v2178 = vunpack.c.h.b16 %v571
    %v2179 = vunpack.c.l.b16 %v572
    %v2180 = vunpack.c.h.b16 %v572
    %v2181 = vunpack.c.l.b16 %v573
    %v2182 = vunpack.c.h.b16 %v573
    %v2183 = vunpack.c.l.b16 %v574
    %v2184 = vunpack.c.h.b16 %v574
    %v2185 = vunpack.c.l.b16 %v575
    %v2186 = vunpack.c.h.b16 %v575
    %v2187 = vunpack.c.l.b16 %v576
    %v2188 = vunpack.c.h.b16 %v576
    %v2189 = vunpack.c.l.b16 %v577
    %v2190 = vunpack.c.h.b16 %v577
    %v2191 = vunpack.c.l.b16 %v578
    %v2192 = vunpack.c.h.b16 %v578
    %v2193 = vunpack.c.l.b16 %v579
    %v2194 = vunpack.c.h.b16 %v579
    %v2195 = vunpack.c.l.b16 %v580
    %v2196 = vunpack.c.h.b16 %v580
    %v2197 = vunpack.c.l.b16 %v581
    %v2198 = vunpack.c.h.b16 %v581
    %v2199 = vunpack.c.l.b16 %v582
    %v2200 = vunpack.c.h.b16 %v582
    %v2201 = vunpack.c.l.b16 %v583
    %v2202 = vunpack.c.h.b16 %v583
    %v2203 = vunpack.c.l.b16 %v584
    %v2204 = vunpack.c.h.b16 %v584
    %v2205 = vunpack.c.l.b16 %v585
    %v2206 = vunpack.c.h.b16 %v585
    %v2207 = vunpack.c.l.b16 %v586
    %v2208 = vunpack.c.h.b16 %v586
    %v2209 = vunpack.c.l.b16 %v587
    %v2210 = vunpack.c.h.b16 %v587
    %v2211 = vunpack.c.l.b16 %v588
    %v2212 = vunpack.c.h.b16 %v588
    %v2213 = vunpack.c.l.b16 %v589
    %v2214 = vunpack.c.h.b16 %v589
    %v2215 = vunpack.c.l.b16 %v590
    %v2216 = vunpack.c.h.b16 %v590
    %v2217 = vunpack.c.l.b16 %v591
    %v2218 = vunpack.c.h.b16 %v591
    %v2219 = vunpack.c.l.b16 %v592
    %v2220 = vunpack.c.h.b16 %v592
    %v2221 = vunpack.c.l.b16 %v593
    %v2222 = vunpack.c.h.b16 %v593
    %v2223 = vunpack.c.l.b16 %v594
    %v2224 = vunpack.c.h.b16 %v594
    %v2225 = vunpack.c.l.b16 %v595
    %v2226 = vunpack.c.h.b16 %v595
    %v2227 = vunpack.c.l.b16 %v596
    %v2228 = vunpack.c.h.b16 %v596
    %v2229 = vunpack.c.l.b16 %v597
    %v2230 = vunpack.c.h.b16 %v597
    %v2231 = vunpack.c.l.b16 %v598
    %v2232 = vunpack.c.h.b16 %v598
    %v2233 = vunpack.c.l.b16 %v599
    %v2234 = vunpack.c.h.b16 %v599
    %v2235 = vunpack.c.l.b16 %v600
    %v2236 = vunpack.c.h.b16 %v600
    %v2237 = vunpack.c.l.b16 %v601
    %v2238 = vunpack.c.h.b16 %v601
    %v2239 = vunpack.c.l.b16 %v602
    %v2240 = vunpack.c.h.b16 %v602
    %v2241 = vunpack.c.l.b16 %v603
    %v2242 = vunpack.c.h.b16 %v603
    %v2243 = vunpack.c.l.b16 %v604
    %v2244 = vunpack.c.h.b16 %v604
    %v2245 = vunpack.c.l.b16 %v605
    %v2246 = vunpack.c.h.b16 %v605
    %v2247 = vunpack.c.l.b16 %v606
    %v2248 = vunpack.c.h.b16 %v606
    %v2249 = vunpack.c.l.b16 %v607
    %v2250 = vunpack.c.h.b16 %v607
    %v2251 = vunpack.c.l.b16 %v608
    %v2252 = vunpack.c.h.b16 %v608
    %v2253 = vunpack.c.l.b16 %v609
    %v2254 = vunpack.c.h.b16 %v609
    %v2255 = vunpack.c.l.b16 %v610
    %v2256 = vunpack.c.h.b16 %v610
    %v2257 = vunpack.c.l.b16 %v611
    %v2258 = vunpack.c.h.b16 %v611
    %v2259 = vunpack.c.l.b16 %v612
    %v2260 = vunpack.c.h.b16 %v612
    %v2261 = vunpack.c.l.b16 %v613
    %v2262 = vunpack.c.h.b16 %v613
    %v2263 = vunpack.c.l.b16 %v614
    %v2264 = vunpack.c.h.b16 %v614
    %v2265 = vunpack.c.l.b16 %v615
    %v2266 = vunpack.c.h.b16 %v615
    %v2267 = vunpack.c.l.b16 %v616
    %v2268 = vunpack.c.h.b16 %v616
    %v2269 = vunpack.c.l.b16 %v617
    %v2270 = vunpack.c.h.b16 %v617
    %v2271 = vunpack.c.l.b16 %v618
    %v2272 = vunpack.c.h.b16 %v618
    %v2273 = vunpack.c.l.b16 %v619
    %v2274 = vunpack.c.h.b16 %v619
    %v2275 = vunpack.c.l.b16 %v620
    %v2276 = vunpack.c.h.b16 %v620
    %v2277 = vunpack.c.l.b16 %v621
    %v2278 = vunpack.c.h.b16 %v621
    %v2279 = vunpack.c.l.b16 %v622
    %v2280 = vunpack.c.h.b16 %v622
    %v2281 = vunpack.c.l.b16 %v623
    %v2282 = vunpack.c.h.b16 %v623
    %v2283 = vunpack.c.l.b16 %v624
    %v2284 = vunpack.c.h.b16 %v624
    %v2285 = vunpack.c.l.b16 %v625
    %v2286 = vunpack.c.h.b16 %v625
    %v2287 = vunpack.c.l.b16 %v626
    %v2288 = vunpack.c.h.b16 %v626
    %v2289 = vunpack.c.l.b16 %v627
    %v2290 = vunpack.c.h.b16 %v627
    %v2291 = vunpack.c.l.b16 %v628
    %v2292 = vunpack.c.h.b16 %v628
    %v2293 = vunpack.c.l.b16 %v629
    %v2294 = vunpack.c.h.b16 %v629
    %v2295 = vunpack.c.l.b16 %v630
    %v2296 = vunpack.c.h.b16 %v630
    %v2297 = vunpack.c.l.b16 %v631
    %v2298 = vunpack.c.h.b16 %v631
    %v2299 = vunpack.c.l.b16 %v632
    %v2300 = vunpack.c.h.b16 %v632
    %v2301 = vunpack.c.l.b16 %v633
    %v2302 = vunpack.c.h.b16 %v633
    %v2303 = vunpack.c.l.b16 %v634
    %v2304 = vunpack.c.h.b16 %v634
    %v2305 = vunpack.c.l.b16 %v635
    %v2306 = vunpack.c.h.b16 %v635
    %v2307 = vunpack.c.l.b16 %v636
    %v2308 = vunpack.c.h.b16 %v636
    %v2309 = vunpack.c.l.b16 %v637
    %v2310 = vunpack.c.h.b16 %v637
    %v2311 = vunpack.c.l.b16 %v638
    %v2312 = vunpack.c.h.b16 %v638
    %v2313 = vunpack.c.l.b16 %v639
    %v2314 = vunpack.c.h.b16 %v639
    %v2315 = vunpack.c.l.b16 %v640
    %v2316 = vunpack.c.h.b16 %v640
    %v2317 = vunpack.c.l.b16 %v641
    %v2318 = vunpack.c.h.b16 %v641
    %v2319 = vunpack.c.l.b16 %v642
    %v2320 = vunpack.c.h.b16 %v642
    %v2321 = vunpack.c.l.b16 %v643
    %v2322 = vunpack.c.h.b16 %v643
    %v2323 = vunpack.c.l.b16 %v644
    %v2324 = vunpack.c.h.b16 %v644
    %v2325 = vunpack.c.l.b16 %v645
    %v2326 = vunpack.c.h.b16 %v645
    %v2327 = vunpack.c.l.b16 %v646
    %v2328 = vunpack.c.h.b16 %v646
    %v2329 = vunpack.c.l.b16 %v647
    %v2330 = vunpack.c.h.b16 %v647
    %v2331 = vunpack.c.l.b16 %v648
    %v2332 = vunpack.c.h.b16 %v648
    %v2333 = vunpack.c.l.b16 %v649
    %v2334 = vunpack.c.h.b16 %v649
    %v2335 = vunpack.c.l.b16 %v650
    %v2336 = vunpack.c.h.b16 %v650
    %v2337 = vunpack.c.l.b16 %v651
    %v2338 = vunpack.c.h.b16 %v651
    %v2339 = vunpack.c.l.b16 %v652
    %v2340 = vunpack.c.h.b16 %v652
    %v2341 = vunpack.c.l.b16 %v653
    %v2342 = vunpack.c.h.b16 %v653
    %v2343 = vunpack.c.l.b16 %v654
    %v2344 = vunpack.c.h.b16 %v654
    %v2345 = vunpack.c.l.b16 %v655
    %v2346 = vunpack.c.h.b16 %v655
    %v2347 = vunpack.c.l.b16 %v656
    %v2348 = vunpack.c.h.b16 %v656
    %v2349 = vunpack.c.l.b16 %v657
    %v2350 = vunpack.c.h.b16 %v657
    %v2351 = vunpack.c.l.b16 %v658
    %v2352 = vunpack.c.h.b16 %v658
    %v2353 = vunpack.c.l.b16 %v659
    %v2354 = vunpack.c.h.b16 %v659
    %v2355 = vunpack.c.l.b16 %v660
    %v2356 = vunpack.c.h.b16 %v660
    %v2357 = vunpack.c.l.b16 %v661
    %v2358 = vunpack.c.h.b16 %v661
    %v2359 = vunpack.c.l.b16 %v662
    %v2360 = vunpack.c.h.b16 %v662
    %v2361 = vunpack.c.l.b16 %v663
    %v2362 = vunpack.c.h.b16 %v663
    %v2363 = vunpack.c.l.b16 %v664
    %v2364 = vunpack.c.h.b16 %v664
    %v2365 = vunpack.c.l.b16 %v665
    %v2366 = vunpack.c.h.b16 %v665
    %v2367 = vunpack.c.l.b16 %v666
    %v2368 = vunpack.c.h.b16 %v666
    %v2369 = vunpack.c.l.b16 %v667
    %v2370 = vunpack.c.h.b16 %v667
    %v2371 = vunpack.c.l.b16 %v668
    %v2372 = vunpack.c.h.b16 %v668
    %v2373 = vunpack.c.l.b16 %v669
    %v2374 = vunpack.c.h.b16 %v669
    %v2375 = vunpack.c.l.b16 %v670
    %v2376 = vunpack.c.h.b16 %v670
    %v2377 = vunpack.c.l.b16 %v671
    %v2378 = vunpack.c.h.b16 %v671
    %v2379 = vunpack.c.l.b16 %v672
    %v2380 = vunpack.c.h.b16 %v672
    %v2381 = vunpack.c.l.b16 %v673
    %v2382 = vunpack.c.h.b16 %v673
    %v2383 = vunpack.c.l.b16 %v674
    %v2384 = vunpack.c.h.b16 %v674
    %v2385 = vunpack.c.l.b16 %v675
    %v2386 = vunpack.c.h.b16 %v675
    %v2387 = vunpack.c.l.b16 %v676
    %v2388 = vunpack.c.h.b16 %v676
    %v2389 = vunpack.c.l.b16 %v677
    %v2390 = vunpack.c.h.b16 %v677
    %v2391 = vunpack.c.l.b16 %v678
    %v2392 = vunpack.c.h.b16 %v678
    %v2393 = vunpack.c.l.b16 %v679
    %v2394 = vunpack.c.h.b16 %v679
    %v2395 = vunpack.c.l.b16 %v680
    %v2396 = vunpack.c.h.b16 %v680
    %v2397 = vunpack.c.l.b16 %v681
    %v2398 = vunpack.c.h.b16 %v681
    %v2399 = vunpack.c.l.b16 %v682
    %v2400 = vunpack.c.h.b16 %v682
    %v2401 = vunpack.c.l.b16 %v683
    %v2402 = vunpack.c.h.b16 %v683
    %v2403 = vunpack.c.l.b16 %v684
    %v2404 = vunpack.c.h.b16 %v684
    %v2405 = vunpack.c.l.b16 %v685
    %v2406 = vunpack.c.h.b16 %v685
    %v2407 = vunpack.c.l.b16 %v686
    %v2408 = vunpack.c.h.b16 %v686
    %v2409 = vunpack.c.l.b16 %v687
    %v2410 = vunpack.c.h.b16 %v687
    %v2411 = vunpack.c.l.b16 %v688
    %v2412 = vunpack.c.h.b16 %v688
    %v2413 = vunpack.c.l.b16 %v689
    %v2414 = vunpack.c.h.b16 %v689
    %v2415 = vunpack.c.l.b16 %v690
    %v2416 = vunpack.c.h.b16 %v690
    %v2417 = vunpack.c.l.b16 %v691
    %v2418 = vunpack.c.h.b16 %v691
    %v2419 = vunpack.c.l.b16 %v692
    %v2420 = vunpack.c.h.b16 %v692
    %v2421 = vunpack.c.l.b16 %v693
    %v2422 = vunpack.c.h.b16 %v693
    %v2423 = vunpack.c.l.b16 %v694
    %v2424 = vunpack.c.h.b16 %v694
    %v2425 = vunpack.c.l.b16 %v695
    %v2426 = vunpack.c.h.b16 %v695
    %v2427 = vunpack.c.l.b16 %v696
    %v2428 = vunpack.c.h.b16 %v696
    %v2429 = vunpack.c.l.b16 %v697
    %v2430 = vunpack.c.h.b16 %v697
    %v2431 = vunpack.c.l.b16 %v698
    %v2432 = vunpack.c.h.b16 %v698
    %v2433 = vunpack.c.l.b16 %v699
    %v2434 = vunpack.c.h.b16 %v699
    %v2435 = vunpack.c.l.b16 %v700
    %v2436 = vunpack.c.h.b16 %v700
    %v2437 = vunpack.c.l.b16 %v701
    %v2438 = vunpack.c.h.b16 %v701
    %v2439 = vunpack.c.l.b16 %v702
    %v2440 = vunpack.c.h.b16 %v702
    %v2441 = vunpack.c.l.b16 %v703
    %v2442 = vunpack.c.h.b16 %v703
    %v2443 = vunpack.c.l.b16 %v704
    %v2444 = vunpack.c.h.b16 %v704
    %v2445 = vunpack.c.l.b16 %v705
    %v2446 = vunpack.c.h.b16 %v705
    %v2447 = vunpack.c.l.b16 %v706
    %v2448 = vunpack.c.h.b16 %v706
    %v2449 = vunpack.c.l.b16 %v707
    %v2450 = vunpack.c.h.b16 %v707
    %v2451 = vunpack.c.l.b16 %v708
    %v2452 = vunpack.c.h.b16 %v708
    %v2453 = vunpack.c.l.b16 %v709
    %v2454 = vunpack.c.h.b16 %v709
    %v2455 = vunpack.c.l.b16 %v710
    %v2456 = vunpack.c.h.b16 %v710
    %v2457 = vunpack.c.l.b16 %v711
    %v2458 = vunpack.c.h.b16 %v711
    %v2459 = vunpack.c.l.b16 %v712
    %v2460 = vunpack.c.h.b16 %v712
    %v2461 = vunpack.c.l.b16 %v713
    %v2462 = vunpack.c.h.b16 %v713
    %v2463 = vunpack.c.l.b16 %v714
    %v2464 = vunpack.c.h.b16 %v714
    %v2465 = vunpack.c.l.b16 %v715
    %v2466 = vunpack.c.h.b16 %v715
    %v2467 = vunpack.c.l.b16 %v716
    %v2468 = vunpack.c.h.b16 %v716
    %v2469 = vunpack.c.l.b16 %v717
    %v2470 = vunpack.c.h.b16 %v717
    %v2471 = vunpack.c.l.b16 %v718
    %v2472 = vunpack.c.h.b16 %v718
    %v2473 = vunpack.c.l.b16 %v719
    %v2474 = vunpack.c.h.b16 %v719
    %v2475 = vunpack.c.l.b16 %v720
    %v2476 = vunpack.c.h.b16 %v720
    %v2477 = vunpack.c.l.b16 %v721
    %v2478 = vunpack.c.h.b16 %v721
    %v2479 = vunpack.c.l.b16 %v722
    %v2480 = vunpack.c.h.b16 %v722
    %v2481 = vunpack.c.l.b16 %v723
    %v2482 = vunpack.c.h.b16 %v723
    %v2483 = vunpack.c.l.b16 %v724
    %v2484 = vunpack.c.h.b16 %v724
    %v2485 = vpack.c.b16 %v1341, %v1333
    %v2486 = vpack.c.b16 %v1342, %v1334
    %v2487 = vpack.c.b16 %v1343, %v1335
    %v2488 = vpack.c.b16 %v1344, %v1336
    %v2489 = vpack.c.b16 %v1345, %v1337
    %v2490 = vpack.c.b16 %v1346, %v1338
    %v2491 = vpack.c.b16 %v1347, %v1339
    %v2492 = vpack.c.b16 %v1348, %v1340
    %v2493 = vpack.c.b16 %v1357, %v1349
    %v2494 = vpack.c.b16 %v1358, %v1350
    %v2495 = vpack.c.b16 %v1359, %v1351
    %v2496 = vpack.c.b16 %v1360, %v1352
    %v2497 = vpack.c.b16 %v1361, %v1353
    %v2498 = vpack.c.b16 %v1362, %v1354
    %v2499 = vpack.c.b16 %v1363, %v1355
    %v2500 = vpack.c.b16 %v1364, %v1356
    %v2501 = vpack.c.b16 %v1373, %v1365
    %v2502 = vpack.c.b16 %v1374, %v1366
    %v2503 = vpack.c.b16 %v1375, %v1367
    %v2504 = vpack.c.b16 %v1376, %v1368
    %v2505 = vpack.c.b16 %v1377, %v1369
    %v2506 = vpack.c.b16 %v1378, %v1370
    %v2507 = vpack.c.b16 %v1379, %v1371
    %v2508 = vpack.c.b16 %v1380, %v1372
    %v2509 = vpack.c.b16 %v1389, %v1381
    %v2510 = vpack.c.b16 %v1390, %v1382
    %v2511 = vpack.c.b16 %v1391, %v1383
    %v2512 = vpack.c.b16 %v1392, %v1384
    %v2513 = vpack.c.b16 %v1393, %v1385
    %v2514 = vpack.c.b16 %v1394, %v1386
    %v2515 = vpack.c.b16 %v1395, %v1387
    %v2516 = vpack.c.b16 %v1396, %v1388
    %v2517 = vpack.c.b16 %v1405, %v1397
    %v2518 = vpack.c.b16 %v1406, %v1398
    %v2519 = vpack.c.b16 %v1407, %v1399
    %v2520 = vpack.c.b16 %v1408, %v1400
    %v2521 = vpack.c.b16 %v1409, %v1401
    %v2522 = vpack.c.b16 %v1410, %v1402
    %v2523 = vpack.c.b16 %v1411, %v1403
    %v2524 = vpack.c.b16 %v1412, %v1404
    %v2525 = vpack.c.b16 %v1421, %v1413
    %v2526 = vpack.c.b16 %v1422, %v1414
    %v2527 = vpack.c.b16 %v1423, %v1415
    %v2528 = vpack.c.b16 %v1424, %v1416
    %v2529 = vpack.c.b16 %v1425, %v1417
    %v2530 = vpack.c.b16 %v1426, %v1418
    %v2531 = vpack.c.b16 %v1427, %v1419
    %v2532 = vpack.c.b16 %v1428, %v1420
    %v2533 = vpack.c.b16 %v1437, %v1429
    %v2534 = vpack.c.b16 %v1438, %v1430
    %v2535 = vpack.c.b16 %v1439, %v1431
    %v2536 = vpack.c.b16 %v1440, %v1432
    %v2537 = vpack.c.b16 %v1441, %v1433
    %v2538 = vpack.c.b16 %v1442, %v1434
    %v2539 = vpack.c.b16 %v1443, %v1435
    %v2540 = vpack.c.b16 %v1444, %v1436
    %v2541 = vpack.c.b16 %v1453, %v1445
    %v2542 = vpack.c.b16 %v1454, %v1446
    %v2543 = vpack.c.b16 %v1455, %v1447
    %v2544 = vpack.c.b16 %v1456, %v1448
    %v2545 = vpack.c.b16 %v1457, %v1449
    %v2546 = vpack.c.b16 %v1458, %v1450
    %v2547 = vpack.c.b16 %v1459, %v1451
    %v2548 = vpack.c.b16 %v1460, %v1452
    %v2549 = vpack.c.b16 %v1469, %v1461
    %v2550 = vpack.c.b16 %v1470, %v1462
    %v2551 = vpack.c.b16 %v1471, %v1463
    %v2552 = vpack.c.b16 %v1472, %v1464
    %v2553 = vpack.c.b16 %v1473, %v1465
    %v2554 = vpack.c.b16 %v1474, %v1466
    %v2555 = vpack.c.b16 %v1475, %v1467
    %v2556 = vpack.c.b16 %v1476, %v1468
    %v2557 = vpack.c.b16 %v1485, %v1477
    %v2558 = vpack.c.b16 %v1486, %v1478
    %v2559 = vpack.c.b16 %v1487, %v1479
    %v2560 = vpack.c.b16 %v1488, %v1480
    %v2561 = vpack.c.b16 %v1489, %v1481
    %v2562 = vpack.c.b16 %v1490, %v1482
    %v2563 = vpack.c.b16 %v1491, %v1483
    %v2564 = vpack.c.b16 %v1492, %v1484
    %v2565 = vpack.c.b16 %v1501, %v1493
    %v2566 = vpack.c.b16 %v1502, %v1494
    %v2567 = vpack.c.b16 %v1503, %v1495
    %v2568 = vpack.c.b16 %v1504, %v1496
    %v2569 = vpack.c.b16 %v1505, %v1497
    %v2570 = vpack.c.b16 %v1506, %v1498
    %v2571 = vpack.c.b16 %v1507, %v1499
    %v2572 = vpack.c.b16 %v1508, %v1500
    %v2573 = vpack.c.b16 %v1517, %v1509
    %v2574 = vpack.c.b16 %v1518, %v1510
    %v2575 = vpack.c.b16 %v1519, %v1511
    %v2576 = vpack.c.b16 %v1520, %v1512
    %v2577 = vpack.c.b16 %v1521, %v1513
    %v2578 = vpack.c.b16 %v1522, %v1514
    %v2579 = vpack.c.b16 %v1523, %v1515
    %v2580 = vpack.c.b16 %v1524, %v1516
    %v2581 = vpack.c.b16 %v1533, %v1525
    %v2582 = vpack.c.b16 %v1534, %v1526
    %v2583 = vpack.c.b16 %v1535, %v1527
    %v2584 = vpack.c.b16 %v1536, %v1528
    %v2585 = vpack.c.b16 %v1537, %v1529
    %v2586 = vpack.c.b16 %v1538, %v1530
    %v2587 = vpack.c.b16 %v1539, %v1531
    %v2588 = vpack.c.b16 %v1540, %v1532
    %v2589 = vpack.c.b16 %v1549, %v1541
    %v2590 = vpack.c.b16 %v1550, %v1542
    %v2591 = vpack.c.b16 %v1551, %v1543
    %v2592 = vpack.c.b16 %v1552, %v1544
    %v2593 = vpack.c.b16 %v1553, %v1545
    %v2594 = vpack.c.b16 %v1554, %v1546
    %v2595 = vpack.c.b16 %v1555, %v1547
    %v2596 = vpack.c.b16 %v1556, %v1548
    %v2597 = vpack.c.b16 %v1565, %v1557
    %v2598 = vpack.c.b16 %v1566, %v1558
    %v2599 = vpack.c.b16 %v1567, %v1559
    %v2600 = vpack.c.b16 %v1568, %v1560
    %v2601 = vpack.c.b16 %v1569, %v1561
    %v2602 = vpack.c.b16 %v1570, %v1562
    %v2603 = vpack.c.b16 %v1571, %v1563
    %v2604 = vpack.c.b16 %v1572, %v1564
    %v2605 = vpack.c.b16 %v1581, %v1573
    %v2606 = vpack.c.b16 %v1582, %v1574
    %v2607 = vpack.c.b16 %v1583, %v1575
    %v2608 = vpack.c.b16 %v1584, %v1576
    %v2609 = vpack.c.b16 %v1585, %v1577
    %v2610 = vpack.c.b16 %v1586, %v1578
    %v2611 = vpack.c.b16 %v1587, %v1579
    %v2612 = vpack.c.b16 %v1588, %v1580
    %v2613 = vpack.c.b16 %v1597, %v1589
    %v2614 = vpack.c.b16 %v1598, %v1590
    %v2615 = vpack.c.b16 %v1599, %v1591
    %v2616 = vpack.c.b16 %v1600, %v1592
    %v2617 = vpack.c.b16 %v1601, %v1593
    %v2618 = vpack.c.b16 %v1602, %v1594
    %v2619 = vpack.c.b16 %v1603, %v1595
    %v2620 = vpack.c.b16 %v1604, %v1596
    %v2621 = vpack.c.b16 %v1613, %v1605
    %v2622 = vpack.c.b16 %v1614, %v1606
    %v2623 = vpack.c.b16 %v1615, %v1607
    %v2624 = vpack.c.b16 %v1616, %v1608
    %v2625 = vpack.c.b16 %v1617, %v1609
    %v2626 = vpack.c.b16 %v1618, %v1610
    %v2627 = vpack.c.b16 %v1619, %v1611
    %v2628 = vpack.c.b16 %v1620, %v1612
    %v2629 = vpack.c.b16 %v1629, %v1621
    %v2630 = vpack.c.b16 %v1630, %v1622
    %v2631 = vpack.c.b16 %v1631, %v1623
    %v2632 = vpack.c.b16 %v1632, %v1624
    %v2633 = vpack.c.b16 %v1633, %v1625
    %v2634 = vpack.c.b16 %v1634, %v1626
    %v2635 = vpack.c.b16 %v1635, %v1627
    %v2636 = vpack.c.b16 %v1636, %v1628
    %v2637 = vpack.c.b16 %v1645, %v1637
    %v2638 = vpack.c.b16 %v1646, %v1638
    %v2639 = vpack.c.b16 %v1647, %v1639
    %v2640 = vpack.c.b16 %v1648, %v1640
    %v2641 = vpack.c.b16 %v1649, %v1641
    %v2642 = vpack.c.b16 %v1650, %v1642
    %v2643 = vpack.c.b16 %v1651, %v1643
    %v2644 = vpack.c.b16 %v1652, %v1644
    %v2645 = vpack.c.b16 %v1661, %v1653
    %v2646 = vpack.c.b16 %v1662, %v1654
    %v2647 = vpack.c.b16 %v1663, %v1655
    %v2648 = vpack.c.b16 %v1664, %v1656
    %v2649 = vpack.c.b16 %v1665, %v1657
    %v2650 = vpack.c.b16 %v1666, %v1658
    %v2651 = vpack.c.b16 %v1667, %v1659
    %v2652 = vpack.c.b16 %v1668, %v1660
    %v2653 = vpack.c.b16 %v1677, %v1669
    %v2654 = vpack.c.b16 %v1678, %v1670
    %v2655 = vpack.c.b16 %v1679, %v1671
    %v2656 = vpack.c.b16 %v1680, %v1672
    %v2657 = vpack.c.b16 %v1681, %v1673
    %v2658 = vpack.c.b16 %v1682, %v1674
    %v2659 = vpack.c.b16 %v1683, %v1675
    %v2660 = vpack.c.b16 %v1684, %v1676
    %v2661 = vpack.c.b16 %v1693, %v1685
    %v2662 = vpack.c.b16 %v1694, %v1686
    %v2663 = vpack.c.b16 %v1695, %v1687
    %v2664 = vpack.c.b16 %v1696, %v1688
    %v2665 = vpack.c.b16 %v1697, %v1689
    %v2666 = vpack.c.b16 %v1698, %v1690
    %v2667 = vpack.c.b16 %v1699, %v1691
    %v2668 = vpack.c.b16 %v1700, %v1692
    %v2669 = vpack.c.b16 %v1709, %v1701
    %v2670 = vpack.c.b16 %v1710, %v1702
    %v2671 = vpack.c.b16 %v1711, %v1703
    %v2672 = vpack.c.b16 %v1712, %v1704
    %v2673 = vpack.c.b16 %v1713, %v1705
    %v2674 = vpack.c.b16 %v1714, %v1706
    %v2675 = vpack.c.b16 %v1715, %v1707
    %v2676 = vpack.c.b16 %v1716, %v1708
    %v2677 = vpack.c.b16 %v1725, %v1717
    %v2678 = vpack.c.b16 %v1726, %v1718
    %v2679 = vpack.c.b16 %v1727, %v1719
    %v2680 = vpack.c.b16 %v1728, %v1720
    %v2681 = vpack.c.b16 %v1729, %v1721
    %v2682 = vpack.c.b16 %v1730, %v1722
    %v2683 = vpack.c.b16 %v1731, %v1723
    %v2684 = vpack.c.b16 %v1732, %v1724
    %v2685 = vpack.c.b16 %v1741, %v1733
    %v2686 = vpack.c.b16 %v1742, %v1734
    %v2687 = vpack.c.b16 %v1743, %v1735
    %v2688 = vpack.c.b16 %v1744, %v1736
    %v2689 = vpack.c.b16 %v1745, %v1737
    %v2690 = vpack.c.b16 %v1746, %v1738
    %v2691 = vpack.c.b16 %v1747, %v1739
    %v2692 = vpack.c.b16 %v1748, %v1740
    %v2693 = vpack.c.b16 %v1757, %v1749
    %v2694 = vpack.c.b16 %v1758, %v1750
    %v2695 = vpack.c.b16 %v1759, %v1751
    %v2696 = vpack.c.b16 %v1760, %v1752
    %v2697 = vpack.c.b16 %v1761, %v1753
    %v2698 = vpack.c.b16 %v1762, %v1754
    %v2699 = vpack.c.b16 %v1763, %v1755
    %v2700 = vpack.c.b16 %v1764, %v1756
    %v2701 = vpack.c.b16 %v1773, %v1765
    %v2702 = vpack.c.b16 %v1774, %v1766
    %v2703 = vpack.c.b16 %v1775, %v1767
    %v2704 = vpack.c.b16 %v1776, %v1768
    %v2705 = vpack.c.b16 %v1777, %v1769
    %v2706 = vpack.c.b16 %v1778, %v1770
    %v2707 = vpack.c.b16 %v1779, %v1771
    %v2708 = vpack.c.b16 %v1780, %v1772
    %v2709 = vpack.c.b16 %v1789, %v1781
    %v2710 = vpack.c.b16 %v1790, %v1782
    %v2711 = vpack.c.b16 %v1791, %v1783
    %v2712 = vpack.c.b16 %v1792, %v1784
    %v2713 = vpack.c.b16 %v1793, %v1785
    %v2714 = vpack.c.b16 %v1794, %v1786
    %v2715 = vpack.c.b16 %v1795, %v1787
    %v2716 = vpack.c.b16 %v1796, %v1788
    %v2717 = vpack.c.b16 %v1805, %v1797
    %v2718 = vpack.c.b16 %v1806, %v1798
    %v2719 = vpack.c.b16 %v1807, %v1799
    %v2720 = vpack.c.b16 %v1808, %v1800
    %v2721 = vpack.c.b16 %v1809, %v1801
    %v2722 = vpack.c.b16 %v1810, %v1802
    %v2723 = vpack.c.b16 %v1811, %v1803
    %v2724 = vpack.c.b16 %v1812, %v1804
    %v2725 = vpack.c.b16 %v1821, %v1813
    %v2726 = vpack.c.b16 %v1822, %v1814
    %v2727 = vpack.c.b16 %v1823, %v1815
    %v2728 = vpack.c.b16 %v1824, %v1816
    %v2729 = vpack.c.b16 %v1825, %v1817
    %v2730 = vpack.c.b16 %v1826, %v1818
    %v2731 = vpack.c.b16 %v1827, %v1819
    %v2732 = vpack.c.b16 %v1828, %v1820
    %v2733 = vpack.c.b16 %v1837, %v1829
    %v2734 = vpack.c.b16 %v1838, %v1830
    %v2735 = vpack.c.b16 %v1839, %v1831
    %v2736 = vpack.c.b16 %v1840, %v1832
    %v2737 = vpack.c.b16 %v1841, %v1833
    %v2738 = vpack.c.b16 %v1842, %v1834
    %v2739 = vpack.c.b16 %v1843, %v1835
    %v2740 = vpack.c.b16 %v1844, %v1836
    %v2741 = vpack.c.b16 %v1853, %v1845
    %v2742 = vpack.c.b16 %v1854, %v1846
    %v2743 = vpack.c.b16 %v1855, %v1847
    %v2744 = vpack.c.b16 %v1856, %v1848
    %v2745 = vpack.c.b16 %v1857, %v1849
    %v2746 = vpack.c.b16 %v1858, %v1850
    %v2747 = vpack.c.b16 %v1859, %v1851
    %v2748 = vpack.c.b16 %v1860, %v1852
    %v2749 = vpack.c.b16 %v1869, %v1861
    %v2750 = vpack.c.b16 %v1870, %v1862
    %v2751 = vpack.c.b16 %v1871, %v1863
    %v2752 = vpack.c.b16 %v1872, %v1864
    %v2753 = vpack.c.b16 %v1873, %v1865
    %v2754 = vpack.c.b16 %v1874, %v1866
    %v2755 = vpack.c.b16 %v1875, %v1867
    %v2756 = vpack.c.b16 %v1876, %v1868
    %v2757 = vpack.c.b16 %v1885, %v1877
    %v2758 = vpack.c.b16 %v1886, %v1878
    %v2759 = vpack.c.b16 %v1887, %v1879
    %v2760 = vpack.c.b16 %v1888, %v1880
    %v2761 = vpack.c.b16 %v1889, %v1881
    %v2762 = vpack.c.b16 %v1890, %v1882
    %v2763 = vpack.c.b16 %v1891, %v1883
    %v2764 = vpack.c.b16 %v1892, %v1884
    %v2765 = vpack.c.b16 %v1901, %v1893
    %v2766 = vpack.c.b16 %v1902, %v1894
    %v2767 = vpack.c.b16 %v1903, %v1895
    %v2768 = vpack.c.b16 %v1904, %v1896
    %v2769 = vpack.c.b16 %v1905, %v1897
    %v2770 = vpack.c.b16 %v1906, %v1898
    %v2771 = vpack.c.b16 %v1907, %v1899
    %v2772 = vpack.c.b16 %v1908, %v1900
    %v2773 = vpack.c.b16 %v1917, %v1909
    %v2774 = vpack.c.b16 %v1918, %v1910
    %v2775 = vpack.c.b16 %v1919, %v1911
    %v2776 = vpack.c.b16 %v1920, %v1912
    %v2777 = vpack.c.b16 %v1921, %v1913
    %v2778 = vpack.c.b16 %v1922, %v1914
    %v2779 = vpack.c.b16 %v1923, %v1915
    %v2780 = vpack.c.b16 %v1924, %v1916
    %v2781 = vpack.c.b16 %v1933, %v1925
    %v2782 = vpack.c.b16 %v1934, %v1926
    %v2783 = vpack.c.b16 %v1935, %v1927
    %v2784 = vpack.c.b16 %v1936, %v1928
    %v2785 = vpack.c.b16 %v1937, %v1929
    %v2786 = vpack.c.b16 %v1938, %v1930
    %v2787 = vpack.c.b16 %v1939, %v1931
    %v2788 = vpack.c.b16 %v1940, %v1932
    %v2789 = vpack.c.b16 %v1949, %v1941
    %v2790 = vpack.c.b16 %v1950, %v1942
    %v2791 = vpack.c.b16 %v1951, %v1943
    %v2792 = vpack.c.b16 %v1952, %v1944
    %v2793 = vpack.c.b16 %v1953, %v1945
    %v2794 = vpack.c.b16 %v1954, %v1946
    %v2795 = vpack.c.b16 %v1955, %v1947
    %v2796 = vpack.c.b16 %v1956, %v1948
    %v2797 = vpack.c.b16 %v1965, %v1957
    %v2798 = vpack.c.b16 %v1966, %v1958
    %v2799 = vpack.c.b16 %v1967, %v1959
    %v2800 = vpack.c.b16 %v1968, %v1960
    %v2801 = vpack.c.b16 %v1969, %v1961
    %v2802 = vpack.c.b16 %v1970, %v1962
    %v2803 = vpack.c.b16 %v1971, %v1963
    %v2804 = vpack.c.b16 %v1972, %v1964
    %v2805 = vpack.c.b16 %v1981, %v1973
    %v2806 = vpack.c.b16 %v1982, %v1974
    %v2807 = vpack.c.b16 %v1983, %v1975
    %v2808 = vpack.c.b16 %v1984, %v1976
    %v2809 = vpack.c.b16 %v1985, %v1977
    %v2810 = vpack.c.b16 %v1986, %v1978
    %v2811 = vpack.c.b16 %v1987, %v1979
    %v2812 = vpack.c.b16 %v1988, %v1980
    %v2813 = vpack.c.b16 %v1997, %v1989
    %v2814 = vpack.c.b16 %v1998, %v1990
    %v2815 = vpack.c.b16 %v1999, %v1991
    %v2816 = vpack.c.b16 %v2000, %v1992
    %v2817 = vpack.c.b16 %v2001, %v1993
    %v2818 = vpack.c.b16 %v2002, %v1994
    %v2819 = vpack.c.b16 %v2003, %v1995
    %v2820 = vpack.c.b16 %v2004, %v1996
    %v2821 = vpack.c.b16 %v2013, %v2005
    %v2822 = vpack.c.b16 %v2014, %v2006
    %v2823 = vpack.c.b16 %v2015, %v2007
    %v2824 = vpack.c.b16 %v2016, %v2008
    %v2825 = vpack.c.b16 %v2017, %v2009
    %v2826 = vpack.c.b16 %v2018, %v2010
    %v2827 = vpack.c.b16 %v2019, %v2011
    %v2828 = vpack.c.b16 %v2020, %v2012
    %v2829 = vpack.c.b16 %v2029, %v2021
    %v2830 = vpack.c.b16 %v2030, %v2022
    %v2831 = vpack.c.b16 %v2031, %v2023
    %v2832 = vpack.c.b16 %v2032, %v2024
    %v2833 = vpack.c.b16 %v2033, %v2025
    %v2834 = vpack.c.b16 %v2034, %v2026
    %v2835 = vpack.c.b16 %v2035, %v2027
    %v2836 = vpack.c.b16 %v2036, %v2028
    %v2837 = vpack.c.b16 %v2045, %v2037
    %v2838 = vpack.c.b16 %v2046, %v2038
    %v2839 = vpack.c.b16 %v2047, %v2039
    %v2840 = vpack.c.b16 %v2048, %v2040
    %v2841 = vpack.c.b16 %v2049, %v2041
    %v2842 = vpack.c.b16 %v2050, %v2042
    %v2843 = vpack.c.b16 %v2051, %v2043
    %v2844 = vpack.c.b16 %v2052, %v2044
    %v2845 = vpack.c.b16 %v2061, %v2053
    %v2846 = vpack.c.b16 %v2062, %v2054
    %v2847 = vpack.c.b16 %v2063, %v2055
    %v2848 = vpack.c.b16 %v2064, %v2056
    %v2849 = vpack.c.b16 %v2065, %v2057
    %v2850 = vpack.c.b16 %v2066, %v2058
    %v2851 = vpack.c.b16 %v2067, %v2059
    %v2852 = vpack.c.b16 %v2068, %v2060
    %v2853 = vpack.c.b16 %v2077, %v2069
    %v2854 = vpack.c.b16 %v2078, %v2070
    %v2855 = vpack.c.b16 %v2079, %v2071
    %v2856 = vpack.c.b16 %v2080, %v2072
    %v2857 = vpack.c.b16 %v2081, %v2073
    %v2858 = vpack.c.b16 %v2082, %v2074
    %v2859 = vpack.c.b16 %v2083, %v2075
    %v2860 = vpack.c.b16 %v2084, %v2076
    %v2861 = vpack.c.b16 %v2093, %v2085
    %v2862 = vpack.c.b16 %v2094, %v2086
    %v2863 = vpack.c.b16 %v2095, %v2087
    %v2864 = vpack.c.b16 %v2096, %v2088
    %v2865 = vpack.c.b16 %v2097, %v2089
    %v2866 = vpack.c.b16 %v2098, %v2090
    %v2867 = vpack.c.b16 %v2099, %v2091
    %v2868 = vpack.c.b16 %v2100, %v2092
    %v2869 = vpack.c.b16 %v2109, %v2101
    %v2870 = vpack.c.b16 %v2110, %v2102
    %v2871 = vpack.c.b16 %v2111, %v2103
    %v2872 = vpack.c.b16 %v2112, %v2104
    %v2873 = vpack.c.b16 %v2113, %v2105
    %v2874 = vpack.c.b16 %v2114, %v2106
    %v2875 = vpack.c.b16 %v2115, %v2107
    %v2876 = vpack.c.b16 %v2116, %v2108
    %v2877 = vpack.c.b16 %v2125, %v2117
    %v2878 = vpack.c.b16 %v2126, %v2118
    %v2879 = vpack.c.b16 %v2127, %v2119
    %v2880 = vpack.c.b16 %v2128, %v2120
    %v2881 = vpack.c.b16 %v2129, %v2121
    %v2882 = vpack.c.b16 %v2130, %v2122
    %v2883 = vpack.c.b16 %v2131, %v2123
    %v2884 = vpack.c.b16 %v2132, %v2124
    %v2885 = vpack.c.b16 %v2141, %v2133
    %v2886 = vpack.c.b16 %v2142, %v2134
    %v2887 = vpack.c.b16 %v2143, %v2135
    %v2888 = vpack.c.b16 %v2144, %v2136
    %v2889 = vpack.c.b16 %v2145, %v2137
    %v2890 = vpack.c.b16 %v2146, %v2138
    %v2891 = vpack.c.b16 %v2147, %v2139
    %v2892 = vpack.c.b16 %v2148, %v2140
    %v2893 = vpack.c.b16 %v2157, %v2149
    %v2894 = vpack.c.b16 %v2158, %v2150
    %v2895 = vpack.c.b16 %v2159, %v2151
    %v2896 = vpack.c.b16 %v2160, %v2152
    %v2897 = vpack.c.b16 %v2161, %v2153
    %v2898 = vpack.c.b16 %v2162, %v2154
    %v2899 = vpack.c.b16 %v2163, %v2155
    %v2900 = vpack.c.b16 %v2164, %v2156
    %v2901 = vpack.c.b16 %v2173, %v2165
    %v2902 = vpack.c.b16 %v2174, %v2166
    %v2903 = vpack.c.b16 %v2175, %v2167
    %v2904 = vpack.c.b16 %v2176, %v2168
    %v2905 = vpack.c.b16 %v2177, %v2169
    %v2906 = vpack.c.b16 %v2178, %v2170
    %v2907 = vpack.c.b16 %v2179, %v2171
    %v2908 = vpack.c.b16 %v2180, %v2172
    %v2909 = vpack.c.b16 %v2189, %v2181
    %v2910 = vpack.c.b16 %v2190, %v2182
    %v2911 = vpack.c.b16 %v2191, %v2183
    %v2912 = vpack.c.b16 %v2192, %v2184
    %v2913 = vpack.c.b16 %v2193, %v2185
    %v2914 = vpack.c.b16 %v2194, %v2186
    %v2915 = vpack.c.b16 %v2195, %v2187
    %v2916 = vpack.c.b16 %v2196, %v2188
    %v2917 = vpack.c.b16 %v2205, %v2197
    %v2918 = vpack.c.b16 %v2206, %v2198
    %v2919 = vpack.c.b16 %v2207, %v2199
    %v2920 = vpack.c.b16 %v2208, %v2200
    %v2921 = vpack.c.b16 %v2209, %v2201
    %v2922 = vpack.c.b16 %v2210, %v2202
    %v2923 = vpack.c.b16 %v2211, %v2203
    %v2924 = vpack.c.b16 %v2212, %v2204
    %v2925 = vpack.c.b16 %v2221, %v2213
    %v2926 = vpack.c.b16 %v2222, %v2214
    %v2927 = vpack.c.b16 %v2223, %v2215
    %v2928 = vpack.c.b16 %v2224, %v2216
    %v2929 = vpack.c.b16 %v2225, %v2217
    %v2930 = vpack.c.b16 %v2226, %v2218
    %v2931 = vpack.c.b16 %v2227, %v2219
    %v2932 = vpack.c.b16 %v2228, %v2220
    %v2933 = vpack.c.b16 %v2237, %v2229
    %v2934 = vpack.c.b16 %v2238, %v2230
    %v2935 = vpack.c.b16 %v2239, %v2231
    %v2936 = vpack.c.b16 %v2240, %v2232
    %v2937 = vpack.c.b16 %v2241, %v2233
    %v2938 = vpack.c.b16 %v2242, %v2234
    %v2939 = vpack.c.b16 %v2243, %v2235
    %v2940 = vpack.c.b16 %v2244, %v2236
    %v2941 = vpack.c.b16 %v2253, %v2245
    %v2942 = vpack.c.b16 %v2254, %v2246
    %v2943 = vpack.c.b16 %v2255, %v2247
    %v2944 = vpack.c.b16 %v2256, %v2248
    %v2945 = vpack.c.b16 %v2257, %v2249
    %v2946 = vpack.c.b16 %v2258, %v2250
    %v2947 = vpack.c.b16 %v2259, %v2251
    %v2948 = vpack.c.b16 %v2260, %v2252
    %v2949 = vpack.c.b16 %v2269, %v2261
    %v2950 = vpack.c.b16 %v2270, %v2262
    %v2951 = vpack.c.b16 %v2271, %v2263
    %v2952 = vpack.c.b16 %v2272, %v2264
    %v2953 = vpack.c.b16 %v2273, %v2265
    %v2954 = vpack.c.b16 %v2274, %v2266
    %v2955 = vpack.c.b16 %v2275, %v2267
    %v2956 = vpack.c.b16 %v2276, %v2268
    %v2957 = vpack.c.b16 %v2285, %v2277
    %v2958 = vpack.c.b16 %v2286, %v2278
    %v2959 = vpack.c.b16 %v2287, %v2279
    %v2960 = vpack.c.b16 %v2288, %v2280
    %v2961 = vpack.c.b16 %v2289, %v2281
    %v2962 = vpack.c.b16 %v2290, %v2282
    %v2963 = vpack.c.b16 %v2291, %v2283
    %v2964 = vpack.c.b16 %v2292, %v2284
    %v2965 = vpack.c.b16 %v2301, %v2293
    %v2966 = vpack.c.b16 %v2302, %v2294
    %v2967 = vpack.c.b16 %v2303, %v2295
    %v2968 = vpack.c.b16 %v2304, %v2296
    %v2969 = vpack.c.b16 %v2305, %v2297
    %v2970 = vpack.c.b16 %v2306, %v2298
    %v2971 = vpack.c.b16 %v2307, %v2299
    %v2972 = vpack.c.b16 %v2308, %v2300
    %v2973 = vpack.c.b16 %v2317, %v2309
    %v2974 = vpack.c.b16 %v2318, %v2310
    %v2975 = vpack.c.b16 %v2319, %v2311
    %v2976 = vpack.c.b16 %v2320, %v2312
    %v2977 = vpack.c.b16 %v2321, %v2313
    %v2978 = vpack.c.b16 %v2322, %v2314
    %v2979 = vpack.c.b16 %v2323, %v2315
    %v2980 = vpack.c.b16 %v2324, %v2316
    %v2981 = vpack.c.b16 %v2333, %v2325
    %v2982 = vpack.c.b16 %v2334, %v2326
    %v2983 = vpack.c.b16 %v2335, %v2327
    %v2984 = vpack.c.b16 %v2336, %v2328
    %v2985 = vpack.c.b16 %v2337, %v2329
    %v2986 = vpack.c.b16 %v2338, %v2330
    %v2987 = vpack.c.b16 %v2339, %v2331
    %v2988 = vpack.c.b16 %v2340, %v2332
    %v2989 = vpack.c.b16 %v2349, %v2341
    %v2990 = vpack.c.b16 %v2350, %v2342
    %v2991 = vpack.c.b16 %v2351, %v2343
    %v2992 = vpack.c.b16 %v2352, %v2344
    %v2993 = vpack.c.b16 %v2353, %v2345
    %v2994 = vpack.c.b16 %v2354, %v2346
    %v2995 = vpack.c.b16 %v2355, %v2347
    %v2996 = vpack.c.b16 %v2356, %v2348
    %v2997 = vpack.c.b16 %v2365, %v2357
    %v2998 = vpack.c.b16 %v2366, %v2358
    %v2999 = vpack.c.b16 %v2367, %v2359
    %v3000 = vpack.c.b16 %v2368, %v2360
    %v3001 = vpack.c.b16 %v2369, %v2361
    %v3002 = vpack.c.b16 %v2370, %v2362
    %v3003 = vpack.c.b16 %v2371, %v2363
    %v3004 = vpack.c.b16 %v2372, %v2364
    %v3005 = vpack.c.b16 %v2381, %v2373
    %v3006 = vpack.c.b16 %v2382, %v2374
    %v3007 = vpack.c.b16 %v2383, %v2375
    %v3008 = vpack.c.b16 %v2384, %v2376
    %v3009 = vpack.c.b16 %v2385, %v2377
    %v3010 = vpack.c.b16 %v2386, %v2378
    %v3011 = vpack.c.b16 %v2387, %v2379
    %v3012 = vpack.c.b16 %v2388, %v2380
    %v3013 = vpack.c.b16 %v2397, %v2389
    %v3014 = vpack.c.b16 %v2398, %v2390
    %v3015 = vpack.c.b16 %v2399, %v2391
    %v3016 = vpack.c.b16 %v2400, %v2392
    %v3017 = vpack.c.b16 %v2401, %v2393
    %v3018 = vpack.c.b16 %v2402, %v2394
    %v3019 = vpack.c.b16 %v2403, %v2395
    %v3020 = vpack.c.b16 %v2404, %v2396
    %v3021 = vpack.c.b16 %v2413, %v2405
    %v3022 = vpack.c.b16 %v2414, %v2406
    %v3023 = vpack.c.b16 %v2415, %v2407
    %v3024 = vpack.c.b16 %v2416, %v2408
    %v3025 = vpack.c.b16 %v2417, %v2409
    %v3026 = vpack.c.b16 %v2418, %v2410
    %v3027 = vpack.c.b16 %v2419, %v2411
    %v3028 = vpack.c.b16 %v2420, %v2412
    %v3029 = vpack.c.b16 %v2429, %v2421
    %v3030 = vpack.c.b16 %v2430, %v2422
    %v3031 = vpack.c.b16 %v2431, %v2423
    %v3032 = vpack.c.b16 %v2432, %v2424
    %v3033 = vpack.c.b16 %v2433, %v2425
    %v3034 = vpack.c.b16 %v2434, %v2426
    %v3035 = vpack.c.b16 %v2435, %v2427
    %v3036 = vpack.c.b16 %v2436, %v2428
    %v3037 = vpack.c.b16 %v2445, %v2437
    %v3038 = vpack.c.b16 %v2446, %v2438
    %v3039 = vpack.c.b16 %v2447, %v2439
    %v3040 = vpack.c.b16 %v2448, %v2440
    %v3041 = vpack.c.b16 %v2449, %v2441
    %v3042 = vpack.c.b16 %v2450, %v2442
    %v3043 = vpack.c.b16 %v2451, %v2443
    %v3044 = vpack.c.b16 %v2452, %v2444
    %v3045 = vpack.c.b16 %v2461, %v2453
    %v3046 = vpack.c.b16 %v2462, %v2454
    %v3047 = vpack.c.b16 %v2463, %v2455
    %v3048 = vpack.c.b16 %v2464, %v2456
    %v3049 = vpack.c.b16 %v2465, %v2457
    %v3050 = vpack.c.b16 %v2466, %v2458
    %v3051 = vpack.c.b16 %v2467, %v2459
    %v3052 = vpack.c.b16 %v2468, %v2460
    %v3053 = vpack.c.b16 %v2477, %v2469
    %v3054 = vpack.c.b16 %v2478, %v2470
    %v3055 = vpack.c.b16 %v2479, %v2471
    %v3056 = vpack.c.b16 %v2480, %v2472
    %v3057 = vpack.c.b16 %v2481, %v2473
    %v3058 = vpack.c.b16 %v2482, %v2474
    %v3059 = vpack.c.b16 %v2483, %v2475
    %v3060 = vpack.c.b16 %v2484, %v2476
    %3637 = vmatprep.subr.bf16.mxu0 %v2486
    %3638 = vmatpush1.bf16.msra.mxu0 %v2485
    %3639 = vmatprep.subr.bf16.mxu0 %v2494
    %3640 = vmatpush1.bf16.msra.mxu0 %v2493
    %3641 = vmatprep.subr.bf16.mxu0 %v2502
    %3642 = vmatpush1.bf16.msra.mxu0 %v2501
    %3643 = vmatprep.subr.bf16.mxu0 %v2510
    %3644 = vmatpush1.bf16.msra.mxu0 %v2509
    %3645 = vmatprep.subr.bf16.mxu0 %v2518
    %3646 = vmatpush1.bf16.msra.mxu0 %v2517
    %3647 = vmatprep.subr.bf16.mxu0 %v2526
    %3648 = vmatpush1.bf16.msra.mxu0 %v2525
    %3649 = vmatprep.subr.bf16.mxu0 %v2534
    %3650 = vmatpush1.bf16.msra.mxu0 %v2533
    %3651 = vmatprep.subr.bf16.mxu0 %v2542
    %3652 = vmatpush1.bf16.msra.mxu0 %v2541
    %3653 = vmatprep.subr.bf16.mxu0 %v2550
    %3654 = vmatpush1.bf16.msra.mxu0 %v2549
    %3655 = vmatprep.subr.bf16.mxu0 %v2558
    %3656 = vmatpush1.bf16.msra.mxu0 %v2557
    %3657 = vmatprep.subr.bf16.mxu0 %v2566
    %3658 = vmatpush1.bf16.msra.mxu0 %v2565
    %3659 = vmatprep.subr.bf16.mxu0 %v2574
    %3660 = vmatpush1.bf16.msra.mxu0 %v2573
    %3661 = vmatprep.subr.bf16.mxu0 %v2582
    %3662 = vmatpush1.bf16.msra.mxu0 %v2581
    %3663 = vmatprep.subr.bf16.mxu0 %v2590
    %3664 = vmatpush1.bf16.msra.mxu0 %v2589
    %3665 = vmatprep.subr.bf16.mxu0 %v2598
    %3666 = vmatpush1.bf16.msra.mxu0 %v2597
    %3667 = vmatprep.subr.bf16.mxu0 %v2606
    %3668 = vmatpush1.bf16.msra.mxu0 %v2605
    %3669 = vmatprep.mubr.bf16.mxu0 %v740
    %3670 = vmatmul.mubr.bf16.gmra.mrb[0].mxu0 %v739
    %v3671 = vpop.f32.mrb[0].mxu0
    %v3672 = vadd.f32 0.0, %v3671
    %v3673 = vpop.f32.mrb[0].mxu0
    %v3674 = vadd.f32 0.0, %v3673
    %v3675 = vpop.f32.mrb[0].mxu0
    %v3676 = vpop.f32.mrb[0].mxu0
    %3677 = vdwg.mxu0
    %3678 = vmatprep.subr.bf16.mxu0 %v2614
    %3679 = vmatpush1.bf16.msra.mxu0 %v2613
    %3680 = vmatprep.subr.bf16.mxu0 %v2622
    %3681 = vmatpush1.bf16.msra.mxu0 %v2621
    %3682 = vmatprep.subr.bf16.mxu0 %v2630
    %3683 = vmatpush1.bf16.msra.mxu0 %v2629
    %3684 = vmatprep.subr.bf16.mxu0 %v2638
    %3685 = vmatpush1.bf16.msra.mxu0 %v2637
    %3686 = vmatprep.subr.bf16.mxu0 %v2646
    %3687 = vmatpush1.bf16.msra.mxu0 %v2645
    %3688 = vmatprep.subr.bf16.mxu0 %v2654
    %3689 = vmatpush1.bf16.msra.mxu0 %v2653
    %3690 = vmatprep.subr.bf16.mxu0 %v2662
    %3691 = vmatpush1.bf16.msra.mxu0 %v2661
    %3692 = vmatprep.subr.bf16.mxu0 %v2670
    %3693 = vmatpush1.bf16.msra.mxu0 %v2669
    %3694 = vmatprep.subr.bf16.mxu0 %v2678
    %3695 = vmatpush1.bf16.msra.mxu0 %v2677
    %3696 = vmatprep.subr.bf16.mxu0 %v2686
    %3697 = vmatpush1.bf16.msra.mxu0 %v2685
    %3698 = vmatprep.subr.bf16.mxu0 %v2694
    %3699 = vmatpush1.bf16.msra.mxu0 %v2693
    %3700 = vmatprep.subr.bf16.mxu0 %v2702
    %3701 = vmatpush1.bf16.msra.mxu0 %v2701
    %3702 = vmatprep.subr.bf16.mxu0 %v2710
    %3703 = vmatpush1.bf16.msra.mxu0 %v2709
    %3704 = vmatprep.subr.bf16.mxu0 %v2718
    %3705 = vmatpush1.bf16.msra.mxu0 %v2717
    %3706 = vmatprep.subr.bf16.mxu0 %v2726
    %3707 = vmatpush1.bf16.msra.mxu0 %v2725
    %3708 = vmatprep.subr.bf16.mxu0 %v2734
    %3709 = vmatpush1.bf16.msra.mxu0 %v2733
    %3710 = vmatprep.mubr.bf16.mxu0 %v742
    %3711 = vmatmul.mubr.bf16.gmra.mrb[0].mxu0 %v741
    %v3712 = vpop.f32.mrb[0].mxu0
    %v3713 = vadd.f32 %v3672, %v3712
    %v3714 = vpop.f32.mrb[0].mxu0
    %v3715 = vadd.f32 %v3674, %v3714
    %v3716 = vpop.f32.mrb[0].mxu0
    %v3717 = vpop.f32.mrb[0].mxu0
    %3718 = vdwg.mxu0
    %3719 = vmatprep.subr.bf16.mxu0 %v2742
    %3720 = vmatpush1.bf16.msra.mxu0 %v2741
    %3721 = vmatprep.subr.bf16.mxu0 %v2750
    %3722 = vmatpush1.bf16.msra.mxu0 %v2749
    %3723 = vmatprep.subr.bf16.mxu0 %v2758
    %3724 = vmatpush1.bf16.msra.mxu0 %v2757
    %3725 = vmatprep.subr.bf16.mxu0 %v2766
    %3726 = vmatpush1.bf16.msra.mxu0 %v2765
    %3727 = vmatprep.subr.bf16.mxu0 %v2774
    %3728 = vmatpush1.bf16.msra.mxu0 %v2773
    %3729 = vmatprep.subr.bf16.mxu0 %v2782
    %3730 = vmatpush1.bf16.msra.mxu0 %v2781
    %3731 = vmatprep.subr.bf16.mxu0 %v2790
    %3732 = vmatpush1.bf16.msra.mxu0 %v2789
    %3733 = vmatprep.subr.bf16.mxu0 %v2798
    %3734 = vmatpush1.bf16.msra.mxu0 %v2797
    %3735 = vmatprep.subr.bf16.mxu0 %v2806
    %3736 = vmatpush1.bf16.msra.mxu0 %v2805
    %3737 = vmatprep.subr.bf16.mxu0 %v2814
    %3738 = vmatpush1.bf16.msra.mxu0 %v2813
    %3739 = vmatprep.subr.bf16.mxu0 %v2822
    %3740 = vmatpush1.bf16.msra.mxu0 %v2821
    %3741 = vmatprep.subr.bf16.mxu0 %v2830
    %3742 = vmatpush1.bf16.msra.mxu0 %v2829
    %3743 = vmatprep.subr.bf16.mxu0 %v2838
    %3744 = vmatpush1.bf16.msra.mxu0 %v2837
    %3745 = vmatprep.subr.bf16.mxu0 %v2846
    %3746 = vmatpush1.bf16.msra.mxu0 %v2845
    %3747 = vmatprep.subr.bf16.mxu0 %v2854
    %3748 = vmatpush1.bf16.msra.mxu0 %v2853
    %3749 = vmatprep.subr.bf16.mxu0 %v2862
    %3750 = vmatpush1.bf16.msra.mxu0 %v2861
    %3751 = vmatprep.mubr.bf16.mxu0 %v744
    %3752 = vmatmul.mubr.bf16.gmra.mrb[0].mxu0 %v743
    %v3753 = vpop.f32.mrb[0].mxu0
    %v3754 = vadd.f32 %v3713, %v3753
    %v3755 = vpop.f32.mrb[0].mxu0
    %v3756 = vadd.f32 %v3715, %v3755
    %v3757 = vpop.f32.mrb[0].mxu0
    %v3758 = vpop.f32.mrb[0].mxu0
    %3759 = vdwg.mxu0
    %3760 = vmatprep.subr.bf16.mxu0 %v2870
    %3761 = vmatpush1.bf16.msra.mxu0 %v2869
    %3762 = vmatprep.subr.bf16.mxu0 %v2878
    %3763 = vmatpush1.bf16.msra.mxu0 %v2877
    %3764 = vmatprep.subr.bf16.mxu0 %v2886
    %3765 = vmatpush1.bf16.msra.mxu0 %v2885
    %3766 = vmatprep.subr.bf16.mxu0 %v2894
    %3767 = vmatpush1.bf16.msra.mxu0 %v2893
    %3768 = vmatprep.subr.bf16.mxu0 %v2902
    %3769 = vmatpush1.bf16.msra.mxu0 %v2901
    %3770 = vmatprep.subr.bf16.mxu0 %v2910
    %3771 = vmatpush1.bf16.msra.mxu0 %v2909
    %3772 = vmatprep.subr.bf16.mxu0 %v2918
    %3773 = vmatpush1.bf16.msra.mxu0 %v2917
    %3774 = vmatprep.subr.bf16.mxu0 %v2926
    %3775 = vmatpush1.bf16.msra.mxu0 %v2925
    %3776 = vmatprep.subr.bf16.mxu0 %v2934
    %3777 = vmatpush1.bf16.msra.mxu0 %v2933
    %3778 = vmatprep.subr.bf16.mxu0 %v2942
    %3779 = vmatpush1.bf16.msra.mxu0 %v2941
    %3780 = vmatprep.subr.bf16.mxu0 %v2950
    %3781 = vmatpush1.bf16.msra.mxu0 %v2949
    %3782 = vmatprep.subr.bf16.mxu0 %v2958
    %3783 = vmatpush1.bf16.msra.mxu0 %v2957
    %3784 = vmatprep.subr.bf16.mxu0 %v2966
    %3785 = vmatpush1.bf16.msra.mxu0 %v2965
    %3786 = vmatprep.subr.bf16.mxu0 %v2974
    %3787 = vmatpush1.bf16.msra.mxu0 %v2973
    %3788 = vmatprep.subr.bf16.mxu0 %v2982
    %3789 = vmatpush1.bf16.msra.mxu0 %v2981
    %3790 = vmatprep.subr.bf16.mxu0 %v2990
    %3791 = vmatpush1.bf16.msra.mxu0 %v2989
    %3792 = vmatprep.mubr.bf16.mxu0 %v746
    %3793 = vmatmul.mubr.bf16.gmra.mrb[0].mxu0 %v745
    %v3794 = vpop.f32.mrb[0].mxu0
    %v3795 = vadd.f32 %v3754, %v3794
    %v3796 = vpop.f32.mrb[0].mxu0
    %v3797 = vadd.f32 %v3756, %v3796
    %v3798 = vpop.f32.mrb[0].mxu0
    %v3799 = vpop.f32.mrb[0].mxu0
    %3800 = vdwg.mxu0
    %3801 = vmatprep.subr.bf16.mxu0 %v2998
    %3802 = vmatpush1.bf16.msra.mxu0 %v2997
    %3803 = vmatprep.subr.bf16.mxu0 %v3006
    %3804 = vmatpush1.bf16.msra.mxu0 %v3005
    %3805 = vmatprep.subr.bf16.mxu0 %v3014
    %3806 = vmatpush1.bf16.msra.mxu0 %v3013
    %3807 = vmatprep.subr.bf16.mxu0 %v3022
    %3808 = vmatpush1.bf16.msra.mxu0 %v3021
    %3809 = vmatprep.subr.bf16.mxu0 %v3030
    %3810 = vmatpush1.bf16.msra.mxu0 %v3029
    %3811 = vmatprep.subr.bf16.mxu0 %v3038
    %3812 = vmatpush1.bf16.msra.mxu0 %v3037
    %3813 = vmatprep.subr.bf16.mxu0 %v3046
    %3814 = vmatpush1.bf16.msra.mxu0 %v3045
    %3815 = vmatprep.subr.bf16.mxu0 %v3054
    %3816 = vmatpush1.bf16.msra.mxu0 %v3053
    %3817 = vmatprep.subr.bf16.mxu0 0
    %3818 = vmatpush1.bf16.msra.mxu0 0
    %3819 = vmatprep.subr.bf16.mxu0 0
    %3820 = vmatpush1.bf16.msra.mxu0 0
    %3821 = vmatprep.subr.bf16.mxu0 0
    %3822 = vmatpush1.bf16.msra.mxu0 0
    %3823 = vmatprep.subr.bf16.mxu0 0
    %3824 = vmatpush1.bf16.msra.mxu0 0
    %3825 = vmatprep.subr.bf16.mxu0 0
    %3826 = vmatpush1.bf16.msra.mxu0 0
    %3827 = vmatprep.subr.bf16.mxu0 0
    %3828 = vmatpush1.bf16.msra.mxu0 0
    %3829 = vmatprep.subr.bf16.mxu0 0
    %3830 = vmatpush1.bf16.msra.mxu0 0
    %3831 = vmatprep.subr.bf16.mxu0 0
    %3832 = vmatpush1.bf16.msra.mxu0 0
    %3833 = vmatprep.mubr.bf16.mxu0 0
    %3834 = vmatmul.mubr.bf16.gmra.mrb[0].mxu0 %v747
    %v3835 = vpop.f32.mrb[0].mxu0
    %v3836 = vadd.f32 %v3795, %v3835
    %v3837 = vpop.f32.mrb[0].mxu0
    %v3838 = vadd.f32 %v3797, %v3837
    %v3839 = vpop.f32.mrb[0].mxu0
    %v3840 = vpop.f32.mrb[0].mxu0
    %3841 = vdwg.mxu0
    %3842 = vmatprep.subr.bf16.mxu0 %v2488
    %3843 = vmatpush1.bf16.msra.mxu0 %v2487
    %3844 = vmatprep.subr.bf16.mxu0 %v2496
    %3845 = vmatpush1.bf16.msra.mxu0 %v2495
    %3846 = vmatprep.subr.bf16.mxu0 %v2504
    %3847 = vmatpush1.bf16.msra.mxu0 %v2503
    %3848 = vmatprep.subr.bf16.mxu0 %v2512
    %3849 = vmatpush1.bf16.msra.mxu0 %v2511
    %3850 = vmatprep.subr.bf16.mxu0 %v2520
    %3851 = vmatpush1.bf16.msra.mxu0 %v2519
    %3852 = vmatprep.subr.bf16.mxu0 %v2528
    %3853 = vmatpush1.bf16.msra.mxu0 %v2527
    %3854 = vmatprep.subr.bf16.mxu0 %v2536
    %3855 = vmatpush1.bf16.msra.mxu0 %v2535
    %3856 = vmatprep.subr.bf16.mxu0 %v2544
    %3857 = vmatpush1.bf16.msra.mxu0 %v2543
    %3858 = vmatprep.subr.bf16.mxu0 %v2552
    %3859 = vmatpush1.bf16.msra.mxu0 %v2551
    %3860 = vmatprep.subr.bf16.mxu0 %v2560
    %3861 = vmatpush1.bf16.msra.mxu0 %v2559
    %3862 = vmatprep.subr.bf16.mxu0 %v2568
    %3863 = vmatpush1.bf16.msra.mxu0 %v2567
    %3864 = vmatprep.subr.bf16.mxu0 %v2576
    %3865 = vmatpush1.bf16.msra.mxu0 %v2575
    %3866 = vmatprep.subr.bf16.mxu0 %v2584
    %3867 = vmatpush1.bf16.msra.mxu0 %v2583
    %3868 = vmatprep.subr.bf16.mxu0 %v2592
    %3869 = vmatpush1.bf16.msra.mxu0 %v2591
    %3870 = vmatprep.subr.bf16.mxu0 %v2600
    %3871 = vmatpush1.bf16.msra.mxu0 %v2599
    %3872 = vmatprep.subr.bf16.mxu0 %v2608
    %3873 = vmatpush1.bf16.msra.mxu0 %v2607
    %3874 = vmatprep.mubr.bf16.mxu0 %v740
    %3875 = vmatmul.mubr.bf16.gmra.mrb[0].mxu0 %v739
    %v3876 = vpop.f32.mrb[0].mxu0
    %v3877 = vadd.f32 0.0, %v3876
    %v3878 = vpop.f32.mrb[0].mxu0
    %v3879 = vadd.f32 0.0, %v3878
    %v3880 = vpop.f32.mrb[0].mxu0
    %v3881 = vpop.f32.mrb[0].mxu0
    %3882 = vdwg.mxu0
    %3883 = vmatprep.subr.bf16.mxu0 %v2616
    %3884 = vmatpush1.bf16.msra.mxu0 %v2615
    %3885 = vmatprep.subr.bf16.mxu0 %v2624
    %3886 = vmatpush1.bf16.msra.mxu0 %v2623
    %3887 = vmatprep.subr.bf16.mxu0 %v2632
    %3888 = vmatpush1.bf16.msra.mxu0 %v2631
    %3889 = vmatprep.subr.bf16.mxu0 %v2640
    %3890 = vmatpush1.bf16.msra.mxu0 %v2639
    %3891 = vmatprep.subr.bf16.mxu0 %v2648
    %3892 = vmatpush1.bf16.msra.mxu0 %v2647
    %3893 = vmatprep.subr.bf16.mxu0 %v2656
    %3894 = vmatpush1.bf16.msra.mxu0 %v2655
    %3895 = vmatprep.subr.bf16.mxu0 %v2664
    %3896 = vmatpush1.bf16.msra.mxu0 %v2663
    %3897 = vmatprep.subr.bf16.mxu0 %v2672
    %3898 = vmatpush1.bf16.msra.mxu0 %v2671
    %3899 = vmatprep.subr.bf16.mxu0 %v2680
    %3900 = vmatpush1.bf16.msra.mxu0 %v2679
    %3901 = vmatprep.subr.bf16.mxu0 %v2688
    %3902 = vmatpush1.bf16.msra.mxu0 %v2687
    %3903 = vmatprep.subr.bf16.mxu0 %v2696
    %3904 = vmatpush1.bf16.msra.mxu0 %v2695
    %3905 = vmatprep.subr.bf16.mxu0 %v2704
    %3906 = vmatpush1.bf16.msra.mxu0 %v2703
    %3907 = vmatprep.subr.bf16.mxu0 %v2712
    %3908 = vmatpush1.bf16.msra.mxu0 %v2711
    %3909 = vmatprep.subr.bf16.mxu0 %v2720
    %3910 = vmatpush1.bf16.msra.mxu0 %v2719
    %3911 = vmatprep.subr.bf16.mxu0 %v2728
    %3912 = vmatpush1.bf16.msra.mxu0 %v2727
    %3913 = vmatprep.subr.bf16.mxu0 %v2736
    %3914 = vmatpush1.bf16.msra.mxu0 %v2735
    %3915 = vmatprep.mubr.bf16.mxu0 %v742
    %3916 = vmatmul.mubr.bf16.gmra.mrb[0].mxu0 %v741
    %v3917 = vpop.f32.mrb[0].mxu0
    %v3918 = vadd.f32 %v3877, %v3917
    %v3919 = vpop.f32.mrb[0].mxu0
    %v3920 = vadd.f32 %v3879, %v3919
    %v3921 = vpop.f32.mrb[0].mxu0
    %v3922 = vpop.f32.mrb[0].mxu0
    %3923 = vdwg.mxu0
    %3924 = vmatprep.subr.bf16.mxu0 %v2744
    %3925 = vmatpush1.bf16.msra.mxu0 %v2743
    %3926 = vmatprep.subr.bf16.mxu0 %v2752
    %3927 = vmatpush1.bf16.msra.mxu0 %v2751
    %3928 = vmatprep.subr.bf16.mxu0 %v2760
    %3929 = vmatpush1.bf16.msra.mxu0 %v2759
    %3930 = vmatprep.subr.bf16.mxu0 %v2768
    %3931 = vmatpush1.bf16.msra.mxu0 %v2767
    %3932 = vmatprep.subr.bf16.mxu0 %v2776
    %3933 = vmatpush1.bf16.msra.mxu0 %v2775
    %3934 = vmatprep.subr.bf16.mxu0 %v2784
    %3935 = vmatpush1.bf16.msra.mxu0 %v2783
    %3936 = vmatprep.subr.bf16.mxu0 %v2792
    %3937 = vmatpush1.bf16.msra.mxu0 %v2791
    %3938 = vmatprep.subr.bf16.mxu0 %v2800
    %3939 = vmatpush1.bf16.msra.mxu0 %v2799
    %3940 = vmatprep.subr.bf16.mxu0 %v2808
    %3941 = vmatpush1.bf16.msra.mxu0 %v2807
    %3942 = vmatprep.subr.bf16.mxu0 %v2816
    %3943 = vmatpush1.bf16.msra.mxu0 %v2815
    %3944 = vmatprep.subr.bf16.mxu0 %v2824
    %3945 = vmatpush1.bf16.msra.mxu0 %v2823
    %3946 = vmatprep.subr.bf16.mxu0 %v2832
    %3947 = vmatpush1.bf16.msra.mxu0 %v2831
    %3948 = vmatprep.subr.bf16.mxu0 %v2840
    %3949 = vmatpush1.bf16.msra.mxu0 %v2839
    %3950 = vmatprep.subr.bf16.mxu0 %v2848
    %3951 = vmatpush1.bf16.msra.mxu0 %v2847
    %3952 = vmatprep.subr.bf16.mxu0 %v2856
    %3953 = vmatpush1.bf16.msra.mxu0 %v2855
    %3954 = vmatprep.subr.bf16.mxu0 %v2864
    %3955 = vmatpush1.bf16.msra.mxu0 %v2863
    %3956 = vmatprep.mubr.bf16.mxu0 %v744
    %3957 = vmatmul.mubr.bf16.gmra.mrb[0].mxu0 %v743
    %v3958 = vpop.f32.mrb[0].mxu0
    %v3959 = vadd.f32 %v3918, %v3958
    %v3960 = vpop.f32.mrb[0].mxu0
    %v3961 = vadd.f32 %v3920, %v3960
    %v3962 = vpop.f32.mrb[0].mxu0
    %v3963 = vpop.f32.mrb[0].mxu0
    %3964 = vdwg.mxu0
    %3965 = vmatprep.subr.bf16.mxu0 %v2872
    %3966 = vmatpush1.bf16.msra.mxu0 %v2871
    %3967 = vmatprep.subr.bf16.mxu0 %v2880
    %3968 = vmatpush1.bf16.msra.mxu0 %v2879
    %3969 = vmatprep.subr.bf16.mxu0 %v2888
    %3970 = vmatpush1.bf16.msra.mxu0 %v2887
    %3971 = vmatprep.subr.bf16.mxu0 %v2896
    %3972 = vmatpush1.bf16.msra.mxu0 %v2895
    %3973 = vmatprep.subr.bf16.mxu0 %v2904
    %3974 = vmatpush1.bf16.msra.mxu0 %v2903
    %3975 = vmatprep.subr.bf16.mxu0 %v2912
    %3976 = vmatpush1.bf16.msra.mxu0 %v2911
    %3977 = vmatprep.subr.bf16.mxu0 %v2920
    %3978 = vmatpush1.bf16.msra.mxu0 %v2919
    %3979 = vmatprep.subr.bf16.mxu0 %v2928
    %3980 = vmatpush1.bf16.msra.mxu0 %v2927
    %3981 = vmatprep.subr.bf16.mxu0 %v2936
    %3982 = vmatpush1.bf16.msra.mxu0 %v2935
    %3983 = vmatprep.subr.bf16.mxu0 %v2944
    %3984 = vmatpush1.bf16.msra.mxu0 %v2943
    %3985 = vmatprep.subr.bf16.mxu0 %v2952
    %3986 = vmatpush1.bf16.msra.mxu0 %v2951
    %3987 = vmatprep.subr.bf16.mxu0 %v2960
    %3988 = vmatpush1.bf16.msra.mxu0 %v2959
    %3989 = vmatprep.subr.bf16.mxu0 %v2968
    %3990 = vmatpush1.bf16.msra.mxu0 %v2967
    %3991 = vmatprep.subr.bf16.mxu0 %v2976
    %3992 = vmatpush1.bf16.msra.mxu0 %v2975
    %3993 = vmatprep.subr.bf16.mxu0 %v2984
    %3994 = vmatpush1.bf16.msra.mxu0 %v2983
    %3995 = vmatprep.subr.bf16.mxu0 %v2992
    %3996 = vmatpush1.bf16.msra.mxu0 %v2991
    %3997 = vmatprep.mubr.bf16.mxu0 %v746
    %3998 = vmatmul.mubr.bf16.gmra.mrb[0].mxu0 %v745
    %v3999 = vpop.f32.mrb[0].mxu0
    %v4000 = vadd.f32 %v3959, %v3999
    %v4001 = vpop.f32.mrb[0].mxu0
    %v4002 = vadd.f32 %v3961, %v4001
    %v4003 = vpop.f32.mrb[0].mxu0
    %v4004 = vpop.f32.mrb[0].mxu0
    %4005 = vdwg.mxu0
    %4006 = vmatprep.subr.bf16.mxu0 %v3000
    %4007 = vmatpush1.bf16.msra.mxu0 %v2999
    %4008 = vmatprep.subr.bf16.mxu0 %v3008
    %4009 = vmatpush1.bf16.msra.mxu0 %v3007
    %4010 = vmatprep.subr.bf16.mxu0 %v3016
    %4011 = vmatpush1.bf16.msra.mxu0 %v3015
    %4012 = vmatprep.subr.bf16.mxu0 %v3024
    %4013 = vmatpush1.bf16.msra.mxu0 %v3023
    %4014 = vmatprep.subr.bf16.mxu0 %v3032
    %4015 = vmatpush1.bf16.msra.mxu0 %v3031
    %4016 = vmatprep.subr.bf16.mxu0 %v3040
    %4017 = vmatpush1.bf16.msra.mxu0 %v3039
    %4018 = vmatprep.subr.bf16.mxu0 %v3048
    %4019 = vmatpush1.bf16.msra.mxu0 %v3047
    %4020 = vmatprep.subr.bf16.mxu0 %v3056
    %4021 = vmatpush1.bf16.msra.mxu0 %v3055
    %4022 = vmatprep.subr.bf16.mxu0 0
    %4023 = vmatpush1.bf16.msra.mxu0 0
    %4024 = vmatprep.subr.bf16.mxu0 0
    %4025 = vmatpush1.bf16.msra.mxu0 0
    %4026 = vmatprep.subr.bf16.mxu0 0
    %4027 = vmatpush1.bf16.msra.mxu0 0
    %4028 = vmatprep.subr.bf16.mxu0 0
    %4029 = vmatpush1.bf16.msra.mxu0 0
    %4030 = vmatprep.subr.bf16.mxu0 0
    %4031 = vmatpush1.bf16.msra.mxu0 0
    %4032 = vmatprep.subr.bf16.mxu0 0
    %4033 = vmatpush1.bf16.msra.mxu0 0
    %4034 = vmatprep.subr.bf16.mxu0 0
    %4035 = vmatpush1.bf16.msra.mxu0 0
    %4036 = vmatprep.subr.bf16.mxu0 0
    %4037 = vmatpush1.bf16.msra.mxu0 0
    %4038 = vmatprep.mubr.bf16.mxu0 0
    %4039 = vmatmul.mubr.bf16.gmra.mrb[0].mxu0 %v747
    %v4040 = vpop.f32.mrb[0].mxu0
    %v4041 = vadd.f32 %v4000, %v4040
    %v4042 = vpop.f32.mrb[0].mxu0
    %v4043 = vadd.f32 %v4002, %v4042
    %v4044 = vpop.f32.mrb[0].mxu0
    %v4045 = vpop.f32.mrb[0].mxu0
    %4046 = vdwg.mxu0
    %4047 = vmatprep.subr.bf16.mxu0 %v2490
    %4048 = vmatpush1.bf16.msra.mxu0 %v2489
    %4049 = vmatprep.subr.bf16.mxu0 %v2498
    %4050 = vmatpush1.bf16.msra.mxu0 %v2497
    %4051 = vmatprep.subr.bf16.mxu0 %v2506
    %4052 = vmatpush1.bf16.msra.mxu0 %v2505
    %4053 = vmatprep.subr.bf16.mxu0 %v2514
    %4054 = vmatpush1.bf16.msra.mxu0 %v2513
    %4055 = vmatprep.subr.bf16.mxu0 %v2522
    %4056 = vmatpush1.bf16.msra.mxu0 %v2521
    %4057 = vmatprep.subr.bf16.mxu0 %v2530
    %4058 = vmatpush1.bf16.msra.mxu0 %v2529
    %4059 = vmatprep.subr.bf16.mxu0 %v2538
    %4060 = vmatpush1.bf16.msra.mxu0 %v2537
    %4061 = vmatprep.subr.bf16.mxu0 %v2546
    %4062 = vmatpush1.bf16.msra.mxu0 %v2545
    %4063 = vmatprep.subr.bf16.mxu0 %v2554
    %4064 = vmatpush1.bf16.msra.mxu0 %v2553
    %4065 = vmatprep.subr.bf16.mxu0 %v2562
    %4066 = vmatpush1.bf16.msra.mxu0 %v2561
    %4067 = vmatprep.subr.bf16.mxu0 %v2570
    %4068 = vmatpush1.bf16.msra.mxu0 %v2569
    %4069 = vmatprep.subr.bf16.mxu0 %v2578
    %4070 = vmatpush1.bf16.msra.mxu0 %v2577
    %4071 = vmatprep.subr.bf16.mxu0 %v2586
    %4072 = vmatpush1.bf16.msra.mxu0 %v2585
    %4073 = vmatprep.subr.bf16.mxu0 %v2594
    %4074 = vmatpush1.bf16.msra.mxu0 %v2593
    %4075 = vmatprep.subr.bf16.mxu0 %v2602
    %4076 = vmatpush1.bf16.msra.mxu0 %v2601
    %4077 = vmatprep.subr.bf16.mxu0 %v2610
    %4078 = vmatpush1.bf16.msra.mxu0 %v2609
    %4079 = vmatprep.mubr.bf16.mxu0 %v740
    %4080 = vmatmul.mubr.bf16.gmra.mrb[0].mxu0 %v739
    %v4081 = vpop.f32.mrb[0].mxu0
    %v4082 = vadd.f32 0.0, %v4081
    %v4083 = vpop.f32.mrb[0].mxu0
    %v4084 = vadd.f32 0.0, %v4083
    %v4085 = vpop.f32.mrb[0].mxu0
    %v4086 = vpop.f32.mrb[0].mxu0
    %4087 = vdwg.mxu0
    %4088 = vmatprep.subr.bf16.mxu0 %v2618
    %4089 = vmatpush1.bf16.msra.mxu0 %v2617
    %4090 = vmatprep.subr.bf16.mxu0 %v2626
    %4091 = vmatpush1.bf16.msra.mxu0 %v2625
    %4092 = vmatprep.subr.bf16.mxu0 %v2634
    %4093 = vmatpush1.bf16.msra.mxu0 %v2633
    %4094 = vmatprep.subr.bf16.mxu0 %v2642
    %4095 = vmatpush1.bf16.msra.mxu0 %v2641
    %4096 = vmatprep.subr.bf16.mxu0 %v2650
    %4097 = vmatpush1.bf16.msra.mxu0 %v2649
    %4098 = vmatprep.subr.bf16.mxu0 %v2658
    %4099 = vmatpush1.bf16.msra.mxu0 %v2657
    %4100 = vmatprep.subr.bf16.mxu0 %v2666
    %4101 = vmatpush1.bf16.msra.mxu0 %v2665
    %4102 = vmatprep.subr.bf16.mxu0 %v2674
    %4103 = vmatpush1.bf16.msra.mxu0 %v2673
    %4104 = vmatprep.subr.bf16.mxu0 %v2682
    %4105 = vmatpush1.bf16.msra.mxu0 %v2681
    %4106 = vmatprep.subr.bf16.mxu0 %v2690
    %4107 = vmatpush1.bf16.msra.mxu0 %v2689
    %4108 = vmatprep.subr.bf16.mxu0 %v2698
    %4109 = vmatpush1.bf16.msra.mxu0 %v2697
    %4110 = vmatprep.subr.bf16.mxu0 %v2706
    %4111 = vmatpush1.bf16.msra.mxu0 %v2705
    %4112 = vmatprep.subr.bf16.mxu0 %v2714
    %4113 = vmatpush1.bf16.msra.mxu0 %v2713
    %4114 = vmatprep.subr.bf16.mxu0 %v2722
    %4115 = vmatpush1.bf16.msra.mxu0 %v2721
    %4116 = vmatprep.subr.bf16.mxu0 %v2730
    %4117 = vmatpush1.bf16.msra.mxu0 %v2729
    %4118 = vmatprep.subr.bf16.mxu0 %v2738
    %4119 = vmatpush1.bf16.msra.mxu0 %v2737
    %4120 = vmatprep.mubr.bf16.mxu0 %v742
    %4121 = vmatmul.mubr.bf16.gmra.mrb[0].mxu0 %v741
    %v4122 = vpop.f32.mrb[0].mxu0
    %v4123 = vadd.f32 %v4082, %v4122
    %v4124 = vpop.f32.mrb[0].mxu0
    %v4125 = vadd.f32 %v4084, %v4124
    %v4126 = vpop.f32.mrb[0].mxu0
    %v4127 = vpop.f32.mrb[0].mxu0
    %4128 = vdwg.mxu0
    %4129 = vmatprep.subr.bf16.mxu0 %v2746
    %4130 = vmatpush1.bf16.msra.mxu0 %v2745
    %4131 = vmatprep.subr.bf16.mxu0 %v2754
    %4132 = vmatpush1.bf16.msra.mxu0 %v2753
    %4133 = vmatprep.subr.bf16.mxu0 %v2762
    %4134 = vmatpush1.bf16.msra.mxu0 %v2761
    %4135 = vmatprep.subr.bf16.mxu0 %v2770
    %4136 = vmatpush1.bf16.msra.mxu0 %v2769
    %4137 = vmatprep.subr.bf16.mxu0 %v2778
    %4138 = vmatpush1.bf16.msra.mxu0 %v2777
    %4139 = vmatprep.subr.bf16.mxu0 %v2786
    %4140 = vmatpush1.bf16.msra.mxu0 %v2785
    %4141 = vmatprep.subr.bf16.mxu0 %v2794
    %4142 = vmatpush1.bf16.msra.mxu0 %v2793
    %4143 = vmatprep.subr.bf16.mxu0 %v2802
    %4144 = vmatpush1.bf16.msra.mxu0 %v2801
    %4145 = vmatprep.subr.bf16.mxu0 %v2810
    %4146 = vmatpush1.bf16.msra.mxu0 %v2809
    %4147 = vmatprep.subr.bf16.mxu0 %v2818
    %4148 = vmatpush1.bf16.msra.mxu0 %v2817
    %4149 = vmatprep.subr.bf16.mxu0 %v2826
    %4150 = vmatpush1.bf16.msra.mxu0 %v2825
    %4151 = vmatprep.subr.bf16.mxu0 %v2834
    %4152 = vmatpush1.bf16.msra.mxu0 %v2833
    %4153 = vmatprep.subr.bf16.mxu0 %v2842
    %4154 = vmatpush1.bf16.msra.mxu0 %v2841
    %4155 = vmatprep.subr.bf16.mxu0 %v2850
    %4156 = vmatpush1.bf16.msra.mxu0 %v2849
    %4157 = vmatprep.subr.bf16.mxu0 %v2858
    %4158 = vmatpush1.bf16.msra.mxu0 %v2857
    %4159 = vmatprep.subr.bf16.mxu0 %v2866
    %4160 = vmatpush1.bf16.msra.mxu0 %v2865
    %4161 = vmatprep.mubr.bf16.mxu0 %v744
    %4162 = vmatmul.mubr.bf16.gmra.mrb[0].mxu0 %v743
    %v4163 = vpop.f32.mrb[0].mxu0
    %v4164 = vadd.f32 %v4123, %v4163
    %v4165 = vpop.f32.mrb[0].mxu0
    %v4166 = vadd.f32 %v4125, %v4165
    %v4167 = vpop.f32.mrb[0].mxu0
    %v4168 = vpop.f32.mrb[0].mxu0
    %4169 = vdwg.mxu0
    %4170 = vmatprep.subr.bf16.mxu0 %v2874
    %4171 = vmatpush1.bf16.msra.mxu0 %v2873
    %4172 = vmatprep.subr.bf16.mxu0 %v2882
    %4173 = vmatpush1.bf16.msra.mxu0 %v2881
    %4174 = vmatprep.subr.bf16.mxu0 %v2890
    %4175 = vmatpush1.bf16.msra.mxu0 %v2889
    %4176 = vmatprep.subr.bf16.mxu0 %v2898
    %4177 = vmatpush1.bf16.msra.mxu0 %v2897
    %4178 = vmatprep.subr.bf16.mxu0 %v2906
    %4179 = vmatpush1.bf16.msra.mxu0 %v2905
    %4180 = vmatprep.subr.bf16.mxu0 %v2914
    %4181 = vmatpush1.bf16.msra.mxu0 %v2913
    %4182 = vmatprep.subr.bf16.mxu0 %v2922
    %4183 = vmatpush1.bf16.msra.mxu0 %v2921
    %4184 = vmatprep.subr.bf16.mxu0 %v2930
    %4185 = vmatpush1.bf16.msra.mxu0 %v2929
    %4186 = vmatprep.subr.bf16.mxu0 %v2938
    %4187 = vmatpush1.bf16.msra.mxu0 %v2937
    %4188 = vmatprep.subr.bf16.mxu0 %v2946
    %4189 = vmatpush1.bf16.msra.mxu0 %v2945
    %4190 = vmatprep.subr.bf16.mxu0 %v2954
    %4191 = vmatpush1.bf16.msra.mxu0 %v2953
    %4192 = vmatprep.subr.bf16.mxu0 %v2962
    %4193 = vmatpush1.bf16.msra.mxu0 %v2961
    %4194 = vmatprep.subr.bf16.mxu0 %v2970
    %4195 = vmatpush1.bf16.msra.mxu0 %v2969
    %4196 = vmatprep.subr.bf16.mxu0 %v2978
    %4197 = vmatpush1.bf16.msra.mxu0 %v2977
    %4198 = vmatprep.subr.bf16.mxu0 %v2986
    %4199 = vmatpush1.bf16.msra.mxu0 %v2985
    %4200 = vmatprep.subr.bf16.mxu0 %v2994
    %4201 = vmatpush1.bf16.msra.mxu0 %v2993
    %4202 = vmatprep.mubr.bf16.mxu0 %v746
    %4203 = vmatmul.mubr.bf16.gmra.mrb[0].mxu0 %v745
    %v4204 = vpop.f32.mrb[0].mxu0
    %v4205 = vadd.f32 %v4164, %v4204
    %v4206 = vpop.f32.mrb[0].mxu0
    %v4207 = vadd.f32 %v4166, %v4206
    %v4208 = vpop.f32.mrb[0].mxu0
    %v4209 = vpop.f32.mrb[0].mxu0
    %4210 = vdwg.mxu0
    %4211 = vmatprep.subr.bf16.mxu0 %v3002
    %4212 = vmatpush1.bf16.msra.mxu0 %v3001
    %4213 = vmatprep.subr.bf16.mxu0 %v3010
    %4214 = vmatpush1.bf16.msra.mxu0 %v3009
    %4215 = vmatprep.subr.bf16.mxu0 %v3018
    %4216 = vmatpush1.bf16.msra.mxu0 %v3017
    %4217 = vmatprep.subr.bf16.mxu0 %v3026
    %4218 = vmatpush1.bf16.msra.mxu0 %v3025
    %4219 = vmatprep.subr.bf16.mxu0 %v3034
    %4220 = vmatpush1.bf16.msra.mxu0 %v3033
    %4221 = vmatprep.subr.bf16.mxu0 %v3042
    %4222 = vmatpush1.bf16.msra.mxu0 %v3041
    %4223 = vmatprep.subr.bf16.mxu0 %v3050
    %4224 = vmatpush1.bf16.msra.mxu0 %v3049
    %4225 = vmatprep.subr.bf16.mxu0 %v3058
    %4226 = vmatpush1.bf16.msra.mxu0 %v3057
    %4227 = vmatprep.subr.bf16.mxu0 0
    %4228 = vmatpush1.bf16.msra.mxu0 0
    %4229 = vmatprep.subr.bf16.mxu0 0
    %4230 = vmatpush1.bf16.msra.mxu0 0
    %4231 = vmatprep.subr.bf16.mxu0 0
    %4232 = vmatpush1.bf16.msra.mxu0 0
    %4233 = vmatprep.subr.bf16.mxu0 0
    %4234 = vmatpush1.bf16.msra.mxu0 0
    %4235 = vmatprep.subr.bf16.mxu0 0
    %4236 = vmatpush1.bf16.msra.mxu0 0
    %4237 = vmatprep.subr.bf16.mxu0 0
    %4238 = vmatpush1.bf16.msra.mxu0 0
    %4239 = vmatprep.subr.bf16.mxu0 0
    %4240 = vmatpush1.bf16.msra.mxu0 0
    %4241 = vmatprep.subr.bf16.mxu0 0
    %4242 = vmatpush1.bf16.msra.mxu0 0
    %4243 = vmatprep.mubr.bf16.mxu0 0
    %4244 = vmatmul.mubr.bf16.gmra.mrb[0].mxu0 %v747
    %v4245 = vpop.f32.mrb[0].mxu0
    %v4246 = vadd.f32 %v4205, %v4245
    %v4247 = vpop.f32.mrb[0].mxu0
    %v4248 = vadd.f32 %v4207, %v4247
    %v4249 = vpop.f32.mrb[0].mxu0
    %v4250 = vpop.f32.mrb[0].mxu0
    %4251 = vdwg.mxu0
    %4252 = vmatprep.subr.bf16.mxu0 %v2492
    %4253 = vmatpush1.bf16.msra.mxu0 %v2491
    %4254 = vmatprep.subr.bf16.mxu0 %v2500
    %4255 = vmatpush1.bf16.msra.mxu0 %v2499
    %4256 = vmatprep.subr.bf16.mxu0 %v2508
    %4257 = vmatpush1.bf16.msra.mxu0 %v2507
    %4258 = vmatprep.subr.bf16.mxu0 %v2516
    %4259 = vmatpush1.bf16.msra.mxu0 %v2515
    %4260 = vmatprep.subr.bf16.mxu0 %v2524
    %4261 = vmatpush1.bf16.msra.mxu0 %v2523
    %4262 = vmatprep.subr.bf16.mxu0 %v2532
    %4263 = vmatpush1.bf16.msra.mxu0 %v2531
    %4264 = vmatprep.subr.bf16.mxu0 %v2540
    %4265 = vmatpush1.bf16.msra.mxu0 %v2539
    %4266 = vmatprep.subr.bf16.mxu0 %v2548
    %4267 = vmatpush1.bf16.msra.mxu0 %v2547
    %4268 = vmatprep.subr.bf16.mxu0 %v2556
    %4269 = vmatpush1.bf16.msra.mxu0 %v2555
    %4270 = vmatprep.subr.bf16.mxu0 %v2564
    %4271 = vmatpush1.bf16.msra.mxu0 %v2563
    %4272 = vmatprep.subr.bf16.mxu0 %v2572
    %4273 = vmatpush1.bf16.msra.mxu0 %v2571
    %4274 = vmatprep.subr.bf16.mxu0 %v2580
    %4275 = vmatpush1.bf16.msra.mxu0 %v2579
    %4276 = vmatprep.subr.bf16.mxu0 %v2588
    %4277 = vmatpush1.bf16.msra.mxu0 %v2587
    %4278 = vmatprep.subr.bf16.mxu0 %v2596
    %4279 = vmatpush1.bf16.msra.mxu0 %v2595
    %4280 = vmatprep.subr.bf16.mxu0 %v2604
    %4281 = vmatpush1.bf16.msra.mxu0 %v2603
    %4282 = vmatprep.subr.bf16.mxu0 %v2612
    %4283 = vmatpush1.bf16.msra.mxu0 %v2611
    %4284 = vmatprep.mubr.bf16.mxu0 %v740
    %4285 = vmatmul.mubr.bf16.gmra.mrb[0].mxu0 %v739
    %v4286 = vpop.f32.mrb[0].mxu0
    %v4287 = vadd.f32 0.0, %v4286
    %v4288 = vpop.f32.mrb[0].mxu0
    %v4289 = vadd.f32 0.0, %v4288
    %v4290 = vpop.f32.mrb[0].mxu0
    %v4291 = vpop.f32.mrb[0].mxu0
    %4292 = vdwg.mxu0
    %4293 = vmatprep.subr.bf16.mxu0 %v2620
    %4294 = vmatpush1.bf16.msra.mxu0 %v2619
    %4295 = vmatprep.subr.bf16.mxu0 %v2628
    %4296 = vmatpush1.bf16.msra.mxu0 %v2627
    %4297 = vmatprep.subr.bf16.mxu0 %v2636
    %4298 = vmatpush1.bf16.msra.mxu0 %v2635
    %4299 = vmatprep.subr.bf16.mxu0 %v2644
    %4300 = vmatpush1.bf16.msra.mxu0 %v2643
    %4301 = vmatprep.subr.bf16.mxu0 %v2652
    %4302 = vmatpush1.bf16.msra.mxu0 %v2651
    %4303 = vmatprep.subr.bf16.mxu0 %v2660
    %4304 = vmatpush1.bf16.msra.mxu0 %v2659
    %4305 = vmatprep.subr.bf16.mxu0 %v2668
    %4306 = vmatpush1.bf16.msra.mxu0 %v2667
    %4307 = vmatprep.subr.bf16.mxu0 %v2676
    %4308 = vmatpush1.bf16.msra.mxu0 %v2675
    %4309 = vmatprep.subr.bf16.mxu0 %v2684
    %4310 = vmatpush1.bf16.msra.mxu0 %v2683
    %4311 = vmatprep.subr.bf16.mxu0 %v2692
    %4312 = vmatpush1.bf16.msra.mxu0 %v2691
    %4313 = vmatprep.subr.bf16.mxu0 %v2700
    %4314 = vmatpush1.bf16.msra.mxu0 %v2699
    %4315 = vmatprep.subr.bf16.mxu0 %v2708
    %4316 = vmatpush1.bf16.msra.mxu0 %v2707
    %4317 = vmatprep.subr.bf16.mxu0 %v2716
    %4318 = vmatpush1.bf16.msra.mxu0 %v2715
    %4319 = vmatprep.subr.bf16.mxu0 %v2724
    %4320 = vmatpush1.bf16.msra.mxu0 %v2723
    %4321 = vmatprep.subr.bf16.mxu0 %v2732
    %4322 = vmatpush1.bf16.msra.mxu0 %v2731
    %4323 = vmatprep.subr.bf16.mxu0 %v2740
    %4324 = vmatpush1.bf16.msra.mxu0 %v2739
    %4325 = vmatprep.mubr.bf16.mxu0 %v742
    %4326 = vmatmul.mubr.bf16.gmra.mrb[0].mxu0 %v741
    %v4327 = vpop.f32.mrb[0].mxu0
    %v4328 = vadd.f32 %v4287, %v4327
    %v4329 = vpop.f32.mrb[0].mxu0
    %v4330 = vadd.f32 %v4289, %v4329
    %v4331 = vpop.f32.mrb[0].mxu0
    %v4332 = vpop.f32.mrb[0].mxu0
    %4333 = vdwg.mxu0
    %4334 = vmatprep.subr.bf16.mxu0 %v2748
    %4335 = vmatpush1.bf16.msra.mxu0 %v2747
    %4336 = vmatprep.subr.bf16.mxu0 %v2756
    %4337 = vmatpush1.bf16.msra.mxu0 %v2755
    %4338 = vmatprep.subr.bf16.mxu0 %v2764
    %4339 = vmatpush1.bf16.msra.mxu0 %v2763
    %4340 = vmatprep.subr.bf16.mxu0 %v2772
    %4341 = vmatpush1.bf16.msra.mxu0 %v2771
    %4342 = vmatprep.subr.bf16.mxu0 %v2780
    %4343 = vmatpush1.bf16.msra.mxu0 %v2779
    %4344 = vmatprep.subr.bf16.mxu0 %v2788
    %4345 = vmatpush1.bf16.msra.mxu0 %v2787
    %4346 = vmatprep.subr.bf16.mxu0 %v2796
    %4347 = vmatpush1.bf16.msra.mxu0 %v2795
    %4348 = vmatprep.subr.bf16.mxu0 %v2804
    %4349 = vmatpush1.bf16.msra.mxu0 %v2803
    %4350 = vmatprep.subr.bf16.mxu0 %v2812
    %4351 = vmatpush1.bf16.msra.mxu0 %v2811
    %4352 = vmatprep.subr.bf16.mxu0 %v2820
    %4353 = vmatpush1.bf16.msra.mxu0 %v2819
    %4354 = vmatprep.subr.bf16.mxu0 %v2828
    %4355 = vmatpush1.bf16.msra.mxu0 %v2827
    %4356 = vmatprep.subr.bf16.mxu0 %v2836
    %4357 = vmatpush1.bf16.msra.mxu0 %v2835
    %4358 = vmatprep.subr.bf16.mxu0 %v2844
    %4359 = vmatpush1.bf16.msra.mxu0 %v2843
    %4360 = vmatprep.subr.bf16.mxu0 %v2852
    %4361 = vmatpush1.bf16.msra.mxu0 %v2851
    %4362 = vmatprep.subr.bf16.mxu0 %v2860
    %4363 = vmatpush1.bf16.msra.mxu0 %v2859
    %4364 = vmatprep.subr.bf16.mxu0 %v2868
    %4365 = vmatpush1.bf16.msra.mxu0 %v2867
    %4366 = vmatprep.mubr.bf16.mxu0 %v744
    %4367 = vmatmul.mubr.bf16.gmra.mrb[0].mxu0 %v743
    %v4368 = vpop.f32.mrb[0].mxu0
    %v4369 = vadd.f32 %v4328, %v4368
    %v4370 = vpop.f32.mrb[0].mxu0
    %v4371 = vadd.f32 %v4330, %v4370
    %v4372 = vpop.f32.mrb[0].mxu0
    %v4373 = vpop.f32.mrb[0].mxu0
    %4374 = vdwg.mxu0
    %4375 = vmatprep.subr.bf16.mxu0 %v2876
    %4376 = vmatpush1.bf16.msra.mxu0 %v2875
    %4377 = vmatprep.subr.bf16.mxu0 %v2884
    %4378 = vmatpush1.bf16.msra.mxu0 %v2883
    %4379 = vmatprep.subr.bf16.mxu0 %v2892
    %4380 = vmatpush1.bf16.msra.mxu0 %v2891
    %4381 = vmatprep.subr.bf16.mxu0 %v2900
    %4382 = vmatpush1.bf16.msra.mxu0 %v2899
    %4383 = vmatprep.subr.bf16.mxu0 %v2908
    %4384 = vmatpush1.bf16.msra.mxu0 %v2907
    %4385 = vmatprep.subr.bf16.mxu0 %v2916
    %4386 = vmatpush1.bf16.msra.mxu0 %v2915
    %4387 = vmatprep.subr.bf16.mxu0 %v2924
    %4388 = vmatpush1.bf16.msra.mxu0 %v2923
    %4389 = vmatprep.subr.bf16.mxu0 %v2932
    %4390 = vmatpush1.bf16.msra.mxu0 %v2931
    %4391 = vmatprep.subr.bf16.mxu0 %v2940
    %4392 = vmatpush1.bf16.msra.mxu0 %v2939
    %4393 = vmatprep.subr.bf16.mxu0 %v2948
    %4394 = vmatpush1.bf16.msra.mxu0 %v2947
    %4395 = vmatprep.subr.bf16.mxu0 %v2956
    %4396 = vmatpush1.bf16.msra.mxu0 %v2955
    %4397 = vmatprep.subr.bf16.mxu0 %v2964
    %4398 = vmatpush1.bf16.msra.mxu0 %v2963
    %4399 = vmatprep.subr.bf16.mxu0 %v2972
    %4400 = vmatpush1.bf16.msra.mxu0 %v2971
    %4401 = vmatprep.subr.bf16.mxu0 %v2980
    %4402 = vmatpush1.bf16.msra.mxu0 %v2979
    %4403 = vmatprep.subr.bf16.mxu0 %v2988
    %4404 = vmatpush1.bf16.msra.mxu0 %v2987
    %4405 = vmatprep.subr.bf16.mxu0 %v2996
    %4406 = vmatpush1.bf16.msra.mxu0 %v2995
    %4407 = vmatprep.mubr.bf16.mxu0 %v746
    %4408 = vmatmul.mubr.bf16.gmra.mrb[0].mxu0 %v745
    %v4409 = vpop.f32.mrb[0].mxu0
    %v4410 = vadd.f32 %v4369, %v4409
    %v4411 = vpop.f32.mrb[0].mxu0
    %v4412 = vadd.f32 %v4371, %v4411
    %v4413 = vpop.f32.mrb[0].mxu0
    %v4414 = vpop.f32.mrb[0].mxu0
    %4415 = vdwg.mxu0
    %4416 = vmatprep.subr.bf16.mxu0 %v3004
    %4417 = vmatpush1.bf16.msra.mxu0 %v3003
    %4418 = vmatprep.subr.bf16.mxu0 %v3012
    %4419 = vmatpush1.bf16.msra.mxu0 %v3011
    %4420 = vmatprep.subr.bf16.mxu0 %v3020
    %4421 = vmatpush1.bf16.msra.mxu0 %v3019
    %4422 = vmatprep.subr.bf16.mxu0 %v3028
    %4423 = vmatpush1.bf16.msra.mxu0 %v3027
    %4424 = vmatprep.subr.bf16.mxu0 %v3036
    %4425 = vmatpush1.bf16.msra.mxu0 %v3035
    %4426 = vmatprep.subr.bf16.mxu0 %v3044
    %4427 = vmatpush1.bf16.msra.mxu0 %v3043
    %4428 = vmatprep.subr.bf16.mxu0 %v3052
    %4429 = vmatpush1.bf16.msra.mxu0 %v3051
    %4430 = vmatprep.subr.bf16.mxu0 %v3060
    %4431 = vmatpush1.bf16.msra.mxu0 %v3059
    %4432 = vmatprep.subr.bf16.mxu0 0
    %4433 = vmatpush1.bf16.msra.mxu0 0
    %4434 = vmatprep.subr.bf16.mxu0 0
    %4435 = vmatpush1.bf16.msra.mxu0 0
    %4436 = vmatprep.subr.bf16.mxu0 0
    %4437 = vmatpush1.bf16.msra.mxu0 0
    %4438 = vmatprep.subr.bf16.mxu0 0
    %4439 = vmatpush1.bf16.msra.mxu0 0
    %4440 = vmatprep.subr.bf16.mxu0 0
    %4441 = vmatpush1.bf16.msra.mxu0 0
    %4442 = vmatprep.subr.bf16.mxu0 0
    %4443 = vmatpush1.bf16.msra.mxu0 0
    %4444 = vmatprep.subr.bf16.mxu0 0
    %4445 = vmatpush1.bf16.msra.mxu0 0
    %4446 = vmatprep.subr.bf16.mxu0 0
    %4447 = vmatpush1.bf16.msra.mxu0 0
    %4448 = vmatprep.mubr.bf16.mxu0 0
    %4449 = vmatmul.mubr.bf16.gmra.mrb[0].mxu0 %v747
    %v4450 = vpop.f32.mrb[0].mxu0
    %v4451 = vadd.f32 %v4410, %v4450
    %v4452 = vpop.f32.mrb[0].mxu0
    %v4453 = vadd.f32 %v4412, %v4452
    %v4454 = vpop.f32.mrb[0].mxu0
    %v4455 = vpop.f32.mrb[0].mxu0
    %4456 = vdwg.mxu0
    %v4457 = vrot.slane %v3836, 4
    %v4458 = vadd.f32 %v3836, %v4457
    %v4459 = vrot.slane %v4458, 2
    %v4460 = vadd.f32 %v4458, %v4459
    %v4461 = vrot.slane %v4460, 1
    %v4462 = vadd.f32 %v4460, %v4461
    %v4463 = vrot.slane %v3838, 4
    %v4464 = vadd.f32 %v3838, %v4463
    %v4465 = vrot.slane %v4464, 2
    %v4466 = vadd.f32 %v4464, %v4465
    %v4467 = vrot.slane %v4466, 1
    %v4468 = vadd.f32 %v4466, %v4467
    %v4469 = vrot.slane %v4041, 4
    %v4470 = vadd.f32 %v4041, %v4469
    %v4471 = vrot.slane %v4470, 2
    %v4472 = vadd.f32 %v4470, %v4471
    %v4473 = vrot.slane %v4472, 1
    %v4474 = vadd.f32 %v4472, %v4473
    %v4475 = vrot.slane %v4043, 4
    %v4476 = vadd.f32 %v4043, %v4475
    %v4477 = vrot.slane %v4476, 2
    %v4478 = vadd.f32 %v4476, %v4477
    %v4479 = vrot.slane %v4478, 1
    %v4480 = vadd.f32 %v4478, %v4479
    %v4481 = vrot.slane %v4246, 4
    %v4482 = vadd.f32 %v4246, %v4481
    %v4483 = vrot.slane %v4482, 2
    %v4484 = vadd.f32 %v4482, %v4483
    %v4485 = vrot.slane %v4484, 1
    %v4486 = vadd.f32 %v4484, %v4485
    %v4487 = vrot.slane %v4248, 4
    %v4488 = vadd.f32 %v4248, %v4487
    %v4489 = vrot.slane %v4488, 2
    %v4490 = vadd.f32 %v4488, %v4489
    %v4491 = vrot.slane %v4490, 1
    %v4492 = vadd.f32 %v4490, %v4491
    %v4493 = vrot.slane %v4451, 4
    %v4494 = vadd.f32 %v4451, %v4493
    %v4495 = vrot.slane %v4494, 2
    %v4496 = vadd.f32 %v4494, %v4495
    %v4497 = vrot.slane %v4496, 1
    %v4498 = vadd.f32 %v4496, %v4497
    %v4499 = vrot.slane %v4453, 4
    %v4500 = vadd.f32 %v4453, %v4499
    %v4501 = vrot.slane %v4500, 2
    %v4502 = vadd.f32 %v4500, %v4501
    %v4503 = vrot.slane %v4502, 1
    %v4504 = vadd.f32 %v4502, %v4503
    %v4505 = vmul.f32 %v4462, 0.125
    %v4506 = vmul.f32 %v4468, 0.125
    %v4507 = vmul.f32 %v4474, 0.125
    %v4508 = vmul.f32 %v4480, 0.125
    %v4509 = vmul.f32 %v4486, 0.125
    %v4510 = vmul.f32 %v4492, 0.125
    %v4511 = vmul.f32 %v4498, 0.125
    %v4512 = vmul.f32 %v4504, 0.125
    %v4513 = vsub.f32 %v3836, %v4505
    %v4514 = vsub.f32 %v3838, %v4506
    %v4515 = vsub.f32 %v4041, %v4507
    %v4516 = vsub.f32 %v4043, %v4508
    %v4517 = vsub.f32 %v4246, %v4509
    %v4518 = vsub.f32 %v4248, %v4510
    %v4519 = vsub.f32 %v4451, %v4511
    %v4520 = vsub.f32 %v4453, %v4512
    %v4521 = vmul.f32 %v4513, %v4513
    %v4522 = vmul.f32 %v4514, %v4514
    %v4523 = vmul.f32 %v4515, %v4515
    %v4524 = vmul.f32 %v4516, %v4516
    %v4525 = vmul.f32 %v4517, %v4517
    %v4526 = vmul.f32 %v4518, %v4518
    %v4527 = vmul.f32 %v4519, %v4519
    %v4528 = vmul.f32 %v4520, %v4520
    %v4529 = vrot.slane %v4521, 4
    %v4530 = vadd.f32 %v4521, %v4529
    %v4531 = vrot.slane %v4530, 2
    %v4532 = vadd.f32 %v4530, %v4531
    %v4533 = vrot.slane %v4532, 1
    %v4534 = vadd.f32 %v4532, %v4533
    %v4535 = vrot.slane %v4522, 4
    %v4536 = vadd.f32 %v4522, %v4535
    %v4537 = vrot.slane %v4536, 2
    %v4538 = vadd.f32 %v4536, %v4537
    %v4539 = vrot.slane %v4538, 1
    %v4540 = vadd.f32 %v4538, %v4539
    %v4541 = vrot.slane %v4523, 4
    %v4542 = vadd.f32 %v4523, %v4541
    %v4543 = vrot.slane %v4542, 2
    %v4544 = vadd.f32 %v4542, %v4543
    %v4545 = vrot.slane %v4544, 1
    %v4546 = vadd.f32 %v4544, %v4545
    %v4547 = vrot.slane %v4524, 4
    %v4548 = vadd.f32 %v4524, %v4547
    %v4549 = vrot.slane %v4548, 2
    %v4550 = vadd.f32 %v4548, %v4549
    %v4551 = vrot.slane %v4550, 1
    %v4552 = vadd.f32 %v4550, %v4551
    %v4553 = vrot.slane %v4525, 4
    %v4554 = vadd.f32 %v4525, %v4553
    %v4555 = vrot.slane %v4554, 2
    %v4556 = vadd.f32 %v4554, %v4555
    %v4557 = vrot.slane %v4556, 1
    %v4558 = vadd.f32 %v4556, %v4557
    %v4559 = vrot.slane %v4526, 4
    %v4560 = vadd.f32 %v4526, %v4559
    %v4561 = vrot.slane %v4560, 2
    %v4562 = vadd.f32 %v4560, %v4561
    %v4563 = vrot.slane %v4562, 1
    %v4564 = vadd.f32 %v4562, %v4563
    %v4565 = vrot.slane %v4527, 4
    %v4566 = vadd.f32 %v4527, %v4565
    %v4567 = vrot.slane %v4566, 2
    %v4568 = vadd.f32 %v4566, %v4567
    %v4569 = vrot.slane %v4568, 1
    %v4570 = vadd.f32 %v4568, %v4569
    %v4571 = vrot.slane %v4528, 4
    %v4572 = vadd.f32 %v4528, %v4571
    %v4573 = vrot.slane %v4572, 2
    %v4574 = vadd.f32 %v4572, %v4573
    %v4575 = vrot.slane %v4574, 1
    %v4576 = vadd.f32 %v4574, %v4575
    %v4577 = vmul.f32 %v4534, 0.125
    %v4578 = vmul.f32 %v4540, 0.125
    %v4579 = vmul.f32 %v4546, 0.125
    %v4580 = vmul.f32 %v4552, 0.125
    %v4581 = vmul.f32 %v4558, 0.125
    %v4582 = vmul.f32 %v4564, 0.125
    %v4583 = vmul.f32 %v4570, 0.125
    %v4584 = vmul.f32 %v4576, 0.125
    %v4585 = vld [vmem:[#allocation7] sm:$0xff]
    %v4586 = vadd.f32 %v4577, 1e-05
    %v4587 = vadd.f32 %v4578, 1e-05
    %v4588 = vadd.f32 %v4579, 1e-05
    %v4589 = vadd.f32 %v4580, 1e-05
    %v4590 = vadd.f32 %v4581, 1e-05
    %v4591 = vadd.f32 %v4582, 1e-05
    %v4592 = vadd.f32 %v4583, 1e-05
    %v4593 = vadd.f32 %v4584, 1e-05
    %v4594 = vrsqrt.pop %v4586
    %v4595 = vrsqrt.pop %v4587
    %v4596 = vrsqrt.pop %v4588
    %v4597 = vrsqrt.pop %v4589
    %v4598 = vrsqrt.pop %v4590
    %v4599 = vrsqrt.pop %v4591
    %v4600 = vrsqrt.pop %v4592
    %v4601 = vrsqrt.pop %v4593
    %v4610 = vcombine.low %v4594, %v4595
    %v4611 = vcombine.low %v4596, %v4597
    %v4612 = vcombine.low %v4598, %v4599
    %v4613 = vcombine.low %v4600, %v4601
    %v4615 = vunpack.c.l.s4 1966171168
    %v4616 = vunpack.c.0.s8 %v4615
    %v4617 = vlaneseq
    %v4618 = vshrl.u32 %v4617, 7
    %v4619 = vsub.s32 %v4616, %v4618
    %v4620 = vrot.slane %v4610, %v4619
    %v4622 = vunpack.c.l.s4 1966171168
    %v4623 = vunpack.c.0.s8 %v4622
    %v4624 = vlaneseq
    %v4625 = vshrl.u32 %v4624, 7
    %v4626 = vsub.s32 %v4623, %v4625
    %v4627 = vrot.slane %v4611, %v4626
    %v4629 = vunpack.c.l.s4 1966171168
    %v4630 = vunpack.c.0.s8 %v4629
    %v4631 = vlaneseq
    %v4632 = vshrl.u32 %v4631, 7
    %v4633 = vsub.s32 %v4630, %v4632
    %v4634 = vrot.slane %v4612, %v4633
    %v4636 = vunpack.c.l.s4 1966171168
    %v4637 = vunpack.c.0.s8 %v4636
    %v4638 = vlaneseq
    %v4639 = vshrl.u32 %v4638, 7
    %v4640 = vsub.s32 %v4637, %v4639
    %v4641 = vrot.slane %v4613, %v4640
    %v4642 = vcombine.low %v4620, %v4627
    %v4643 = vcombine.low %v4634, %v4641
    %v4645 = vunpack.c.l.s4 1966171168
    %v4646 = vunpack.c.0.s8 %v4645
    %v4647 = vlaneseq
    %v4648 = vshrl.u32 %v4647, 7
    %v4649 = vsub.s32 %v4646, %v4648
    %v4650 = vrot.slane %v4642, %v4649
    %v4652 = vunpack.c.l.s4 1966171168
    %v4653 = vunpack.c.0.s8 %v4652
    %v4654 = vlaneseq
    %v4655 = vshrl.u32 %v4654, 7
    %v4656 = vsub.s32 %v4653, %v4655
    %v4657 = vrot.slane %v4643, %v4656
    %v4658 = vcombine.low %v4650, %v4657
    %v4660 = vmul.f32 %v4585, %v4658
    %v4662 = vlaneseq
    %v4663 = vshrl.u32 %v4662, 7
    %v4664 = vsub.s32 0, %v4663
    %v4665 = vrot.slane %v4660, %v4664
    %v4666 = vlaneseq
    %v4667 = vshrl.u32 %v4666, 7
    %v4668 = vsub.s32 1, %v4667
    %v4669 = vrot.slane %v4660, %v4668
    %v4670 = vlaneseq
    %v4671 = vshrl.u32 %v4670, 7
    %v4672 = vsub.s32 2, %v4671
    %v4673 = vrot.slane %v4660, %v4672
    %v4674 = vlaneseq
    %v4675 = vshrl.u32 %v4674, 7
    %v4676 = vsub.s32 3, %v4675
    %v4677 = vrot.slane %v4660, %v4676
    %v4678 = vlaneseq
    %v4679 = vshrl.u32 %v4678, 7
    %v4680 = vsub.s32 4, %v4679
    %v4681 = vrot.slane %v4660, %v4680
    %v4682 = vlaneseq
    %v4683 = vshrl.u32 %v4682, 7
    %v4684 = vsub.s32 5, %v4683
    %v4685 = vrot.slane %v4660, %v4684
    %v4686 = vlaneseq
    %v4687 = vshrl.u32 %v4686, 7
    %v4688 = vsub.s32 6, %v4687
    %v4689 = vrot.slane %v4660, %v4688
    %v4690 = vlaneseq
    %v4691 = vshrl.u32 %v4690, 7
    %v4692 = vsub.s32 7, %v4691
    %v4693 = vrot.slane %v4660, %v4692
    %v4702 = vmul.f32 %v4513, %v4665
    %v4703 = vmul.f32 %v4514, %v4669
    %v4704 = vmul.f32 %v4515, %v4673
    %v4705 = vmul.f32 %v4516, %v4677
    %v4706 = vmul.f32 %v4517, %v4681
    %v4707 = vmul.f32 %v4518, %v4685
    %v4708 = vmul.f32 %v4519, %v4689
    %v4709 = vmul.f32 %v4520, %v4693
    %v4710 = vld [vmem:[#allocation8] sm:$0xff]
    %v4712 = vlaneseq
    %v4713 = vshrl.u32 %v4712, 7
    %v4714 = vsub.s32 0, %v4713
    %v4715 = vrot.slane %v4710, %v4714
    %v4716 = vlaneseq
    %v4717 = vshrl.u32 %v4716, 7
    %v4718 = vsub.s32 1, %v4717
    %v4719 = vrot.slane %v4710, %v4718
    %v4720 = vlaneseq
    %v4721 = vshrl.u32 %v4720, 7
    %v4722 = vsub.s32 2, %v4721
    %v4723 = vrot.slane %v4710, %v4722
    %v4724 = vlaneseq
    %v4725 = vshrl.u32 %v4724, 7
    %v4726 = vsub.s32 3, %v4725
    %v4727 = vrot.slane %v4710, %v4726
    %v4728 = vlaneseq
    %v4729 = vshrl.u32 %v4728, 7
    %v4730 = vsub.s32 4, %v4729
    %v4731 = vrot.slane %v4710, %v4730
    %v4732 = vlaneseq
    %v4733 = vshrl.u32 %v4732, 7
    %v4734 = vsub.s32 5, %v4733
    %v4735 = vrot.slane %v4710, %v4734
    %v4736 = vlaneseq
    %v4737 = vshrl.u32 %v4736, 7
    %v4738 = vsub.s32 6, %v4737
    %v4739 = vrot.slane %v4710, %v4738
    %v4740 = vlaneseq
    %v4741 = vshrl.u32 %v4740, 7
    %v4742 = vsub.s32 7, %v4741
    %v4743 = vrot.slane %v4710, %v4742
    %v4752 = vadd.f32 %v4702, %v4715
    %v4753 = vadd.f32 %v4703, %v4719
    %v4754 = vadd.f32 %v4704, %v4723
    %v4755 = vadd.f32 %v4705, %v4727
    %v4756 = vadd.f32 %v4706, %v4731
    %v4757 = vadd.f32 %v4707, %v4735
    %v4758 = vadd.f32 %v4708, %v4739
    %v4759 = vadd.f32 %v4709, %v4743
    %v4760 = vmax.f32 %v4752, 0.0
    %v4761 = vmax.f32 %v4753, 0.0
    %v4762 = vmax.f32 %v4754, 0.0
    %v4763 = vmax.f32 %v4755, 0.0
    %v4764 = vmax.f32 %v4756, 0.0
    %v4765 = vmax.f32 %v4757, 0.0
    %v4766 = vmax.f32 %v4758, 0.0
    %v4767 = vmax.f32 %v4759, 0.0
    %v4768 = vpack.c.bf16 %v4760, %v4760
    %v4769 = vpack.c.bf16 %v4761, %v4761
    %v4770 = vpack.c.bf16 %v4762, %v4762
    %v4771 = vpack.c.bf16 %v4763, %v4763
    %v4772 = vpack.c.bf16 %v4764, %v4764
    %v4773 = vpack.c.bf16 %v4765, %v4765
    %v4774 = vpack.c.bf16 %v4766, %v4766
    %v4775 = vpack.c.bf16 %v4767, %v4767
    %v4776 = vld [vmem:[#allocation10] sm:$0xff]
    %v4777 = vld [vmem:[#allocation10 + $0x8] sm:$0xff]
    %v4778 = vld [vmem:[#allocation10 + $0x10] sm:$0xff]
    %v4779 = vld [vmem:[#allocation10 + $0x18] sm:$0xff]
    %v4780 = vld [vmem:[#allocation10 + $0x20] sm:$0xff]
    %v4781 = vld [vmem:[#allocation10 + $0x28] sm:$0xff]
    %v4782 = vld [vmem:[#allocation10 + $0x30] sm:$0xff]
    %v4783 = vld [vmem:[#allocation10 + $0x38] sm:$0xff]
    %v4784 = vld [vmem:[#allocation10 + $0x40] sm:$0xff]
    %v4785 = vld [vmem:[#allocation10 + $0x48] sm:$0xff]
    %v4786 = vld [vmem:[#allocation10 + $0x50] sm:$0xff]
    %v4787 = vld [vmem:[#allocation10 + $0x58] sm:$0xff]
    %v4788 = vld [vmem:[#allocation10 + $0x60] sm:$0xff]
    %v4789 = vld [vmem:[#allocation10 + $0x68] sm:$0xff]
    %v4790 = vld [vmem:[#allocation10 + $0x70] sm:$0xff]
    %v4791 = vld [vmem:[#allocation10 + $0x78] sm:$0xff]
    %v4792 = vld [vmem:[#allocation10 + $0x80] sm:$0xff]
    %v4793 = vld [vmem:[#allocation10 + $0x88] sm:$0xff]
    %v4794 = vld [vmem:[#allocation10 + $0x90] sm:$0xff]
    %v4795 = vld [vmem:[#allocation10 + $0x98] sm:$0xff]
    %v4796 = vld [vmem:[#allocation10 + $0xa0] sm:$0xff]
    %v4797 = vld [vmem:[#allocation10 + $0xa8] sm:$0xff]
    %v4798 = vld [vmem:[#allocation10 + $0xb0] sm:$0xff]
    %v4799 = vld [vmem:[#allocation10 + $0xb8] sm:$0xff]
    %v4800 = vld [vmem:[#allocation10 + $0xc0] sm:$0xff]
    %v4801 = vld [vmem:[#allocation10 + $0xc8] sm:$0xff]
    %v4802 = vld [vmem:[#allocation10 + $0xd0] sm:$0xff]
    %v4803 = vld [vmem:[#allocation10 + $0xd8] sm:$0xff]
    %v4804 = vld [vmem:[#allocation10 + $0xe0] sm:$0xff]
    %v4805 = vld [vmem:[#allocation10 + $0xe8] sm:$0xff]
    %v4806 = vld [vmem:[#allocation10 + $0xf0] sm:$0xff]
    %v4807 = vld [vmem:[#allocation10 + $0xf8] sm:$0xff]
    %v4808 = vld [vmem:[#allocation10 + $0x100] sm:$0xff]
    %v4809 = vld [vmem:[#allocation10 + $0x108] sm:$0xff]
    %v4810 = vld [vmem:[#allocation10 + $0x110] sm:$0xff]
    %v4811 = vld [vmem:[#allocation10 + $0x118] sm:$0xff]
    %v4812 = vld [vmem:[#allocation10 + $0x120] sm:$0xff]
    %v4813 = vld [vmem:[#allocation10 + $0x128] sm:$0xff]
    %v4814 = vld [vmem:[#allocation10 + $0x130] sm:$0xff]
    %v4815 = vld [vmem:[#allocation10 + $0x138] sm:$0xff]
    %v4816 = vld [vmem:[#allocation10 + $0x140] sm:$0xff]
    %v4817 = vld [vmem:[#allocation10 + $0x148] sm:$0xff]
    %v4818 = vld [vmem:[#allocation10 + $0x150] sm:$0xff]
    %v4819 = vld [vmem:[#allocation10 + $0x158] sm:$0xff]
    %v4820 = vld [vmem:[#allocation10 + $0x160] sm:$0xff]
    %v4821 = vld [vmem:[#allocation10 + $0x168] sm:$0xff]
    %v4822 = vld [vmem:[#allocation10 + $0x170] sm:$0xff]
    %v4823 = vld [vmem:[#allocation10 + $0x178] sm:$0xff]
    %v4824 = vld [vmem:[#allocation10 + $0x180] sm:$0xff]
    %v4825 = vld [vmem:[#allocation10 + $0x188] sm:$0xff]
    %v4826 = vld [vmem:[#allocation10 + $0x190] sm:$0xff]
    %v4827 = vld [vmem:[#allocation10 + $0x198] sm:$0xff]
    %v4828 = vld [vmem:[#allocation10 + $0x1a0] sm:$0xff]
    %v4829 = vld [vmem:[#allocation10 + $0x1a8] sm:$0xff]
    %v4830 = vld [vmem:[#allocation10 + $0x1b0] sm:$0xff]
    %v4831 = vld [vmem:[#allocation10 + $0x1b8] sm:$0xff]
    %v4832 = vld [vmem:[#allocation10 + $0x1c0] sm:$0xff]
    %v4833 = vld [vmem:[#allocation10 + $0x1c8] sm:$0xff]
    %v4834 = vld [vmem:[#allocation10 + $0x1d0] sm:$0xff]
    %v4835 = vld [vmem:[#allocation10 + $0x1d8] sm:$0xff]
    %v4836 = vld [vmem:[#allocation10 + $0x1e0] sm:$0xff]
    %v4837 = vld [vmem:[#allocation10 + $0x1e8] sm:$0xff]
    %v4838 = vld [vmem:[#allocation10 + $0x1f0] sm:$0xff]
    %v4839 = vld [vmem:[#allocation10 + $0x1f8] sm:$0xff]
    %v4840 = vld [vmem:[#allocation10 + $0x200] sm:$0xff]
    %v4841 = vld [vmem:[#allocation10 + $0x208] sm:$0xff]
    %v4842 = vld [vmem:[#allocation10 + $0x210] sm:$0xff]
    %v4843 = vld [vmem:[#allocation10 + $0x218] sm:$0xff]
    %v4844 = vld [vmem:[#allocation10 + $0x220] sm:$0xff]
    %v4845 = vld [vmem:[#allocation10 + $0x228] sm:$0xff]
    %v4846 = vld [vmem:[#allocation10 + $0x230] sm:$0xff]
    %v4847 = vld [vmem:[#allocation10 + $0x238] sm:$0xff]
    %v4848 = vld [vmem:[#allocation10 + $0x240] sm:$0xff]
    %v4849 = vld [vmem:[#allocation10 + $0x248] sm:$0xff]
    %v4850 = vld [vmem:[#allocation10 + $0x250] sm:$0xff]
    %v4851 = vld [vmem:[#allocation10 + $0x258] sm:$0xff]
    %v4852 = vld [vmem:[#allocation10 + $0x260] sm:$0xff]
    %v4853 = vld [vmem:[#allocation10 + $0x268] sm:$0xff]
    %v4854 = vld [vmem:[#allocation10 + $0x270] sm:$0xff]
    %v4855 = vld [vmem:[#allocation10 + $0x278] sm:$0xff]
    %v4856 = vld [vmem:[#allocation10 + $0x280] sm:$0xff]
    %v4857 = vld [vmem:[#allocation10 + $0x288] sm:$0xff]
    %v4858 = vld [vmem:[#allocation10 + $0x290] sm:$0xff]
    %v4859 = vld [vmem:[#allocation10 + $0x298] sm:$0xff]
    %v4860 = vld [vmem:[#allocation10 + $0x2a0] sm:$0xff]
    %v4861 = vld [vmem:[#allocation10 + $0x2a8] sm:$0xff]
    %v4862 = vld [vmem:[#allocation10 + $0x2b0] sm:$0xff]
    %v4863 = vld [vmem:[#allocation10 + $0x2b8] sm:$0xff]
    %v4864 = vld [vmem:[#allocation10 + $0x2c0] sm:$0xff]
    %v4865 = vld [vmem:[#allocation10 + $0x2c8] sm:$0xff]
    %v4866 = vld [vmem:[#allocation10 + $0x2d0] sm:$0xff]
    %v4867 = vld [vmem:[#allocation10 + $0x2d8] sm:$0xff]
    %v4868 = vld [vmem:[#allocation10 + $0x2e0] sm:$0xff]
    %v4869 = vld [vmem:[#allocation10 + $0x2e8] sm:$0xff]
    %v4870 = vld [vmem:[#allocation10 + $0x2f0] sm:$0xff]
    %v4871 = vld [vmem:[#allocation10 + $0x2f8] sm:$0xff]
    %v4872 = vld [vmem:[#allocation10 + $0x300] sm:$0xff]
    %v4873 = vld [vmem:[#allocation10 + $0x308] sm:$0xff]
    %v4874 = vld [vmem:[#allocation10 + $0x310] sm:$0xff]
    %v4875 = vld [vmem:[#allocation10 + $0x318] sm:$0xff]
    %v4876 = vld [vmem:[#allocation10 + $0x320] sm:$0xff]
    %v4877 = vld [vmem:[#allocation10 + $0x328] sm:$0xff]
    %v4878 = vld [vmem:[#allocation10 + $0x330] sm:$0xff]
    %v4879 = vld [vmem:[#allocation10 + $0x338] sm:$0xff]
    %v4880 = vld [vmem:[#allocation10 + $0x340] sm:$0xff]
    %v4881 = vld [vmem:[#allocation10 + $0x348] sm:$0xff]
    %v4882 = vld [vmem:[#allocation10 + $0x350] sm:$0xff]
    %v4883 = vld [vmem:[#allocation10 + $0x358] sm:$0xff]
    %v4884 = vld [vmem:[#allocation10 + $0x360] sm:$0xff]
    %v4885 = vld [vmem:[#allocation10 + $0x368] sm:$0xff]
    %v4886 = vld [vmem:[#allocation10 + $0x370] sm:$0xff]
    %v4887 = vld [vmem:[#allocation10 + $0x378] sm:$0xff]
    %v4888 = vld [vmem:[#allocation10 + $0x380] sm:$0xff]
    %v4889 = vld [vmem:[#allocation10 + $0x388] sm:$0xff]
    %v4890 = vld [vmem:[#allocation10 + $0x390] sm:$0xff]
    %v4891 = vld [vmem:[#allocation10 + $0x398] sm:$0xff]
    %v4892 = vld [vmem:[#allocation10 + $0x3a0] sm:$0xff]
    %v4893 = vld [vmem:[#allocation10 + $0x3a8] sm:$0xff]
    %v4894 = vld [vmem:[#allocation10 + $0x3b0] sm:$0xff]
    %v4895 = vld [vmem:[#allocation10 + $0x3b8] sm:$0xff]
    %v4896 = vld [vmem:[#allocation10 + $0x3c0] sm:$0xff]
    %v4897 = vld [vmem:[#allocation10 + $0x3c8] sm:$0xff]
    %v4898 = vld [vmem:[#allocation10 + $0x3d0] sm:$0xff]
    %v4899 = vld [vmem:[#allocation10 + $0x3d8] sm:$0xff]
    %v4900 = vld [vmem:[#allocation10 + $0x3e0] sm:$0xff]
    %v4901 = vld [vmem:[#allocation10 + $0x3e8] sm:$0xff]
    %v4902 = vld [vmem:[#allocation10 + $0x3f0] sm:$0xff]
    %v4903 = vld [vmem:[#allocation10 + $0x3f8] sm:$0xff]
    %v4904 = vld [vmem:[#allocation10 + $0x400] sm:$0xff]
    %v4905 = vld [vmem:[#allocation10 + $0x408] sm:$0xff]
    %v4906 = vld [vmem:[#allocation10 + $0x410] sm:$0xff]
    %v4907 = vld [vmem:[#allocation10 + $0x418] sm:$0xff]
    %v4908 = vld [vmem:[#allocation10 + $0x420] sm:$0xff]
    %v4909 = vld [vmem:[#allocation10 + $0x428] sm:$0xff]
    %v4910 = vld [vmem:[#allocation10 + $0x430] sm:$0xff]
    %v4911 = vld [vmem:[#allocation10 + $0x438] sm:$0xff]
    %v4912 = vld [vmem:[#allocation10 + $0x440] sm:$0xff]
    %v4913 = vld [vmem:[#allocation10 + $0x448] sm:$0xff]
    %v4914 = vld [vmem:[#allocation10 + $0x450] sm:$0xff]
    %v4915 = vld [vmem:[#allocation10 + $0x458] sm:$0xff]
    %v4916 = vld [vmem:[#allocation10 + $0x460] sm:$0xff]
    %v4917 = vld [vmem:[#allocation10 + $0x468] sm:$0xff]
    %v4918 = vld [vmem:[#allocation10 + $0x470] sm:$0xff]
    %v4919 = vld [vmem:[#allocation10 + $0x478] sm:$0xff]
    %v4920 = vld [vmem:[#allocation10 + $0x480] sm:$0xff]
    %v4921 = vld [vmem:[#allocation10 + $0x488] sm:$0xff]
    %v4922 = vld [vmem:[#allocation10 + $0x490] sm:$0xff]
    %v4923 = vld [vmem:[#allocation10 + $0x498] sm:$0xff]
    %v4924 = vld [vmem:[#allocation10 + $0x4a0] sm:$0xff]
    %v4925 = vld [vmem:[#allocation10 + $0x4a8] sm:$0xff]
    %v4926 = vld [vmem:[#allocation10 + $0x4b0] sm:$0xff]
    %v4927 = vld [vmem:[#allocation10 + $0x4b8] sm:$0xff]
    %v4928 = vld [vmem:[#allocation10 + $0x4c0] sm:$0xff]
    %v4929 = vld [vmem:[#allocation10 + $0x4c8] sm:$0xff]
    %v4930 = vld [vmem:[#allocation10 + $0x4d0] sm:$0xff]
    %v4931 = vld [vmem:[#allocation10 + $0x4d8] sm:$0xff]
    %v4932 = vld [vmem:[#allocation10 + $0x4e0] sm:$0xff]
    %v4933 = vld [vmem:[#allocation10 + $0x4e8] sm:$0xff]
    %v4934 = vld [vmem:[#allocation10 + $0x4f0] sm:$0xff]
    %v4935 = vld [vmem:[#allocation10 + $0x4f8] sm:$0xff]
    %v4936 = vld [vmem:[#allocation10 + $0x500] sm:$0xff]
    %v4937 = vld [vmem:[#allocation10 + $0x508] sm:$0xff]
    %v4938 = vld [vmem:[#allocation10 + $0x510] sm:$0xff]
    %v4939 = vld [vmem:[#allocation10 + $0x518] sm:$0xff]
    %v4940 = vld [vmem:[#allocation10 + $0x520] sm:$0xff]
    %v4941 = vld [vmem:[#allocation10 + $0x528] sm:$0xff]
    %v4942 = vld [vmem:[#allocation10 + $0x530] sm:$0xff]
    %v4943 = vld [vmem:[#allocation10 + $0x538] sm:$0xff]
    %v4944 = vld [vmem:[#allocation10 + $0x540] sm:$0xff]
    %v4945 = vld [vmem:[#allocation10 + $0x548] sm:$0xff]
    %v4946 = vld [vmem:[#allocation10 + $0x550] sm:$0xff]
    %v4947 = vld [vmem:[#allocation10 + $0x558] sm:$0xff]
    %v4948 = vld [vmem:[#allocation10 + $0x560] sm:$0xff]
    %v4949 = vld [vmem:[#allocation10 + $0x568] sm:$0xff]
    %v4950 = vld [vmem:[#allocation10 + $0x570] sm:$0xff]
    %v4951 = vld [vmem:[#allocation10 + $0x578] sm:$0xff]
    %v4952 = vld [vmem:[#allocation10 + $0x580] sm:$0xff]
    %v4953 = vld [vmem:[#allocation10 + $0x588] sm:$0xff]
    %v4954 = vld [vmem:[#allocation10 + $0x590] sm:$0xff]
    %v4955 = vld [vmem:[#allocation10 + $0x598] sm:$0xff]
    %v4956 = vld [vmem:[#allocation10 + $0x5a0] sm:$0xff]
    %v4957 = vld [vmem:[#allocation10 + $0x5a8] sm:$0xff]
    %v4958 = vld [vmem:[#allocation10 + $0x5b0] sm:$0xff]
    %v4959 = vld [vmem:[#allocation10 + $0x5b8] sm:$0xff]
    %v4960 = vld [vmem:[#allocation10 + $0x5c0] sm:$0xff]
    %v4961 = vld [vmem:[#allocation10 + $0x5c8] sm:$0xff]
    %v4962 = vld [vmem:[#allocation10 + $0x5d0] sm:$0xff]
    %v4963 = vld [vmem:[#allocation10 + $0x5d8] sm:$0xff]
    %v4964 = vld [vmem:[#allocation10 + $0x5e0] sm:$0xff]
    %v4965 = vld [vmem:[#allocation10 + $0x5e8] sm:$0xff]
    %v4966 = vld [vmem:[#allocation10 + $0x5f0] sm:$0xff]
    %v4967 = vld [vmem:[#allocation10 + $0x5f8] sm:$0xff]
    %v4968 = vld [vmem:[#allocation10 + $0x600] sm:$0xff]
    %v4969 = vld [vmem:[#allocation10 + $0x608] sm:$0xff]
    %v4970 = vld [vmem:[#allocation10 + $0x610] sm:$0xff]
    %v4971 = vld [vmem:[#allocation10 + $0x618] sm:$0xff]
    %v4972 = vld [vmem:[#allocation10 + $0x620] sm:$0xff]
    %v4973 = vld [vmem:[#allocation10 + $0x628] sm:$0xff]
    %v4974 = vld [vmem:[#allocation10 + $0x630] sm:$0xff]
    %v4975 = vld [vmem:[#allocation10 + $0x638] sm:$0xff]
    %v4976 = vld [vmem:[#allocation10 + $0x640] sm:$0xff]
    %v4977 = vld [vmem:[#allocation10 + $0x648] sm:$0xff]
    %v4978 = vld [vmem:[#allocation10 + $0x650] sm:$0xff]
    %v4979 = vld [vmem:[#allocation10 + $0x658] sm:$0xff]
    %v4980 = vld [vmem:[#allocation10 + $0x660] sm:$0xff]
    %v4981 = vld [vmem:[#allocation10 + $0x668] sm:$0xff]
    %v4982 = vld [vmem:[#allocation10 + $0x670] sm:$0xff]
    %v4983 = vld [vmem:[#allocation10 + $0x678] sm:$0xff]
    %v4984 = vld [vmem:[#allocation10 + $0x680] sm:$0xff]
    %v4985 = vld [vmem:[#allocation10 + $0x688] sm:$0xff]
    %v4986 = vld [vmem:[#allocation10 + $0x690] sm:$0xff]
    %v4987 = vld [vmem:[#allocation10 + $0x698] sm:$0xff]
    %v4988 = vld [vmem:[#allocation10 + $0x6a0] sm:$0xff]
    %v4989 = vld [vmem:[#allocation10 + $0x6a8] sm:$0xff]
    %v4990 = vld [vmem:[#allocation10 + $0x6b0] sm:$0xff]
    %v4991 = vld [vmem:[#allocation10 + $0x6b8] sm:$0xff]
    %v4992 = vld [vmem:[#allocation10 + $0x6c0] sm:$0xff]
    %v4993 = vld [vmem:[#allocation10 + $0x6c8] sm:$0xff]
    %v4994 = vld [vmem:[#allocation10 + $0x6d0] sm:$0xff]
    %v4995 = vld [vmem:[#allocation10 + $0x6d8] sm:$0xff]
    %v4996 = vld [vmem:[#allocation10 + $0x6e0] sm:$0xff]
    %v4997 = vld [vmem:[#allocation10 + $0x6e8] sm:$0xff]
    %v4998 = vld [vmem:[#allocation10 + $0x6f0] sm:$0xff]
    %v4999 = vld [vmem:[#allocation10 + $0x6f8] sm:$0xff]
    %v5000 = vld [vmem:[#allocation10 + $0x700] sm:$0xff]
    %v5001 = vld [vmem:[#allocation10 + $0x708] sm:$0xff]
    %v5002 = vld [vmem:[#allocation10 + $0x710] sm:$0xff]
    %v5003 = vld [vmem:[#allocation10 + $0x718] sm:$0xff]
    %v5004 = vld [vmem:[#allocation10 + $0x720] sm:$0xff]
    %v5005 = vld [vmem:[#allocation10 + $0x728] sm:$0xff]
    %v5006 = vld [vmem:[#allocation10 + $0x730] sm:$0xff]
    %v5007 = vld [vmem:[#allocation10 + $0x738] sm:$0xff]
    %v5008 = vld [vmem:[#allocation10 + $0x740] sm:$0xff]
    %v5009 = vld [vmem:[#allocation10 + $0x748] sm:$0xff]
    %v5010 = vld [vmem:[#allocation10 + $0x750] sm:$0xff]
    %v5011 = vld [vmem:[#allocation10 + $0x758] sm:$0xff]
    %v5012 = vld [vmem:[#allocation10 + $0x760] sm:$0xff]
    %v5013 = vld [vmem:[#allocation10 + $0x768] sm:$0xff]
    %v5014 = vld [vmem:[#allocation10 + $0x770] sm:$0xff]
    %v5015 = vld [vmem:[#allocation10 + $0x778] sm:$0xff]
    %v5016 = vld [vmem:[#allocation10 + $0x780] sm:$0xff]
    %v5017 = vld [vmem:[#allocation10 + $0x788] sm:$0xff]
    %v5018 = vld [vmem:[#allocation10 + $0x790] sm:$0xff]
    %v5019 = vld [vmem:[#allocation10 + $0x798] sm:$0xff]
    %v5020 = vld [vmem:[#allocation10 + $0x7a0] sm:$0xff]
    %v5021 = vld [vmem:[#allocation10 + $0x7a8] sm:$0xff]
    %v5022 = vld [vmem:[#allocation10 + $0x7b0] sm:$0xff]
    %v5023 = vld [vmem:[#allocation10 + $0x7b8] sm:$0xff]
    %v5024 = vld [vmem:[#allocation10 + $0x7c0] sm:$0xff]
    %v5025 = vld [vmem:[#allocation10 + $0x7c8] sm:$0xff]
    %v5026 = vld [vmem:[#allocation10 + $0x7d0] sm:$0xff]
    %v5027 = vld [vmem:[#allocation10 + $0x7d8] sm:$0xff]
    %v5028 = vld [vmem:[#allocation10 + $0x7e0] sm:$0xff]
    %v5029 = vld [vmem:[#allocation10 + $0x7e8] sm:$0xff]
    %v5030 = vld [vmem:[#allocation10 + $0x7f0] sm:$0xff]
    %v5031 = vld [vmem:[#allocation10 + $0x7f8] sm:$0xff]
    %v5032 = vld [vmem:[#allocation10 + $0x800] sm:$0xff]
    %v5033 = vld [vmem:[#allocation10 + $0x808] sm:$0xff]
    %v5034 = vld [vmem:[#allocation10 + $0x810] sm:$0xff]
    %v5035 = vld [vmem:[#allocation10 + $0x818] sm:$0xff]
    %v5036 = vld [vmem:[#allocation10 + $0x820] sm:$0xff]
    %v5037 = vld [vmem:[#allocation10 + $0x828] sm:$0xff]
    %v5038 = vld [vmem:[#allocation10 + $0x830] sm:$0xff]
    %v5039 = vld [vmem:[#allocation10 + $0x838] sm:$0xff]
    %v5040 = vld [vmem:[#allocation10 + $0x840] sm:$0xff]
    %v5041 = vld [vmem:[#allocation10 + $0x848] sm:$0xff]
    %v5042 = vld [vmem:[#allocation10 + $0x850] sm:$0xff]
    %v5043 = vld [vmem:[#allocation10 + $0x858] sm:$0xff]
    %v5044 = vld [vmem:[#allocation10 + $0x860] sm:$0xff]
    %v5045 = vld [vmem:[#allocation10 + $0x868] sm:$0xff]
    %v5046 = vld [vmem:[#allocation10 + $0x870] sm:$0xff]
    %v5047 = vld [vmem:[#allocation10 + $0x878] sm:$0xff]
    %v5048 = vld [vmem:[#allocation10 + $0x880] sm:$0xff]
    %v5049 = vld [vmem:[#allocation10 + $0x888] sm:$0xff]
    %v5050 = vld [vmem:[#allocation10 + $0x890] sm:$0xff]
    %v5051 = vld [vmem:[#allocation10 + $0x898] sm:$0xff]
    %v5052 = vld [vmem:[#allocation10 + $0x8a0] sm:$0xff]
    %v5053 = vld [vmem:[#allocation10 + $0x8a8] sm:$0xff]
    %v5054 = vld [vmem:[#allocation10 + $0x8b0] sm:$0xff]
    %v5055 = vld [vmem:[#allocation10 + $0x8b8] sm:$0xff]
    %v5056 = vld [vmem:[#allocation10 + $0x8c0] sm:$0xff]
    %v5057 = vld [vmem:[#allocation10 + $0x8c8] sm:$0xff]
    %v5058 = vld [vmem:[#allocation10 + $0x8d0] sm:$0xff]
    %v5059 = vld [vmem:[#allocation10 + $0x8d8] sm:$0xff]
    %v5060 = vld [vmem:[#allocation10 + $0x8e0] sm:$0xff]
    %v5061 = vld [vmem:[#allocation10 + $0x8e8] sm:$0xff]
    %v5062 = vld [vmem:[#allocation10 + $0x8f0] sm:$0xff]
    %v5063 = vld [vmem:[#allocation10 + $0x8f8] sm:$0xff]
    %v5064 = vld [vmem:[#allocation10 + $0x900] sm:$0xff]
    %v5065 = vld [vmem:[#allocation10 + $0x908] sm:$0xff]
    %v5066 = vld [vmem:[#allocation10 + $0x910] sm:$0xff]
    %v5067 = vld [vmem:[#allocation10 + $0x918] sm:$0xff]
    %v5068 = vld [vmem:[#allocation10 + $0x920] sm:$0xff]
    %v5069 = vld [vmem:[#allocation10 + $0x928] sm:$0xff]
    %v5070 = vld [vmem:[#allocation10 + $0x930] sm:$0xff]
    %v5071 = vld [vmem:[#allocation10 + $0x938] sm:$0xff]
    %v5072 = vld [vmem:[#allocation10 + $0x940] sm:$0xff]
    %v5073 = vld [vmem:[#allocation10 + $0x948] sm:$0xff]
    %v5074 = vld [vmem:[#allocation10 + $0x950] sm:$0xff]
    %v5075 = vld [vmem:[#allocation10 + $0x958] sm:$0xff]
    %v5076 = vld [vmem:[#allocation10 + $0x960] sm:$0xff]
    %v5077 = vld [vmem:[#allocation10 + $0x968] sm:$0xff]
    %v5078 = vld [vmem:[#allocation10 + $0x970] sm:$0xff]
    %v5079 = vld [vmem:[#allocation10 + $0x978] sm:$0xff]
    %v5080 = vld [vmem:[#allocation10 + $0x980] sm:$0xff]
    %v5081 = vld [vmem:[#allocation10 + $0x988] sm:$0xff]
    %v5082 = vld [vmem:[#allocation10 + $0x990] sm:$0xff]
    %v5083 = vld [vmem:[#allocation10 + $0x998] sm:$0xff]
    %v5084 = vld [vmem:[#allocation10 + $0x9a0] sm:$0xff]
    %v5085 = vld [vmem:[#allocation10 + $0x9a8] sm:$0xff]
    %v5086 = vld [vmem:[#allocation10 + $0x9b0] sm:$0xff]
    %v5087 = vld [vmem:[#allocation10 + $0x9b8] sm:$0xff]
    %v5088 = vld [vmem:[#allocation10 + $0x9c0] sm:$0xff]
    %v5089 = vld [vmem:[#allocation10 + $0x9c8] sm:$0xff]
    %v5090 = vld [vmem:[#allocation10 + $0x9d0] sm:$0xff]
    %v5091 = vld [vmem:[#allocation10 + $0x9d8] sm:$0xff]
    %v5092 = vld [vmem:[#allocation10 + $0x9e0] sm:$0xff]
    %v5093 = vld [vmem:[#allocation10 + $0x9e8] sm:$0xff]
    %v5094 = vld [vmem:[#allocation10 + $0x9f0] sm:$0xff]
    %v5095 = vld [vmem:[#allocation10 + $0x9f8] sm:$0xff]
    %v5096 = vld [vmem:[#allocation10 + $0xa00] sm:$0xff]
    %v5097 = vld [vmem:[#allocation10 + $0xa08] sm:$0xff]
    %v5098 = vld [vmem:[#allocation10 + $0xa10] sm:$0xff]
    %v5099 = vld [vmem:[#allocation10 + $0xa18] sm:$0xff]
    %v5100 = vld [vmem:[#allocation10 + $0xa20] sm:$0xff]
    %v5101 = vld [vmem:[#allocation10 + $0xa28] sm:$0xff]
    %v5102 = vld [vmem:[#allocation10 + $0xa30] sm:$0xff]
    %v5103 = vld [vmem:[#allocation10 + $0xa38] sm:$0xff]
    %v5104 = vld [vmem:[#allocation10 + $0xa40] sm:$0xff]
    %v5105 = vld [vmem:[#allocation10 + $0xa48] sm:$0xff]
    %v5106 = vld [vmem:[#allocation10 + $0xa50] sm:$0xff]
    %v5107 = vld [vmem:[#allocation10 + $0xa58] sm:$0xff]
    %v5108 = vld [vmem:[#allocation10 + $0xa60] sm:$0xff]
    %v5109 = vld [vmem:[#allocation10 + $0xa68] sm:$0xff]
    %v5110 = vld [vmem:[#allocation10 + $0xa70] sm:$0xff]
    %v5111 = vld [vmem:[#allocation10 + $0xa78] sm:$0xff]
    %v5112 = vld [vmem:[#allocation10 + $0xa80] sm:$0xff]
    %v5113 = vld [vmem:[#allocation10 + $0xa88] sm:$0xff]
    %v5114 = vld [vmem:[#allocation10 + $0xa90] sm:$0xff]
    %v5115 = vld [vmem:[#allocation10 + $0xa98] sm:$0xff]
    %v5116 = vld [vmem:[#allocation10 + $0xaa0] sm:$0xff]
    %v5117 = vld [vmem:[#allocation10 + $0xaa8] sm:$0xff]
    %v5118 = vld [vmem:[#allocation10 + $0xab0] sm:$0xff]
    %v5119 = vld [vmem:[#allocation10 + $0xab8] sm:$0xff]
    %v5120 = vld [vmem:[#allocation10 + $0xac0] sm:$0xff]
    %v5121 = vld [vmem:[#allocation10 + $0xac8] sm:$0xff]
    %v5122 = vld [vmem:[#allocation10 + $0xad0] sm:$0xff]
    %v5123 = vld [vmem:[#allocation10 + $0xad8] sm:$0xff]
    %v5124 = vld [vmem:[#allocation10 + $0xae0] sm:$0xff]
    %v5125 = vld [vmem:[#allocation10 + $0xae8] sm:$0xff]
    %v5126 = vld [vmem:[#allocation10 + $0xaf0] sm:$0xff]
    %v5127 = vld [vmem:[#allocation10 + $0xaf8] sm:$0xff]
    %v5128 = vld [vmem:[#allocation10 + $0xb00] sm:$0xff]
    %v5129 = vld [vmem:[#allocation10 + $0xb08] sm:$0xff]
    %v5130 = vld [vmem:[#allocation10 + $0xb10] sm:$0xff]
    %v5131 = vld [vmem:[#allocation10 + $0xb18] sm:$0xff]
    %v5132 = vld [vmem:[#allocation10 + $0xb20] sm:$0xff]
    %v5133 = vld [vmem:[#allocation10 + $0xb28] sm:$0xff]
    %v5134 = vld [vmem:[#allocation10 + $0xb30] sm:$0xff]
    %v5135 = vld [vmem:[#allocation10 + $0xb38] sm:$0xff]
    %v5136 = vld [vmem:[#allocation10 + $0xb40] sm:$0xff]
    %v5137 = vld [vmem:[#allocation10 + $0xb48] sm:$0xff]
    %v5138 = vld [vmem:[#allocation10 + $0xb50] sm:$0xff]
    %v5139 = vld [vmem:[#allocation10 + $0xb58] sm:$0xff]
    %v5140 = vld [vmem:[#allocation10 + $0xb60] sm:$0xff]
    %v5141 = vld [vmem:[#allocation10 + $0xb68] sm:$0xff]
    %v5142 = vld [vmem:[#allocation10 + $0xb70] sm:$0xff]
    %v5143 = vld [vmem:[#allocation10 + $0xb78] sm:$0xff]
    %v5144 = vld [vmem:[#allocation10 + $0xb80] sm:$0xff]
    %v5145 = vld [vmem:[#allocation10 + $0xb88] sm:$0xff]
    %v5146 = vld [vmem:[#allocation10 + $0xb90] sm:$0xff]
    %v5147 = vld [vmem:[#allocation10 + $0xb98] sm:$0xff]
    %v5148 = vld [vmem:[#allocation10 + $0xba0] sm:$0xff]
    %v5149 = vld [vmem:[#allocation10 + $0xba8] sm:$0xff]
    %v5150 = vld [vmem:[#allocation10 + $0xbb0] sm:$0xff]
    %v5151 = vld [vmem:[#allocation10 + $0xbb8] sm:$0xff]
    %v5152 = vld [vmem:[#allocation10 + $0xbc0] sm:$0xff]
    %v5153 = vld [vmem:[#allocation10 + $0xbc8] sm:$0xff]
    %v5154 = vld [vmem:[#allocation10 + $0xbd0] sm:$0xff]
    %v5155 = vld [vmem:[#allocation10 + $0xbd8] sm:$0xff]
    %v5156 = vld [vmem:[#allocation10 + $0xbe0] sm:$0xff]
    %v5157 = vld [vmem:[#allocation10 + $0xbe8] sm:$0xff]
    %v5158 = vld [vmem:[#allocation10 + $0xbf0] sm:$0xff]
    %v5159 = vld [vmem:[#allocation10 + $0xbf8] sm:$0xff]
    %v5160 = vld [vmem:[#allocation10 + $0xc00] sm:$0xff]
    %v5161 = vld [vmem:[#allocation10 + $0xc08] sm:$0xff]
    %v5162 = vld [vmem:[#allocation10 + $0xc10] sm:$0xff]
    %v5163 = vld [vmem:[#allocation10 + $0xc18] sm:$0xff]
    %v5164 = vld [vmem:[#allocation10 + $0xc20] sm:$0xff]
    %v5165 = vld [vmem:[#allocation10 + $0xc28] sm:$0xff]
    %v5166 = vld [vmem:[#allocation10 + $0xc30] sm:$0xff]
    %v5167 = vld [vmem:[#allocation10 + $0xc38] sm:$0xff]
    %v5168 = vld [vmem:[#allocation10 + $0xc40] sm:$0xff]
    %v5169 = vld [vmem:[#allocation10 + $0xc48] sm:$0xff]
    %v5170 = vld [vmem:[#allocation10 + $0xc50] sm:$0xff]
    %v5171 = vld [vmem:[#allocation10 + $0xc58] sm:$0xff]
    %v5172 = vld [vmem:[#allocation10 + $0xc60] sm:$0xff]
    %v5173 = vld [vmem:[#allocation10 + $0xc68] sm:$0xff]
    %v5174 = vld [vmem:[#allocation10 + $0xc70] sm:$0xff]
    %v5175 = vld [vmem:[#allocation10 + $0xc78] sm:$0xff]
    %v5176 = vld [vmem:[#allocation10 + $0xc80] sm:$0xff]
    %v5177 = vld [vmem:[#allocation10 + $0xc88] sm:$0xff]
    %v5178 = vld [vmem:[#allocation10 + $0xc90] sm:$0xff]
    %v5179 = vld [vmem:[#allocation10 + $0xc98] sm:$0xff]
    %v5180 = vld [vmem:[#allocation10 + $0xca0] sm:$0xff]
    %v5181 = vld [vmem:[#allocation10 + $0xca8] sm:$0xff]
    %v5182 = vld [vmem:[#allocation10 + $0xcb0] sm:$0xff]
    %v5183 = vld [vmem:[#allocation10 + $0xcb8] sm:$0xff]
    %v5184 = vld [vmem:[#allocation10 + $0xcc0] sm:$0xff]
    %v5185 = vld [vmem:[#allocation10 + $0xcc8] sm:$0xff]
    %v5186 = vld [vmem:[#allocation10 + $0xcd0] sm:$0xff]
    %v5187 = vld [vmem:[#allocation10 + $0xcd8] sm:$0xff]
    %v5188 = vld [vmem:[#allocation10 + $0xce0] sm:$0xff]
    %v5189 = vld [vmem:[#allocation10 + $0xce8] sm:$0xff]
    %v5190 = vld [vmem:[#allocation10 + $0xcf0] sm:$0xff]
    %v5191 = vld [vmem:[#allocation10 + $0xcf8] sm:$0xff]
    %v5192 = vld [vmem:[#allocation10 + $0xd00] sm:$0xff]
    %v5193 = vld [vmem:[#allocation10 + $0xd08] sm:$0xff]
    %v5194 = vld [vmem:[#allocation10 + $0xd10] sm:$0xff]
    %v5195 = vld [vmem:[#allocation10 + $0xd18] sm:$0xff]
    %v5196 = vld [vmem:[#allocation10 + $0xd20] sm:$0xff]
    %v5197 = vld [vmem:[#allocation10 + $0xd28] sm:$0xff]
    %v5198 = vld [vmem:[#allocation10 + $0xd30] sm:$0xff]
    %v5199 = vld [vmem:[#allocation10 + $0xd38] sm:$0xff]
    %v5200 = vld [vmem:[#allocation10 + $0xd40] sm:$0xff]
    %v5201 = vld [vmem:[#allocation10 + $0xd48] sm:$0xff]
    %v5202 = vld [vmem:[#allocation10 + $0xd50] sm:$0xff]
    %v5203 = vld [vmem:[#allocation10 + $0xd58] sm:$0xff]
    %v5204 = vld [vmem:[#allocation10 + $0xd60] sm:$0xff]
    %v5205 = vld [vmem:[#allocation10 + $0xd68] sm:$0xff]
    %v5206 = vld [vmem:[#allocation10 + $0xd70] sm:$0xff]
    %v5207 = vld [vmem:[#allocation10 + $0xd78] sm:$0xff]
    %v5208 = vld [vmem:[#allocation10 + $0xd80] sm:$0xff]
    %v5209 = vld [vmem:[#allocation10 + $0xd88] sm:$0xff]
    %v5210 = vld [vmem:[#allocation10 + $0xd90] sm:$0xff]
    %v5211 = vld [vmem:[#allocation10 + $0xd98] sm:$0xff]
    %v5212 = vld [vmem:[#allocation10 + $0xda0] sm:$0xff]
    %v5213 = vld [vmem:[#allocation10 + $0xda8] sm:$0xff]
    %v5214 = vld [vmem:[#allocation10 + $0xdb0] sm:$0xff]
    %v5215 = vld [vmem:[#allocation10 + $0xdb8] sm:$0xff]
    %v5216 = vld [vmem:[#allocation10 + $0xdc0] sm:$0xff]
    %v5217 = vld [vmem:[#allocation10 + $0xdc8] sm:$0xff]
    %v5218 = vld [vmem:[#allocation10 + $0xdd0] sm:$0xff]
    %v5219 = vld [vmem:[#allocation10 + $0xdd8] sm:$0xff]
    %v5220 = vld [vmem:[#allocation10 + $0xde0] sm:$0xff]
    %v5221 = vld [vmem:[#allocation10 + $0xde8] sm:$0xff]
    %v5222 = vld [vmem:[#allocation10 + $0xdf0] sm:$0xff]
    %v5223 = vld [vmem:[#allocation10 + $0xdf8] sm:$0xff]
    %v5224 = vld [vmem:[#allocation10 + $0xe00] sm:$0xff]
    %v5225 = vld [vmem:[#allocation10 + $0xe08] sm:$0xff]
    %v5226 = vld [vmem:[#allocation10 + $0xe10] sm:$0xff]
    %v5227 = vld [vmem:[#allocation10 + $0xe18] sm:$0xff]
    %v5228 = vld [vmem:[#allocation10 + $0xe20] sm:$0xff]
    %v5229 = vld [vmem:[#allocation10 + $0xe28] sm:$0xff]
    %v5230 = vld [vmem:[#allocation10 + $0xe30] sm:$0xff]
    %v5231 = vld [vmem:[#allocation10 + $0xe38] sm:$0xff]
    %v5232 = vld [vmem:[#allocation10 + $0xe40] sm:$0xff]
    %v5233 = vld [vmem:[#allocation10 + $0xe48] sm:$0xff]
    %v5234 = vld [vmem:[#allocation10 + $0xe50] sm:$0xff]
    %v5235 = vld [vmem:[#allocation10 + $0xe58] sm:$0xff]
    %v5236 = vld [vmem:[#allocation10 + $0xe60] sm:$0xff]
    %v5237 = vld [vmem:[#allocation10 + $0xe68] sm:$0xff]
    %v5238 = vld [vmem:[#allocation10 + $0xe70] sm:$0xff]
    %v5239 = vld [vmem:[#allocation10 + $0xe78] sm:$0xff]
    %v5240 = vld [vmem:[#allocation10 + $0xe80] sm:$0xff]
    %v5241 = vld [vmem:[#allocation10 + $0xe88] sm:$0xff]
    %v5242 = vld [vmem:[#allocation10 + $0xe90] sm:$0xff]
    %v5243 = vld [vmem:[#allocation10 + $0xe98] sm:$0xff]
    %v5244 = vld [vmem:[#allocation10 + $0xea0] sm:$0xff]
    %v5245 = vld [vmem:[#allocation10 + $0xea8] sm:$0xff]
    %v5246 = vld [vmem:[#allocation10 + $0xeb0] sm:$0xff]
    %v5247 = vld [vmem:[#allocation10 + $0xeb8] sm:$0xff]
    %v5248 = vld [vmem:[#allocation10 + $0xec0] sm:$0xff]
    %v5249 = vld [vmem:[#allocation10 + $0xec8] sm:$0xff]
    %v5250 = vld [vmem:[#allocation10 + $0xed0] sm:$0xff]
    %v5251 = vld [vmem:[#allocation10 + $0xed8] sm:$0xff]
    %v5252 = vld [vmem:[#allocation10 + $0xee0] sm:$0xff]
    %v5253 = vld [vmem:[#allocation10 + $0xee8] sm:$0xff]
    %v5254 = vld [vmem:[#allocation10 + $0xef0] sm:$0xff]
    %v5255 = vld [vmem:[#allocation10 + $0xef8] sm:$0xff]
    %v5256 = vld [vmem:[#allocation10 + $0xf00] sm:$0xff]
    %v5257 = vld [vmem:[#allocation10 + $0xf08] sm:$0xff]
    %v5258 = vld [vmem:[#allocation10 + $0xf10] sm:$0xff]
    %v5259 = vld [vmem:[#allocation10 + $0xf18] sm:$0xff]
    %v5260 = vld [vmem:[#allocation10 + $0xf20] sm:$0xff]
    %v5261 = vld [vmem:[#allocation10 + $0xf28] sm:$0xff]
    %v5262 = vld [vmem:[#allocation10 + $0xf30] sm:$0xff]
    %v5263 = vld [vmem:[#allocation10 + $0xf38] sm:$0xff]
    %v5264 = vld [vmem:[#allocation10 + $0xf40] sm:$0xff]
    %v5265 = vld [vmem:[#allocation10 + $0xf48] sm:$0xff]
    %v5266 = vld [vmem:[#allocation10 + $0xf50] sm:$0xff]
    %v5267 = vld [vmem:[#allocation10 + $0xf58] sm:$0xff]
    %v5268 = vld [vmem:[#allocation10 + $0xf60] sm:$0xff]
    %v5269 = vld [vmem:[#allocation10 + $0xf68] sm:$0xff]
    %v5270 = vld [vmem:[#allocation10 + $0xf70] sm:$0xff]
    %v5271 = vld [vmem:[#allocation10 + $0xf78] sm:$0xff]
    %v5272 = vld [vmem:[#allocation10 + $0xf80] sm:$0xff]
    %v5273 = vld [vmem:[#allocation10 + $0xf88] sm:$0xff]
    %v5274 = vld [vmem:[#allocation10 + $0xf90] sm:$0xff]
    %v5275 = vld [vmem:[#allocation10 + $0xf98] sm:$0xff]
    %v5276 = vld [vmem:[#allocation10 + $0xfa0] sm:$0xff]
    %v5277 = vld [vmem:[#allocation10 + $0xfa8] sm:$0xff]
    %v5278 = vld [vmem:[#allocation10 + $0xfb0] sm:$0xff]
    %v5279 = vld [vmem:[#allocation10 + $0xfb8] sm:$0xff]
    %v5280 = vld [vmem:[#allocation10 + $0xfc0] sm:$0xff]
    %v5281 = vld [vmem:[#allocation10 + $0xfc8] sm:$0xff]
    %v5282 = vld [vmem:[#allocation10 + $0xfd0] sm:$0xff]
    %v5283 = vld [vmem:[#allocation10 + $0xfd8] sm:$0xff]
    %v5284 = vld [vmem:[#allocation10 + $0xfe0] sm:$0xff]
    %v5285 = vld [vmem:[#allocation10 + $0xfe8] sm:$0xff]
    %v5286 = vld [vmem:[#allocation10 + $0xff0] sm:$0xff]
    %v5287 = vld [vmem:[#allocation10 + $0xff8] sm:$0xff]
    %v5800 = vunpack.c.l.b16 %v4776
    %v5801 = vunpack.c.h.b16 %v4776
    %v5802 = vunpack.c.l.b16 %v4777
    %v5803 = vunpack.c.h.b16 %v4777
    %v5804 = vunpack.c.l.b16 %v4778
    %v5805 = vunpack.c.h.b16 %v4778
    %v5806 = vunpack.c.l.b16 %v4779
    %v5807 = vunpack.c.h.b16 %v4779
    %v5808 = vunpack.c.l.b16 %v4780
    %v5809 = vunpack.c.h.b16 %v4780
    %v5810 = vunpack.c.l.b16 %v4781
    %v5811 = vunpack.c.h.b16 %v4781
    %v5812 = vunpack.c.l.b16 %v4782
    %v5813 = vunpack.c.h.b16 %v4782
    %v5814 = vunpack.c.l.b16 %v4783
    %v5815 = vunpack.c.h.b16 %v4783
    %v5816 = vunpack.c.l.b16 %v4784
    %v5817 = vunpack.c.h.b16 %v4784
    %v5818 = vunpack.c.l.b16 %v4785
    %v5819 = vunpack.c.h.b16 %v4785
    %v5820 = vunpack.c.l.b16 %v4786
    %v5821 = vunpack.c.h.b16 %v4786
    %v5822 = vunpack.c.l.b16 %v4787
    %v5823 = vunpack.c.h.b16 %v4787
    %v5824 = vunpack.c.l.b16 %v4788
    %v5825 = vunpack.c.h.b16 %v4788
    %v5826 = vunpack.c.l.b16 %v4789
    %v5827 = vunpack.c.h.b16 %v4789
    %v5828 = vunpack.c.l.b16 %v4790
    %v5829 = vunpack.c.h.b16 %v4790
    %v5830 = vunpack.c.l.b16 %v4791
    %v5831 = vunpack.c.h.b16 %v4791
    %v5832 = vunpack.c.l.b16 %v4792
    %v5833 = vunpack.c.h.b16 %v4792
    %v5834 = vunpack.c.l.b16 %v4793
    %v5835 = vunpack.c.h.b16 %v4793
    %v5836 = vunpack.c.l.b16 %v4794
    %v5837 = vunpack.c.h.b16 %v4794
    %v5838 = vunpack.c.l.b16 %v4795
    %v5839 = vunpack.c.h.b16 %v4795
    %v5840 = vunpack.c.l.b16 %v4796
    %v5841 = vunpack.c.h.b16 %v4796
    %v5842 = vunpack.c.l.b16 %v4797
    %v5843 = vunpack.c.h.b16 %v4797
    %v5844 = vunpack.c.l.b16 %v4798
    %v5845 = vunpack.c.h.b16 %v4798
    %v5846 = vunpack.c.l.b16 %v4799
    %v5847 = vunpack.c.h.b16 %v4799
    %v5848 = vunpack.c.l.b16 %v4800
    %v5849 = vunpack.c.h.b16 %v4800
    %v5850 = vunpack.c.l.b16 %v4801
    %v5851 = vunpack.c.h.b16 %v4801
    %v5852 = vunpack.c.l.b16 %v4802
    %v5853 = vunpack.c.h.b16 %v4802
    %v5854 = vunpack.c.l.b16 %v4803
    %v5855 = vunpack.c.h.b16 %v4803
    %v5856 = vunpack.c.l.b16 %v4804
    %v5857 = vunpack.c.h.b16 %v4804
    %v5858 = vunpack.c.l.b16 %v4805
    %v5859 = vunpack.c.h.b16 %v4805
    %v5860 = vunpack.c.l.b16 %v4806
    %v5861 = vunpack.c.h.b16 %v4806
    %v5862 = vunpack.c.l.b16 %v4807
    %v5863 = vunpack.c.h.b16 %v4807
    %v5864 = vunpack.c.l.b16 %v4808
    %v5865 = vunpack.c.h.b16 %v4808
    %v5866 = vunpack.c.l.b16 %v4809
    %v5867 = vunpack.c.h.b16 %v4809
    %v5868 = vunpack.c.l.b16 %v4810
    %v5869 = vunpack.c.h.b16 %v4810
    %v5870 = vunpack.c.l.b16 %v4811
    %v5871 = vunpack.c.h.b16 %v4811
    %v5872 = vunpack.c.l.b16 %v4812
    %v5873 = vunpack.c.h.b16 %v4812
    %v5874 = vunpack.c.l.b16 %v4813
    %v5875 = vunpack.c.h.b16 %v4813
    %v5876 = vunpack.c.l.b16 %v4814
    %v5877 = vunpack.c.h.b16 %v4814
    %v5878 = vunpack.c.l.b16 %v4815
    %v5879 = vunpack.c.h.b16 %v4815
    %v5880 = vunpack.c.l.b16 %v4816
    %v5881 = vunpack.c.h.b16 %v4816
    %v5882 = vunpack.c.l.b16 %v4817
    %v5883 = vunpack.c.h.b16 %v4817
    %v5884 = vunpack.c.l.b16 %v4818
    %v5885 = vunpack.c.h.b16 %v4818
    %v5886 = vunpack.c.l.b16 %v4819
    %v5887 = vunpack.c.h.b16 %v4819
    %v5888 = vunpack.c.l.b16 %v4820
    %v5889 = vunpack.c.h.b16 %v4820
    %v5890 = vunpack.c.l.b16 %v4821
    %v5891 = vunpack.c.h.b16 %v4821
    %v5892 = vunpack.c.l.b16 %v4822
    %v5893 = vunpack.c.h.b16 %v4822
    %v5894 = vunpack.c.l.b16 %v4823
    %v5895 = vunpack.c.h.b16 %v4823
    %v5896 = vunpack.c.l.b16 %v4824
    %v5897 = vunpack.c.h.b16 %v4824
    %v5898 = vunpack.c.l.b16 %v4825
    %v5899 = vunpack.c.h.b16 %v4825
    %v5900 = vunpack.c.l.b16 %v4826
    %v5901 = vunpack.c.h.b16 %v4826
    %v5902 = vunpack.c.l.b16 %v4827
    %v5903 = vunpack.c.h.b16 %v4827
    %v5904 = vunpack.c.l.b16 %v4828
    %v5905 = vunpack.c.h.b16 %v4828
    %v5906 = vunpack.c.l.b16 %v4829
    %v5907 = vunpack.c.h.b16 %v4829
    %v5908 = vunpack.c.l.b16 %v4830
    %v5909 = vunpack.c.h.b16 %v4830
    %v5910 = vunpack.c.l.b16 %v4831
    %v5911 = vunpack.c.h.b16 %v4831
    %v5912 = vunpack.c.l.b16 %v4832
    %v5913 = vunpack.c.h.b16 %v4832
    %v5914 = vunpack.c.l.b16 %v4833
    %v5915 = vunpack.c.h.b16 %v4833
    %v5916 = vunpack.c.l.b16 %v4834
    %v5917 = vunpack.c.h.b16 %v4834
    %v5918 = vunpack.c.l.b16 %v4835
    %v5919 = vunpack.c.h.b16 %v4835
    %v5920 = vunpack.c.l.b16 %v4836
    %v5921 = vunpack.c.h.b16 %v4836
    %v5922 = vunpack.c.l.b16 %v4837
    %v5923 = vunpack.c.h.b16 %v4837
    %v5924 = vunpack.c.l.b16 %v4838
    %v5925 = vunpack.c.h.b16 %v4838
    %v5926 = vunpack.c.l.b16 %v4839
    %v5927 = vunpack.c.h.b16 %v4839
    %v5928 = vunpack.c.l.b16 %v4840
    %v5929 = vunpack.c.h.b16 %v4840
    %v5930 = vunpack.c.l.b16 %v4841
    %v5931 = vunpack.c.h.b16 %v4841
    %v5932 = vunpack.c.l.b16 %v4842
    %v5933 = vunpack.c.h.b16 %v4842
    %v5934 = vunpack.c.l.b16 %v4843
    %v5935 = vunpack.c.h.b16 %v4843
    %v5936 = vunpack.c.l.b16 %v4844
    %v5937 = vunpack.c.h.b16 %v4844
    %v5938 = vunpack.c.l.b16 %v4845
    %v5939 = vunpack.c.h.b16 %v4845
    %v5940 = vunpack.c.l.b16 %v4846
    %v5941 = vunpack.c.h.b16 %v4846
    %v5942 = vunpack.c.l.b16 %v4847
    %v5943 = vunpack.c.h.b16 %v4847
    %v5944 = vunpack.c.l.b16 %v4848
    %v5945 = vunpack.c.h.b16 %v4848
    %v5946 = vunpack.c.l.b16 %v4849
    %v5947 = vunpack.c.h.b16 %v4849
    %v5948 = vunpack.c.l.b16 %v4850
    %v5949 = vunpack.c.h.b16 %v4850
    %v5950 = vunpack.c.l.b16 %v4851
    %v5951 = vunpack.c.h.b16 %v4851
    %v5952 = vunpack.c.l.b16 %v4852
    %v5953 = vunpack.c.h.b16 %v4852
    %v5954 = vunpack.c.l.b16 %v4853
    %v5955 = vunpack.c.h.b16 %v4853
    %v5956 = vunpack.c.l.b16 %v4854
    %v5957 = vunpack.c.h.b16 %v4854
    %v5958 = vunpack.c.l.b16 %v4855
    %v5959 = vunpack.c.h.b16 %v4855
    %v5960 = vunpack.c.l.b16 %v4856
    %v5961 = vunpack.c.h.b16 %v4856
    %v5962 = vunpack.c.l.b16 %v4857
    %v5963 = vunpack.c.h.b16 %v4857
    %v5964 = vunpack.c.l.b16 %v4858
    %v5965 = vunpack.c.h.b16 %v4858
    %v5966 = vunpack.c.l.b16 %v4859
    %v5967 = vunpack.c.h.b16 %v4859
    %v5968 = vunpack.c.l.b16 %v4860
    %v5969 = vunpack.c.h.b16 %v4860
    %v5970 = vunpack.c.l.b16 %v4861
    %v5971 = vunpack.c.h.b16 %v4861
    %v5972 = vunpack.c.l.b16 %v4862
    %v5973 = vunpack.c.h.b16 %v4862
    %v5974 = vunpack.c.l.b16 %v4863
    %v5975 = vunpack.c.h.b16 %v4863
    %v5976 = vunpack.c.l.b16 %v4864
    %v5977 = vunpack.c.h.b16 %v4864
    %v5978 = vunpack.c.l.b16 %v4865
    %v5979 = vunpack.c.h.b16 %v4865
    %v5980 = vunpack.c.l.b16 %v4866
    %v5981 = vunpack.c.h.b16 %v4866
    %v5982 = vunpack.c.l.b16 %v4867
    %v5983 = vunpack.c.h.b16 %v4867
    %v5984 = vunpack.c.l.b16 %v4868
    %v5985 = vunpack.c.h.b16 %v4868
    %v5986 = vunpack.c.l.b16 %v4869
    %v5987 = vunpack.c.h.b16 %v4869
    %v5988 = vunpack.c.l.b16 %v4870
    %v5989 = vunpack.c.h.b16 %v4870
    %v5990 = vunpack.c.l.b16 %v4871
    %v5991 = vunpack.c.h.b16 %v4871
    %v5992 = vunpack.c.l.b16 %v4872
    %v5993 = vunpack.c.h.b16 %v4872
    %v5994 = vunpack.c.l.b16 %v4873
    %v5995 = vunpack.c.h.b16 %v4873
    %v5996 = vunpack.c.l.b16 %v4874
    %v5997 = vunpack.c.h.b16 %v4874
    %v5998 = vunpack.c.l.b16 %v4875
    %v5999 = vunpack.c.h.b16 %v4875
    %v6000 = vunpack.c.l.b16 %v4876
    %v6001 = vunpack.c.h.b16 %v4876
    %v6002 = vunpack.c.l.b16 %v4877
    %v6003 = vunpack.c.h.b16 %v4877
    %v6004 = vunpack.c.l.b16 %v4878
    %v6005 = vunpack.c.h.b16 %v4878
    %v6006 = vunpack.c.l.b16 %v4879
    %v6007 = vunpack.c.h.b16 %v4879
    %v6008 = vunpack.c.l.b16 %v4880
    %v6009 = vunpack.c.h.b16 %v4880
    %v6010 = vunpack.c.l.b16 %v4881
    %v6011 = vunpack.c.h.b16 %v4881
    %v6012 = vunpack.c.l.b16 %v4882
    %v6013 = vunpack.c.h.b16 %v4882
    %v6014 = vunpack.c.l.b16 %v4883
    %v6015 = vunpack.c.h.b16 %v4883
    %v6016 = vunpack.c.l.b16 %v4884
    %v6017 = vunpack.c.h.b16 %v4884
    %v6018 = vunpack.c.l.b16 %v4885
    %v6019 = vunpack.c.h.b16 %v4885
    %v6020 = vunpack.c.l.b16 %v4886
    %v6021 = vunpack.c.h.b16 %v4886
    %v6022 = vunpack.c.l.b16 %v4887
    %v6023 = vunpack.c.h.b16 %v4887
    %v6024 = vunpack.c.l.b16 %v4888
    %v6025 = vunpack.c.h.b16 %v4888
    %v6026 = vunpack.c.l.b16 %v4889
    %v6027 = vunpack.c.h.b16 %v4889
    %v6028 = vunpack.c.l.b16 %v4890
    %v6029 = vunpack.c.h.b16 %v4890
    %v6030 = vunpack.c.l.b16 %v4891
    %v6031 = vunpack.c.h.b16 %v4891
    %v6032 = vunpack.c.l.b16 %v4892
    %v6033 = vunpack.c.h.b16 %v4892
    %v6034 = vunpack.c.l.b16 %v4893
    %v6035 = vunpack.c.h.b16 %v4893
    %v6036 = vunpack.c.l.b16 %v4894
    %v6037 = vunpack.c.h.b16 %v4894
    %v6038 = vunpack.c.l.b16 %v4895
    %v6039 = vunpack.c.h.b16 %v4895
    %v6040 = vunpack.c.l.b16 %v4896
    %v6041 = vunpack.c.h.b16 %v4896
    %v6042 = vunpack.c.l.b16 %v4897
    %v6043 = vunpack.c.h.b16 %v4897
    %v6044 = vunpack.c.l.b16 %v4898
    %v6045 = vunpack.c.h.b16 %v4898
    %v6046 = vunpack.c.l.b16 %v4899
    %v6047 = vunpack.c.h.b16 %v4899
    %v6048 = vunpack.c.l.b16 %v4900
    %v6049 = vunpack.c.h.b16 %v4900
    %v6050 = vunpack.c.l.b16 %v4901
    %v6051 = vunpack.c.h.b16 %v4901
    %v6052 = vunpack.c.l.b16 %v4902
    %v6053 = vunpack.c.h.b16 %v4902
    %v6054 = vunpack.c.l.b16 %v4903
    %v6055 = vunpack.c.h.b16 %v4903
    %v6056 = vunpack.c.l.b16 %v4904
    %v6057 = vunpack.c.h.b16 %v4904
    %v6058 = vunpack.c.l.b16 %v4905
    %v6059 = vunpack.c.h.b16 %v4905
    %v6060 = vunpack.c.l.b16 %v4906
    %v6061 = vunpack.c.h.b16 %v4906
    %v6062 = vunpack.c.l.b16 %v4907
    %v6063 = vunpack.c.h.b16 %v4907
    %v6064 = vunpack.c.l.b16 %v4908
    %v6065 = vunpack.c.h.b16 %v4908
    %v6066 = vunpack.c.l.b16 %v4909
    %v6067 = vunpack.c.h.b16 %v4909
    %v6068 = vunpack.c.l.b16 %v4910
    %v6069 = vunpack.c.h.b16 %v4910
    %v6070 = vunpack.c.l.b16 %v4911
    %v6071 = vunpack.c.h.b16 %v4911
    %v6072 = vunpack.c.l.b16 %v4912
    %v6073 = vunpack.c.h.b16 %v4912
    %v6074 = vunpack.c.l.b16 %v4913
    %v6075 = vunpack.c.h.b16 %v4913
    %v6076 = vunpack.c.l.b16 %v4914
    %v6077 = vunpack.c.h.b16 %v4914
    %v6078 = vunpack.c.l.b16 %v4915
    %v6079 = vunpack.c.h.b16 %v4915
    %v6080 = vunpack.c.l.b16 %v4916
    %v6081 = vunpack.c.h.b16 %v4916
    %v6082 = vunpack.c.l.b16 %v4917
    %v6083 = vunpack.c.h.b16 %v4917
    %v6084 = vunpack.c.l.b16 %v4918
    %v6085 = vunpack.c.h.b16 %v4918
    %v6086 = vunpack.c.l.b16 %v4919
    %v6087 = vunpack.c.h.b16 %v4919
    %v6088 = vunpack.c.l.b16 %v4920
    %v6089 = vunpack.c.h.b16 %v4920
    %v6090 = vunpack.c.l.b16 %v4921
    %v6091 = vunpack.c.h.b16 %v4921
    %v6092 = vunpack.c.l.b16 %v4922
    %v6093 = vunpack.c.h.b16 %v4922
    %v6094 = vunpack.c.l.b16 %v4923
    %v6095 = vunpack.c.h.b16 %v4923
    %v6096 = vunpack.c.l.b16 %v4924
    %v6097 = vunpack.c.h.b16 %v4924
    %v6098 = vunpack.c.l.b16 %v4925
    %v6099 = vunpack.c.h.b16 %v4925
    %v6100 = vunpack.c.l.b16 %v4926
    %v6101 = vunpack.c.h.b16 %v4926
    %v6102 = vunpack.c.l.b16 %v4927
    %v6103 = vunpack.c.h.b16 %v4927
    %v6104 = vunpack.c.l.b16 %v4928
    %v6105 = vunpack.c.h.b16 %v4928
    %v6106 = vunpack.c.l.b16 %v4929
    %v6107 = vunpack.c.h.b16 %v4929
    %v6108 = vunpack.c.l.b16 %v4930
    %v6109 = vunpack.c.h.b16 %v4930
    %v6110 = vunpack.c.l.b16 %v4931
    %v6111 = vunpack.c.h.b16 %v4931
    %v6112 = vunpack.c.l.b16 %v4932
    %v6113 = vunpack.c.h.b16 %v4932
    %v6114 = vunpack.c.l.b16 %v4933
    %v6115 = vunpack.c.h.b16 %v4933
    %v6116 = vunpack.c.l.b16 %v4934
    %v6117 = vunpack.c.h.b16 %v4934
    %v6118 = vunpack.c.l.b16 %v4935
    %v6119 = vunpack.c.h.b16 %v4935
    %v6120 = vunpack.c.l.b16 %v4936
    %v6121 = vunpack.c.h.b16 %v4936
    %v6122 = vunpack.c.l.b16 %v4937
    %v6123 = vunpack.c.h.b16 %v4937
    %v6124 = vunpack.c.l.b16 %v4938
    %v6125 = vunpack.c.h.b16 %v4938
    %v6126 = vunpack.c.l.b16 %v4939
    %v6127 = vunpack.c.h.b16 %v4939
    %v6128 = vunpack.c.l.b16 %v4940
    %v6129 = vunpack.c.h.b16 %v4940
    %v6130 = vunpack.c.l.b16 %v4941
    %v6131 = vunpack.c.h.b16 %v4941
    %v6132 = vunpack.c.l.b16 %v4942
    %v6133 = vunpack.c.h.b16 %v4942
    %v6134 = vunpack.c.l.b16 %v4943
    %v6135 = vunpack.c.h.b16 %v4943
    %v6136 = vunpack.c.l.b16 %v4944
    %v6137 = vunpack.c.h.b16 %v4944
    %v6138 = vunpack.c.l.b16 %v4945
    %v6139 = vunpack.c.h.b16 %v4945
    %v6140 = vunpack.c.l.b16 %v4946
    %v6141 = vunpack.c.h.b16 %v4946
    %v6142 = vunpack.c.l.b16 %v4947
    %v6143 = vunpack.c.h.b16 %v4947
    %v6144 = vunpack.c.l.b16 %v4948
    %v6145 = vunpack.c.h.b16 %v4948
    %v6146 = vunpack.c.l.b16 %v4949
    %v6147 = vunpack.c.h.b16 %v4949
    %v6148 = vunpack.c.l.b16 %v4950
    %v6149 = vunpack.c.h.b16 %v4950
    %v6150 = vunpack.c.l.b16 %v4951
    %v6151 = vunpack.c.h.b16 %v4951
    %v6152 = vunpack.c.l.b16 %v4952
    %v6153 = vunpack.c.h.b16 %v4952
    %v6154 = vunpack.c.l.b16 %v4953
    %v6155 = vunpack.c.h.b16 %v4953
    %v6156 = vunpack.c.l.b16 %v4954
    %v6157 = vunpack.c.h.b16 %v4954
    %v6158 = vunpack.c.l.b16 %v4955
    %v6159 = vunpack.c.h.b16 %v4955
    %v6160 = vunpack.c.l.b16 %v4956
    %v6161 = vunpack.c.h.b16 %v4956
    %v6162 = vunpack.c.l.b16 %v4957
    %v6163 = vunpack.c.h.b16 %v4957
    %v6164 = vunpack.c.l.b16 %v4958
    %v6165 = vunpack.c.h.b16 %v4958
    %v6166 = vunpack.c.l.b16 %v4959
    %v6167 = vunpack.c.h.b16 %v4959
    %v6168 = vunpack.c.l.b16 %v4960
    %v6169 = vunpack.c.h.b16 %v4960
    %v6170 = vunpack.c.l.b16 %v4961
    %v6171 = vunpack.c.h.b16 %v4961
    %v6172 = vunpack.c.l.b16 %v4962
    %v6173 = vunpack.c.h.b16 %v4962
    %v6174 = vunpack.c.l.b16 %v4963
    %v6175 = vunpack.c.h.b16 %v4963
    %v6176 = vunpack.c.l.b16 %v4964
    %v6177 = vunpack.c.h.b16 %v4964
    %v6178 = vunpack.c.l.b16 %v4965
    %v6179 = vunpack.c.h.b16 %v4965
    %v6180 = vunpack.c.l.b16 %v4966
    %v6181 = vunpack.c.h.b16 %v4966
    %v6182 = vunpack.c.l.b16 %v4967
    %v6183 = vunpack.c.h.b16 %v4967
    %v6184 = vunpack.c.l.b16 %v4968
    %v6185 = vunpack.c.h.b16 %v4968
    %v6186 = vunpack.c.l.b16 %v4969
    %v6187 = vunpack.c.h.b16 %v4969
    %v6188 = vunpack.c.l.b16 %v4970
    %v6189 = vunpack.c.h.b16 %v4970
    %v6190 = vunpack.c.l.b16 %v4971
    %v6191 = vunpack.c.h.b16 %v4971
    %v6192 = vunpack.c.l.b16 %v4972
    %v6193 = vunpack.c.h.b16 %v4972
    %v6194 = vunpack.c.l.b16 %v4973
    %v6195 = vunpack.c.h.b16 %v4973
    %v6196 = vunpack.c.l.b16 %v4974
    %v6197 = vunpack.c.h.b16 %v4974
    %v6198 = vunpack.c.l.b16 %v4975
    %v6199 = vunpack.c.h.b16 %v4975
    %v6200 = vunpack.c.l.b16 %v4976
    %v6201 = vunpack.c.h.b16 %v4976
    %v6202 = vunpack.c.l.b16 %v4977
    %v6203 = vunpack.c.h.b16 %v4977
    %v6204 = vunpack.c.l.b16 %v4978
    %v6205 = vunpack.c.h.b16 %v4978
    %v6206 = vunpack.c.l.b16 %v4979
    %v6207 = vunpack.c.h.b16 %v4979
    %v6208 = vunpack.c.l.b16 %v4980
    %v6209 = vunpack.c.h.b16 %v4980
    %v6210 = vunpack.c.l.b16 %v4981
    %v6211 = vunpack.c.h.b16 %v4981
    %v6212 = vunpack.c.l.b16 %v4982
    %v6213 = vunpack.c.h.b16 %v4982
    %v6214 = vunpack.c.l.b16 %v4983
    %v6215 = vunpack.c.h.b16 %v4983
    %v6216 = vunpack.c.l.b16 %v4984
    %v6217 = vunpack.c.h.b16 %v4984
    %v6218 = vunpack.c.l.b16 %v4985
    %v6219 = vunpack.c.h.b16 %v4985
    %v6220 = vunpack.c.l.b16 %v4986
    %v6221 = vunpack.c.h.b16 %v4986
    %v6222 = vunpack.c.l.b16 %v4987
    %v6223 = vunpack.c.h.b16 %v4987
    %v6224 = vunpack.c.l.b16 %v4988
    %v6225 = vunpack.c.h.b16 %v4988
    %v6226 = vunpack.c.l.b16 %v4989
    %v6227 = vunpack.c.h.b16 %v4989
    %v6228 = vunpack.c.l.b16 %v4990
    %v6229 = vunpack.c.h.b16 %v4990
    %v6230 = vunpack.c.l.b16 %v4991
    %v6231 = vunpack.c.h.b16 %v4991
    %v6232 = vunpack.c.l.b16 %v4992
    %v6233 = vunpack.c.h.b16 %v4992
    %v6234 = vunpack.c.l.b16 %v4993
    %v6235 = vunpack.c.h.b16 %v4993
    %v6236 = vunpack.c.l.b16 %v4994
    %v6237 = vunpack.c.h.b16 %v4994
    %v6238 = vunpack.c.l.b16 %v4995
    %v6239 = vunpack.c.h.b16 %v4995
    %v6240 = vunpack.c.l.b16 %v4996
    %v6241 = vunpack.c.h.b16 %v4996
    %v6242 = vunpack.c.l.b16 %v4997
    %v6243 = vunpack.c.h.b16 %v4997
    %v6244 = vunpack.c.l.b16 %v4998
    %v6245 = vunpack.c.h.b16 %v4998
    %v6246 = vunpack.c.l.b16 %v4999
    %v6247 = vunpack.c.h.b16 %v4999
    %v6248 = vunpack.c.l.b16 %v5000
    %v6249 = vunpack.c.h.b16 %v5000
    %v6250 = vunpack.c.l.b16 %v5001
    %v6251 = vunpack.c.h.b16 %v5001
    %v6252 = vunpack.c.l.b16 %v5002
    %v6253 = vunpack.c.h.b16 %v5002
    %v6254 = vunpack.c.l.b16 %v5003
    %v6255 = vunpack.c.h.b16 %v5003
    %v6256 = vunpack.c.l.b16 %v5004
    %v6257 = vunpack.c.h.b16 %v5004
    %v6258 = vunpack.c.l.b16 %v5005
    %v6259 = vunpack.c.h.b16 %v5005
    %v6260 = vunpack.c.l.b16 %v5006
    %v6261 = vunpack.c.h.b16 %v5006
    %v6262 = vunpack.c.l.b16 %v5007
    %v6263 = vunpack.c.h.b16 %v5007
    %v6264 = vunpack.c.l.b16 %v5008
    %v6265 = vunpack.c.h.b16 %v5008
    %v6266 = vunpack.c.l.b16 %v5009
    %v6267 = vunpack.c.h.b16 %v5009
    %v6268 = vunpack.c.l.b16 %v5010
    %v6269 = vunpack.c.h.b16 %v5010
    %v6270 = vunpack.c.l.b16 %v5011
    %v6271 = vunpack.c.h.b16 %v5011
    %v6272 = vunpack.c.l.b16 %v5012
    %v6273 = vunpack.c.h.b16 %v5012
    %v6274 = vunpack.c.l.b16 %v5013
    %v6275 = vunpack.c.h.b16 %v5013
    %v6276 = vunpack.c.l.b16 %v5014
    %v6277 = vunpack.c.h.b16 %v5014
    %v6278 = vunpack.c.l.b16 %v5015
    %v6279 = vunpack.c.h.b16 %v5015
    %v6280 = vunpack.c.l.b16 %v5016
    %v6281 = vunpack.c.h.b16 %v5016
    %v6282 = vunpack.c.l.b16 %v5017
    %v6283 = vunpack.c.h.b16 %v5017
    %v6284 = vunpack.c.l.b16 %v5018
    %v6285 = vunpack.c.h.b16 %v5018
    %v6286 = vunpack.c.l.b16 %v5019
    %v6287 = vunpack.c.h.b16 %v5019
    %v6288 = vunpack.c.l.b16 %v5020
    %v6289 = vunpack.c.h.b16 %v5020
    %v6290 = vunpack.c.l.b16 %v5021
    %v6291 = vunpack.c.h.b16 %v5021
    %v6292 = vunpack.c.l.b16 %v5022
    %v6293 = vunpack.c.h.b16 %v5022
    %v6294 = vunpack.c.l.b16 %v5023
    %v6295 = vunpack.c.h.b16 %v5023
    %v6296 = vunpack.c.l.b16 %v5024
    %v6297 = vunpack.c.h.b16 %v5024
    %v6298 = vunpack.c.l.b16 %v5025
    %v6299 = vunpack.c.h.b16 %v5025
    %v6300 = vunpack.c.l.b16 %v5026
    %v6301 = vunpack.c.h.b16 %v5026
    %v6302 = vunpack.c.l.b16 %v5027
    %v6303 = vunpack.c.h.b16 %v5027
    %v6304 = vunpack.c.l.b16 %v5028
    %v6305 = vunpack.c.h.b16 %v5028
    %v6306 = vunpack.c.l.b16 %v5029
    %v6307 = vunpack.c.h.b16 %v5029
    %v6308 = vunpack.c.l.b16 %v5030
    %v6309 = vunpack.c.h.b16 %v5030
    %v6310 = vunpack.c.l.b16 %v5031
    %v6311 = vunpack.c.h.b16 %v5031
    %v6312 = vunpack.c.l.b16 %v5032
    %v6313 = vunpack.c.h.b16 %v5032
    %v6314 = vunpack.c.l.b16 %v5033
    %v6315 = vunpack.c.h.b16 %v5033
    %v6316 = vunpack.c.l.b16 %v5034
    %v6317 = vunpack.c.h.b16 %v5034
    %v6318 = vunpack.c.l.b16 %v5035
    %v6319 = vunpack.c.h.b16 %v5035
    %v6320 = vunpack.c.l.b16 %v5036
    %v6321 = vunpack.c.h.b16 %v5036
    %v6322 = vunpack.c.l.b16 %v5037
    %v6323 = vunpack.c.h.b16 %v5037
    %v6324 = vunpack.c.l.b16 %v5038
    %v6325 = vunpack.c.h.b16 %v5038
    %v6326 = vunpack.c.l.b16 %v5039
    %v6327 = vunpack.c.h.b16 %v5039
    %v6328 = vunpack.c.l.b16 %v5040
    %v6329 = vunpack.c.h.b16 %v5040
    %v6330 = vunpack.c.l.b16 %v5041
    %v6331 = vunpack.c.h.b16 %v5041
    %v6332 = vunpack.c.l.b16 %v5042
    %v6333 = vunpack.c.h.b16 %v5042
    %v6334 = vunpack.c.l.b16 %v5043
    %v6335 = vunpack.c.h.b16 %v5043
    %v6336 = vunpack.c.l.b16 %v5044
    %v6337 = vunpack.c.h.b16 %v5044
    %v6338 = vunpack.c.l.b16 %v5045
    %v6339 = vunpack.c.h.b16 %v5045
    %v6340 = vunpack.c.l.b16 %v5046
    %v6341 = vunpack.c.h.b16 %v5046
    %v6342 = vunpack.c.l.b16 %v5047
    %v6343 = vunpack.c.h.b16 %v5047
    %v6344 = vunpack.c.l.b16 %v5048
    %v6345 = vunpack.c.h.b16 %v5048
    %v6346 = vunpack.c.l.b16 %v5049
    %v6347 = vunpack.c.h.b16 %v5049
    %v6348 = vunpack.c.l.b16 %v5050
    %v6349 = vunpack.c.h.b16 %v5050
    %v6350 = vunpack.c.l.b16 %v5051
    %v6351 = vunpack.c.h.b16 %v5051
    %v6352 = vunpack.c.l.b16 %v5052
    %v6353 = vunpack.c.h.b16 %v5052
    %v6354 = vunpack.c.l.b16 %v5053
    %v6355 = vunpack.c.h.b16 %v5053
    %v6356 = vunpack.c.l.b16 %v5054
    %v6357 = vunpack.c.h.b16 %v5054
    %v6358 = vunpack.c.l.b16 %v5055
    %v6359 = vunpack.c.h.b16 %v5055
    %v6360 = vunpack.c.l.b16 %v5056
    %v6361 = vunpack.c.h.b16 %v5056
    %v6362 = vunpack.c.l.b16 %v5057
    %v6363 = vunpack.c.h.b16 %v5057
    %v6364 = vunpack.c.l.b16 %v5058
    %v6365 = vunpack.c.h.b16 %v5058
    %v6366 = vunpack.c.l.b16 %v5059
    %v6367 = vunpack.c.h.b16 %v5059
    %v6368 = vunpack.c.l.b16 %v5060
    %v6369 = vunpack.c.h.b16 %v5060
    %v6370 = vunpack.c.l.b16 %v5061
    %v6371 = vunpack.c.h.b16 %v5061
    %v6372 = vunpack.c.l.b16 %v5062
    %v6373 = vunpack.c.h.b16 %v5062
    %v6374 = vunpack.c.l.b16 %v5063
    %v6375 = vunpack.c.h.b16 %v5063
    %v6376 = vunpack.c.l.b16 %v5064
    %v6377 = vunpack.c.h.b16 %v5064
    %v6378 = vunpack.c.l.b16 %v5065
    %v6379 = vunpack.c.h.b16 %v5065
    %v6380 = vunpack.c.l.b16 %v5066
    %v6381 = vunpack.c.h.b16 %v5066
    %v6382 = vunpack.c.l.b16 %v5067
    %v6383 = vunpack.c.h.b16 %v5067
    %v6384 = vunpack.c.l.b16 %v5068
    %v6385 = vunpack.c.h.b16 %v5068
    %v6386 = vunpack.c.l.b16 %v5069
    %v6387 = vunpack.c.h.b16 %v5069
    %v6388 = vunpack.c.l.b16 %v5070
    %v6389 = vunpack.c.h.b16 %v5070
    %v6390 = vunpack.c.l.b16 %v5071
    %v6391 = vunpack.c.h.b16 %v5071
    %v6392 = vunpack.c.l.b16 %v5072
    %v6393 = vunpack.c.h.b16 %v5072
    %v6394 = vunpack.c.l.b16 %v5073
    %v6395 = vunpack.c.h.b16 %v5073
    %v6396 = vunpack.c.l.b16 %v5074
    %v6397 = vunpack.c.h.b16 %v5074
    %v6398 = vunpack.c.l.b16 %v5075
    %v6399 = vunpack.c.h.b16 %v5075
    %v6400 = vunpack.c.l.b16 %v5076
    %v6401 = vunpack.c.h.b16 %v5076
    %v6402 = vunpack.c.l.b16 %v5077
    %v6403 = vunpack.c.h.b16 %v5077
    %v6404 = vunpack.c.l.b16 %v5078
    %v6405 = vunpack.c.h.b16 %v5078
    %v6406 = vunpack.c.l.b16 %v5079
    %v6407 = vunpack.c.h.b16 %v5079
    %v6408 = vunpack.c.l.b16 %v5080
    %v6409 = vunpack.c.h.b16 %v5080
    %v6410 = vunpack.c.l.b16 %v5081
    %v6411 = vunpack.c.h.b16 %v5081
    %v6412 = vunpack.c.l.b16 %v5082
    %v6413 = vunpack.c.h.b16 %v5082
    %v6414 = vunpack.c.l.b16 %v5083
    %v6415 = vunpack.c.h.b16 %v5083
    %v6416 = vunpack.c.l.b16 %v5084
    %v6417 = vunpack.c.h.b16 %v5084
    %v6418 = vunpack.c.l.b16 %v5085
    %v6419 = vunpack.c.h.b16 %v5085
    %v6420 = vunpack.c.l.b16 %v5086
    %v6421 = vunpack.c.h.b16 %v5086
    %v6422 = vunpack.c.l.b16 %v5087
    %v6423 = vunpack.c.h.b16 %v5087
    %v6424 = vunpack.c.l.b16 %v5088
    %v6425 = vunpack.c.h.b16 %v5088
    %v6426 = vunpack.c.l.b16 %v5089
    %v6427 = vunpack.c.h.b16 %v5089
    %v6428 = vunpack.c.l.b16 %v5090
    %v6429 = vunpack.c.h.b16 %v5090
    %v6430 = vunpack.c.l.b16 %v5091
    %v6431 = vunpack.c.h.b16 %v5091
    %v6432 = vunpack.c.l.b16 %v5092
    %v6433 = vunpack.c.h.b16 %v5092
    %v6434 = vunpack.c.l.b16 %v5093
    %v6435 = vunpack.c.h.b16 %v5093
    %v6436 = vunpack.c.l.b16 %v5094
    %v6437 = vunpack.c.h.b16 %v5094
    %v6438 = vunpack.c.l.b16 %v5095
    %v6439 = vunpack.c.h.b16 %v5095
    %v6440 = vunpack.c.l.b16 %v5096
    %v6441 = vunpack.c.h.b16 %v5096
    %v6442 = vunpack.c.l.b16 %v5097
    %v6443 = vunpack.c.h.b16 %v5097
    %v6444 = vunpack.c.l.b16 %v5098
    %v6445 = vunpack.c.h.b16 %v5098
    %v6446 = vunpack.c.l.b16 %v5099
    %v6447 = vunpack.c.h.b16 %v5099
    %v6448 = vunpack.c.l.b16 %v5100
    %v6449 = vunpack.c.h.b16 %v5100
    %v6450 = vunpack.c.l.b16 %v5101
    %v6451 = vunpack.c.h.b16 %v5101
    %v6452 = vunpack.c.l.b16 %v5102
    %v6453 = vunpack.c.h.b16 %v5102
    %v6454 = vunpack.c.l.b16 %v5103
    %v6455 = vunpack.c.h.b16 %v5103
    %v6456 = vunpack.c.l.b16 %v5104
    %v6457 = vunpack.c.h.b16 %v5104
    %v6458 = vunpack.c.l.b16 %v5105
    %v6459 = vunpack.c.h.b16 %v5105
    %v6460 = vunpack.c.l.b16 %v5106
    %v6461 = vunpack.c.h.b16 %v5106
    %v6462 = vunpack.c.l.b16 %v5107
    %v6463 = vunpack.c.h.b16 %v5107
    %v6464 = vunpack.c.l.b16 %v5108
    %v6465 = vunpack.c.h.b16 %v5108
    %v6466 = vunpack.c.l.b16 %v5109
    %v6467 = vunpack.c.h.b16 %v5109
    %v6468 = vunpack.c.l.b16 %v5110
    %v6469 = vunpack.c.h.b16 %v5110
    %v6470 = vunpack.c.l.b16 %v5111
    %v6471 = vunpack.c.h.b16 %v5111
    %v6472 = vunpack.c.l.b16 %v5112
    %v6473 = vunpack.c.h.b16 %v5112
    %v6474 = vunpack.c.l.b16 %v5113
    %v6475 = vunpack.c.h.b16 %v5113
    %v6476 = vunpack.c.l.b16 %v5114
    %v6477 = vunpack.c.h.b16 %v5114
    %v6478 = vunpack.c.l.b16 %v5115
    %v6479 = vunpack.c.h.b16 %v5115
    %v6480 = vunpack.c.l.b16 %v5116
    %v6481 = vunpack.c.h.b16 %v5116
    %v6482 = vunpack.c.l.b16 %v5117
    %v6483 = vunpack.c.h.b16 %v5117
    %v6484 = vunpack.c.l.b16 %v5118
    %v6485 = vunpack.c.h.b16 %v5118
    %v6486 = vunpack.c.l.b16 %v5119
    %v6487 = vunpack.c.h.b16 %v5119
    %v6488 = vunpack.c.l.b16 %v5120
    %v6489 = vunpack.c.h.b16 %v5120
    %v6490 = vunpack.c.l.b16 %v5121
    %v6491 = vunpack.c.h.b16 %v5121
    %v6492 = vunpack.c.l.b16 %v5122
    %v6493 = vunpack.c.h.b16 %v5122
    %v6494 = vunpack.c.l.b16 %v5123
    %v6495 = vunpack.c.h.b16 %v5123
    %v6496 = vunpack.c.l.b16 %v5124
    %v6497 = vunpack.c.h.b16 %v5124
    %v6498 = vunpack.c.l.b16 %v5125
    %v6499 = vunpack.c.h.b16 %v5125
    %v6500 = vunpack.c.l.b16 %v5126
    %v6501 = vunpack.c.h.b16 %v5126
    %v6502 = vunpack.c.l.b16 %v5127
    %v6503 = vunpack.c.h.b16 %v5127
    %v6504 = vunpack.c.l.b16 %v5128
    %v6505 = vunpack.c.h.b16 %v5128
    %v6506 = vunpack.c.l.b16 %v5129
    %v6507 = vunpack.c.h.b16 %v5129
    %v6508 = vunpack.c.l.b16 %v5130
    %v6509 = vunpack.c.h.b16 %v5130
    %v6510 = vunpack.c.l.b16 %v5131
    %v6511 = vunpack.c.h.b16 %v5131
    %v6512 = vunpack.c.l.b16 %v5132
    %v6513 = vunpack.c.h.b16 %v5132
    %v6514 = vunpack.c.l.b16 %v5133
    %v6515 = vunpack.c.h.b16 %v5133
    %v6516 = vunpack.c.l.b16 %v5134
    %v6517 = vunpack.c.h.b16 %v5134
    %v6518 = vunpack.c.l.b16 %v5135
    %v6519 = vunpack.c.h.b16 %v5135
    %v6520 = vunpack.c.l.b16 %v5136
    %v6521 = vunpack.c.h.b16 %v5136
    %v6522 = vunpack.c.l.b16 %v5137
    %v6523 = vunpack.c.h.b16 %v5137
    %v6524 = vunpack.c.l.b16 %v5138
    %v6525 = vunpack.c.h.b16 %v5138
    %v6526 = vunpack.c.l.b16 %v5139
    %v6527 = vunpack.c.h.b16 %v5139
    %v6528 = vunpack.c.l.b16 %v5140
    %v6529 = vunpack.c.h.b16 %v5140
    %v6530 = vunpack.c.l.b16 %v5141
    %v6531 = vunpack.c.h.b16 %v5141
    %v6532 = vunpack.c.l.b16 %v5142
    %v6533 = vunpack.c.h.b16 %v5142
    %v6534 = vunpack.c.l.b16 %v5143
    %v6535 = vunpack.c.h.b16 %v5143
    %v6536 = vunpack.c.l.b16 %v5144
    %v6537 = vunpack.c.h.b16 %v5144
    %v6538 = vunpack.c.l.b16 %v5145
    %v6539 = vunpack.c.h.b16 %v5145
    %v6540 = vunpack.c.l.b16 %v5146
    %v6541 = vunpack.c.h.b16 %v5146
    %v6542 = vunpack.c.l.b16 %v5147
    %v6543 = vunpack.c.h.b16 %v5147
    %v6544 = vunpack.c.l.b16 %v5148
    %v6545 = vunpack.c.h.b16 %v5148
    %v6546 = vunpack.c.l.b16 %v5149
    %v6547 = vunpack.c.h.b16 %v5149
    %v6548 = vunpack.c.l.b16 %v5150
    %v6549 = vunpack.c.h.b16 %v5150
    %v6550 = vunpack.c.l.b16 %v5151
    %v6551 = vunpack.c.h.b16 %v5151
    %v6552 = vunpack.c.l.b16 %v5152
    %v6553 = vunpack.c.h.b16 %v5152
    %v6554 = vunpack.c.l.b16 %v5153
    %v6555 = vunpack.c.h.b16 %v5153
    %v6556 = vunpack.c.l.b16 %v5154
    %v6557 = vunpack.c.h.b16 %v5154
    %v6558 = vunpack.c.l.b16 %v5155
    %v6559 = vunpack.c.h.b16 %v5155
    %v6560 = vunpack.c.l.b16 %v5156
    %v6561 = vunpack.c.h.b16 %v5156
    %v6562 = vunpack.c.l.b16 %v5157
    %v6563 = vunpack.c.h.b16 %v5157
    %v6564 = vunpack.c.l.b16 %v5158
    %v6565 = vunpack.c.h.b16 %v5158
    %v6566 = vunpack.c.l.b16 %v5159
    %v6567 = vunpack.c.h.b16 %v5159
    %v6568 = vunpack.c.l.b16 %v5160
    %v6569 = vunpack.c.h.b16 %v5160
    %v6570 = vunpack.c.l.b16 %v5161
    %v6571 = vunpack.c.h.b16 %v5161
    %v6572 = vunpack.c.l.b16 %v5162
    %v6573 = vunpack.c.h.b16 %v5162
    %v6574 = vunpack.c.l.b16 %v5163
    %v6575 = vunpack.c.h.b16 %v5163
    %v6576 = vunpack.c.l.b16 %v5164
    %v6577 = vunpack.c.h.b16 %v5164
    %v6578 = vunpack.c.l.b16 %v5165
    %v6579 = vunpack.c.h.b16 %v5165
    %v6580 = vunpack.c.l.b16 %v5166
    %v6581 = vunpack.c.h.b16 %v5166
    %v6582 = vunpack.c.l.b16 %v5167
    %v6583 = vunpack.c.h.b16 %v5167
    %v6584 = vunpack.c.l.b16 %v5168
    %v6585 = vunpack.c.h.b16 %v5168
    %v6586 = vunpack.c.l.b16 %v5169
    %v6587 = vunpack.c.h.b16 %v5169
    %v6588 = vunpack.c.l.b16 %v5170
    %v6589 = vunpack.c.h.b16 %v5170
    %v6590 = vunpack.c.l.b16 %v5171
    %v6591 = vunpack.c.h.b16 %v5171
    %v6592 = vunpack.c.l.b16 %v5172
    %v6593 = vunpack.c.h.b16 %v5172
    %v6594 = vunpack.c.l.b16 %v5173
    %v6595 = vunpack.c.h.b16 %v5173
    %v6596 = vunpack.c.l.b16 %v5174
    %v6597 = vunpack.c.h.b16 %v5174
    %v6598 = vunpack.c.l.b16 %v5175
    %v6599 = vunpack.c.h.b16 %v5175
    %v6600 = vunpack.c.l.b16 %v5176
    %v6601 = vunpack.c.h.b16 %v5176
    %v6602 = vunpack.c.l.b16 %v5177
    %v6603 = vunpack.c.h.b16 %v5177
    %v6604 = vunpack.c.l.b16 %v5178
    %v6605 = vunpack.c.h.b16 %v5178
    %v6606 = vunpack.c.l.b16 %v5179
    %v6607 = vunpack.c.h.b16 %v5179
    %v6608 = vunpack.c.l.b16 %v5180
    %v6609 = vunpack.c.h.b16 %v5180
    %v6610 = vunpack.c.l.b16 %v5181
    %v6611 = vunpack.c.h.b16 %v5181
    %v6612 = vunpack.c.l.b16 %v5182
    %v6613 = vunpack.c.h.b16 %v5182
    %v6614 = vunpack.c.l.b16 %v5183
    %v6615 = vunpack.c.h.b16 %v5183
    %v6616 = vunpack.c.l.b16 %v5184
    %v6617 = vunpack.c.h.b16 %v5184
    %v6618 = vunpack.c.l.b16 %v5185
    %v6619 = vunpack.c.h.b16 %v5185
    %v6620 = vunpack.c.l.b16 %v5186
    %v6621 = vunpack.c.h.b16 %v5186
    %v6622 = vunpack.c.l.b16 %v5187
    %v6623 = vunpack.c.h.b16 %v5187
    %v6624 = vunpack.c.l.b16 %v5188
    %v6625 = vunpack.c.h.b16 %v5188
    %v6626 = vunpack.c.l.b16 %v5189
    %v6627 = vunpack.c.h.b16 %v5189
    %v6628 = vunpack.c.l.b16 %v5190
    %v6629 = vunpack.c.h.b16 %v5190
    %v6630 = vunpack.c.l.b16 %v5191
    %v6631 = vunpack.c.h.b16 %v5191
    %v6632 = vunpack.c.l.b16 %v5192
    %v6633 = vunpack.c.h.b16 %v5192
    %v6634 = vunpack.c.l.b16 %v5193
    %v6635 = vunpack.c.h.b16 %v5193
    %v6636 = vunpack.c.l.b16 %v5194
    %v6637 = vunpack.c.h.b16 %v5194
    %v6638 = vunpack.c.l.b16 %v5195
    %v6639 = vunpack.c.h.b16 %v5195
    %v6640 = vunpack.c.l.b16 %v5196
    %v6641 = vunpack.c.h.b16 %v5196
    %v6642 = vunpack.c.l.b16 %v5197
    %v6643 = vunpack.c.h.b16 %v5197
    %v6644 = vunpack.c.l.b16 %v5198
    %v6645 = vunpack.c.h.b16 %v5198
    %v6646 = vunpack.c.l.b16 %v5199
    %v6647 = vunpack.c.h.b16 %v5199
    %v6648 = vunpack.c.l.b16 %v5200
    %v6649 = vunpack.c.h.b16 %v5200
    %v6650 = vunpack.c.l.b16 %v5201
    %v6651 = vunpack.c.h.b16 %v5201
    %v6652 = vunpack.c.l.b16 %v5202
    %v6653 = vunpack.c.h.b16 %v5202
    %v6654 = vunpack.c.l.b16 %v5203
    %v6655 = vunpack.c.h.b16 %v5203
    %v6656 = vunpack.c.l.b16 %v5204
    %v6657 = vunpack.c.h.b16 %v5204
    %v6658 = vunpack.c.l.b16 %v5205
    %v6659 = vunpack.c.h.b16 %v5205
    %v6660 = vunpack.c.l.b16 %v5206
    %v6661 = vunpack.c.h.b16 %v5206
    %v6662 = vunpack.c.l.b16 %v5207
    %v6663 = vunpack.c.h.b16 %v5207
    %v6664 = vunpack.c.l.b16 %v5208
    %v6665 = vunpack.c.h.b16 %v5208
    %v6666 = vunpack.c.l.b16 %v5209
    %v6667 = vunpack.c.h.b16 %v5209
    %v6668 = vunpack.c.l.b16 %v5210
    %v6669 = vunpack.c.h.b16 %v5210
    %v6670 = vunpack.c.l.b16 %v5211
    %v6671 = vunpack.c.h.b16 %v5211
    %v6672 = vunpack.c.l.b16 %v5212
    %v6673 = vunpack.c.h.b16 %v5212
    %v6674 = vunpack.c.l.b16 %v5213
    %v6675 = vunpack.c.h.b16 %v5213
    %v6676 = vunpack.c.l.b16 %v5214
    %v6677 = vunpack.c.h.b16 %v5214
    %v6678 = vunpack.c.l.b16 %v5215
    %v6679 = vunpack.c.h.b16 %v5215
    %v6680 = vunpack.c.l.b16 %v5216
    %v6681 = vunpack.c.h.b16 %v5216
    %v6682 = vunpack.c.l.b16 %v5217
    %v6683 = vunpack.c.h.b16 %v5217
    %v6684 = vunpack.c.l.b16 %v5218
    %v6685 = vunpack.c.h.b16 %v5218
    %v6686 = vunpack.c.l.b16 %v5219
    %v6687 = vunpack.c.h.b16 %v5219
    %v6688 = vunpack.c.l.b16 %v5220
    %v6689 = vunpack.c.h.b16 %v5220
    %v6690 = vunpack.c.l.b16 %v5221
    %v6691 = vunpack.c.h.b16 %v5221
    %v6692 = vunpack.c.l.b16 %v5222
    %v6693 = vunpack.c.h.b16 %v5222
    %v6694 = vunpack.c.l.b16 %v5223
    %v6695 = vunpack.c.h.b16 %v5223
    %v6696 = vunpack.c.l.b16 %v5224
    %v6697 = vunpack.c.h.b16 %v5224
    %v6698 = vunpack.c.l.b16 %v5225
    %v6699 = vunpack.c.h.b16 %v5225
    %v6700 = vunpack.c.l.b16 %v5226
    %v6701 = vunpack.c.h.b16 %v5226
    %v6702 = vunpack.c.l.b16 %v5227
    %v6703 = vunpack.c.h.b16 %v5227
    %v6704 = vunpack.c.l.b16 %v5228
    %v6705 = vunpack.c.h.b16 %v5228
    %v6706 = vunpack.c.l.b16 %v5229
    %v6707 = vunpack.c.h.b16 %v5229
    %v6708 = vunpack.c.l.b16 %v5230
    %v6709 = vunpack.c.h.b16 %v5230
    %v6710 = vunpack.c.l.b16 %v5231
    %v6711 = vunpack.c.h.b16 %v5231
    %v6712 = vunpack.c.l.b16 %v5232
    %v6713 = vunpack.c.h.b16 %v5232
    %v6714 = vunpack.c.l.b16 %v5233
    %v6715 = vunpack.c.h.b16 %v5233
    %v6716 = vunpack.c.l.b16 %v5234
    %v6717 = vunpack.c.h.b16 %v5234
    %v6718 = vunpack.c.l.b16 %v5235
    %v6719 = vunpack.c.h.b16 %v5235
    %v6720 = vunpack.c.l.b16 %v5236
    %v6721 = vunpack.c.h.b16 %v5236
    %v6722 = vunpack.c.l.b16 %v5237
    %v6723 = vunpack.c.h.b16 %v5237
    %v6724 = vunpack.c.l.b16 %v5238
    %v6725 = vunpack.c.h.b16 %v5238
    %v6726 = vunpack.c.l.b16 %v5239
    %v6727 = vunpack.c.h.b16 %v5239
    %v6728 = vunpack.c.l.b16 %v5240
    %v6729 = vunpack.c.h.b16 %v5240
    %v6730 = vunpack.c.l.b16 %v5241
    %v6731 = vunpack.c.h.b16 %v5241
    %v6732 = vunpack.c.l.b16 %v5242
    %v6733 = vunpack.c.h.b16 %v5242
    %v6734 = vunpack.c.l.b16 %v5243
    %v6735 = vunpack.c.h.b16 %v5243
    %v6736 = vunpack.c.l.b16 %v5244
    %v6737 = vunpack.c.h.b16 %v5244
    %v6738 = vunpack.c.l.b16 %v5245
    %v6739 = vunpack.c.h.b16 %v5245
    %v6740 = vunpack.c.l.b16 %v5246
    %v6741 = vunpack.c.h.b16 %v5246
    %v6742 = vunpack.c.l.b16 %v5247
    %v6743 = vunpack.c.h.b16 %v5247
    %v6744 = vunpack.c.l.b16 %v5248
    %v6745 = vunpack.c.h.b16 %v5248
    %v6746 = vunpack.c.l.b16 %v5249
    %v6747 = vunpack.c.h.b16 %v5249
    %v6748 = vunpack.c.l.b16 %v5250
    %v6749 = vunpack.c.h.b16 %v5250
    %v6750 = vunpack.c.l.b16 %v5251
    %v6751 = vunpack.c.h.b16 %v5251
    %v6752 = vunpack.c.l.b16 %v5252
    %v6753 = vunpack.c.h.b16 %v5252
    %v6754 = vunpack.c.l.b16 %v5253
    %v6755 = vunpack.c.h.b16 %v5253
    %v6756 = vunpack.c.l.b16 %v5254
    %v6757 = vunpack.c.h.b16 %v5254
    %v6758 = vunpack.c.l.b16 %v5255
    %v6759 = vunpack.c.h.b16 %v5255
    %v6760 = vunpack.c.l.b16 %v5256
    %v6761 = vunpack.c.h.b16 %v5256
    %v6762 = vunpack.c.l.b16 %v5257
    %v6763 = vunpack.c.h.b16 %v5257
    %v6764 = vunpack.c.l.b16 %v5258
    %v6765 = vunpack.c.h.b16 %v5258
    %v6766 = vunpack.c.l.b16 %v5259
    %v6767 = vunpack.c.h.b16 %v5259
    %v6768 = vunpack.c.l.b16 %v5260
    %v6769 = vunpack.c.h.b16 %v5260
    %v6770 = vunpack.c.l.b16 %v5261
    %v6771 = vunpack.c.h.b16 %v5261
    %v6772 = vunpack.c.l.b16 %v5262
    %v6773 = vunpack.c.h.b16 %v5262
    %v6774 = vunpack.c.l.b16 %v5263
    %v6775 = vunpack.c.h.b16 %v5263
    %v6776 = vunpack.c.l.b16 %v5264
    %v6777 = vunpack.c.h.b16 %v5264
    %v6778 = vunpack.c.l.b16 %v5265
    %v6779 = vunpack.c.h.b16 %v5265
    %v6780 = vunpack.c.l.b16 %v5266
    %v6781 = vunpack.c.h.b16 %v5266
    %v6782 = vunpack.c.l.b16 %v5267
    %v6783 = vunpack.c.h.b16 %v5267
    %v6784 = vunpack.c.l.b16 %v5268
    %v6785 = vunpack.c.h.b16 %v5268
    %v6786 = vunpack.c.l.b16 %v5269
    %v6787 = vunpack.c.h.b16 %v5269
    %v6788 = vunpack.c.l.b16 %v5270
    %v6789 = vunpack.c.h.b16 %v5270
    %v6790 = vunpack.c.l.b16 %v5271
    %v6791 = vunpack.c.h.b16 %v5271
    %v6792 = vunpack.c.l.b16 %v5272
    %v6793 = vunpack.c.h.b16 %v5272
    %v6794 = vunpack.c.l.b16 %v5273
    %v6795 = vunpack.c.h.b16 %v5273
    %v6796 = vunpack.c.l.b16 %v5274
    %v6797 = vunpack.c.h.b16 %v5274
    %v6798 = vunpack.c.l.b16 %v5275
    %v6799 = vunpack.c.h.b16 %v5275
    %v6800 = vunpack.c.l.b16 %v5276
    %v6801 = vunpack.c.h.b16 %v5276
    %v6802 = vunpack.c.l.b16 %v5277
    %v6803 = vunpack.c.h.b16 %v5277
    %v6804 = vunpack.c.l.b16 %v5278
    %v6805 = vunpack.c.h.b16 %v5278
    %v6806 = vunpack.c.l.b16 %v5279
    %v6807 = vunpack.c.h.b16 %v5279
    %v6808 = vunpack.c.l.b16 %v5280
    %v6809 = vunpack.c.h.b16 %v5280
    %v6810 = vunpack.c.l.b16 %v5281
    %v6811 = vunpack.c.h.b16 %v5281
    %v6812 = vunpack.c.l.b16 %v5282
    %v6813 = vunpack.c.h.b16 %v5282
    %v6814 = vunpack.c.l.b16 %v5283
    %v6815 = vunpack.c.h.b16 %v5283
    %v6816 = vunpack.c.l.b16 %v5284
    %v6817 = vunpack.c.h.b16 %v5284
    %v6818 = vunpack.c.l.b16 %v5285
    %v6819 = vunpack.c.h.b16 %v5285
    %v6820 = vunpack.c.l.b16 %v5286
    %v6821 = vunpack.c.h.b16 %v5286
    %v6822 = vunpack.c.l.b16 %v5287
    %v6823 = vunpack.c.h.b16 %v5287
    %v6824 = vpack.c.b16 %v5808, %v5800
    %v6825 = vpack.c.b16 %v5809, %v5801
    %v6826 = vpack.c.b16 %v5810, %v5802
    %v6827 = vpack.c.b16 %v5811, %v5803
    %v6828 = vpack.c.b16 %v5812, %v5804
    %v6829 = vpack.c.b16 %v5813, %v5805
    %v6830 = vpack.c.b16 %v5814, %v5806
    %v6831 = vpack.c.b16 %v5815, %v5807
    %v6832 = vpack.c.b16 %v5824, %v5816
    %v6833 = vpack.c.b16 %v5825, %v5817
    %v6834 = vpack.c.b16 %v5826, %v5818
    %v6835 = vpack.c.b16 %v5827, %v5819
    %v6836 = vpack.c.b16 %v5828, %v5820
    %v6837 = vpack.c.b16 %v5829, %v5821
    %v6838 = vpack.c.b16 %v5830, %v5822
    %v6839 = vpack.c.b16 %v5831, %v5823
    %v6840 = vpack.c.b16 %v5840, %v5832
    %v6841 = vpack.c.b16 %v5841, %v5833
    %v6842 = vpack.c.b16 %v5842, %v5834
    %v6843 = vpack.c.b16 %v5843, %v5835
    %v6844 = vpack.c.b16 %v5844, %v5836
    %v6845 = vpack.c.b16 %v5845, %v5837
    %v6846 = vpack.c.b16 %v5846, %v5838
    %v6847 = vpack.c.b16 %v5847, %v5839
    %v6848 = vpack.c.b16 %v5856, %v5848
    %v6849 = vpack.c.b16 %v5857, %v5849
    %v6850 = vpack.c.b16 %v5858, %v5850
    %v6851 = vpack.c.b16 %v5859, %v5851
    %v6852 = vpack.c.b16 %v5860, %v5852
    %v6853 = vpack.c.b16 %v5861, %v5853
    %v6854 = vpack.c.b16 %v5862, %v5854
    %v6855 = vpack.c.b16 %v5863, %v5855
    %v6856 = vpack.c.b16 %v5872, %v5864
    %v6857 = vpack.c.b16 %v5873, %v5865
    %v6858 = vpack.c.b16 %v5874, %v5866
    %v6859 = vpack.c.b16 %v5875, %v5867
    %v6860 = vpack.c.b16 %v5876, %v5868
    %v6861 = vpack.c.b16 %v5877, %v5869
    %v6862 = vpack.c.b16 %v5878, %v5870
    %v6863 = vpack.c.b16 %v5879, %v5871
    %v6864 = vpack.c.b16 %v5888, %v5880
    %v6865 = vpack.c.b16 %v5889, %v5881
    %v6866 = vpack.c.b16 %v5890, %v5882
    %v6867 = vpack.c.b16 %v5891, %v5883
    %v6868 = vpack.c.b16 %v5892, %v5884
    %v6869 = vpack.c.b16 %v5893, %v5885
    %v6870 = vpack.c.b16 %v5894, %v5886
    %v6871 = vpack.c.b16 %v5895, %v5887
    %v6872 = vpack.c.b16 %v5904, %v5896
    %v6873 = vpack.c.b16 %v5905, %v5897
    %v6874 = vpack.c.b16 %v5906, %v5898
    %v6875 = vpack.c.b16 %v5907, %v5899
    %v6876 = vpack.c.b16 %v5908, %v5900
    %v6877 = vpack.c.b16 %v5909, %v5901
    %v6878 = vpack.c.b16 %v5910, %v5902
    %v6879 = vpack.c.b16 %v5911, %v5903
    %v6880 = vpack.c.b16 %v5920, %v5912
    %v6881 = vpack.c.b16 %v5921, %v5913
    %v6882 = vpack.c.b16 %v5922, %v5914
    %v6883 = vpack.c.b16 %v5923, %v5915
    %v6884 = vpack.c.b16 %v5924, %v5916
    %v6885 = vpack.c.b16 %v5925, %v5917
    %v6886 = vpack.c.b16 %v5926, %v5918
    %v6887 = vpack.c.b16 %v5927, %v5919
    %v6888 = vpack.c.b16 %v5936, %v5928
    %v6889 = vpack.c.b16 %v5937, %v5929
    %v6890 = vpack.c.b16 %v5938, %v5930
    %v6891 = vpack.c.b16 %v5939, %v5931
    %v6892 = vpack.c.b16 %v5940, %v5932
    %v6893 = vpack.c.b16 %v5941, %v5933
    %v6894 = vpack.c.b16 %v5942, %v5934
    %v6895 = vpack.c.b16 %v5943, %v5935
    %v6896 = vpack.c.b16 %v5952, %v5944
    %v6897 = vpack.c.b16 %v5953, %v5945
    %v6898 = vpack.c.b16 %v5954, %v5946
    %v6899 = vpack.c.b16 %v5955, %v5947
    %v6900 = vpack.c.b16 %v5956, %v5948
    %v6901 = vpack.c.b16 %v5957, %v5949
    %v6902 = vpack.c.b16 %v5958, %v5950
    %v6903 = vpack.c.b16 %v5959, %v5951
    %v6904 = vpack.c.b16 %v5968, %v5960
    %v6905 = vpack.c.b16 %v5969, %v5961
    %v6906 = vpack.c.b16 %v5970, %v5962
    %v6907 = vpack.c.b16 %v5971, %v5963
    %v6908 = vpack.c.b16 %v5972, %v5964
    %v6909 = vpack.c.b16 %v5973, %v5965
    %v6910 = vpack.c.b16 %v5974, %v5966
    %v6911 = vpack.c.b16 %v5975, %v5967
    %v6912 = vpack.c.b16 %v5984, %v5976
    %v6913 = vpack.c.b16 %v5985, %v5977
    %v6914 = vpack.c.b16 %v5986, %v5978
    %v6915 = vpack.c.b16 %v5987, %v5979
    %v6916 = vpack.c.b16 %v5988, %v5980
    %v6917 = vpack.c.b16 %v5989, %v5981
    %v6918 = vpack.c.b16 %v5990, %v5982
    %v6919 = vpack.c.b16 %v5991, %v5983
    %v6920 = vpack.c.b16 %v6000, %v5992
    %v6921 = vpack.c.b16 %v6001, %v5993
    %v6922 = vpack.c.b16 %v6002, %v5994
    %v6923 = vpack.c.b16 %v6003, %v5995
    %v6924 = vpack.c.b16 %v6004, %v5996
    %v6925 = vpack.c.b16 %v6005, %v5997
    %v6926 = vpack.c.b16 %v6006, %v5998
    %v6927 = vpack.c.b16 %v6007, %v5999
    %v6928 = vpack.c.b16 %v6016, %v6008
    %v6929 = vpack.c.b16 %v6017, %v6009
    %v6930 = vpack.c.b16 %v6018, %v6010
    %v6931 = vpack.c.b16 %v6019, %v6011
    %v6932 = vpack.c.b16 %v6020, %v6012
    %v6933 = vpack.c.b16 %v6021, %v6013
    %v6934 = vpack.c.b16 %v6022, %v6014
    %v6935 = vpack.c.b16 %v6023, %v6015
    %v6936 = vpack.c.b16 %v6032, %v6024
    %v6937 = vpack.c.b16 %v6033, %v6025
    %v6938 = vpack.c.b16 %v6034, %v6026
    %v6939 = vpack.c.b16 %v6035, %v6027
    %v6940 = vpack.c.b16 %v6036, %v6028
    %v6941 = vpack.c.b16 %v6037, %v6029
    %v6942 = vpack.c.b16 %v6038, %v6030
    %v6943 = vpack.c.b16 %v6039, %v6031
    %v6944 = vpack.c.b16 %v6048, %v6040
    %v6945 = vpack.c.b16 %v6049, %v6041
    %v6946 = vpack.c.b16 %v6050, %v6042
    %v6947 = vpack.c.b16 %v6051, %v6043
    %v6948 = vpack.c.b16 %v6052, %v6044
    %v6949 = vpack.c.b16 %v6053, %v6045
    %v6950 = vpack.c.b16 %v6054, %v6046
    %v6951 = vpack.c.b16 %v6055, %v6047
    %v6952 = vpack.c.b16 %v6064, %v6056
    %v6953 = vpack.c.b16 %v6065, %v6057
    %v6954 = vpack.c.b16 %v6066, %v6058
    %v6955 = vpack.c.b16 %v6067, %v6059
    %v6956 = vpack.c.b16 %v6068, %v6060
    %v6957 = vpack.c.b16 %v6069, %v6061
    %v6958 = vpack.c.b16 %v6070, %v6062
    %v6959 = vpack.c.b16 %v6071, %v6063
    %v6960 = vpack.c.b16 %v6080, %v6072
    %v6961 = vpack.c.b16 %v6081, %v6073
    %v6962 = vpack.c.b16 %v6082, %v6074
    %v6963 = vpack.c.b16 %v6083, %v6075
    %v6964 = vpack.c.b16 %v6084, %v6076
    %v6965 = vpack.c.b16 %v6085, %v6077
    %v6966 = vpack.c.b16 %v6086, %v6078
    %v6967 = vpack.c.b16 %v6087, %v6079
    %v6968 = vpack.c.b16 %v6096, %v6088
    %v6969 = vpack.c.b16 %v6097, %v6089
    %v6970 = vpack.c.b16 %v6098, %v6090
    %v6971 = vpack.c.b16 %v6099, %v6091
    %v6972 = vpack.c.b16 %v6100, %v6092
    %v6973 = vpack.c.b16 %v6101, %v6093
    %v6974 = vpack.c.b16 %v6102, %v6094
    %v6975 = vpack.c.b16 %v6103, %v6095
    %v6976 = vpack.c.b16 %v6112, %v6104
    %v6977 = vpack.c.b16 %v6113, %v6105
    %v6978 = vpack.c.b16 %v6114, %v6106
    %v6979 = vpack.c.b16 %v6115, %v6107
    %v6980 = vpack.c.b16 %v6116, %v6108
    %v6981 = vpack.c.b16 %v6117, %v6109
    %v6982 = vpack.c.b16 %v6118, %v6110
    %v6983 = vpack.c.b16 %v6119, %v6111
    %v6984 = vpack.c.b16 %v6128, %v6120
    %v6985 = vpack.c.b16 %v6129, %v6121
    %v6986 = vpack.c.b16 %v6130, %v6122
    %v6987 = vpack.c.b16 %v6131, %v6123
    %v6988 = vpack.c.b16 %v6132, %v6124
    %v6989 = vpack.c.b16 %v6133, %v6125
    %v6990 = vpack.c.b16 %v6134, %v6126
    %v6991 = vpack.c.b16 %v6135, %v6127
    %v6992 = vpack.c.b16 %v6144, %v6136
    %v6993 = vpack.c.b16 %v6145, %v6137
    %v6994 = vpack.c.b16 %v6146, %v6138
    %v6995 = vpack.c.b16 %v6147, %v6139
    %v6996 = vpack.c.b16 %v6148, %v6140
    %v6997 = vpack.c.b16 %v6149, %v6141
    %v6998 = vpack.c.b16 %v6150, %v6142
    %v6999 = vpack.c.b16 %v6151, %v6143
    %v7000 = vpack.c.b16 %v6160, %v6152
    %v7001 = vpack.c.b16 %v6161, %v6153
    %v7002 = vpack.c.b16 %v6162, %v6154
    %v7003 = vpack.c.b16 %v6163, %v6155
    %v7004 = vpack.c.b16 %v6164, %v6156
    %v7005 = vpack.c.b16 %v6165, %v6157
    %v7006 = vpack.c.b16 %v6166, %v6158
    %v7007 = vpack.c.b16 %v6167, %v6159
    %v7008 = vpack.c.b16 %v6176, %v6168
    %v7009 = vpack.c.b16 %v6177, %v6169
    %v7010 = vpack.c.b16 %v6178, %v6170
    %v7011 = vpack.c.b16 %v6179, %v6171
    %v7012 = vpack.c.b16 %v6180, %v6172
    %v7013 = vpack.c.b16 %v6181, %v6173
    %v7014 = vpack.c.b16 %v6182, %v6174
    %v7015 = vpack.c.b16 %v6183, %v6175
    %v7016 = vpack.c.b16 %v6192, %v6184
    %v7017 = vpack.c.b16 %v6193, %v6185
    %v7018 = vpack.c.b16 %v6194, %v6186
    %v7019 = vpack.c.b16 %v6195, %v6187
    %v7020 = vpack.c.b16 %v6196, %v6188
    %v7021 = vpack.c.b16 %v6197, %v6189
    %v7022 = vpack.c.b16 %v6198, %v6190
    %v7023 = vpack.c.b16 %v6199, %v6191
    %v7024 = vpack.c.b16 %v6208, %v6200
    %v7025 = vpack.c.b16 %v6209, %v6201
    %v7026 = vpack.c.b16 %v6210, %v6202
    %v7027 = vpack.c.b16 %v6211, %v6203
    %v7028 = vpack.c.b16 %v6212, %v6204
    %v7029 = vpack.c.b16 %v6213, %v6205
    %v7030 = vpack.c.b16 %v6214, %v6206
    %v7031 = vpack.c.b16 %v6215, %v6207
    %v7032 = vpack.c.b16 %v6224, %v6216
    %v7033 = vpack.c.b16 %v6225, %v6217
    %v7034 = vpack.c.b16 %v6226, %v6218
    %v7035 = vpack.c.b16 %v6227, %v6219
    %v7036 = vpack.c.b16 %v6228, %v6220
    %v7037 = vpack.c.b16 %v6229, %v6221
    %v7038 = vpack.c.b16 %v6230, %v6222
    %v7039 = vpack.c.b16 %v6231, %v6223
    %v7040 = vpack.c.b16 %v6240, %v6232
    %v7041 = vpack.c.b16 %v6241, %v6233
    %v7042 = vpack.c.b16 %v6242, %v6234
    %v7043 = vpack.c.b16 %v6243, %v6235
    %v7044 = vpack.c.b16 %v6244, %v6236
    %v7045 = vpack.c.b16 %v6245, %v6237
    %v7046 = vpack.c.b16 %v6246, %v6238
    %v7047 = vpack.c.b16 %v6247, %v6239
    %v7048 = vpack.c.b16 %v6256, %v6248
    %v7049 = vpack.c.b16 %v6257, %v6249
    %v7050 = vpack.c.b16 %v6258, %v6250
    %v7051 = vpack.c.b16 %v6259, %v6251
    %v7052 = vpack.c.b16 %v6260, %v6252
    %v7053 = vpack.c.b16 %v6261, %v6253
    %v7054 = vpack.c.b16 %v6262, %v6254
    %v7055 = vpack.c.b16 %v6263, %v6255
    %v7056 = vpack.c.b16 %v6272, %v6264
    %v7057 = vpack.c.b16 %v6273, %v6265
    %v7058 = vpack.c.b16 %v6274, %v6266
    %v7059 = vpack.c.b16 %v6275, %v6267
    %v7060 = vpack.c.b16 %v6276, %v6268
    %v7061 = vpack.c.b16 %v6277, %v6269
    %v7062 = vpack.c.b16 %v6278, %v6270
    %v7063 = vpack.c.b16 %v6279, %v6271
    %v7064 = vpack.c.b16 %v6288, %v6280
    %v7065 = vpack.c.b16 %v6289, %v6281
    %v7066 = vpack.c.b16 %v6290, %v6282
    %v7067 = vpack.c.b16 %v6291, %v6283
    %v7068 = vpack.c.b16 %v6292, %v6284
    %v7069 = vpack.c.b16 %v6293, %v6285
    %v7070 = vpack.c.b16 %v6294, %v6286
    %v7071 = vpack.c.b16 %v6295, %v6287
    %v7072 = vpack.c.b16 %v6304, %v6296
    %v7073 = vpack.c.b16 %v6305, %v6297
    %v7074 = vpack.c.b16 %v6306, %v6298
    %v7075 = vpack.c.b16 %v6307, %v6299
    %v7076 = vpack.c.b16 %v6308, %v6300
    %v7077 = vpack.c.b16 %v6309, %v6301
    %v7078 = vpack.c.b16 %v6310, %v6302
    %v7079 = vpack.c.b16 %v6311, %v6303
    %v7080 = vpack.c.b16 %v6320, %v6312
    %v7081 = vpack.c.b16 %v6321, %v6313
    %v7082 = vpack.c.b16 %v6322, %v6314
    %v7083 = vpack.c.b16 %v6323, %v6315
    %v7084 = vpack.c.b16 %v6324, %v6316
    %v7085 = vpack.c.b16 %v6325, %v6317
    %v7086 = vpack.c.b16 %v6326, %v6318
    %v7087 = vpack.c.b16 %v6327, %v6319
    %v7088 = vpack.c.b16 %v6336, %v6328
    %v7089 = vpack.c.b16 %v6337, %v6329
    %v7090 = vpack.c.b16 %v6338, %v6330
    %v7091 = vpack.c.b16 %v6339, %v6331
    %v7092 = vpack.c.b16 %v6340, %v6332
    %v7093 = vpack.c.b16 %v6341, %v6333
    %v7094 = vpack.c.b16 %v6342, %v6334
    %v7095 = vpack.c.b16 %v6343, %v6335
    %v7096 = vpack.c.b16 %v6352, %v6344
    %v7097 = vpack.c.b16 %v6353, %v6345
    %v7098 = vpack.c.b16 %v6354, %v6346
    %v7099 = vpack.c.b16 %v6355, %v6347
    %v7100 = vpack.c.b16 %v6356, %v6348
    %v7101 = vpack.c.b16 %v6357, %v6349
    %v7102 = vpack.c.b16 %v6358, %v6350
    %v7103 = vpack.c.b16 %v6359, %v6351
    %v7104 = vpack.c.b16 %v6368, %v6360
    %v7105 = vpack.c.b16 %v6369, %v6361
    %v7106 = vpack.c.b16 %v6370, %v6362
    %v7107 = vpack.c.b16 %v6371, %v6363
    %v7108 = vpack.c.b16 %v6372, %v6364
    %v7109 = vpack.c.b16 %v6373, %v6365
    %v7110 = vpack.c.b16 %v6374, %v6366
    %v7111 = vpack.c.b16 %v6375, %v6367
    %v7112 = vpack.c.b16 %v6384, %v6376
    %v7113 = vpack.c.b16 %v6385, %v6377
    %v7114 = vpack.c.b16 %v6386, %v6378
    %v7115 = vpack.c.b16 %v6387, %v6379
    %v7116 = vpack.c.b16 %v6388, %v6380
    %v7117 = vpack.c.b16 %v6389, %v6381
    %v7118 = vpack.c.b16 %v6390, %v6382
    %v7119 = vpack.c.b16 %v6391, %v6383
    %v7120 = vpack.c.b16 %v6400, %v6392
    %v7121 = vpack.c.b16 %v6401, %v6393
    %v7122 = vpack.c.b16 %v6402, %v6394
    %v7123 = vpack.c.b16 %v6403, %v6395
    %v7124 = vpack.c.b16 %v6404, %v6396
    %v7125 = vpack.c.b16 %v6405, %v6397
    %v7126 = vpack.c.b16 %v6406, %v6398
    %v7127 = vpack.c.b16 %v6407, %v6399
    %v7128 = vpack.c.b16 %v6416, %v6408
    %v7129 = vpack.c.b16 %v6417, %v6409
    %v7130 = vpack.c.b16 %v6418, %v6410
    %v7131 = vpack.c.b16 %v6419, %v6411
    %v7132 = vpack.c.b16 %v6420, %v6412
    %v7133 = vpack.c.b16 %v6421, %v6413
    %v7134 = vpack.c.b16 %v6422, %v6414
    %v7135 = vpack.c.b16 %v6423, %v6415
    %v7136 = vpack.c.b16 %v6432, %v6424
    %v7137 = vpack.c.b16 %v6433, %v6425
    %v7138 = vpack.c.b16 %v6434, %v6426
    %v7139 = vpack.c.b16 %v6435, %v6427
    %v7140 = vpack.c.b16 %v6436, %v6428
    %v7141 = vpack.c.b16 %v6437, %v6429
    %v7142 = vpack.c.b16 %v6438, %v6430
    %v7143 = vpack.c.b16 %v6439, %v6431
    %v7144 = vpack.c.b16 %v6448, %v6440
    %v7145 = vpack.c.b16 %v6449, %v6441
    %v7146 = vpack.c.b16 %v6450, %v6442
    %v7147 = vpack.c.b16 %v6451, %v6443
    %v7148 = vpack.c.b16 %v6452, %v6444
    %v7149 = vpack.c.b16 %v6453, %v6445
    %v7150 = vpack.c.b16 %v6454, %v6446
    %v7151 = vpack.c.b16 %v6455, %v6447
    %v7152 = vpack.c.b16 %v6464, %v6456
    %v7153 = vpack.c.b16 %v6465, %v6457
    %v7154 = vpack.c.b16 %v6466, %v6458
    %v7155 = vpack.c.b16 %v6467, %v6459
    %v7156 = vpack.c.b16 %v6468, %v6460
    %v7157 = vpack.c.b16 %v6469, %v6461
    %v7158 = vpack.c.b16 %v6470, %v6462
    %v7159 = vpack.c.b16 %v6471, %v6463
    %v7160 = vpack.c.b16 %v6480, %v6472
    %v7161 = vpack.c.b16 %v6481, %v6473
    %v7162 = vpack.c.b16 %v6482, %v6474
    %v7163 = vpack.c.b16 %v6483, %v6475
    %v7164 = vpack.c.b16 %v6484, %v6476
    %v7165 = vpack.c.b16 %v6485, %v6477
    %v7166 = vpack.c.b16 %v6486, %v6478
    %v7167 = vpack.c.b16 %v6487, %v6479
    %v7168 = vpack.c.b16 %v6496, %v6488
    %v7169 = vpack.c.b16 %v6497, %v6489
    %v7170 = vpack.c.b16 %v6498, %v6490
    %v7171 = vpack.c.b16 %v6499, %v6491
    %v7172 = vpack.c.b16 %v6500, %v6492
    %v7173 = vpack.c.b16 %v6501, %v6493
    %v7174 = vpack.c.b16 %v6502, %v6494
    %v7175 = vpack.c.b16 %v6503, %v6495
    %v7176 = vpack.c.b16 %v6512, %v6504
    %v7177 = vpack.c.b16 %v6513, %v6505
    %v7178 = vpack.c.b16 %v6514, %v6506
    %v7179 = vpack.c.b16 %v6515, %v6507
    %v7180 = vpack.c.b16 %v6516, %v6508
    %v7181 = vpack.c.b16 %v6517, %v6509
    %v7182 = vpack.c.b16 %v6518, %v6510
    %v7183 = vpack.c.b16 %v6519, %v6511
    %v7184 = vpack.c.b16 %v6528, %v6520
    %v7185 = vpack.c.b16 %v6529, %v6521
    %v7186 = vpack.c.b16 %v6530, %v6522
    %v7187 = vpack.c.b16 %v6531, %v6523
    %v7188 = vpack.c.b16 %v6532, %v6524
    %v7189 = vpack.c.b16 %v6533, %v6525
    %v7190 = vpack.c.b16 %v6534, %v6526
    %v7191 = vpack.c.b16 %v6535, %v6527
    %v7192 = vpack.c.b16 %v6544, %v6536
    %v7193 = vpack.c.b16 %v6545, %v6537
    %v7194 = vpack.c.b16 %v6546, %v6538
    %v7195 = vpack.c.b16 %v6547, %v6539
    %v7196 = vpack.c.b16 %v6548, %v6540
    %v7197 = vpack.c.b16 %v6549, %v6541
    %v7198 = vpack.c.b16 %v6550, %v6542
    %v7199 = vpack.c.b16 %v6551, %v6543
    %v7200 = vpack.c.b16 %v6560, %v6552
    %v7201 = vpack.c.b16 %v6561, %v6553
    %v7202 = vpack.c.b16 %v6562, %v6554
    %v7203 = vpack.c.b16 %v6563, %v6555
    %v7204 = vpack.c.b16 %v6564, %v6556
    %v7205 = vpack.c.b16 %v6565, %v6557
    %v7206 = vpack.c.b16 %v6566, %v6558
    %v7207 = vpack.c.b16 %v6567, %v6559
    %v7208 = vpack.c.b16 %v6576, %v6568
    %v7209 = vpack.c.b16 %v6577, %v6569
    %v7210 = vpack.c.b16 %v6578, %v6570
    %v7211 = vpack.c.b16 %v6579, %v6571
    %v7212 = vpack.c.b16 %v6580, %v6572
    %v7213 = vpack.c.b16 %v6581, %v6573
    %v7214 = vpack.c.b16 %v6582, %v6574
    %v7215 = vpack.c.b16 %v6583, %v6575
    %v7216 = vpack.c.b16 %v6592, %v6584
    %v7217 = vpack.c.b16 %v6593, %v6585
    %v7218 = vpack.c.b16 %v6594, %v6586
    %v7219 = vpack.c.b16 %v6595, %v6587
    %v7220 = vpack.c.b16 %v6596, %v6588
    %v7221 = vpack.c.b16 %v6597, %v6589
    %v7222 = vpack.c.b16 %v6598, %v6590
    %v7223 = vpack.c.b16 %v6599, %v6591
    %v7224 = vpack.c.b16 %v6608, %v6600
    %v7225 = vpack.c.b16 %v6609, %v6601
    %v7226 = vpack.c.b16 %v6610, %v6602
    %v7227 = vpack.c.b16 %v6611, %v6603
    %v7228 = vpack.c.b16 %v6612, %v6604
    %v7229 = vpack.c.b16 %v6613, %v6605
    %v7230 = vpack.c.b16 %v6614, %v6606
    %v7231 = vpack.c.b16 %v6615, %v6607
    %v7232 = vpack.c.b16 %v6624, %v6616
    %v7233 = vpack.c.b16 %v6625, %v6617
    %v7234 = vpack.c.b16 %v6626, %v6618
    %v7235 = vpack.c.b16 %v6627, %v6619
    %v7236 = vpack.c.b16 %v6628, %v6620
    %v7237 = vpack.c.b16 %v6629, %v6621
    %v7238 = vpack.c.b16 %v6630, %v6622
    %v7239 = vpack.c.b16 %v6631, %v6623
    %v7240 = vpack.c.b16 %v6640, %v6632
    %v7241 = vpack.c.b16 %v6641, %v6633
    %v7242 = vpack.c.b16 %v6642, %v6634
    %v7243 = vpack.c.b16 %v6643, %v6635
    %v7244 = vpack.c.b16 %v6644, %v6636
    %v7245 = vpack.c.b16 %v6645, %v6637
    %v7246 = vpack.c.b16 %v6646, %v6638
    %v7247 = vpack.c.b16 %v6647, %v6639
    %v7248 = vpack.c.b16 %v6656, %v6648
    %v7249 = vpack.c.b16 %v6657, %v6649
    %v7250 = vpack.c.b16 %v6658, %v6650
    %v7251 = vpack.c.b16 %v6659, %v6651
    %v7252 = vpack.c.b16 %v6660, %v6652
    %v7253 = vpack.c.b16 %v6661, %v6653
    %v7254 = vpack.c.b16 %v6662, %v6654
    %v7255 = vpack.c.b16 %v6663, %v6655
    %v7256 = vpack.c.b16 %v6672, %v6664
    %v7257 = vpack.c.b16 %v6673, %v6665
    %v7258 = vpack.c.b16 %v6674, %v6666
    %v7259 = vpack.c.b16 %v6675, %v6667
    %v7260 = vpack.c.b16 %v6676, %v6668
    %v7261 = vpack.c.b16 %v6677, %v6669
    %v7262 = vpack.c.b16 %v6678, %v6670
    %v7263 = vpack.c.b16 %v6679, %v6671
    %v7264 = vpack.c.b16 %v6688, %v6680
    %v7265 = vpack.c.b16 %v6689, %v6681
    %v7266 = vpack.c.b16 %v6690, %v6682
    %v7267 = vpack.c.b16 %v6691, %v6683
    %v7268 = vpack.c.b16 %v6692, %v6684
    %v7269 = vpack.c.b16 %v6693, %v6685
    %v7270 = vpack.c.b16 %v6694, %v6686
    %v7271 = vpack.c.b16 %v6695, %v6687
    %v7272 = vpack.c.b16 %v6704, %v6696
    %v7273 = vpack.c.b16 %v6705, %v6697
    %v7274 = vpack.c.b16 %v6706, %v6698
    %v7275 = vpack.c.b16 %v6707, %v6699
    %v7276 = vpack.c.b16 %v6708, %v6700
    %v7277 = vpack.c.b16 %v6709, %v6701
    %v7278 = vpack.c.b16 %v6710, %v6702
    %v7279 = vpack.c.b16 %v6711, %v6703
    %v7280 = vpack.c.b16 %v6720, %v6712
    %v7281 = vpack.c.b16 %v6721, %v6713
    %v7282 = vpack.c.b16 %v6722, %v6714
    %v7283 = vpack.c.b16 %v6723, %v6715
    %v7284 = vpack.c.b16 %v6724, %v6716
    %v7285 = vpack.c.b16 %v6725, %v6717
    %v7286 = vpack.c.b16 %v6726, %v6718
    %v7287 = vpack.c.b16 %v6727, %v6719
    %v7288 = vpack.c.b16 %v6736, %v6728
    %v7289 = vpack.c.b16 %v6737, %v6729
    %v7290 = vpack.c.b16 %v6738, %v6730
    %v7291 = vpack.c.b16 %v6739, %v6731
    %v7292 = vpack.c.b16 %v6740, %v6732
    %v7293 = vpack.c.b16 %v6741, %v6733
    %v7294 = vpack.c.b16 %v6742, %v6734
    %v7295 = vpack.c.b16 %v6743, %v6735
    %v7296 = vpack.c.b16 %v6752, %v6744
    %v7297 = vpack.c.b16 %v6753, %v6745
    %v7298 = vpack.c.b16 %v6754, %v6746
    %v7299 = vpack.c.b16 %v6755, %v6747
    %v7300 = vpack.c.b16 %v6756, %v6748
    %v7301 = vpack.c.b16 %v6757, %v6749
    %v7302 = vpack.c.b16 %v6758, %v6750
    %v7303 = vpack.c.b16 %v6759, %v6751
    %v7304 = vpack.c.b16 %v6768, %v6760
    %v7305 = vpack.c.b16 %v6769, %v6761
    %v7306 = vpack.c.b16 %v6770, %v6762
    %v7307 = vpack.c.b16 %v6771, %v6763
    %v7308 = vpack.c.b16 %v6772, %v6764
    %v7309 = vpack.c.b16 %v6773, %v6765
    %v7310 = vpack.c.b16 %v6774, %v6766
    %v7311 = vpack.c.b16 %v6775, %v6767
    %v7312 = vpack.c.b16 %v6784, %v6776
    %v7313 = vpack.c.b16 %v6785, %v6777
    %v7314 = vpack.c.b16 %v6786, %v6778
    %v7315 = vpack.c.b16 %v6787, %v6779
    %v7316 = vpack.c.b16 %v6788, %v6780
    %v7317 = vpack.c.b16 %v6789, %v6781
    %v7318 = vpack.c.b16 %v6790, %v6782
    %v7319 = vpack.c.b16 %v6791, %v6783
    %v7320 = vpack.c.b16 %v6800, %v6792
    %v7321 = vpack.c.b16 %v6801, %v6793
    %v7322 = vpack.c.b16 %v6802, %v6794
    %v7323 = vpack.c.b16 %v6803, %v6795
    %v7324 = vpack.c.b16 %v6804, %v6796
    %v7325 = vpack.c.b16 %v6805, %v6797
    %v7326 = vpack.c.b16 %v6806, %v6798
    %v7327 = vpack.c.b16 %v6807, %v6799
    %v7328 = vpack.c.b16 %v6816, %v6808
    %v7329 = vpack.c.b16 %v6817, %v6809
    %v7330 = vpack.c.b16 %v6818, %v6810
    %v7331 = vpack.c.b16 %v6819, %v6811
    %v7332 = vpack.c.b16 %v6820, %v6812
    %v7333 = vpack.c.b16 %v6821, %v6813
    %v7334 = vpack.c.b16 %v6822, %v6814
    %v7335 = vpack.c.b16 %v6823, %v6815
    %7848 = vmatprep.subr.bf16.mxu0 %v6825
    %7849 = vmatpush1.bf16.msra.mxu0 %v6824
    %7850 = vmatprep.subr.bf16.mxu0 %v6833
    %7851 = vmatpush1.bf16.msra.mxu0 %v6832
    %7852 = vmatprep.subr.bf16.mxu0 %v6841
    %7853 = vmatpush1.bf16.msra.mxu0 %v6840
    %7854 = vmatprep.subr.bf16.mxu0 %v6849
    %7855 = vmatpush1.bf16.msra.mxu0 %v6848
    %7856 = vmatprep.subr.bf16.mxu0 %v6857
    %7857 = vmatpush1.bf16.msra.mxu0 %v6856
    %7858 = vmatprep.subr.bf16.mxu0 %v6865
    %7859 = vmatpush1.bf16.msra.mxu0 %v6864
    %7860 = vmatprep.subr.bf16.mxu0 %v6873
    %7861 = vmatpush1.bf16.msra.mxu0 %v6872
    %7862 = vmatprep.subr.bf16.mxu0 %v6881
    %7863 = vmatpush1.bf16.msra.mxu0 %v6880
    %7864 = vmatprep.subr.bf16.mxu0 %v6889
    %7865 = vmatpush1.bf16.msra.mxu0 %v6888
    %7866 = vmatprep.subr.bf16.mxu0 %v6897
    %7867 = vmatpush1.bf16.msra.mxu0 %v6896
    %7868 = vmatprep.subr.bf16.mxu0 %v6905
    %7869 = vmatpush1.bf16.msra.mxu0 %v6904
    %7870 = vmatprep.subr.bf16.mxu0 %v6913
    %7871 = vmatpush1.bf16.msra.mxu0 %v6912
    %7872 = vmatprep.subr.bf16.mxu0 %v6921
    %7873 = vmatpush1.bf16.msra.mxu0 %v6920
    %7874 = vmatprep.subr.bf16.mxu0 %v6929
    %7875 = vmatpush1.bf16.msra.mxu0 %v6928
    %7876 = vmatprep.subr.bf16.mxu0 %v6937
    %7877 = vmatpush1.bf16.msra.mxu0 %v6936
    %7878 = vmatprep.subr.bf16.mxu0 %v6945
    %7879 = vmatpush1.bf16.msra.mxu0 %v6944
    %7880 = vmatprep.mubr.bf16.mxu0 %v4769
    %7881 = vmatmul.mubr.bf16.gmra.mrb[0].mxu0 %v4768
    %v7882 = vpop.f32.mrb[0].mxu0
    %v7883 = vadd.f32 0.0, %v7882
    %v7884 = vpop.f32.mrb[0].mxu0
    %v7885 = vadd.f32 0.0, %v7884
    %v7886 = vpop.f32.mrb[0].mxu0
    %v7887 = vpop.f32.mrb[0].mxu0
    %7888 = vdwg.mxu0
    %7889 = vmatprep.subr.bf16.mxu0 %v6953
    %7890 = vmatpush1.bf16.msra.mxu0 %v6952
    %7891 = vmatprep.subr.bf16.mxu0 %v6961
    %7892 = vmatpush1.bf16.msra.mxu0 %v6960
    %7893 = vmatprep.subr.bf16.mxu0 %v6969
    %7894 = vmatpush1.bf16.msra.mxu0 %v6968
    %7895 = vmatprep.subr.bf16.mxu0 %v6977
    %7896 = vmatpush1.bf16.msra.mxu0 %v6976
    %7897 = vmatprep.subr.bf16.mxu0 %v6985
    %7898 = vmatpush1.bf16.msra.mxu0 %v6984
    %7899 = vmatprep.subr.bf16.mxu0 %v6993
    %7900 = vmatpush1.bf16.msra.mxu0 %v6992
    %7901 = vmatprep.subr.bf16.mxu0 %v7001
    %7902 = vmatpush1.bf16.msra.mxu0 %v7000
    %7903 = vmatprep.subr.bf16.mxu0 %v7009
    %7904 = vmatpush1.bf16.msra.mxu0 %v7008
    %7905 = vmatprep.subr.bf16.mxu0 %v7017
    %7906 = vmatpush1.bf16.msra.mxu0 %v7016
    %7907 = vmatprep.subr.bf16.mxu0 %v7025
    %7908 = vmatpush1.bf16.msra.mxu0 %v7024
    %7909 = vmatprep.subr.bf16.mxu0 %v7033
    %7910 = vmatpush1.bf16.msra.mxu0 %v7032
    %7911 = vmatprep.subr.bf16.mxu0 %v7041
    %7912 = vmatpush1.bf16.msra.mxu0 %v7040
    %7913 = vmatprep.subr.bf16.mxu0 %v7049
    %7914 = vmatpush1.bf16.msra.mxu0 %v7048
    %7915 = vmatprep.subr.bf16.mxu0 %v7057
    %7916 = vmatpush1.bf16.msra.mxu0 %v7056
    %7917 = vmatprep.subr.bf16.mxu0 %v7065
    %7918 = vmatpush1.bf16.msra.mxu0 %v7064
    %7919 = vmatprep.subr.bf16.mxu0 %v7073
    %7920 = vmatpush1.bf16.msra.mxu0 %v7072
    %7921 = vmatprep.mubr.bf16.mxu0 %v4771
    %7922 = vmatmul.mubr.bf16.gmra.mrb[0].mxu0 %v4770
    %v7923 = vpop.f32.mrb[0].mxu0
    %v7924 = vadd.f32 %v7883, %v7923
    %v7925 = vpop.f32.mrb[0].mxu0
    %v7926 = vadd.f32 %v7885, %v7925
    %v7927 = vpop.f32.mrb[0].mxu0
    %v7928 = vpop.f32.mrb[0].mxu0
    %7929 = vdwg.mxu0
    %7930 = vmatprep.subr.bf16.mxu0 %v7081
    %7931 = vmatpush1.bf16.msra.mxu0 %v7080
    %7932 = vmatprep.subr.bf16.mxu0 %v7089
    %7933 = vmatpush1.bf16.msra.mxu0 %v7088
    %7934 = vmatprep.subr.bf16.mxu0 %v7097
    %7935 = vmatpush1.bf16.msra.mxu0 %v7096
    %7936 = vmatprep.subr.bf16.mxu0 %v7105
    %7937 = vmatpush1.bf16.msra.mxu0 %v7104
    %7938 = vmatprep.subr.bf16.mxu0 %v7113
    %7939 = vmatpush1.bf16.msra.mxu0 %v7112
    %7940 = vmatprep.subr.bf16.mxu0 %v7121
    %7941 = vmatpush1.bf16.msra.mxu0 %v7120
    %7942 = vmatprep.subr.bf16.mxu0 %v7129
    %7943 = vmatpush1.bf16.msra.mxu0 %v7128
    %7944 = vmatprep.subr.bf16.mxu0 %v7137
    %7945 = vmatpush1.bf16.msra.mxu0 %v7136
    %7946 = vmatprep.subr.bf16.mxu0 %v7145
    %7947 = vmatpush1.bf16.msra.mxu0 %v7144
    %7948 = vmatprep.subr.bf16.mxu0 %v7153
    %7949 = vmatpush1.bf16.msra.mxu0 %v7152
    %7950 = vmatprep.subr.bf16.mxu0 %v7161
    %7951 = vmatpush1.bf16.msra.mxu0 %v7160
    %7952 = vmatprep.subr.bf16.mxu0 %v7169
    %7953 = vmatpush1.bf16.msra.mxu0 %v7168
    %7954 = vmatprep.subr.bf16.mxu0 %v7177
    %7955 = vmatpush1.bf16.msra.mxu0 %v7176
    %7956 = vmatprep.subr.bf16.mxu0 %v7185
    %7957 = vmatpush1.bf16.msra.mxu0 %v7184
    %7958 = vmatprep.subr.bf16.mxu0 %v7193
    %7959 = vmatpush1.bf16.msra.mxu0 %v7192
    %7960 = vmatprep.subr.bf16.mxu0 %v7201
    %7961 = vmatpush1.bf16.msra.mxu0 %v7200
    %7962 = vmatprep.mubr.bf16.mxu0 %v4773
    %7963 = vmatmul.mubr.bf16.gmra.mrb[0].mxu0 %v4772
    %v7964 = vpop.f32.mrb[0].mxu0
    %v7965 = vadd.f32 %v7924, %v7964
    %v7966 = vpop.f32.mrb[0].mxu0
    %v7967 = vadd.f32 %v7926, %v7966
    %v7968 = vpop.f32.mrb[0].mxu0
    %v7969 = vpop.f32.mrb[0].mxu0
    %7970 = vdwg.mxu0
    %7971 = vmatprep.subr.bf16.mxu0 %v7209
    %7972 = vmatpush1.bf16.msra.mxu0 %v7208
    %7973 = vmatprep.subr.bf16.mxu0 %v7217
    %7974 = vmatpush1.bf16.msra.mxu0 %v7216
    %7975 = vmatprep.subr.bf16.mxu0 %v7225
    %7976 = vmatpush1.bf16.msra.mxu0 %v7224
    %7977 = vmatprep.subr.bf16.mxu0 %v7233
    %7978 = vmatpush1.bf16.msra.mxu0 %v7232
    %7979 = vmatprep.subr.bf16.mxu0 %v7241
    %7980 = vmatpush1.bf16.msra.mxu0 %v7240
    %7981 = vmatprep.subr.bf16.mxu0 %v7249
    %7982 = vmatpush1.bf16.msra.mxu0 %v7248
    %7983 = vmatprep.subr.bf16.mxu0 %v7257
    %7984 = vmatpush1.bf16.msra.mxu0 %v7256
    %7985 = vmatprep.subr.bf16.mxu0 %v7265
    %7986 = vmatpush1.bf16.msra.mxu0 %v7264
    %7987 = vmatprep.subr.bf16.mxu0 %v7273
    %7988 = vmatpush1.bf16.msra.mxu0 %v7272
    %7989 = vmatprep.subr.bf16.mxu0 %v7281
    %7990 = vmatpush1.bf16.msra.mxu0 %v7280
    %7991 = vmatprep.subr.bf16.mxu0 %v7289
    %7992 = vmatpush1.bf16.msra.mxu0 %v7288
    %7993 = vmatprep.subr.bf16.mxu0 %v7297
    %7994 = vmatpush1.bf16.msra.mxu0 %v7296
    %7995 = vmatprep.subr.bf16.mxu0 %v7305
    %7996 = vmatpush1.bf16.msra.mxu0 %v7304
    %7997 = vmatprep.subr.bf16.mxu0 %v7313
    %7998 = vmatpush1.bf16.msra.mxu0 %v7312
    %7999 = vmatprep.subr.bf16.mxu0 %v7321
    %8000 = vmatpush1.bf16.msra.mxu0 %v7320
    %8001 = vmatprep.subr.bf16.mxu0 %v7329
    %8002 = vmatpush1.bf16.msra.mxu0 %v7328
    %8003 = vmatprep.mubr.bf16.mxu0 %v4775
    %8004 = vmatmul.mubr.bf16.gmra.mrb[0].mxu0 %v4774
    %v8005 = vpop.f32.mrb[0].mxu0
    %v8006 = vadd.f32 %v7965, %v8005
    %v8007 = vpop.f32.mrb[0].mxu0
    %v8008 = vadd.f32 %v7967, %v8007
    %v8009 = vpop.f32.mrb[0].mxu0
    %v8010 = vpop.f32.mrb[0].mxu0
    %8011 = vdwg.mxu0
    %8012 = vmatprep.subr.bf16.mxu0 %v6827
    %8013 = vmatpush1.bf16.msra.mxu0 %v6826
    %8014 = vmatprep.subr.bf16.mxu0 %v6835
    %8015 = vmatpush1.bf16.msra.mxu0 %v6834
    %8016 = vmatprep.subr.bf16.mxu0 %v6843
    %8017 = vmatpush1.bf16.msra.mxu0 %v6842
    %8018 = vmatprep.subr.bf16.mxu0 %v6851
    %8019 = vmatpush1.bf16.msra.mxu0 %v6850
    %8020 = vmatprep.subr.bf16.mxu0 %v6859
    %8021 = vmatpush1.bf16.msra.mxu0 %v6858
    %8022 = vmatprep.subr.bf16.mxu0 %v6867
    %8023 = vmatpush1.bf16.msra.mxu0 %v6866
    %8024 = vmatprep.subr.bf16.mxu0 %v6875
    %8025 = vmatpush1.bf16.msra.mxu0 %v6874
    %8026 = vmatprep.subr.bf16.mxu0 %v6883
    %8027 = vmatpush1.bf16.msra.mxu0 %v6882
    %8028 = vmatprep.subr.bf16.mxu0 %v6891
    %8029 = vmatpush1.bf16.msra.mxu0 %v6890
    %8030 = vmatprep.subr.bf16.mxu0 %v6899
    %8031 = vmatpush1.bf16.msra.mxu0 %v6898
    %8032 = vmatprep.subr.bf16.mxu0 %v6907
    %8033 = vmatpush1.bf16.msra.mxu0 %v6906
    %8034 = vmatprep.subr.bf16.mxu0 %v6915
    %8035 = vmatpush1.bf16.msra.mxu0 %v6914
    %8036 = vmatprep.subr.bf16.mxu0 %v6923
    %8037 = vmatpush1.bf16.msra.mxu0 %v6922
    %8038 = vmatprep.subr.bf16.mxu0 %v6931
    %8039 = vmatpush1.bf16.msra.mxu0 %v6930
    %8040 = vmatprep.subr.bf16.mxu0 %v6939
    %8041 = vmatpush1.bf16.msra.mxu0 %v6938
    %8042 = vmatprep.subr.bf16.mxu0 %v6947
    %8043 = vmatpush1.bf16.msra.mxu0 %v6946
    %8044 = vmatprep.mubr.bf16.mxu0 %v4769
    %8045 = vmatmul.mubr.bf16.gmra.mrb[0].mxu0 %v4768
    %v8046 = vpop.f32.mrb[0].mxu0
    %v8047 = vadd.f32 0.0, %v8046
    %v8048 = vpop.f32.mrb[0].mxu0
    %v8049 = vadd.f32 0.0, %v8048
    %v8050 = vpop.f32.mrb[0].mxu0
    %v8051 = vpop.f32.mrb[0].mxu0
    %8052 = vdwg.mxu0
    %8053 = vmatprep.subr.bf16.mxu0 %v6955
    %8054 = vmatpush1.bf16.msra.mxu0 %v6954
    %8055 = vmatprep.subr.bf16.mxu0 %v6963
    %8056 = vmatpush1.bf16.msra.mxu0 %v6962
    %8057 = vmatprep.subr.bf16.mxu0 %v6971
    %8058 = vmatpush1.bf16.msra.mxu0 %v6970
    %8059 = vmatprep.subr.bf16.mxu0 %v6979
    %8060 = vmatpush1.bf16.msra.mxu0 %v6978
    %8061 = vmatprep.subr.bf16.mxu0 %v6987
    %8062 = vmatpush1.bf16.msra.mxu0 %v6986
    %8063 = vmatprep.subr.bf16.mxu0 %v6995
    %8064 = vmatpush1.bf16.msra.mxu0 %v6994
    %8065 = vmatprep.subr.bf16.mxu0 %v7003
    %8066 = vmatpush1.bf16.msra.mxu0 %v7002
    %8067 = vmatprep.subr.bf16.mxu0 %v7011
    %8068 = vmatpush1.bf16.msra.mxu0 %v7010
    %8069 = vmatprep.subr.bf16.mxu0 %v7019
    %8070 = vmatpush1.bf16.msra.mxu0 %v7018
    %8071 = vmatprep.subr.bf16.mxu0 %v7027
    %8072 = vmatpush1.bf16.msra.mxu0 %v7026
    %8073 = vmatprep.subr.bf16.mxu0 %v7035
    %8074 = vmatpush1.bf16.msra.mxu0 %v7034
    %8075 = vmatprep.subr.bf16.mxu0 %v7043
    %8076 = vmatpush1.bf16.msra.mxu0 %v7042
    %8077 = vmatprep.subr.bf16.mxu0 %v7051
    %8078 = vmatpush1.bf16.msra.mxu0 %v7050
    %8079 = vmatprep.subr.bf16.mxu0 %v7059
    %8080 = vmatpush1.bf16.msra.mxu0 %v7058
    %8081 = vmatprep.subr.bf16.mxu0 %v7067
    %8082 = vmatpush1.bf16.msra.mxu0 %v7066
    %8083 = vmatprep.subr.bf16.mxu0 %v7075
    %8084 = vmatpush1.bf16.msra.mxu0 %v7074
    %8085 = vmatprep.mubr.bf16.mxu0 %v4771
    %8086 = vmatmul.mubr.bf16.gmra.mrb[0].mxu0 %v4770
    %v8087 = vpop.f32.mrb[0].mxu0
    %v8088 = vadd.f32 %v8047, %v8087
    %v8089 = vpop.f32.mrb[0].mxu0
    %v8090 = vadd.f32 %v8049, %v8089
    %v8091 = vpop.f32.mrb[0].mxu0
    %v8092 = vpop.f32.mrb[0].mxu0
    %8093 = vdwg.mxu0
    %8094 = vmatprep.subr.bf16.mxu0 %v7083
    %8095 = vmatpush1.bf16.msra.mxu0 %v7082
    %8096 = vmatprep.subr.bf16.mxu0 %v7091
    %8097 = vmatpush1.bf16.msra.mxu0 %v7090
    %8098 = vmatprep.subr.bf16.mxu0 %v7099
    %8099 = vmatpush1.bf16.msra.mxu0 %v7098
    %8100 = vmatprep.subr.bf16.mxu0 %v7107
    %8101 = vmatpush1.bf16.msra.mxu0 %v7106
    %8102 = vmatprep.subr.bf16.mxu0 %v7115
    %8103 = vmatpush1.bf16.msra.mxu0 %v7114
    %8104 = vmatprep.subr.bf16.mxu0 %v7123
    %8105 = vmatpush1.bf16.msra.mxu0 %v7122
    %8106 = vmatprep.subr.bf16.mxu0 %v7131
    %8107 = vmatpush1.bf16.msra.mxu0 %v7130
    %8108 = vmatprep.subr.bf16.mxu0 %v7139
    %8109 = vmatpush1.bf16.msra.mxu0 %v7138
    %8110 = vmatprep.subr.bf16.mxu0 %v7147
    %8111 = vmatpush1.bf16.msra.mxu0 %v7146
    %8112 = vmatprep.subr.bf16.mxu0 %v7155
    %8113 = vmatpush1.bf16.msra.mxu0 %v7154
    %8114 = vmatprep.subr.bf16.mxu0 %v7163
    %8115 = vmatpush1.bf16.msra.mxu0 %v7162
    %8116 = vmatprep.subr.bf16.mxu0 %v7171
    %8117 = vmatpush1.bf16.msra.mxu0 %v7170
    %8118 = vmatprep.subr.bf16.mxu0 %v7179
    %8119 = vmatpush1.bf16.msra.mxu0 %v7178
    %8120 = vmatprep.subr.bf16.mxu0 %v7187
    %8121 = vmatpush1.bf16.msra.mxu0 %v7186
    %8122 = vmatprep.subr.bf16.mxu0 %v7195
    %8123 = vmatpush1.bf16.msra.mxu0 %v7194
    %8124 = vmatprep.subr.bf16.mxu0 %v7203
    %8125 = vmatpush1.bf16.msra.mxu0 %v7202
    %8126 = vmatprep.mubr.bf16.mxu0 %v4773
    %8127 = vmatmul.mubr.bf16.gmra.mrb[0].mxu0 %v4772
    %v8128 = vpop.f32.mrb[0].mxu0
    %v8129 = vadd.f32 %v8088, %v8128
    %v8130 = vpop.f32.mrb[0].mxu0
    %v8131 = vadd.f32 %v8090, %v8130
    %v8132 = vpop.f32.mrb[0].mxu0
    %v8133 = vpop.f32.mrb[0].mxu0
    %8134 = vdwg.mxu0
    %8135 = vmatprep.subr.bf16.mxu0 %v7211
    %8136 = vmatpush1.bf16.msra.mxu0 %v7210
    %8137 = vmatprep.subr.bf16.mxu0 %v7219
    %8138 = vmatpush1.bf16.msra.mxu0 %v7218
    %8139 = vmatprep.subr.bf16.mxu0 %v7227
    %8140 = vmatpush1.bf16.msra.mxu0 %v7226
    %8141 = vmatprep.subr.bf16.mxu0 %v7235
    %8142 = vmatpush1.bf16.msra.mxu0 %v7234
    %8143 = vmatprep.subr.bf16.mxu0 %v7243
    %8144 = vmatpush1.bf16.msra.mxu0 %v7242
    %8145 = vmatprep.subr.bf16.mxu0 %v7251
    %8146 = vmatpush1.bf16.msra.mxu0 %v7250
    %8147 = vmatprep.subr.bf16.mxu0 %v7259
    %8148 = vmatpush1.bf16.msra.mxu0 %v7258
    %8149 = vmatprep.subr.bf16.mxu0 %v7267
    %8150 = vmatpush1.bf16.msra.mxu0 %v7266
    %8151 = vmatprep.subr.bf16.mxu0 %v7275
    %8152 = vmatpush1.bf16.msra.mxu0 %v7274
    %8153 = vmatprep.subr.bf16.mxu0 %v7283
    %8154 = vmatpush1.bf16.msra.mxu0 %v7282
    %8155 = vmatprep.subr.bf16.mxu0 %v7291
    %8156 = vmatpush1.bf16.msra.mxu0 %v7290
    %8157 = vmatprep.subr.bf16.mxu0 %v7299
    %8158 = vmatpush1.bf16.msra.mxu0 %v7298
    %8159 = vmatprep.subr.bf16.mxu0 %v7307
    %8160 = vmatpush1.bf16.msra.mxu0 %v7306
    %8161 = vmatprep.subr.bf16.mxu0 %v7315
    %8162 = vmatpush1.bf16.msra.mxu0 %v7314
    %8163 = vmatprep.subr.bf16.mxu0 %v7323
    %8164 = vmatpush1.bf16.msra.mxu0 %v7322
    %8165 = vmatprep.subr.bf16.mxu0 %v7331
    %8166 = vmatpush1.bf16.msra.mxu0 %v7330
    %8167 = vmatprep.mubr.bf16.mxu0 %v4775
    %8168 = vmatmul.mubr.bf16.gmra.mrb[0].mxu0 %v4774
    %v8169 = vpop.f32.mrb[0].mxu0
    %v8170 = vadd.f32 %v8129, %v8169
    %v8171 = vpop.f32.mrb[0].mxu0
    %v8172 = vadd.f32 %v8131, %v8171
    %v8173 = vpop.f32.mrb[0].mxu0
    %v8174 = vpop.f32.mrb[0].mxu0
    %8175 = vdwg.mxu0
    %8176 = vmatprep.subr.bf16.mxu0 %v6829
    %8177 = vmatpush1.bf16.msra.mxu0 %v6828
    %8178 = vmatprep.subr.bf16.mxu0 %v6837
    %8179 = vmatpush1.bf16.msra.mxu0 %v6836
    %8180 = vmatprep.subr.bf16.mxu0 %v6845
    %8181 = vmatpush1.bf16.msra.mxu0 %v6844
    %8182 = vmatprep.subr.bf16.mxu0 %v6853
    %8183 = vmatpush1.bf16.msra.mxu0 %v6852
    %8184 = vmatprep.subr.bf16.mxu0 %v6861
    %8185 = vmatpush1.bf16.msra.mxu0 %v6860
    %8186 = vmatprep.subr.bf16.mxu0 %v6869
    %8187 = vmatpush1.bf16.msra.mxu0 %v6868
    %8188 = vmatprep.subr.bf16.mxu0 %v6877
    %8189 = vmatpush1.bf16.msra.mxu0 %v6876
    %8190 = vmatprep.subr.bf16.mxu0 %v6885
    %8191 = vmatpush1.bf16.msra.mxu0 %v6884
    %8192 = vmatprep.subr.bf16.mxu0 %v6893
    %8193 = vmatpush1.bf16.msra.mxu0 %v6892
    %8194 = vmatprep.subr.bf16.mxu0 %v6901
    %8195 = vmatpush1.bf16.msra.mxu0 %v6900
    %8196 = vmatprep.subr.bf16.mxu0 %v6909
    %8197 = vmatpush1.bf16.msra.mxu0 %v6908
    %8198 = vmatprep.subr.bf16.mxu0 %v6917
    %8199 = vmatpush1.bf16.msra.mxu0 %v6916
    %8200 = vmatprep.subr.bf16.mxu0 %v6925
    %8201 = vmatpush1.bf16.msra.mxu0 %v6924
    %8202 = vmatprep.subr.bf16.mxu0 %v6933
    %8203 = vmatpush1.bf16.msra.mxu0 %v6932
    %8204 = vmatprep.subr.bf16.mxu0 %v6941
    %8205 = vmatpush1.bf16.msra.mxu0 %v6940
    %8206 = vmatprep.subr.bf16.mxu0 %v6949
    %8207 = vmatpush1.bf16.msra.mxu0 %v6948
    %8208 = vmatprep.mubr.bf16.mxu0 %v4769
    %8209 = vmatmul.mubr.bf16.gmra.mrb[0].mxu0 %v4768
    %v8210 = vpop.f32.mrb[0].mxu0
    %v8211 = vadd.f32 0.0, %v8210
    %v8212 = vpop.f32.mrb[0].mxu0
    %v8213 = vadd.f32 0.0, %v8212
    %v8214 = vpop.f32.mrb[0].mxu0
    %v8215 = vpop.f32.mrb[0].mxu0
    %8216 = vdwg.mxu0
    %8217 = vmatprep.subr.bf16.mxu0 %v6957
    %8218 = vmatpush1.bf16.msra.mxu0 %v6956
    %8219 = vmatprep.subr.bf16.mxu0 %v6965
    %8220 = vmatpush1.bf16.msra.mxu0 %v6964
    %8221 = vmatprep.subr.bf16.mxu0 %v6973
    %8222 = vmatpush1.bf16.msra.mxu0 %v6972
    %8223 = vmatprep.subr.bf16.mxu0 %v6981
    %8224 = vmatpush1.bf16.msra.mxu0 %v6980
    %8225 = vmatprep.subr.bf16.mxu0 %v6989
    %8226 = vmatpush1.bf16.msra.mxu0 %v6988
    %8227 = vmatprep.subr.bf16.mxu0 %v6997
    %8228 = vmatpush1.bf16.msra.mxu0 %v6996
    %8229 = vmatprep.subr.bf16.mxu0 %v7005
    %8230 = vmatpush1.bf16.msra.mxu0 %v7004
    %8231 = vmatprep.subr.bf16.mxu0 %v7013
    %8232 = vmatpush1.bf16.msra.mxu0 %v7012
    %8233 = vmatprep.subr.bf16.mxu0 %v7021
    %8234 = vmatpush1.bf16.msra.mxu0 %v7020
    %8235 = vmatprep.subr.bf16.mxu0 %v7029
    %8236 = vmatpush1.bf16.msra.mxu0 %v7028
    %8237 = vmatprep.subr.bf16.mxu0 %v7037
    %8238 = vmatpush1.bf16.msra.mxu0 %v7036
    %8239 = vmatprep.subr.bf16.mxu0 %v7045
    %8240 = vmatpush1.bf16.msra.mxu0 %v7044
    %8241 = vmatprep.subr.bf16.mxu0 %v7053
    %8242 = vmatpush1.bf16.msra.mxu0 %v7052
    %8243 = vmatprep.subr.bf16.mxu0 %v7061
    %8244 = vmatpush1.bf16.msra.mxu0 %v7060
    %8245 = vmatprep.subr.bf16.mxu0 %v7069
    %8246 = vmatpush1.bf16.msra.mxu0 %v7068
    %8247 = vmatprep.subr.bf16.mxu0 %v7077
    %8248 = vmatpush1.bf16.msra.mxu0 %v7076
    %8249 = vmatprep.mubr.bf16.mxu0 %v4771
    %8250 = vmatmul.mubr.bf16.gmra.mrb[0].mxu0 %v4770
    %v8251 = vpop.f32.mrb[0].mxu0
    %v8252 = vadd.f32 %v8211, %v8251
    %v8253 = vpop.f32.mrb[0].mxu0
    %v8254 = vadd.f32 %v8213, %v8253
    %v8255 = vpop.f32.mrb[0].mxu0
    %v8256 = vpop.f32.mrb[0].mxu0
    %8257 = vdwg.mxu0
    %8258 = vmatprep.subr.bf16.mxu0 %v7085
    %8259 = vmatpush1.bf16.msra.mxu0 %v7084
    %8260 = vmatprep.subr.bf16.mxu0 %v7093
    %8261 = vmatpush1.bf16.msra.mxu0 %v7092
    %8262 = vmatprep.subr.bf16.mxu0 %v7101
    %8263 = vmatpush1.bf16.msra.mxu0 %v7100
    %8264 = vmatprep.subr.bf16.mxu0 %v7109
    %8265 = vmatpush1.bf16.msra.mxu0 %v7108
    %8266 = vmatprep.subr.bf16.mxu0 %v7117
    %8267 = vmatpush1.bf16.msra.mxu0 %v7116
    %8268 = vmatprep.subr.bf16.mxu0 %v7125
    %8269 = vmatpush1.bf16.msra.mxu0 %v7124
    %8270 = vmatprep.subr.bf16.mxu0 %v7133
    %8271 = vmatpush1.bf16.msra.mxu0 %v7132
    %8272 = vmatprep.subr.bf16.mxu0 %v7141
    %8273 = vmatpush1.bf16.msra.mxu0 %v7140
    %8274 = vmatprep.subr.bf16.mxu0 %v7149
    %8275 = vmatpush1.bf16.msra.mxu0 %v7148
    %8276 = vmatprep.subr.bf16.mxu0 %v7157
    %8277 = vmatpush1.bf16.msra.mxu0 %v7156
    %8278 = vmatprep.subr.bf16.mxu0 %v7165
    %8279 = vmatpush1.bf16.msra.mxu0 %v7164
    %8280 = vmatprep.subr.bf16.mxu0 %v7173
    %8281 = vmatpush1.bf16.msra.mxu0 %v7172
    %8282 = vmatprep.subr.bf16.mxu0 %v7181
    %8283 = vmatpush1.bf16.msra.mxu0 %v7180
    %8284 = vmatprep.subr.bf16.mxu0 %v7189
    %8285 = vmatpush1.bf16.msra.mxu0 %v7188
    %8286 = vmatprep.subr.bf16.mxu0 %v7197
    %8287 = vmatpush1.bf16.msra.mxu0 %v7196
    %8288 = vmatprep.subr.bf16.mxu0 %v7205
    %8289 = vmatpush1.bf16.msra.mxu0 %v7204
    %8290 = vmatprep.mubr.bf16.mxu0 %v4773
    %8291 = vmatmul.mubr.bf16.gmra.mrb[0].mxu0 %v4772
    %v8292 = vpop.f32.mrb[0].mxu0
    %v8293 = vadd.f32 %v8252, %v8292
    %v8294 = vpop.f32.mrb[0].mxu0
    %v8295 = vadd.f32 %v8254, %v8294
    %v8296 = vpop.f32.mrb[0].mxu0
    %v8297 = vpop.f32.mrb[0].mxu0
    %8298 = vdwg.mxu0
    %8299 = vmatprep.subr.bf16.mxu0 %v7213
    %8300 = vmatpush1.bf16.msra.mxu0 %v7212
    %8301 = vmatprep.subr.bf16.mxu0 %v7221
    %8302 = vmatpush1.bf16.msra.mxu0 %v7220
    %8303 = vmatprep.subr.bf16.mxu0 %v7229
    %8304 = vmatpush1.bf16.msra.mxu0 %v7228
    %8305 = vmatprep.subr.bf16.mxu0 %v7237
    %8306 = vmatpush1.bf16.msra.mxu0 %v7236
    %8307 = vmatprep.subr.bf16.mxu0 %v7245
    %8308 = vmatpush1.bf16.msra.mxu0 %v7244
    %8309 = vmatprep.subr.bf16.mxu0 %v7253
    %8310 = vmatpush1.bf16.msra.mxu0 %v7252
    %8311 = vmatprep.subr.bf16.mxu0 %v7261
    %8312 = vmatpush1.bf16.msra.mxu0 %v7260
    %8313 = vmatprep.subr.bf16.mxu0 %v7269
    %8314 = vmatpush1.bf16.msra.mxu0 %v7268
    %8315 = vmatprep.subr.bf16.mxu0 %v7277
    %8316 = vmatpush1.bf16.msra.mxu0 %v7276
    %8317 = vmatprep.subr.bf16.mxu0 %v7285
    %8318 = vmatpush1.bf16.msra.mxu0 %v7284
    %8319 = vmatprep.subr.bf16.mxu0 %v7293
    %8320 = vmatpush1.bf16.msra.mxu0 %v7292
    %8321 = vmatprep.subr.bf16.mxu0 %v7301
    %8322 = vmatpush1.bf16.msra.mxu0 %v7300
    %8323 = vmatprep.subr.bf16.mxu0 %v7309
    %8324 = vmatpush1.bf16.msra.mxu0 %v7308
    %8325 = vmatprep.subr.bf16.mxu0 %v7317
    %8326 = vmatpush1.bf16.msra.mxu0 %v7316
    %8327 = vmatprep.subr.bf16.mxu0 %v7325
    %8328 = vmatpush1.bf16.msra.mxu0 %v7324
    %8329 = vmatprep.subr.bf16.mxu0 %v7333
    %8330 = vmatpush1.bf16.msra.mxu0 %v7332
    %8331 = vmatprep.mubr.bf16.mxu0 %v4775
    %8332 = vmatmul.mubr.bf16.gmra.mrb[0].mxu0 %v4774
    %v8333 = vpop.f32.mrb[0].mxu0
    %v8334 = vadd.f32 %v8293, %v8333
    %v8335 = vpop.f32.mrb[0].mxu0
    %v8336 = vadd.f32 %v8295, %v8335
    %v8337 = vpop.f32.mrb[0].mxu0
    %v8338 = vpop.f32.mrb[0].mxu0
    %8339 = vdwg.mxu0
    %8340 = vmatprep.subr.bf16.mxu0 %v6831
    %8341 = vmatpush1.bf16.msra.mxu0 %v6830
    %8342 = vmatprep.subr.bf16.mxu0 %v6839
    %8343 = vmatpush1.bf16.msra.mxu0 %v6838
    %8344 = vmatprep.subr.bf16.mxu0 %v6847
    %8345 = vmatpush1.bf16.msra.mxu0 %v6846
    %8346 = vmatprep.subr.bf16.mxu0 %v6855
    %8347 = vmatpush1.bf16.msra.mxu0 %v6854
    %8348 = vmatprep.subr.bf16.mxu0 %v6863
    %8349 = vmatpush1.bf16.msra.mxu0 %v6862
    %8350 = vmatprep.subr.bf16.mxu0 %v6871
    %8351 = vmatpush1.bf16.msra.mxu0 %v6870
    %8352 = vmatprep.subr.bf16.mxu0 %v6879
    %8353 = vmatpush1.bf16.msra.mxu0 %v6878
    %8354 = vmatprep.subr.bf16.mxu0 %v6887
    %8355 = vmatpush1.bf16.msra.mxu0 %v6886
    %8356 = vmatprep.subr.bf16.mxu0 %v6895
    %8357 = vmatpush1.bf16.msra.mxu0 %v6894
    %8358 = vmatprep.subr.bf16.mxu0 %v6903
    %8359 = vmatpush1.bf16.msra.mxu0 %v6902
    %8360 = vmatprep.subr.bf16.mxu0 %v6911
    %8361 = vmatpush1.bf16.msra.mxu0 %v6910
    %8362 = vmatprep.subr.bf16.mxu0 %v6919
    %8363 = vmatpush1.bf16.msra.mxu0 %v6918
    %8364 = vmatprep.subr.bf16.mxu0 %v6927
    %8365 = vmatpush1.bf16.msra.mxu0 %v6926
    %8366 = vmatprep.subr.bf16.mxu0 %v6935
    %8367 = vmatpush1.bf16.msra.mxu0 %v6934
    %8368 = vmatprep.subr.bf16.mxu0 %v6943
    %8369 = vmatpush1.bf16.msra.mxu0 %v6942
    %8370 = vmatprep.subr.bf16.mxu0 %v6951
    %8371 = vmatpush1.bf16.msra.mxu0 %v6950
    %8372 = vmatprep.mubr.bf16.mxu0 %v4769
    %8373 = vmatmul.mubr.bf16.gmra.mrb[0].mxu0 %v4768
    %v8374 = vpop.f32.mrb[0].mxu0
    %v8375 = vadd.f32 0.0, %v8374
    %v8376 = vpop.f32.mrb[0].mxu0
    %v8377 = vadd.f32 0.0, %v8376
    %v8378 = vpop.f32.mrb[0].mxu0
    %v8379 = vpop.f32.mrb[0].mxu0
    %8380 = vdwg.mxu0
    %8381 = vmatprep.subr.bf16.mxu0 %v6959
    %8382 = vmatpush1.bf16.msra.mxu0 %v6958
    %8383 = vmatprep.subr.bf16.mxu0 %v6967
    %8384 = vmatpush1.bf16.msra.mxu0 %v6966
    %8385 = vmatprep.subr.bf16.mxu0 %v6975
    %8386 = vmatpush1.bf16.msra.mxu0 %v6974
    %8387 = vmatprep.subr.bf16.mxu0 %v6983
    %8388 = vmatpush1.bf16.msra.mxu0 %v6982
    %8389 = vmatprep.subr.bf16.mxu0 %v6991
    %8390 = vmatpush1.bf16.msra.mxu0 %v6990
    %8391 = vmatprep.subr.bf16.mxu0 %v6999
    %8392 = vmatpush1.bf16.msra.mxu0 %v6998
    %8393 = vmatprep.subr.bf16.mxu0 %v7007
    %8394 = vmatpush1.bf16.msra.mxu0 %v7006
    %8395 = vmatprep.subr.bf16.mxu0 %v7015
    %8396 = vmatpush1.bf16.msra.mxu0 %v7014
    %8397 = vmatprep.subr.bf16.mxu0 %v7023
    %8398 = vmatpush1.bf16.msra.mxu0 %v7022
    %8399 = vmatprep.subr.bf16.mxu0 %v7031
    %8400 = vmatpush1.bf16.msra.mxu0 %v7030
    %8401 = vmatprep.subr.bf16.mxu0 %v7039
    %8402 = vmatpush1.bf16.msra.mxu0 %v7038
    %8403 = vmatprep.subr.bf16.mxu0 %v7047
    %8404 = vmatpush1.bf16.msra.mxu0 %v7046
    %8405 = vmatprep.subr.bf16.mxu0 %v7055
    %8406 = vmatpush1.bf16.msra.mxu0 %v7054
    %8407 = vmatprep.subr.bf16.mxu0 %v7063
    %8408 = vmatpush1.bf16.msra.mxu0 %v7062
    %8409 = vmatprep.subr.bf16.mxu0 %v7071
    %8410 = vmatpush1.bf16.msra.mxu0 %v7070
    %8411 = vmatprep.subr.bf16.mxu0 %v7079
    %8412 = vmatpush1.bf16.msra.mxu0 %v7078
    %8413 = vmatprep.mubr.bf16.mxu0 %v4771
    %8414 = vmatmul.mubr.bf16.gmra.mrb[0].mxu0 %v4770
    %v8415 = vpop.f32.mrb[0].mxu0
    %v8416 = vadd.f32 %v8375, %v8415
    %v8417 = vpop.f32.mrb[0].mxu0
    %v8418 = vadd.f32 %v8377, %v8417
    %v8419 = vpop.f32.mrb[0].mxu0
    %v8420 = vpop.f32.mrb[0].mxu0
    %8421 = vdwg.mxu0
    %8422 = vmatprep.subr.bf16.mxu0 %v7087
    %8423 = vmatpush1.bf16.msra.mxu0 %v7086
    %8424 = vmatprep.subr.bf16.mxu0 %v7095
    %8425 = vmatpush1.bf16.msra.mxu0 %v7094
    %8426 = vmatprep.subr.bf16.mxu0 %v7103
    %8427 = vmatpush1.bf16.msra.mxu0 %v7102
    %8428 = vmatprep.subr.bf16.mxu0 %v7111
    %8429 = vmatpush1.bf16.msra.mxu0 %v7110
    %8430 = vmatprep.subr.bf16.mxu0 %v7119
    %8431 = vmatpush1.bf16.msra.mxu0 %v7118
    %8432 = vmatprep.subr.bf16.mxu0 %v7127
    %8433 = vmatpush1.bf16.msra.mxu0 %v7126
    %8434 = vmatprep.subr.bf16.mxu0 %v7135
    %8435 = vmatpush1.bf16.msra.mxu0 %v7134
    %8436 = vmatprep.subr.bf16.mxu0 %v7143
    %8437 = vmatpush1.bf16.msra.mxu0 %v7142
    %8438 = vmatprep.subr.bf16.mxu0 %v7151
    %8439 = vmatpush1.bf16.msra.mxu0 %v7150
    %8440 = vmatprep.subr.bf16.mxu0 %v7159
    %8441 = vmatpush1.bf16.msra.mxu0 %v7158
    %8442 = vmatprep.subr.bf16.mxu0 %v7167
    %8443 = vmatpush1.bf16.msra.mxu0 %v7166
    %8444 = vmatprep.subr.bf16.mxu0 %v7175
    %8445 = vmatpush1.bf16.msra.mxu0 %v7174
    %8446 = vmatprep.subr.bf16.mxu0 %v7183
    %8447 = vmatpush1.bf16.msra.mxu0 %v7182
    %8448 = vmatprep.subr.bf16.mxu0 %v7191
    %8449 = vmatpush1.bf16.msra.mxu0 %v7190
    %8450 = vmatprep.subr.bf16.mxu0 %v7199
    %8451 = vmatpush1.bf16.msra.mxu0 %v7198
    %8452 = vmatprep.subr.bf16.mxu0 %v7207
    %8453 = vmatpush1.bf16.msra.mxu0 %v7206
    %8454 = vmatprep.mubr.bf16.mxu0 %v4773
    %8455 = vmatmul.mubr.bf16.gmra.mrb[0].mxu0 %v4772
    %v8456 = vpop.f32.mrb[0].mxu0
    %v8457 = vadd.f32 %v8416, %v8456
    %v8458 = vpop.f32.mrb[0].mxu0
    %v8459 = vadd.f32 %v8418, %v8458
    %v8460 = vpop.f32.mrb[0].mxu0
    %v8461 = vpop.f32.mrb[0].mxu0
    %8462 = vdwg.mxu0
    %8463 = vmatprep.subr.bf16.mxu0 %v7215
    %8464 = vmatpush1.bf16.msra.mxu0 %v7214
    %8465 = vmatprep.subr.bf16.mxu0 %v7223
    %8466 = vmatpush1.bf16.msra.mxu0 %v7222
    %8467 = vmatprep.subr.bf16.mxu0 %v7231
    %8468 = vmatpush1.bf16.msra.mxu0 %v7230
    %8469 = vmatprep.subr.bf16.mxu0 %v7239
    %8470 = vmatpush1.bf16.msra.mxu0 %v7238
    %8471 = vmatprep.subr.bf16.mxu0 %v7247
    %8472 = vmatpush1.bf16.msra.mxu0 %v7246
    %8473 = vmatprep.subr.bf16.mxu0 %v7255
    %8474 = vmatpush1.bf16.msra.mxu0 %v7254
    %8475 = vmatprep.subr.bf16.mxu0 %v7263
    %8476 = vmatpush1.bf16.msra.mxu0 %v7262
    %8477 = vmatprep.subr.bf16.mxu0 %v7271
    %8478 = vmatpush1.bf16.msra.mxu0 %v7270
    %8479 = vmatprep.subr.bf16.mxu0 %v7279
    %8480 = vmatpush1.bf16.msra.mxu0 %v7278
    %8481 = vmatprep.subr.bf16.mxu0 %v7287
    %8482 = vmatpush1.bf16.msra.mxu0 %v7286
    %8483 = vmatprep.subr.bf16.mxu0 %v7295
    %8484 = vmatpush1.bf16.msra.mxu0 %v7294
    %8485 = vmatprep.subr.bf16.mxu0 %v7303
    %8486 = vmatpush1.bf16.msra.mxu0 %v7302
    %8487 = vmatprep.subr.bf16.mxu0 %v7311
    %8488 = vmatpush1.bf16.msra.mxu0 %v7310
    %8489 = vmatprep.subr.bf16.mxu0 %v7319
    %8490 = vmatpush1.bf16.msra.mxu0 %v7318
    %8491 = vmatprep.subr.bf16.mxu0 %v7327
    %8492 = vmatpush1.bf16.msra.mxu0 %v7326
    %8493 = vmatprep.subr.bf16.mxu0 %v7335
    %8494 = vmatpush1.bf16.msra.mxu0 %v7334
    %8495 = vmatprep.mubr.bf16.mxu0 %v4775
    %8496 = vmatmul.mubr.bf16.gmra.mrb[0].mxu0 %v4774
    %v8497 = vpop.f32.mrb[0].mxu0
    %v8498 = vadd.f32 %v8457, %v8497
    %v8499 = vpop.f32.mrb[0].mxu0
    %v8500 = vadd.f32 %v8459, %v8499
    %v8501 = vpop.f32.mrb[0].mxu0
    %v8502 = vpop.f32.mrb[0].mxu0
    %8503 = vdwg.mxu0
    %v8504 = vrot.slane %v8006, 4
    %v8505 = vadd.f32 %v8006, %v8504
    %v8506 = vrot.slane %v8505, 2
    %v8507 = vadd.f32 %v8505, %v8506
    %v8508 = vrot.slane %v8507, 1
    %v8509 = vadd.f32 %v8507, %v8508
    %v8510 = vrot.slane %v8008, 4
    %v8511 = vadd.f32 %v8008, %v8510
    %v8512 = vrot.slane %v8511, 2
    %v8513 = vadd.f32 %v8511, %v8512
    %v8514 = vrot.slane %v8513, 1
    %v8515 = vadd.f32 %v8513, %v8514
    %v8516 = vrot.slane %v8170, 4
    %v8517 = vadd.f32 %v8170, %v8516
    %v8518 = vrot.slane %v8517, 2
    %v8519 = vadd.f32 %v8517, %v8518
    %v8520 = vrot.slane %v8519, 1
    %v8521 = vadd.f32 %v8519, %v8520
    %v8522 = vrot.slane %v8172, 4
    %v8523 = vadd.f32 %v8172, %v8522
    %v8524 = vrot.slane %v8523, 2
    %v8525 = vadd.f32 %v8523, %v8524
    %v8526 = vrot.slane %v8525, 1
    %v8527 = vadd.f32 %v8525, %v8526
    %v8528 = vrot.slane %v8334, 4
    %v8529 = vadd.f32 %v8334, %v8528
    %v8530 = vrot.slane %v8529, 2
    %v8531 = vadd.f32 %v8529, %v8530
    %v8532 = vrot.slane %v8531, 1
    %v8533 = vadd.f32 %v8531, %v8532
    %v8534 = vrot.slane %v8336, 4
    %v8535 = vadd.f32 %v8336, %v8534
    %v8536 = vrot.slane %v8535, 2
    %v8537 = vadd.f32 %v8535, %v8536
    %v8538 = vrot.slane %v8537, 1
    %v8539 = vadd.f32 %v8537, %v8538
    %v8540 = vrot.slane %v8498, 4
    %v8541 = vadd.f32 %v8498, %v8540
    %v8542 = vrot.slane %v8541, 2
    %v8543 = vadd.f32 %v8541, %v8542
    %v8544 = vrot.slane %v8543, 1
    %v8545 = vadd.f32 %v8543, %v8544
    %v8546 = vrot.slane %v8500, 4
    %v8547 = vadd.f32 %v8500, %v8546
    %v8548 = vrot.slane %v8547, 2
    %v8549 = vadd.f32 %v8547, %v8548
    %v8550 = vrot.slane %v8549, 1
    %v8551 = vadd.f32 %v8549, %v8550
    %v8552 = vmul.f32 %v8509, 0.125
    %v8553 = vmul.f32 %v8515, 0.125
    %v8554 = vmul.f32 %v8521, 0.125
    %v8555 = vmul.f32 %v8527, 0.125
    %v8556 = vmul.f32 %v8533, 0.125
    %v8557 = vmul.f32 %v8539, 0.125
    %v8558 = vmul.f32 %v8545, 0.125
    %v8559 = vmul.f32 %v8551, 0.125
    %v8560 = vsub.f32 %v8006, %v8552
    %v8561 = vsub.f32 %v8008, %v8553
    %v8562 = vsub.f32 %v8170, %v8554
    %v8563 = vsub.f32 %v8172, %v8555
    %v8564 = vsub.f32 %v8334, %v8556
    %v8565 = vsub.f32 %v8336, %v8557
    %v8566 = vsub.f32 %v8498, %v8558
    %v8567 = vsub.f32 %v8500, %v8559
    %v8568 = vmul.f32 %v8560, %v8560
    %v8569 = vmul.f32 %v8561, %v8561
    %v8570 = vmul.f32 %v8562, %v8562
    %v8571 = vmul.f32 %v8563, %v8563
    %v8572 = vmul.f32 %v8564, %v8564
    %v8573 = vmul.f32 %v8565, %v8565
    %v8574 = vmul.f32 %v8566, %v8566
    %v8575 = vmul.f32 %v8567, %v8567
    %v8576 = vrot.slane %v8568, 4
    %v8577 = vadd.f32 %v8568, %v8576
    %v8578 = vrot.slane %v8577, 2
    %v8579 = vadd.f32 %v8577, %v8578
    %v8580 = vrot.slane %v8579, 1
    %v8581 = vadd.f32 %v8579, %v8580
    %v8582 = vrot.slane %v8569, 4
    %v8583 = vadd.f32 %v8569, %v8582
    %v8584 = vrot.slane %v8583, 2
    %v8585 = vadd.f32 %v8583, %v8584
    %v8586 = vrot.slane %v8585, 1
    %v8587 = vadd.f32 %v8585, %v8586
    %v8588 = vrot.slane %v8570, 4
    %v8589 = vadd.f32 %v8570, %v8588
    %v8590 = vrot.slane %v8589, 2
    %v8591 = vadd.f32 %v8589, %v8590
    %v8592 = vrot.slane %v8591, 1
    %v8593 = vadd.f32 %v8591, %v8592
    %v8594 = vrot.slane %v8571, 4
    %v8595 = vadd.f32 %v8571, %v8594
    %v8596 = vrot.slane %v8595, 2
    %v8597 = vadd.f32 %v8595, %v8596
    %v8598 = vrot.slane %v8597, 1
    %v8599 = vadd.f32 %v8597, %v8598
    %v8600 = vrot.slane %v8572, 4
    %v8601 = vadd.f32 %v8572, %v8600
    %v8602 = vrot.slane %v8601, 2
    %v8603 = vadd.f32 %v8601, %v8602
    %v8604 = vrot.slane %v8603, 1
    %v8605 = vadd.f32 %v8603, %v8604
    %v8606 = vrot.slane %v8573, 4
    %v8607 = vadd.f32 %v8573, %v8606
    %v8608 = vrot.slane %v8607, 2
    %v8609 = vadd.f32 %v8607, %v8608
    %v8610 = vrot.slane %v8609, 1
    %v8611 = vadd.f32 %v8609, %v8610
    %v8612 = vrot.slane %v8574, 4
    %v8613 = vadd.f32 %v8574, %v8612
    %v8614 = vrot.slane %v8613, 2
    %v8615 = vadd.f32 %v8613, %v8614
    %v8616 = vrot.slane %v8615, 1
    %v8617 = vadd.f32 %v8615, %v8616
    %v8618 = vrot.slane %v8575, 4
    %v8619 = vadd.f32 %v8575, %v8618
    %v8620 = vrot.slane %v8619, 2
    %v8621 = vadd.f32 %v8619, %v8620
    %v8622 = vrot.slane %v8621, 1
    %v8623 = vadd.f32 %v8621, %v8622
    %v8624 = vmul.f32 %v8581, 0.125
    %v8625 = vmul.f32 %v8587, 0.125
    %v8626 = vmul.f32 %v8593, 0.125
    %v8627 = vmul.f32 %v8599, 0.125
    %v8628 = vmul.f32 %v8605, 0.125
    %v8629 = vmul.f32 %v8611, 0.125
    %v8630 = vmul.f32 %v8617, 0.125
    %v8631 = vmul.f32 %v8623, 0.125
    %v8632 = vld [vmem:[#allocation11] sm:$0xff]
    %v8633 = vadd.f32 %v8624, 1e-05
    %v8634 = vadd.f32 %v8625, 1e-05
    %v8635 = vadd.f32 %v8626, 1e-05
    %v8636 = vadd.f32 %v8627, 1e-05
    %v8637 = vadd.f32 %v8628, 1e-05
    %v8638 = vadd.f32 %v8629, 1e-05
    %v8639 = vadd.f32 %v8630, 1e-05
    %v8640 = vadd.f32 %v8631, 1e-05
    %v8641 = vrsqrt.pop %v8633
    %v8642 = vrsqrt.pop %v8634
    %v8643 = vrsqrt.pop %v8635
    %v8644 = vrsqrt.pop %v8636
    %v8645 = vrsqrt.pop %v8637
    %v8646 = vrsqrt.pop %v8638
    %v8647 = vrsqrt.pop %v8639
    %v8648 = vrsqrt.pop %v8640
    %v8657 = vcombine.low %v8641, %v8642
    %v8658 = vcombine.low %v8643, %v8644
    %v8659 = vcombine.low %v8645, %v8646
    %v8660 = vcombine.low %v8647, %v8648
    %v8662 = vunpack.c.l.s4 1966171168
    %v8663 = vunpack.c.0.s8 %v8662
    %v8664 = vlaneseq
    %v8665 = vshrl.u32 %v8664, 7
    %v8666 = vsub.s32 %v8663, %v8665
    %v8667 = vrot.slane %v8657, %v8666
    %v8669 = vunpack.c.l.s4 1966171168
    %v8670 = vunpack.c.0.s8 %v8669
    %v8671 = vlaneseq
    %v8672 = vshrl.u32 %v8671, 7
    %v8673 = vsub.s32 %v8670, %v8672
    %v8674 = vrot.slane %v8658, %v8673
    %v8676 = vunpack.c.l.s4 1966171168
    %v8677 = vunpack.c.0.s8 %v8676
    %v8678 = vlaneseq
    %v8679 = vshrl.u32 %v8678, 7
    %v8680 = vsub.s32 %v8677, %v8679
    %v8681 = vrot.slane %v8659, %v8680
    %v8683 = vunpack.c.l.s4 1966171168
    %v8684 = vunpack.c.0.s8 %v8683
    %v8685 = vlaneseq
    %v8686 = vshrl.u32 %v8685, 7
    %v8687 = vsub.s32 %v8684, %v8686
    %v8688 = vrot.slane %v8660, %v8687
    %v8689 = vcombine.low %v8667, %v8674
    %v8690 = vcombine.low %v8681, %v8688
    %v8692 = vunpack.c.l.s4 1966171168
    %v8693 = vunpack.c.0.s8 %v8692
    %v8694 = vlaneseq
    %v8695 = vshrl.u32 %v8694, 7
    %v8696 = vsub.s32 %v8693, %v8695
    %v8697 = vrot.slane %v8689, %v8696
    %v8699 = vunpack.c.l.s4 1966171168
    %v8700 = vunpack.c.0.s8 %v8699
    %v8701 = vlaneseq
    %v8702 = vshrl.u32 %v8701, 7
    %v8703 = vsub.s32 %v8700, %v8702
    %v8704 = vrot.slane %v8690, %v8703
    %v8705 = vcombine.low %v8697, %v8704
    %v8707 = vmul.f32 %v8632, %v8705
    %v8709 = vlaneseq
    %v8710 = vshrl.u32 %v8709, 7
    %v8711 = vsub.s32 0, %v8710
    %v8712 = vrot.slane %v8707, %v8711
    %v8713 = vlaneseq
    %v8714 = vshrl.u32 %v8713, 7
    %v8715 = vsub.s32 1, %v8714
    %v8716 = vrot.slane %v8707, %v8715
    %v8717 = vlaneseq
    %v8718 = vshrl.u32 %v8717, 7
    %v8719 = vsub.s32 2, %v8718
    %v8720 = vrot.slane %v8707, %v8719
    %v8721 = vlaneseq
    %v8722 = vshrl.u32 %v8721, 7
    %v8723 = vsub.s32 3, %v8722
    %v8724 = vrot.slane %v8707, %v8723
    %v8725 = vlaneseq
    %v8726 = vshrl.u32 %v8725, 7
    %v8727 = vsub.s32 4, %v8726
    %v8728 = vrot.slane %v8707, %v8727
    %v8729 = vlaneseq
    %v8730 = vshrl.u32 %v8729, 7
    %v8731 = vsub.s32 5, %v8730
    %v8732 = vrot.slane %v8707, %v8731
    %v8733 = vlaneseq
    %v8734 = vshrl.u32 %v8733, 7
    %v8735 = vsub.s32 6, %v8734
    %v8736 = vrot.slane %v8707, %v8735
    %v8737 = vlaneseq
    %v8738 = vshrl.u32 %v8737, 7
    %v8739 = vsub.s32 7, %v8738
    %v8740 = vrot.slane %v8707, %v8739
    %v8749 = vmul.f32 %v8560, %v8712
    %v8750 = vmul.f32 %v8561, %v8716
    %v8751 = vmul.f32 %v8562, %v8720
    %v8752 = vmul.f32 %v8563, %v8724
    %v8753 = vmul.f32 %v8564, %v8728
    %v8754 = vmul.f32 %v8565, %v8732
    %v8755 = vmul.f32 %v8566, %v8736
    %v8756 = vmul.f32 %v8567, %v8740
    %v8757 = vld [vmem:[#allocation13] sm:$0xff]
    %v8759 = vlaneseq
    %v8760 = vshrl.u32 %v8759, 7
    %v8761 = vsub.s32 0, %v8760
    %v8762 = vrot.slane %v8757, %v8761
    %v8763 = vlaneseq
    %v8764 = vshrl.u32 %v8763, 7
    %v8765 = vsub.s32 1, %v8764
    %v8766 = vrot.slane %v8757, %v8765
    %v8767 = vlaneseq
    %v8768 = vshrl.u32 %v8767, 7
    %v8769 = vsub.s32 2, %v8768
    %v8770 = vrot.slane %v8757, %v8769
    %v8771 = vlaneseq
    %v8772 = vshrl.u32 %v8771, 7
    %v8773 = vsub.s32 3, %v8772
    %v8774 = vrot.slane %v8757, %v8773
    %v8775 = vlaneseq
    %v8776 = vshrl.u32 %v8775, 7
    %v8777 = vsub.s32 4, %v8776
    %v8778 = vrot.slane %v8757, %v8777
    %v8779 = vlaneseq
    %v8780 = vshrl.u32 %v8779, 7
    %v8781 = vsub.s32 5, %v8780
    %v8782 = vrot.slane %v8757, %v8781
    %v8783 = vlaneseq
    %v8784 = vshrl.u32 %v8783, 7
    %v8785 = vsub.s32 6, %v8784
    %v8786 = vrot.slane %v8757, %v8785
    %v8787 = vlaneseq
    %v8788 = vshrl.u32 %v8787, 7
    %v8789 = vsub.s32 7, %v8788
    %v8790 = vrot.slane %v8757, %v8789
    %v8799 = vadd.f32 %v8749, %v8762
    %v8800 = vadd.f32 %v8750, %v8766
    %v8801 = vadd.f32 %v8751, %v8770
    %v8802 = vadd.f32 %v8752, %v8774
    %v8803 = vadd.f32 %v8753, %v8778
    %v8804 = vadd.f32 %v8754, %v8782
    %v8805 = vadd.f32 %v8755, %v8786
    %v8806 = vadd.f32 %v8756, %v8790
    %v8807 = vmax.f32 %v8799, 0.0
    %v8808 = vmax.f32 %v8800, 0.0
    %v8809 = vmax.f32 %v8801, 0.0
    %v8810 = vmax.f32 %v8802, 0.0
    %v8811 = vmax.f32 %v8803, 0.0
    %v8812 = vmax.f32 %v8804, 0.0
    %v8813 = vmax.f32 %v8805, 0.0
    %v8814 = vmax.f32 %v8806, 0.0
    %v8815 = vpack.c.bf16 %v8807, %v8807
    %v8816 = vpack.c.bf16 %v8808, %v8808
    %v8817 = vpack.c.bf16 %v8809, %v8809
    %v8818 = vpack.c.bf16 %v8810, %v8810
    %v8819 = vpack.c.bf16 %v8811, %v8811
    %v8820 = vpack.c.bf16 %v8812, %v8812
    %v8821 = vpack.c.bf16 %v8813, %v8813
    %v8822 = vpack.c.bf16 %v8814, %v8814
    %v8823 = vld [vmem:[#allocation14] sm:$0xf]
    %v8824 = vld [vmem:[#allocation14 + $0x4] sm:$0xf]
    %v8825 = vld [vmem:[#allocation14 + $0x8] sm:$0xf]
    %v8826 = vld [vmem:[#allocation14 + $0xc] sm:$0xf]
    %v8827 = vld [vmem:[#allocation14 + $0x10] sm:$0xf]
    %v8828 = vld [vmem:[#allocation14 + $0x14] sm:$0xf]
    %v8829 = vld [vmem:[#allocation14 + $0x18] sm:$0xf]
    %v8830 = vld [vmem:[#allocation14 + $0x1c] sm:$0xf]
    %v8831 = vld [vmem:[#allocation14 + $0x20] sm:$0xf]
    %v8832 = vld [vmem:[#allocation14 + $0x24] sm:$0xf]
    %v8833 = vld [vmem:[#allocation14 + $0x28] sm:$0xf]
    %v8834 = vld [vmem:[#allocation14 + $0x2c] sm:$0xf]
    %v8835 = vld [vmem:[#allocation14 + $0x30] sm:$0xf]
    %v8836 = vld [vmem:[#allocation14 + $0x34] sm:$0xf]
    %v8837 = vld [vmem:[#allocation14 + $0x38] sm:$0xf]
    %v8838 = vld [vmem:[#allocation14 + $0x3c] sm:$0xf]
    %v8839 = vld [vmem:[#allocation14 + $0x40] sm:$0xf]
    %v8840 = vld [vmem:[#allocation14 + $0x44] sm:$0xf]
    %v8841 = vld [vmem:[#allocation14 + $0x48] sm:$0xf]
    %v8842 = vld [vmem:[#allocation14 + $0x4c] sm:$0xf]
    %v8843 = vld [vmem:[#allocation14 + $0x50] sm:$0xf]
    %v8844 = vld [vmem:[#allocation14 + $0x54] sm:$0xf]
    %v8845 = vld [vmem:[#allocation14 + $0x58] sm:$0xf]
    %v8846 = vld [vmem:[#allocation14 + $0x5c] sm:$0xf]
    %v8847 = vld [vmem:[#allocation14 + $0x60] sm:$0xf]
    %v8848 = vld [vmem:[#allocation14 + $0x64] sm:$0xf]
    %v8849 = vld [vmem:[#allocation14 + $0x68] sm:$0xf]
    %v8850 = vld [vmem:[#allocation14 + $0x6c] sm:$0xf]
    %v8851 = vld [vmem:[#allocation14 + $0x70] sm:$0xf]
    %v8852 = vld [vmem:[#allocation14 + $0x74] sm:$0xf]
    %v8853 = vld [vmem:[#allocation14 + $0x78] sm:$0xf]
    %v8854 = vld [vmem:[#allocation14 + $0x7c] sm:$0xf]
    %v8855 = vld [vmem:[#allocation14 + $0x80] sm:$0xf]
    %v8856 = vld [vmem:[#allocation14 + $0x84] sm:$0xf]
    %v8857 = vld [vmem:[#allocation14 + $0x88] sm:$0xf]
    %v8858 = vld [vmem:[#allocation14 + $0x8c] sm:$0xf]
    %v8859 = vld [vmem:[#allocation14 + $0x90] sm:$0xf]
    %v8860 = vld [vmem:[#allocation14 + $0x94] sm:$0xf]
    %v8861 = vld [vmem:[#allocation14 + $0x98] sm:$0xf]
    %v8862 = vld [vmem:[#allocation14 + $0x9c] sm:$0xf]
    %v8863 = vld [vmem:[#allocation14 + $0xa0] sm:$0xf]
    %v8864 = vld [vmem:[#allocation14 + $0xa4] sm:$0xf]
    %v8865 = vld [vmem:[#allocation14 + $0xa8] sm:$0xf]
    %v8866 = vld [vmem:[#allocation14 + $0xac] sm:$0xf]
    %v8867 = vld [vmem:[#allocation14 + $0xb0] sm:$0xf]
    %v8868 = vld [vmem:[#allocation14 + $0xb4] sm:$0xf]
    %v8869 = vld [vmem:[#allocation14 + $0xb8] sm:$0xf]
    %v8870 = vld [vmem:[#allocation14 + $0xbc] sm:$0xf]
    %v8871 = vld [vmem:[#allocation14 + $0xc0] sm:$0xf]
    %v8872 = vld [vmem:[#allocation14 + $0xc4] sm:$0xf]
    %v8873 = vld [vmem:[#allocation14 + $0xc8] sm:$0xf]
    %v8874 = vld [vmem:[#allocation14 + $0xcc] sm:$0xf]
    %v8875 = vld [vmem:[#allocation14 + $0xd0] sm:$0xf]
    %v8876 = vld [vmem:[#allocation14 + $0xd4] sm:$0xf]
    %v8877 = vld [vmem:[#allocation14 + $0xd8] sm:$0xf]
    %v8878 = vld [vmem:[#allocation14 + $0xdc] sm:$0xf]
    %v8879 = vld [vmem:[#allocation14 + $0xe0] sm:$0xf]
    %v8880 = vld [vmem:[#allocation14 + $0xe4] sm:$0xf]
    %v8881 = vld [vmem:[#allocation14 + $0xe8] sm:$0xf]
    %v8882 = vld [vmem:[#allocation14 + $0xec] sm:$0xf]
    %v8883 = vld [vmem:[#allocation14 + $0xf0] sm:$0xf]
    %v8884 = vld [vmem:[#allocation14 + $0xf4] sm:$0xf]
    %v8885 = vld [vmem:[#allocation14 + $0xf8] sm:$0xf]
    %v8886 = vld [vmem:[#allocation14 + $0xfc] sm:$0xf]
    %v8887 = vld [vmem:[#allocation14 + $0x100] sm:$0xf]
    %v8888 = vld [vmem:[#allocation14 + $0x104] sm:$0xf]
    %v8889 = vld [vmem:[#allocation14 + $0x108] sm:$0xf]
    %v8890 = vld [vmem:[#allocation14 + $0x10c] sm:$0xf]
    %v8891 = vld [vmem:[#allocation14 + $0x110] sm:$0xf]
    %v8892 = vld [vmem:[#allocation14 + $0x114] sm:$0xf]
    %v8893 = vld [vmem:[#allocation14 + $0x118] sm:$0xf]
    %v8894 = vld [vmem:[#allocation14 + $0x11c] sm:$0xf]
    %v8895 = vld [vmem:[#allocation14 + $0x120] sm:$0xf]
    %v8896 = vld [vmem:[#allocation14 + $0x124] sm:$0xf]
    %v8897 = vld [vmem:[#allocation14 + $0x128] sm:$0xf]
    %v8898 = vld [vmem:[#allocation14 + $0x12c] sm:$0xf]
    %v8899 = vld [vmem:[#allocation14 + $0x130] sm:$0xf]
    %v8900 = vld [vmem:[#allocation14 + $0x134] sm:$0xf]
    %v8901 = vld [vmem:[#allocation14 + $0x138] sm:$0xf]
    %v8902 = vld [vmem:[#allocation14 + $0x13c] sm:$0xf]
    %v8903 = vld [vmem:[#allocation14 + $0x140] sm:$0xf]
    %v8904 = vld [vmem:[#allocation14 + $0x144] sm:$0xf]
    %v8905 = vld [vmem:[#allocation14 + $0x148] sm:$0xf]
    %v8906 = vld [vmem:[#allocation14 + $0x14c] sm:$0xf]
    %v8907 = vld [vmem:[#allocation14 + $0x150] sm:$0xf]
    %v8908 = vld [vmem:[#allocation14 + $0x154] sm:$0xf]
    %v8909 = vld [vmem:[#allocation14 + $0x158] sm:$0xf]
    %v8910 = vld [vmem:[#allocation14 + $0x15c] sm:$0xf]
    %v8911 = vld [vmem:[#allocation14 + $0x160] sm:$0xf]
    %v8912 = vld [vmem:[#allocation14 + $0x164] sm:$0xf]
    %v8913 = vld [vmem:[#allocation14 + $0x168] sm:$0xf]
    %v8914 = vld [vmem:[#allocation14 + $0x16c] sm:$0xf]
    %v8915 = vld [vmem:[#allocation14 + $0x170] sm:$0xf]
    %v8916 = vld [vmem:[#allocation14 + $0x174] sm:$0xf]
    %v8917 = vld [vmem:[#allocation14 + $0x178] sm:$0xf]
    %v8918 = vld [vmem:[#allocation14 + $0x17c] sm:$0xf]
    %v8919 = vld [vmem:[#allocation14 + $0x180] sm:$0xf]
    %v8920 = vld [vmem:[#allocation14 + $0x184] sm:$0xf]
    %v8921 = vld [vmem:[#allocation14 + $0x188] sm:$0xf]
    %v8922 = vld [vmem:[#allocation14 + $0x18c] sm:$0xf]
    %v8923 = vld [vmem:[#allocation14 + $0x190] sm:$0xf]
    %v8924 = vld [vmem:[#allocation14 + $0x194] sm:$0xf]
    %v8925 = vld [vmem:[#allocation14 + $0x198] sm:$0xf]
    %v8926 = vld [vmem:[#allocation14 + $0x19c] sm:$0xf]
    %v8927 = vld [vmem:[#allocation14 + $0x1a0] sm:$0xf]
    %v8928 = vld [vmem:[#allocation14 + $0x1a4] sm:$0xf]
    %v8929 = vld [vmem:[#allocation14 + $0x1a8] sm:$0xf]
    %v8930 = vld [vmem:[#allocation14 + $0x1ac] sm:$0xf]
    %v8931 = vld [vmem:[#allocation14 + $0x1b0] sm:$0xf]
    %v8932 = vld [vmem:[#allocation14 + $0x1b4] sm:$0xf]
    %v8933 = vld [vmem:[#allocation14 + $0x1b8] sm:$0xf]
    %v8934 = vld [vmem:[#allocation14 + $0x1bc] sm:$0xf]
    %v8935 = vld [vmem:[#allocation14 + $0x1c0] sm:$0xf]
    %v8936 = vld [vmem:[#allocation14 + $0x1c4] sm:$0xf]
    %v8937 = vld [vmem:[#allocation14 + $0x1c8] sm:$0xf]
    %v8938 = vld [vmem:[#allocation14 + $0x1cc] sm:$0xf]
    %v8939 = vld [vmem:[#allocation14 + $0x1d0] sm:$0xf]
    %v8940 = vld [vmem:[#allocation14 + $0x1d4] sm:$0xf]
    %v8941 = vld [vmem:[#allocation14 + $0x1d8] sm:$0xf]
    %v8942 = vld [vmem:[#allocation14 + $0x1dc] sm:$0xf]
    %v8943 = vld [vmem:[#allocation14 + $0x1e0] sm:$0xf]
    %v8944 = vld [vmem:[#allocation14 + $0x1e4] sm:$0xf]
    %v8945 = vld [vmem:[#allocation14 + $0x1e8] sm:$0xf]
    %v8946 = vld [vmem:[#allocation14 + $0x1ec] sm:$0xf]
    %v8947 = vld [vmem:[#allocation14 + $0x1f0] sm:$0xf]
    %v8948 = vld [vmem:[#allocation14 + $0x1f4] sm:$0xf]
    %v8949 = vld [vmem:[#allocation14 + $0x1f8] sm:$0xf]
    %v8950 = vld [vmem:[#allocation14 + $0x1fc] sm:$0xf]
    %v8951 = vld [vmem:[#allocation16] sm:$0x1]
    %v8953 = vlaneseq
    %v8954 = vshrl.u32 %v8953, 7
    %v8955 = vsub.s32 0, %v8954
    %v8956 = vrot.slane %v8951, %v8955
    %v9086 = vunpack.c.l.b16 %v8823
    %v9087 = vunpack.c.l.b16 %v8824
    %v9088 = vunpack.c.l.b16 %v8825
    %v9089 = vunpack.c.l.b16 %v8826
    %v9090 = vunpack.c.l.b16 %v8827
    %v9091 = vunpack.c.l.b16 %v8828
    %v9092 = vunpack.c.l.b16 %v8829
    %v9093 = vunpack.c.l.b16 %v8830
    %v9094 = vunpack.c.l.b16 %v8831
    %v9095 = vunpack.c.l.b16 %v8832
    %v9096 = vunpack.c.l.b16 %v8833
    %v9097 = vunpack.c.l.b16 %v8834
    %v9098 = vunpack.c.l.b16 %v8835
    %v9099 = vunpack.c.l.b16 %v8836
    %v9100 = vunpack.c.l.b16 %v8837
    %v9101 = vunpack.c.l.b16 %v8838
    %v9102 = vunpack.c.l.b16 %v8839
    %v9103 = vunpack.c.l.b16 %v8840
    %v9104 = vunpack.c.l.b16 %v8841
    %v9105 = vunpack.c.l.b16 %v8842
    %v9106 = vunpack.c.l.b16 %v8843
    %v9107 = vunpack.c.l.b16 %v8844
    %v9108 = vunpack.c.l.b16 %v8845
    %v9109 = vunpack.c.l.b16 %v8846
    %v9110 = vunpack.c.l.b16 %v8847
    %v9111 = vunpack.c.l.b16 %v8848
    %v9112 = vunpack.c.l.b16 %v8849
    %v9113 = vunpack.c.l.b16 %v8850
    %v9114 = vunpack.c.l.b16 %v8851
    %v9115 = vunpack.c.l.b16 %v8852
    %v9116 = vunpack.c.l.b16 %v8853
    %v9117 = vunpack.c.l.b16 %v8854
    %v9118 = vunpack.c.l.b16 %v8855
    %v9119 = vunpack.c.l.b16 %v8856
    %v9120 = vunpack.c.l.b16 %v8857
    %v9121 = vunpack.c.l.b16 %v8858
    %v9122 = vunpack.c.l.b16 %v8859
    %v9123 = vunpack.c.l.b16 %v8860
    %v9124 = vunpack.c.l.b16 %v8861
    %v9125 = vunpack.c.l.b16 %v8862
    %v9126 = vunpack.c.l.b16 %v8863
    %v9127 = vunpack.c.l.b16 %v8864
    %v9128 = vunpack.c.l.b16 %v8865
    %v9129 = vunpack.c.l.b16 %v8866
    %v9130 = vunpack.c.l.b16 %v8867
    %v9131 = vunpack.c.l.b16 %v8868
    %v9132 = vunpack.c.l.b16 %v8869
    %v9133 = vunpack.c.l.b16 %v8870
    %v9134 = vunpack.c.l.b16 %v8871
    %v9135 = vunpack.c.l.b16 %v8872
    %v9136 = vunpack.c.l.b16 %v8873
    %v9137 = vunpack.c.l.b16 %v8874
    %v9138 = vunpack.c.l.b16 %v8875
    %v9139 = vunpack.c.l.b16 %v8876
    %v9140 = vunpack.c.l.b16 %v8877
    %v9141 = vunpack.c.l.b16 %v8878
    %v9142 = vunpack.c.l.b16 %v8879
    %v9143 = vunpack.c.l.b16 %v8880
    %v9144 = vunpack.c.l.b16 %v8881
    %v9145 = vunpack.c.l.b16 %v8882
    %v9146 = vunpack.c.l.b16 %v8883
    %v9147 = vunpack.c.l.b16 %v8884
    %v9148 = vunpack.c.l.b16 %v8885
    %v9149 = vunpack.c.l.b16 %v8886
    %v9150 = vunpack.c.l.b16 %v8887
    %v9151 = vunpack.c.l.b16 %v8888
    %v9152 = vunpack.c.l.b16 %v8889
    %v9153 = vunpack.c.l.b16 %v8890
    %v9154 = vunpack.c.l.b16 %v8891
    %v9155 = vunpack.c.l.b16 %v8892
    %v9156 = vunpack.c.l.b16 %v8893
    %v9157 = vunpack.c.l.b16 %v8894
    %v9158 = vunpack.c.l.b16 %v8895
    %v9159 = vunpack.c.l.b16 %v8896
    %v9160 = vunpack.c.l.b16 %v8897
    %v9161 = vunpack.c.l.b16 %v8898
    %v9162 = vunpack.c.l.b16 %v8899
    %v9163 = vunpack.c.l.b16 %v8900
    %v9164 = vunpack.c.l.b16 %v8901
    %v9165 = vunpack.c.l.b16 %v8902
    %v9166 = vunpack.c.l.b16 %v8903
    %v9167 = vunpack.c.l.b16 %v8904
    %v9168 = vunpack.c.l.b16 %v8905
    %v9169 = vunpack.c.l.b16 %v8906
    %v9170 = vunpack.c.l.b16 %v8907
    %v9171 = vunpack.c.l.b16 %v8908
    %v9172 = vunpack.c.l.b16 %v8909
    %v9173 = vunpack.c.l.b16 %v8910
    %v9174 = vunpack.c.l.b16 %v8911
    %v9175 = vunpack.c.l.b16 %v8912
    %v9176 = vunpack.c.l.b16 %v8913
    %v9177 = vunpack.c.l.b16 %v8914
    %v9178 = vunpack.c.l.b16 %v8915
    %v9179 = vunpack.c.l.b16 %v8916
    %v9180 = vunpack.c.l.b16 %v8917
    %v9181 = vunpack.c.l.b16 %v8918
    %v9182 = vunpack.c.l.b16 %v8919
    %v9183 = vunpack.c.l.b16 %v8920
    %v9184 = vunpack.c.l.b16 %v8921
    %v9185 = vunpack.c.l.b16 %v8922
    %v9186 = vunpack.c.l.b16 %v8923
    %v9187 = vunpack.c.l.b16 %v8924
    %v9188 = vunpack.c.l.b16 %v8925
    %v9189 = vunpack.c.l.b16 %v8926
    %v9190 = vunpack.c.l.b16 %v8927
    %v9191 = vunpack.c.l.b16 %v8928
    %v9192 = vunpack.c.l.b16 %v8929
    %v9193 = vunpack.c.l.b16 %v8930
    %v9194 = vunpack.c.l.b16 %v8931
    %v9195 = vunpack.c.l.b16 %v8932
    %v9196 = vunpack.c.l.b16 %v8933
    %v9197 = vunpack.c.l.b16 %v8934
    %v9198 = vunpack.c.l.b16 %v8935
    %v9199 = vunpack.c.l.b16 %v8936
    %v9200 = vunpack.c.l.b16 %v8937
    %v9201 = vunpack.c.l.b16 %v8938
    %v9202 = vunpack.c.l.b16 %v8939
    %v9203 = vunpack.c.l.b16 %v8940
    %v9204 = vunpack.c.l.b16 %v8941
    %v9205 = vunpack.c.l.b16 %v8942
    %v9206 = vunpack.c.l.b16 %v8943
    %v9207 = vunpack.c.l.b16 %v8944
    %v9208 = vunpack.c.l.b16 %v8945
    %v9209 = vunpack.c.l.b16 %v8946
    %v9210 = vunpack.c.l.b16 %v8947
    %v9211 = vunpack.c.l.b16 %v8948
    %v9212 = vunpack.c.l.b16 %v8949
    %v9213 = vunpack.c.l.b16 %v8950
    %v9214 = vpack.c.b16 %v9087, %v9086
    %v9215 = vpack.c.b16 %v9089, %v9088
    %v9216 = vpack.c.b16 %v9091, %v9090
    %v9217 = vpack.c.b16 %v9093, %v9092
    %v9218 = vpack.c.b16 %v9095, %v9094
    %v9219 = vpack.c.b16 %v9097, %v9096
    %v9220 = vpack.c.b16 %v9099, %v9098
    %v9221 = vpack.c.b16 %v9101, %v9100
    %v9222 = vpack.c.b16 %v9103, %v9102
    %v9223 = vpack.c.b16 %v9105, %v9104
    %v9224 = vpack.c.b16 %v9107, %v9106
    %v9225 = vpack.c.b16 %v9109, %v9108
    %v9226 = vpack.c.b16 %v9111, %v9110
    %v9227 = vpack.c.b16 %v9113, %v9112
    %v9228 = vpack.c.b16 %v9115, %v9114
    %v9229 = vpack.c.b16 %v9117, %v9116
    %v9230 = vpack.c.b16 %v9119, %v9118
    %v9231 = vpack.c.b16 %v9121, %v9120
    %v9232 = vpack.c.b16 %v9123, %v9122
    %v9233 = vpack.c.b16 %v9125, %v9124
    %v9234 = vpack.c.b16 %v9127, %v9126
    %v9235 = vpack.c.b16 %v9129, %v9128
    %v9236 = vpack.c.b16 %v9131, %v9130
    %v9237 = vpack.c.b16 %v9133, %v9132
    %v9238 = vpack.c.b16 %v9135, %v9134
    %v9239 = vpack.c.b16 %v9137, %v9136
    %v9240 = vpack.c.b16 %v9139, %v9138
    %v9241 = vpack.c.b16 %v9141, %v9140
    %v9242 = vpack.c.b16 %v9143, %v9142
    %v9243 = vpack.c.b16 %v9145, %v9144
    %v9244 = vpack.c.b16 %v9147, %v9146
    %v9245 = vpack.c.b16 %v9149, %v9148
    %v9246 = vpack.c.b16 %v9151, %v9150
    %v9247 = vpack.c.b16 %v9153, %v9152
    %v9248 = vpack.c.b16 %v9155, %v9154
    %v9249 = vpack.c.b16 %v9157, %v9156
    %v9250 = vpack.c.b16 %v9159, %v9158
    %v9251 = vpack.c.b16 %v9161, %v9160
    %v9252 = vpack.c.b16 %v9163, %v9162
    %v9253 = vpack.c.b16 %v9165, %v9164
    %v9254 = vpack.c.b16 %v9167, %v9166
    %v9255 = vpack.c.b16 %v9169, %v9168
    %v9256 = vpack.c.b16 %v9171, %v9170
    %v9257 = vpack.c.b16 %v9173, %v9172
    %v9258 = vpack.c.b16 %v9175, %v9174
    %v9259 = vpack.c.b16 %v9177, %v9176
    %v9260 = vpack.c.b16 %v9179, %v9178
    %v9261 = vpack.c.b16 %v9181, %v9180
    %v9262 = vpack.c.b16 %v9183, %v9182
    %v9263 = vpack.c.b16 %v9185, %v9184
    %v9264 = vpack.c.b16 %v9187, %v9186
    %v9265 = vpack.c.b16 %v9189, %v9188
    %v9266 = vpack.c.b16 %v9191, %v9190
    %v9267 = vpack.c.b16 %v9193, %v9192
    %v9268 = vpack.c.b16 %v9195, %v9194
    %v9269 = vpack.c.b16 %v9197, %v9196
    %v9270 = vpack.c.b16 %v9199, %v9198
    %v9271 = vpack.c.b16 %v9201, %v9200
    %v9272 = vpack.c.b16 %v9203, %v9202
    %v9273 = vpack.c.b16 %v9205, %v9204
    %v9274 = vpack.c.b16 %v9207, %v9206
    %v9275 = vpack.c.b16 %v9209, %v9208
    %v9276 = vpack.c.b16 %v9211, %v9210
    %v9277 = vpack.c.b16 %v9213, %v9212
    %9342 = vmatprep.subr.bf16.mxu0 0
    %9343 = vmatpush1.bf16.msra.mxu0 %v9214
    %9344 = vmatprep.subr.bf16.mxu0 0
    %9345 = vmatpush1.bf16.msra.mxu0 %v9215
    %9346 = vmatprep.subr.bf16.mxu0 0
    %9347 = vmatpush1.bf16.msra.mxu0 %v9216
    %9348 = vmatprep.subr.bf16.mxu0 0
    %9349 = vmatpush1.bf16.msra.mxu0 %v9217
    %9350 = vmatprep.subr.bf16.mxu0 0
    %9351 = vmatpush1.bf16.msra.mxu0 %v9218
    %9352 = vmatprep.subr.bf16.mxu0 0
    %9353 = vmatpush1.bf16.msra.mxu0 %v9219
    %9354 = vmatprep.subr.bf16.mxu0 0
    %9355 = vmatpush1.bf16.msra.mxu0 %v9220
    %9356 = vmatprep.subr.bf16.mxu0 0
    %9357 = vmatpush1.bf16.msra.mxu0 %v9221
    %9358 = vmatprep.subr.bf16.mxu0 0
    %9359 = vmatpush1.bf16.msra.mxu0 %v9222
    %9360 = vmatprep.subr.bf16.mxu0 0
    %9361 = vmatpush1.bf16.msra.mxu0 %v9223
    %9362 = vmatprep.subr.bf16.mxu0 0
    %9363 = vmatpush1.bf16.msra.mxu0 %v9224
    %9364 = vmatprep.subr.bf16.mxu0 0
    %9365 = vmatpush1.bf16.msra.mxu0 %v9225
    %9366 = vmatprep.subr.bf16.mxu0 0
    %9367 = vmatpush1.bf16.msra.mxu0 %v9226
    %9368 = vmatprep.subr.bf16.mxu0 0
    %9369 = vmatpush1.bf16.msra.mxu0 %v9227
    %9370 = vmatprep.subr.bf16.mxu0 0
    %9371 = vmatpush1.bf16.msra.mxu0 %v9228
    %9372 = vmatprep.subr.bf16.mxu0 0
    %9373 = vmatpush1.bf16.msra.mxu0 %v9229
    %9374 = vmatprep.mubr.bf16.mxu0 %v8816
    %9375 = vmatmul.mubr.bf16.gmra.mrb[0].mxu0 %v8815
    %v9376 = vpop.f32.mrb[0].mxu0
    %v9377 = vadd.f32 %v8956, %v9376
    %v9378 = vpop.f32.mrb[0].mxu0
    %v9379 = vpop.f32.mrb[0].mxu0
    %v9380 = vpop.f32.mrb[0].mxu0
    %9381 = vdwg.mxu0
    %9382 = vmatprep.subr.bf16.mxu0 0
    %9383 = vmatpush1.bf16.msra.mxu0 %v9230
    %9384 = vmatprep.subr.bf16.mxu0 0
    %9385 = vmatpush1.bf16.msra.mxu0 %v9231
    %9386 = vmatprep.subr.bf16.mxu0 0
    %9387 = vmatpush1.bf16.msra.mxu0 %v9232
    %9388 = vmatprep.subr.bf16.mxu0 0
    %9389 = vmatpush1.bf16.msra.mxu0 %v9233
    %9390 = vmatprep.subr.bf16.mxu0 0
    %9391 = vmatpush1.bf16.msra.mxu0 %v9234
    %9392 = vmatprep.subr.bf16.mxu0 0
    %9393 = vmatpush1.bf16.msra.mxu0 %v9235
    %9394 = vmatprep.subr.bf16.mxu0 0
    %9395 = vmatpush1.bf16.msra.mxu0 %v9236
    %9396 = vmatprep.subr.bf16.mxu0 0
    %9397 = vmatpush1.bf16.msra.mxu0 %v9237
    %9398 = vmatprep.subr.bf16.mxu0 0
    %9399 = vmatpush1.bf16.msra.mxu0 %v9238
    %9400 = vmatprep.subr.bf16.mxu0 0
    %9401 = vmatpush1.bf16.msra.mxu0 %v9239
    %9402 = vmatprep.subr.bf16.mxu0 0
    %9403 = vmatpush1.bf16.msra.mxu0 %v9240
    %9404 = vmatprep.subr.bf16.mxu0 0
    %9405 = vmatpush1.bf16.msra.mxu0 %v9241
    %9406 = vmatprep.subr.bf16.mxu0 0
    %9407 = vmatpush1.bf16.msra.mxu0 %v9242
    %9408 = vmatprep.subr.bf16.mxu0 0
    %9409 = vmatpush1.bf16.msra.mxu0 %v9243
    %9410 = vmatprep.subr.bf16.mxu0 0
    %9411 = vmatpush1.bf16.msra.mxu0 %v9244
    %9412 = vmatprep.subr.bf16.mxu0 0
    %9413 = vmatpush1.bf16.msra.mxu0 %v9245
    %9414 = vmatprep.mubr.bf16.mxu0 %v8818
    %9415 = vmatmul.mubr.bf16.gmra.mrb[0].mxu0 %v8817
    %v9416 = vpop.f32.mrb[0].mxu0
    %v9417 = vadd.f32 %v9377, %v9416
    %v9418 = vpop.f32.mrb[0].mxu0
    %v9419 = vpop.f32.mrb[0].mxu0
    %v9420 = vpop.f32.mrb[0].mxu0
    %9421 = vdwg.mxu0
    %9422 = vmatprep.subr.bf16.mxu0 0
    %9423 = vmatpush1.bf16.msra.mxu0 %v9246
    %9424 = vmatprep.subr.bf16.mxu0 0
    %9425 = vmatpush1.bf16.msra.mxu0 %v9247
    %9426 = vmatprep.subr.bf16.mxu0 0
    %9427 = vmatpush1.bf16.msra.mxu0 %v9248
    %9428 = vmatprep.subr.bf16.mxu0 0
    %9429 = vmatpush1.bf16.msra.mxu0 %v9249
    %9430 = vmatprep.subr.bf16.mxu0 0
    %9431 = vmatpush1.bf16.msra.mxu0 %v9250
    %9432 = vmatprep.subr.bf16.mxu0 0
    %9433 = vmatpush1.bf16.msra.mxu0 %v9251
    %9434 = vmatprep.subr.bf16.mxu0 0
    %9435 = vmatpush1.bf16.msra.mxu0 %v9252
    %9436 = vmatprep.subr.bf16.mxu0 0
    %9437 = vmatpush1.bf16.msra.mxu0 %v9253
    %9438 = vmatprep.subr.bf16.mxu0 0
    %9439 = vmatpush1.bf16.msra.mxu0 %v9254
    %9440 = vmatprep.subr.bf16.mxu0 0
    %9441 = vmatpush1.bf16.msra.mxu0 %v9255
    %9442 = vmatprep.subr.bf16.mxu0 0
    %9443 = vmatpush1.bf16.msra.mxu0 %v9256
    %9444 = vmatprep.subr.bf16.mxu0 0
    %9445 = vmatpush1.bf16.msra.mxu0 %v9257
    %9446 = vmatprep.subr.bf16.mxu0 0
    %9447 = vmatpush1.bf16.msra.mxu0 %v9258
    %9448 = vmatprep.subr.bf16.mxu0 0
    %9449 = vmatpush1.bf16.msra.mxu0 %v9259
    %9450 = vmatprep.subr.bf16.mxu0 0
    %9451 = vmatpush1.bf16.msra.mxu0 %v9260
    %9452 = vmatprep.subr.bf16.mxu0 0
    %9453 = vmatpush1.bf16.msra.mxu0 %v9261
    %9454 = vmatprep.mubr.bf16.mxu0 %v8820
    %9455 = vmatmul.mubr.bf16.gmra.mrb[0].mxu0 %v8819
    %v9456 = vpop.f32.mrb[0].mxu0
    %v9457 = vadd.f32 %v9417, %v9456
    %v9458 = vpop.f32.mrb[0].mxu0
    %v9459 = vpop.f32.mrb[0].mxu0
    %v9460 = vpop.f32.mrb[0].mxu0
    %9461 = vdwg.mxu0
    %9462 = vmatprep.subr.bf16.mxu0 0
    %9463 = vmatpush1.bf16.msra.mxu0 %v9262
    %9464 = vmatprep.subr.bf16.mxu0 0
    %9465 = vmatpush1.bf16.msra.mxu0 %v9263
    %9466 = vmatprep.subr.bf16.mxu0 0
    %9467 = vmatpush1.bf16.msra.mxu0 %v9264
    %9468 = vmatprep.subr.bf16.mxu0 0
    %9469 = vmatpush1.bf16.msra.mxu0 %v9265
    %9470 = vmatprep.subr.bf16.mxu0 0
    %9471 = vmatpush1.bf16.msra.mxu0 %v9266
    %9472 = vmatprep.subr.bf16.mxu0 0
    %9473 = vmatpush1.bf16.msra.mxu0 %v9267
    %9474 = vmatprep.subr.bf16.mxu0 0
    %9475 = vmatpush1.bf16.msra.mxu0 %v9268
    %9476 = vmatprep.subr.bf16.mxu0 0
    %9477 = vmatpush1.bf16.msra.mxu0 %v9269
    %9478 = vmatprep.subr.bf16.mxu0 0
    %9479 = vmatpush1.bf16.msra.mxu0 %v9270
    %9480 = vmatprep.subr.bf16.mxu0 0
    %9481 = vmatpush1.bf16.msra.mxu0 %v9271
    %9482 = vmatprep.subr.bf16.mxu0 0
    %9483 = vmatpush1.bf16.msra.mxu0 %v9272
    %9484 = vmatprep.subr.bf16.mxu0 0
    %9485 = vmatpush1.bf16.msra.mxu0 %v9273
    %9486 = vmatprep.subr.bf16.mxu0 0
    %9487 = vmatpush1.bf16.msra.mxu0 %v9274
    %9488 = vmatprep.subr.bf16.mxu0 0
    %9489 = vmatpush1.bf16.msra.mxu0 %v9275
    %9490 = vmatprep.subr.bf16.mxu0 0
    %9491 = vmatpush1.bf16.msra.mxu0 %v9276
    %9492 = vmatprep.subr.bf16.mxu0 0
    %9493 = vmatpush1.bf16.msra.mxu0 %v9277
    %9494 = vmatprep.mubr.bf16.mxu0 %v8822
    %9495 = vmatmul.mubr.bf16.gmra.mrb[0].mxu0 %v8821
    %v9496 = vpop.f32.mrb[0].mxu0
    %v9497 = vadd.f32 %v9457, %v9496
    %v9498 = vpop.f32.mrb[0].mxu0
    %v9499 = vpop.f32.mrb[0].mxu0
    %v9500 = vpop.f32.mrb[0].mxu0
    %9501 = vdwg.mxu0
    %v9502 = vlaneseq
    %v9503 = vand.u32 %v9502, 127
    %vm9504 = vcmp.lt.s32.totalorder %v9503, 2
    %v9505 = vsel %vm9504, %v9497, -1e+30
    %9506 = vmax.xlane.f32.xlu0 %v9505
    %v9507 = vpop.xlane.xlu0 %9506
    %v9508 = vsub.f32 %v9505, %v9507
    %v9509 = vmul.f32 %v9508, 1.442695
    %v9510 = vpow.pop %v9509
    %9511 = vadd.xlane.f32.xlu0 %v9510
    %v9512 = vpop.xlane.xlu0 %9511
    %v9513 = vlog2.pop %v9512
    %v9514 = vmul.f32 %v9513, 0.6931472
    %v9515 = vadd.f32 %v9507, %v9514
    %v9516 = vsub.f32 %v9505, %v9515
    %9517 = vst [vmem:[#allocation17] sm:$0xff] %v9516
    // Predicated region
    $region74: #{tpu_custom_call.1} parent=1 // pred_check
      _
    $region75: #{tpu_custom_call.1} parent=1 // pred_check_branch
      %9519 = sbr.rel (0) target = $region77
    $region76: #{tpu_custom_call.1} parent=1 // pred_region
      %s9521 = ssub.s32 128, 128
      %9522 = vsyncadd [#allocation4], %s9521
      %s9524 = sshll.u32 [#allocation17], 4
      %s9525 = int_to_ptr.vmem [resolvable:$true] %s9524
      %9527 = dma.vmem_to_hbm [thread:$0]  %s9525, 128, %s9, [#allocation4]
    $region77: #{tpu_custom_call.1} parent=1 // pred_fallthru
      _
    // Predicated region
    $region78: #{tpu_custom_call.1} parent=1 // pred_check
      _
    $region79: #{tpu_custom_call.1} parent=1 // pred_check_branch
      %9529 = sbr.rel (0) target = $region81
    $region80: #{tpu_custom_call.1} parent=1 // pred_region
      %9530 = dma.done [#allocation4], 128
    $region81: #{tpu_custom_call.1} parent=1 // pred_fallthru
      _
    %9531 = vsyncpa [#allocation3], 1
    %9532 = vsyncpa [#allocation6], 1
    %9533 = vsyncpa [#allocation9], 1
    %9534 = vsyncpa [#allocation12], 1
    %9535 = vsyncpa [#allocation15], 1
    %9536 = vsyncpa [#allocation4], 1

</llo_original>
